<compile_context>
chip_gen: v5e
topology: v5e:2x2
jax: 0.10.0
libtpu: 0.0.40
codegen_flags: <defaults>
</compile_context>

<pallas_src>
import math

import jax
import jax.numpy as jnp
from jax import lax
from jax.experimental import pallas as pl
from jax.experimental.pallas import tpu as pltpu

EPS = 1e-5       # InstanceNorm1d default eps
SLOPE = 0.2      # LeakyReLU negative slope
NUM_BLOCKS = 10  # -> 9 ResBlks


def _leaky(v):
    return jnp.where(v >= 0, v, SLOPE * v)


# ---------------------------------------------------------------------------
# fused feature-extractor + heads kernel (one batch element per grid step)
# ---------------------------------------------------------------------------
def fused_kernel(x_ref, pool_ref, scw0_ref,
                 w10_ref, b10_ref, g10_ref, be10_ref,
                 w20_ref, b20_ref, g20_ref, be20_ref,
                 w1a_ref, b1a_ref, g1a_ref, be1a_ref,
                 w2a_ref, b2a_ref, g2a_ref, be2a_ref,
                 hw1_ref, hb1_ref, hw2_ref, hb2_ref,
                 out_ref):
    inv_s2 = jnp.float32(1.0 / math.sqrt(2.0))

    def conv3(v, wcat, bias):
        # zero-"same" k=3 conv; wcat = [w_left | w_center | w_right] (C_out, 3*C_in)
        C, L = v.shape
        col = lax.broadcasted_iota(jnp.int32, (1, L), 1)
        left = jnp.where(col >= 1, pltpu.roll(v, shift=1, axis=1),
                         jnp.float32(0.0))
        right = jnp.where(col < L - 1, pltpu.roll(v, shift=L - 1, axis=1),
                          jnp.float32(0.0))
        if C % 8 == 0:
            # single MXU sequence with K = 3*C (aligned sublane concat)
            xcat = jnp.concatenate([left, v, right], axis=0)      # (3C, L)
            acc = jnp.dot(wcat, xcat, preferred_element_type=jnp.float32)
        else:
            # block 0 (C_in = 3): keep three small dots, avoid unaligned concat
            acc = jnp.dot(wcat[:, :C], left, preferred_element_type=jnp.float32)
            acc = acc + jnp.dot(wcat[:, C:2 * C], v,
                                preferred_element_type=jnp.float32)
            acc = acc + jnp.dot(wcat[:, 2 * C:], right,
                                preferred_element_type=jnp.float32)
        return acc + bias

    def inorm(v, gamma, beta):
        # one-pass InstanceNorm1d (biased variance, affine, eps inside the sqrt)
        inv_n = jnp.float32(1.0 / v.shape[1])
        mean = jnp.sum(v, axis=1, keepdims=True) * inv_n
        ex2 = jnp.sum(v * v, axis=1, keepdims=True) * inv_n
        scale = lax.rsqrt(ex2 - mean * mean + EPS) * gamma
        return (v - mean) * scale + beta

    def resblk(v, scw, w1cat, b1, g1, be1, w2cat, b2, g2, be2):
        C, L = v.shape
        pmat = pool_ref[pl.ds(0, L), pl.ds(0, L // 2)]            # (L, L/2)
        # residual first half: norm1 -> lrelu -> conv1
        r = conv3(_leaky(inorm(v, g1, be1)), w1cat, b1)           # (C, L)
        if C % 8 == 0:
            # ONE pool matmul for shortcut-input and conv1-output
            pooled = jnp.dot(jnp.concatenate([v, r], axis=0), pmat,
                             preferred_element_type=jnp.float32)  # (2C, L/2)
            sc, r = pooled[:C], pooled[C:]
        else:
            sc = jnp.dot(v, pmat, preferred_element_type=jnp.float32)
            r = jnp.dot(r, pmat, preferred_element_type=jnp.float32)
        if scw is not None:     # block 0: learned 1x1 AFTER the pool (both linear)
            sc = jnp.dot(scw, sc, preferred_element_type=jnp.float32)
        # residual second half: norm2 -> lrelu -> conv2
        r = conv3(_leaky(inorm(r, g2, be2)), w2cat, b2)           # (C_out, L/2)
        return (sc + r) * inv_s2

    h = x_ref[0]                                                  # (C_in, L0)

    # block 0 (learned 1x1 shortcut: input_dim -> dim)
    h = resblk(h, scw0_ref[...],
               w10_ref[...], b10_ref[...], g10_ref[...], be10_ref[...],
               w20_ref[...], b20_ref[...], g20_ref[...], be20_ref[...])

    # blocks 1..8 (identity shortcut; dim -> dim) — statically unrolled
    for i in range(NUM_BLOCKS - 2):
        h = resblk(h, None,
                   w1a_ref[i], b1a_ref[i], g1a_ref[i], be1a_ref[i],
                   w2a_ref[i], b2a_ref[i], g2a_ref[i], be2a_ref[i])

    # fused MLP heads: torch.flatten order (c*Lf + l) is folded into the packed
    # head weights, so the kernel only takes per-column dots of h (no reshape).
    C, Lf = h.shape
    hid = hb1_ref[...]                                            # (2*D2, 1)
    for l in range(Lf):
        hid = hid + jnp.dot(hw1_ref[l], h[:, l:l + 1],
                            preferred_element_type=jnp.float32)
    hid = _leaky(hid)
    res = jnp.dot(hw2_ref[...], hid,
                  preferred_element_type=jnp.float32) + hb2_ref[...]  # (2, 1)
    out_ref[0] = res.astype(out_ref.dtype)


# ---------------------------------------------------------------------------
# one-time parameter packing (outside the jitted path)
# ---------------------------------------------------------------------------
def pack_params(params):
    blocks = params["blocks"]
    heads = params["heads"]
    b0, rest = blocks[0], blocks[1:]
    dim = b0["w2"].shape[1]

    def cat_taps(w):                      # (3, C_out, C_in) -> (C_out, 3*C_in)
        return jnp.concatenate([w[0], w[1], w[2]], axis=1)

    D, D2 = heads["wd1"].shape
    Lf = D // dim
    L0 = Lf * 2 ** (NUM_BLOCKS - 1)

    # exact avg_pool1d(2) matrix for the largest length; the matrix for length L
    # is the top-left (L, L//2) corner.  Values 0 / 0.5 are exact constants.
    r = jnp.arange(L0)[:, None]
    c = jnp.arange(L0 // 2)[None, :]
    pool = jnp.where((r == 2 * c) | (r == 2 * c + 1), 0.5, 0.0).astype(jnp.float32)

    def perm_w1(w1):
        # feat index c*Lf + l  ->  per-column stacked form (Lf, D2, C)
        return w1.reshape(dim, Lf, D2).transpose(1, 2, 0)

    hw1 = jnp.concatenate([perm_w1(heads["wd1"]), perm_w1(heads["wa1"])],
                          axis=1)                                  # (Lf, 2*D2, C)
    hb1 = jnp.concatenate([heads["bd1"].reshape(D2, 1),
                           heads["ba1"].reshape(D2, 1)], axis=0)   # (2*D2, 1)
    hw2 = jnp.zeros((2, 2 * D2), jnp.float32)
    hw2 = hw2.at[0, :D2].set(heads["wd2"][:, 0]).at[1, D2:].set(heads["wa2"][:, 0])
    hb2 = jnp.concatenate([heads["bd2"].reshape(1, 1),
                           heads["ba2"].reshape(1, 1)], axis=0)    # (2, 1)

    return dict(
        pool=pool,
        scw0=b0["scw"] if "scw" in b0 else jnp.eye(dim, dtype=jnp.float32),
        w10=cat_taps(b0["w1"]), b10=b0["b1"], g10=b0["g1"], be10=b0["be1"],
        w20=cat_taps(b0["w2"]), b20=b0["b2"], g20=b0["g2"], be20=b0["be2"],
        w1a=jnp.stack([cat_taps(bp["w1"]) for bp in rest]),
        b1a=jnp.stack([bp["b1"] for bp in rest]),
        g1a=jnp.stack([bp["g1"] for bp in rest]),
        be1a=jnp.stack([bp["be1"] for bp in rest]),
        w2a=jnp.stack([cat_taps(bp["w2"]) for bp in rest]),
        b2a=jnp.stack([bp["b2"] for bp in rest]),
        g2a=jnp.stack([bp["g2"] for bp in rest]),
        be2a=jnp.stack([bp["be2"] for bp in rest]),
        hw1=hw1, hb1=hb1, hw2=hw2, hb2=hb2,
    )


def model_forward(x, pk):
    B, C0, L0 = x.shape
    assert pk["pool"].shape[0] == L0

    def full(a):
        return pl.BlockSpec(a.shape, lambda b, _n=a.ndim: (0,) * _n)

    args = (x, pk["pool"], pk["scw0"],
            pk["w10"], pk["b10"], pk["g10"], pk["be10"],
            pk["w20"], pk["b20"], pk["g20"], pk["be20"],
            pk["w1a"], pk["b1a"], pk["g1a"], pk["be1a"],
            pk["w2a"], pk["b2a"], pk["g2a"], pk["be2a"],
            pk["hw1"], pk["hb1"], pk["hw2"], pk["hb2"])
    in_specs = [pl.BlockSpec((1, C0, L0), lambda b: (b, 0, 0))]
    in_specs += [full(a) for a in args[1:]]

    out = pl.pallas_call(
        fused_kernel,
        out_shape=jax.ShapeDtypeStruct((B, 2, 1), x.dtype),
        grid=(B,),
        in_specs=in_specs,
        out_specs=pl.BlockSpec((1, 2, 1), lambda b: (b, 0, 0)),
        compiler_params=pltpu.CompilerParams(dimension_semantics=("parallel",)),
    )(*args)
    return out[:, 0, 0], out[:, 1, 0]           # (dis, aux), each (B,) -- squeeze(-1)


# ---------------------------------------------------------------------------
# deterministic parameter init (synthetic; shapes match the PyTorch module)
# ---------------------------------------------------------------------------
def init_params(key, input_dim, dim, kernel_size, gen_length):
    # TODO(synk): kernel_size != 3 uses ReflectionPad1d(>0); only the kernel_size==3
    # zero-"same" padding path of the PyTorch module is implemented in-kernel.
    assert kernel_size == 3
    assert gen_length % (2 ** (NUM_BLOCKS - 1)) == 0

    keys = iter(jax.random.split(key, 128))

    def rnd(shape, scale=0.1):
        return (scale * jax.random.normal(next(keys), shape)).astype(jnp.float32)

    blocks = []
    for i in range(NUM_BLOCKS - 1):
        c_in = input_dim if i == 0 else dim
        c_out = dim
        bp = dict(
            w1=rnd((kernel_size, c_in, c_in)), b1=rnd((c_in, 1)),
            w2=rnd((kernel_size, c_out, c_in)), b2=rnd((c_out, 1)),
            g1=1.0 + rnd((c_in, 1)), be1=rnd((c_in, 1)),
            g2=1.0 + rnd((c_in, 1)), be2=rnd((c_in, 1)),
        )
        if c_in != c_out:
            bp["scw"] = rnd((c_out, c_in))          # learned 1x1 shortcut (block 0)
        blocks.append(bp)

    D = (gen_length // 2 ** (NUM_BLOCKS - 1)) * dim
    D2 = D // 2
    heads = dict(
        wd1=rnd((D, D2)), bd1=rnd((1, D2)), wd2=rnd((D2, 1)), bd2=rnd((1, 1)),
        wa1=rnd((D, D2)), ba1=rnd((1, D2)), wa2=rnd((D2, 1)), ba2=rnd((1, 1)),
    )
    return dict(blocks=blocks, heads=heads)


# ---------------------------------------------------------------------------
# pure-JAX reference (same math, no Pallas) for a correctness check
# ---------------------------------------------------------------------------
def _head(feat, w1, b1, w2, b2):
    t = feat @ w1 + b1
    t = jnp.where(t >= 0, t, SLOPE * t)
    return (t @ w2 + b2)[:, 0]


def _ref_resblk(x, p):
    def inorm(v, g, b):
        m = v.mean(axis=2, keepdims=True)
        var = ((v - m) ** 2).mean(axis=2, keepdims=True)
        return (v - m) / jnp.sqrt(var + EPS) * g[None] + b[None]

    def conv(v, w, b):
        K = w.shape[0]
        pad = (K - 1) // 2
        L = v.shape[2]
        vp = jnp.pad(v, ((0, 0), (0, 0), (pad, pad)))
        out = sum(jnp.einsum("oc,bcl->bol", w[k], vp[:, :, k:k + L]) for k in range(K))
        return out + b[None]

    def pool(v):
        B, C, L = v.shape
        return v.reshape(B, C, L // 2, 2).mean(-1)

    def lrelu(v):
        return jnp.where(v >= 0, v, SLOPE * v)

    sc = x if "scw" not in p else jnp.einsum("oc,bcl->bol", p["scw"], x)
    sc = pool(sc)
    h = lrelu(inorm(x, p["g1"], p["be1"]))
    h = pool(conv(h, p["w1"], p["b1"]))
    h = lrelu(inorm(h, p["g2"], p["be2"]))
    h = conv(h, p["w2"], p["b2"])
    return (sc + h) / math.sqrt(2.0)


def _ref_forward(x, params):
    h = x
    for bp in params["blocks"]:
        h = _ref_resblk(h, bp)
    feat = h.reshape(h.shape[0], -1)
    hp = params["heads"]
    return (_head(feat, hp["wd1"], hp["bd1"], hp["wd2"], hp["bd2"]),
            _head(feat, hp["wa1"], hp["ba1"], hp["wa2"], hp["ba2"]))


# ---------------------------------------------------------------------------
if __name__ == "__main__":
    B, input_dim, dim, kernel_size, gen_length = 2, 3, 8, 3, 1024

    key = jax.random.PRNGKey(0)
    kx, kp = jax.random.split(key)
    x = jax.random.normal(kx, (B, input_dim, gen_length), jnp.float32)
    params = init_params(kp, input_dim, dim, kernel_size, gen_length)
    packed = pack_params(params)            # one-time packing, outside jit

    fwd = jax.jit(model_forward)
    dis, aux = fwd(x, packed)
    jax.block_until_ready((dis, aux))

    dis_ref, aux_ref = _ref_forward(x, params)
    assert dis.shape == (B,) and aux.shape == (B,)
    assert jnp.allclose(dis, dis_ref, atol=1e-3, rtol=1e-3), (dis, dis_ref)
    assert jnp.allclose(aux, aux_ref, atol=1e-3, rtol=1e-3), (aux, aux_ref)

    print("KERNEL_OK")
</pallas_src>

<mosaic_0001>
module attributes {stable_mosaic.version = 11 : i64} {
  func.func @fused_kernel(%arg0: i32, %arg1: memref<1x3x1024xf32, #tpu.memory_space<vmem>>, %arg2: memref<1024x512xf32, #tpu.memory_space<vmem>>, %arg3: memref<8x3xf32, #tpu.memory_space<vmem>>, %arg4: memref<3x9xf32, #tpu.memory_space<vmem>>, %arg5: memref<3x1xf32, #tpu.memory_space<vmem>>, %arg6: memref<3x1xf32, #tpu.memory_space<vmem>>, %arg7: memref<3x1xf32, #tpu.memory_space<vmem>>, %arg8: memref<8x9xf32, #tpu.memory_space<vmem>>, %arg9: memref<8x1xf32, #tpu.memory_space<vmem>>, %arg10: memref<3x1xf32, #tpu.memory_space<vmem>>, %arg11: memref<3x1xf32, #tpu.memory_space<vmem>>, %arg12: memref<8x8x24xf32, #tpu.memory_space<vmem>>, %arg13: memref<8x8x1xf32, #tpu.memory_space<vmem>>, %arg14: memref<8x8x1xf32, #tpu.memory_space<vmem>>, %arg15: memref<8x8x1xf32, #tpu.memory_space<vmem>>, %arg16: memref<8x8x24xf32, #tpu.memory_space<vmem>>, %arg17: memref<8x8x1xf32, #tpu.memory_space<vmem>>, %arg18: memref<8x8x1xf32, #tpu.memory_space<vmem>>, %arg19: memref<8x8x1xf32, #tpu.memory_space<vmem>>, %arg20: memref<2x16x8xf32, #tpu.memory_space<vmem>>, %arg21: memref<16x1xf32, #tpu.memory_space<vmem>>, %arg22: memref<2x16xf32, #tpu.memory_space<vmem>>, %arg23: memref<2x1xf32, #tpu.memory_space<vmem>>, %arg24: memref<1x2x1xf32, #tpu.memory_space<vmem>>) attributes {dimension_semantics = [#tpu.dimension_semantics<parallel>], iteration_bounds = array<i64: 2>, scalar_prefetch = 0 : i64, scratch_operands = 0 : i64, tpu.core_type = #tpu.core_type<tc>, window_params = [{transform_indices = @transform_0, window_bounds = array<i64: 1, 3, 1024>}, {pipeline_mode = #tpu.pipeline_mode<synchronous>, transform_indices = @transform_1, window_bounds = array<i64: 1024, 512>}, {pipeline_mode = #tpu.pipeline_mode<synchronous>, transform_indices = @transform_2, window_bounds = array<i64: 8, 3>}, {pipeline_mode = #tpu.pipeline_mode<synchronous>, transform_indices = @transform_3, window_bounds = array<i64: 3, 9>}, {pipeline_mode = #tpu.pipeline_mode<synchronous>, transform_indices = @transform_4, window_bounds = array<i64: 3, 1>}, {pipeline_mode = #tpu.pipeline_mode<synchronous>, transform_indices = @transform_5, window_bounds = array<i64: 3, 1>}, {pipeline_mode = #tpu.pipeline_mode<synchronous>, transform_indices = @transform_6, window_bounds = array<i64: 3, 1>}, {pipeline_mode = #tpu.pipeline_mode<synchronous>, transform_indices = @transform_7, window_bounds = array<i64: 8, 9>}, {pipeline_mode = #tpu.pipeline_mode<synchronous>, transform_indices = @transform_8, window_bounds = array<i64: 8, 1>}, {pipeline_mode = #tpu.pipeline_mode<synchronous>, transform_indices = @transform_9, window_bounds = array<i64: 3, 1>}, {pipeline_mode = #tpu.pipeline_mode<synchronous>, transform_indices = @transform_10, window_bounds = array<i64: 3, 1>}, {pipeline_mode = #tpu.pipeline_mode<synchronous>, transform_indices = @transform_11, window_bounds = array<i64: 8, 8, 24>}, {pipeline_mode = #tpu.pipeline_mode<synchronous>, transform_indices = @transform_12, window_bounds = array<i64: 8, 8, 1>}, {pipeline_mode = #tpu.pipeline_mode<synchronous>, transform_indices = @transform_13, window_bounds = array<i64: 8, 8, 1>}, {pipeline_mode = #tpu.pipeline_mode<synchronous>, transform_indices = @transform_14, window_bounds = array<i64: 8, 8, 1>}, {pipeline_mode = #tpu.pipeline_mode<synchronous>, transform_indices = @transform_15, window_bounds = array<i64: 8, 8, 24>}, {pipeline_mode = #tpu.pipeline_mode<synchronous>, transform_indices = @transform_16, window_bounds = array<i64: 8, 8, 1>}, {pipeline_mode = #tpu.pipeline_mode<synchronous>, transform_indices = @transform_17, window_bounds = array<i64: 8, 8, 1>}, {pipeline_mode = #tpu.pipeline_mode<synchronous>, transform_indices = @transform_18, window_bounds = array<i64: 8, 8, 1>}, {pipeline_mode = #tpu.pipeline_mode<synchronous>, transform_indices = @transform_19, window_bounds = array<i64: 2, 16, 8>}, {pipeline_mode = #tpu.pipeline_mode<synchronous>, transform_indices = @transform_20, window_bounds = array<i64: 16, 1>}, {pipeline_mode = #tpu.pipeline_mode<synchronous>, transform_indices = @transform_21, window_bounds = array<i64: 2, 16>}, {pipeline_mode = #tpu.pipeline_mode<synchronous>, transform_indices = @transform_22, window_bounds = array<i64: 2, 1>}, {transform_indices = @transform_23, window_bounds = array<i64: 1, 2, 1>}]} {
    %c0 = arith.constant 0 : index
    %c0_0 = arith.constant 0 : index
    %c0_1 = arith.constant 0 : index
    %0 = vector.load %arg1[%c0, %c0_0, %c0_1] : memref<1x3x1024xf32, #tpu.memory_space<vmem>>, vector<1x3x1024xf32>
    %1 = vector.shape_cast %0 : vector<1x3x1024xf32> to vector<3x1024xf32>
    %c0_2 = arith.constant 0 : index
    %c0_3 = arith.constant 0 : index
    %2 = vector.load %arg3[%c0_2, %c0_3] : memref<8x3xf32, #tpu.memory_space<vmem>>, vector<8x3xf32>
    %c0_4 = arith.constant 0 : index
    %c0_5 = arith.constant 0 : index
    %3 = vector.load %arg4[%c0_4, %c0_5] : memref<3x9xf32, #tpu.memory_space<vmem>>, vector<3x9xf32>
    %c0_6 = arith.constant 0 : index
    %c0_7 = arith.constant 0 : index
    %4 = vector.load %arg5[%c0_6, %c0_7] : memref<3x1xf32, #tpu.memory_space<vmem>>, vector<3x1xf32>
    %c0_8 = arith.constant 0 : index
    %c0_9 = arith.constant 0 : index
    %5 = vector.load %arg6[%c0_8, %c0_9] : memref<3x1xf32, #tpu.memory_space<vmem>>, vector<3x1xf32>
    %c0_10 = arith.constant 0 : index
    %c0_11 = arith.constant 0 : index
    %6 = vector.load %arg7[%c0_10, %c0_11] : memref<3x1xf32, #tpu.memory_space<vmem>>, vector<3x1xf32>
    %c0_12 = arith.constant 0 : index
    %c0_13 = arith.constant 0 : index
    %7 = vector.load %arg8[%c0_12, %c0_13] : memref<8x9xf32, #tpu.memory_space<vmem>>, vector<8x9xf32>
    %c0_14 = arith.constant 0 : index
    %c0_15 = arith.constant 0 : index
    %8 = vector.load %arg9[%c0_14, %c0_15] : memref<8x1xf32, #tpu.memory_space<vmem>>, vector<8x1xf32>
    %c0_16 = arith.constant 0 : index
    %c0_17 = arith.constant 0 : index
    %9 = vector.load %arg10[%c0_16, %c0_17] : memref<3x1xf32, #tpu.memory_space<vmem>>, vector<3x1xf32>
    %c0_18 = arith.constant 0 : index
    %c0_19 = arith.constant 0 : index
    %10 = vector.load %arg11[%c0_18, %c0_19] : memref<3x1xf32, #tpu.memory_space<vmem>>, vector<3x1xf32>
    %c0_20 = arith.constant 0 : index
    %c0_21 = arith.constant 0 : index
    %11 = vector.load %arg2[%c0_20, %c0_21] : memref<1024x512xf32, #tpu.memory_space<vmem>>, vector<1024x512xf32>
    %cst = arith.constant dense<0.000000e+00> : vector<3xf32>
    %12 = vector.multi_reduction <add>, %1, %cst [1] : vector<3x1024xf32> to vector<3xf32>
    %13 = vector.shape_cast %12 : vector<3xf32> to vector<3x1xf32>
    %cst_22 = arith.constant 9.765625E-4 : f32
    %14 = vector.broadcast %cst_22 : f32 to vector<3x1xf32>
    %15 = arith.mulf %13, %14 : vector<3x1xf32>
    %16 = arith.mulf %1, %1 : vector<3x1024xf32>
    %cst_23 = arith.constant dense<0.000000e+00> : vector<3xf32>
    %17 = vector.multi_reduction <add>, %16, %cst_23 [1] : vector<3x1024xf32> to vector<3xf32>
    %18 = vector.shape_cast %17 : vector<3xf32> to vector<3x1xf32>
    %cst_24 = arith.constant 9.765625E-4 : f32
    %19 = vector.broadcast %cst_24 : f32 to vector<3x1xf32>
    %20 = arith.mulf %18, %19 : vector<3x1xf32>
    %21 = arith.mulf %15, %15 : vector<3x1xf32>
    %22 = arith.subf %20, %21 : vector<3x1xf32>
    %cst_25 = arith.constant 9.99999974E-6 : f32
    %23 = vector.broadcast %cst_25 : f32 to vector<3x1xf32>
    %24 = arith.addf %22, %23 : vector<3x1xf32>
    %25 = math.rsqrt %24 : vector<3x1xf32>
    %26 = arith.mulf %25, %5 : vector<3x1xf32>
    %27 = vector.broadcast %15 : vector<3x1xf32> to vector<3x1024xf32>
    %28 = arith.subf %1, %27 : vector<3x1024xf32>
    %29 = vector.broadcast %26 : vector<3x1xf32> to vector<3x1024xf32>
    %30 = arith.mulf %28, %29 : vector<3x1024xf32>
    %31 = vector.broadcast %6 : vector<3x1xf32> to vector<3x1024xf32>
    %32 = arith.addf %30, %31 : vector<3x1024xf32>
    %cst_26 = arith.constant 0.000000e+00 : f32
    %33 = vector.broadcast %cst_26 : f32 to vector<3x1024xf32>
    %34 = arith.cmpf oge, %32, %33 : vector<3x1024xf32>
    %cst_27 = arith.constant 2.000000e-01 : f32
    %35 = vector.broadcast %cst_27 : f32 to vector<3x1024xf32>
    %36 = arith.mulf %35, %32 : vector<3x1024xf32>
    %37 = arith.select %34, %32, %36 : vector<3x1024xi1>, vector<3x1024xf32>
    %38 = tpu.iota {dimensions = array<i32: 1>} : vector<1x1024xi32>
    %c1_i32 = arith.constant 1 : i32
    %39 = vector.broadcast %c1_i32 : i32 to vector<1x1024xi32>
    %40 = arith.cmpi sge, %38, %39 : vector<1x1024xi32>
    %c1_i32_28 = arith.constant 1 : i32
    %41 = tpu.dynamic_rotate %37 by %c1_i32_28 dim 1 : vector<3x1024xf32>, i32 -> vector<3x1024xf32>
    %cst_29 = arith.constant 0.000000e+00 : f32
    %42 = vector.shape_cast %40 : vector<1x1024xi1> to vector<1x1024xi1>
    %43 = vector.broadcast %42 : vector<1x1024xi1> to vector<3x1024xi1>
    %44 = vector.broadcast %cst_29 : f32 to vector<3x1024xf32>
    %45 = arith.select %43, %41, %44 : vector<3x1024xi1>, vector<3x1024xf32>
    %c1023_i32 = arith.constant 1023 : i32
    %46 = vector.broadcast %c1023_i32 : i32 to vector<1x1024xi32>
    %47 = arith.cmpi slt, %38, %46 : vector<1x1024xi32>
    %c1023_i32_30 = arith.constant 1023 : i32
    %48 = tpu.dynamic_rotate %37 by %c1023_i32_30 dim 1 : vector<3x1024xf32>, i32 -> vector<3x1024xf32>
    %cst_31 = arith.constant 0.000000e+00 : f32
    %49 = vector.shape_cast %47 : vector<1x1024xi1> to vector<1x1024xi1>
    %50 = vector.broadcast %49 : vector<1x1024xi1> to vector<3x1024xi1>
    %51 = vector.broadcast %cst_31 : f32 to vector<3x1024xf32>
    %52 = arith.select %50, %48, %51 : vector<3x1024xi1>, vector<3x1024xf32>
    %53 = vector.extract_strided_slice %3 {offsets = [0, 0], sizes = [3, 3], strides = [1, 1]} : vector<3x9xf32> to vector<3x3xf32>
    %cst_32 = arith.constant dense<0.000000e+00> : vector<3x1024xf32>
    %54 = tpu.matmul %53, %45, %cst_32 {dimension_numbers = #tpu.dot_dimension_numbers<[1], [0], [0], [1], [0, 0, 1, 1], [], []>} : vector<3x3xf32>, vector<3x1024xf32>, vector<3x1024xf32> -> vector<3x1024xf32>
    %55 = vector.extract_strided_slice %3 {offsets = [0, 3], sizes = [3, 3], strides = [1, 1]} : vector<3x9xf32> to vector<3x3xf32>
    %cst_33 = arith.constant dense<0.000000e+00> : vector<3x1024xf32>
    %56 = tpu.matmul %55, %37, %cst_33 {dimension_numbers = #tpu.dot_dimension_numbers<[1], [0], [0], [1], [0, 0, 1, 1], [], []>} : vector<3x3xf32>, vector<3x1024xf32>, vector<3x1024xf32> -> vector<3x1024xf32>
    %57 = arith.addf %54, %56 : vector<3x1024xf32>
    %58 = vector.extract_strided_slice %3 {offsets = [0, 6], sizes = [3, 3], strides = [1, 1]} : vector<3x9xf32> to vector<3x3xf32>
    %cst_34 = arith.constant dense<0.000000e+00> : vector<3x1024xf32>
    %59 = tpu.matmul %58, %52, %cst_34 {dimension_numbers = #tpu.dot_dimension_numbers<[1], [0], [0], [1], [0, 0, 1, 1], [], []>} : vector<3x3xf32>, vector<3x1024xf32>, vector<3x1024xf32> -> vector<3x1024xf32>
    %60 = arith.addf %57, %59 : vector<3x1024xf32>
    %61 = vector.broadcast %4 : vector<3x1xf32> to vector<3x1024xf32>
    %62 = arith.addf %60, %61 : vector<3x1024xf32>
    %cst_35 = arith.constant dense<0.000000e+00> : vector<3x512xf32>
    %63 = tpu.matmul %1, %11, %cst_35 {dimension_numbers = #tpu.dot_dimension_numbers<[1], [0], [0], [1], [0, 0, 1, 1], [], []>} : vector<3x1024xf32>, vector<1024x512xf32>, vector<3x512xf32> -> vector<3x512xf32>
    %cst_36 = arith.constant dense<0.000000e+00> : vector<3x512xf32>
    %64 = tpu.matmul %62, %11, %cst_36 {dimension_numbers = #tpu.dot_dimension_numbers<[1], [0], [0], [1], [0, 0, 1, 1], [], []>} : vector<3x1024xf32>, vector<1024x512xf32>, vector<3x512xf32> -> vector<3x512xf32>
    %cst_37 = arith.constant dense<0.000000e+00> : vector<8x512xf32>
    %65 = tpu.matmul %2, %63, %cst_37 {dimension_numbers = #tpu.dot_dimension_numbers<[1], [0], [0], [1], [0, 0, 1, 1], [], []>} : vector<8x3xf32>, vector<3x512xf32>, vector<8x512xf32> -> vector<8x512xf32>
    %cst_38 = arith.constant dense<0.000000e+00> : vector<3xf32>
    %66 = vector.multi_reduction <add>, %64, %cst_38 [1] : vector<3x512xf32> to vector<3xf32>
    %67 = vector.shape_cast %66 : vector<3xf32> to vector<3x1xf32>
    %cst_39 = arith.constant 0.001953125 : f32
    %68 = vector.broadcast %cst_39 : f32 to vector<3x1xf32>
    %69 = arith.mulf %67, %68 : vector<3x1xf32>
    %70 = arith.mulf %64, %64 : vector<3x512xf32>
    %cst_40 = arith.constant dense<0.000000e+00> : vector<3xf32>
    %71 = vector.multi_reduction <add>, %70, %cst_40 [1] : vector<3x512xf32> to vector<3xf32>
    %72 = vector.shape_cast %71 : vector<3xf32> to vector<3x1xf32>
    %cst_41 = arith.constant 0.001953125 : f32
    %73 = vector.broadcast %cst_41 : f32 to vector<3x1xf32>
    %74 = arith.mulf %72, %73 : vector<3x1xf32>
    %75 = arith.mulf %69, %69 : vector<3x1xf32>
    %76 = arith.subf %74, %75 : vector<3x1xf32>
    %cst_42 = arith.constant 9.99999974E-6 : f32
    %77 = vector.broadcast %cst_42 : f32 to vector<3x1xf32>
    %78 = arith.addf %76, %77 : vector<3x1xf32>
    %79 = math.rsqrt %78 : vector<3x1xf32>
    %80 = arith.mulf %79, %9 : vector<3x1xf32>
    %81 = vector.broadcast %69 : vector<3x1xf32> to vector<3x512xf32>
    %82 = arith.subf %64, %81 : vector<3x512xf32>
    %83 = vector.broadcast %80 : vector<3x1xf32> to vector<3x512xf32>
    %84 = arith.mulf %82, %83 : vector<3x512xf32>
    %85 = vector.broadcast %10 : vector<3x1xf32> to vector<3x512xf32>
    %86 = arith.addf %84, %85 : vector<3x512xf32>
    %cst_43 = arith.constant 0.000000e+00 : f32
    %87 = vector.broadcast %cst_43 : f32 to vector<3x512xf32>
    %88 = arith.cmpf oge, %86, %87 : vector<3x512xf32>
    %cst_44 = arith.constant 2.000000e-01 : f32
    %89 = vector.broadcast %cst_44 : f32 to vector<3x512xf32>
    %90 = arith.mulf %89, %86 : vector<3x512xf32>
    %91 = arith.select %88, %86, %90 : vector<3x512xi1>, vector<3x512xf32>
    %92 = tpu.iota {dimensions = array<i32: 1>} : vector<1x512xi32>
    %c1_i32_45 = arith.constant 1 : i32
    %93 = vector.broadcast %c1_i32_45 : i32 to vector<1x512xi32>
    %94 = arith.cmpi sge, %92, %93 : vector<1x512xi32>
    %c1_i32_46 = arith.constant 1 : i32
    %95 = tpu.dynamic_rotate %91 by %c1_i32_46 dim 1 : vector<3x512xf32>, i32 -> vector<3x512xf32>
    %cst_47 = arith.constant 0.000000e+00 : f32
    %96 = vector.shape_cast %94 : vector<1x512xi1> to vector<1x512xi1>
    %97 = vector.broadcast %96 : vector<1x512xi1> to vector<3x512xi1>
    %98 = vector.broadcast %cst_47 : f32 to vector<3x512xf32>
    %99 = arith.select %97, %95, %98 : vector<3x512xi1>, vector<3x512xf32>
    %c511_i32 = arith.constant 511 : i32
    %100 = vector.broadcast %c511_i32 : i32 to vector<1x512xi32>
    %101 = arith.cmpi slt, %92, %100 : vector<1x512xi32>
    %c511_i32_48 = arith.constant 511 : i32
    %102 = tpu.dynamic_rotate %91 by %c511_i32_48 dim 1 : vector<3x512xf32>, i32 -> vector<3x512xf32>
    %cst_49 = arith.constant 0.000000e+00 : f32
    %103 = vector.shape_cast %101 : vector<1x512xi1> to vector<1x512xi1>
    %104 = vector.broadcast %103 : vector<1x512xi1> to vector<3x512xi1>
    %105 = vector.broadcast %cst_49 : f32 to vector<3x512xf32>
    %106 = arith.select %104, %102, %105 : vector<3x512xi1>, vector<3x512xf32>
    %107 = vector.extract_strided_slice %7 {offsets = [0, 0], sizes = [8, 3], strides = [1, 1]} : vector<8x9xf32> to vector<8x3xf32>
    %cst_50 = arith.constant dense<0.000000e+00> : vector<8x512xf32>
    %108 = tpu.matmul %107, %99, %cst_50 {dimension_numbers = #tpu.dot_dimension_numbers<[1], [0], [0], [1], [0, 0, 1, 1], [], []>} : vector<8x3xf32>, vector<3x512xf32>, vector<8x512xf32> -> vector<8x512xf32>
    %109 = vector.extract_strided_slice %7 {offsets = [0, 3], sizes = [8, 3], strides = [1, 1]} : vector<8x9xf32> to vector<8x3xf32>
    %cst_51 = arith.constant dense<0.000000e+00> : vector<8x512xf32>
    %110 = tpu.matmul %109, %91, %cst_51 {dimension_numbers = #tpu.dot_dimension_numbers<[1], [0], [0], [1], [0, 0, 1, 1], [], []>} : vector<8x3xf32>, vector<3x512xf32>, vector<8x512xf32> -> vector<8x512xf32>
    %111 = arith.addf %108, %110 : vector<8x512xf32>
    %112 = vector.extract_strided_slice %7 {offsets = [0, 6], sizes = [8, 3], strides = [1, 1]} : vector<8x9xf32> to vector<8x3xf32>
    %cst_52 = arith.constant dense<0.000000e+00> : vector<8x512xf32>
    %113 = tpu.matmul %112, %106, %cst_52 {dimension_numbers = #tpu.dot_dimension_numbers<[1], [0], [0], [1], [0, 0, 1, 1], [], []>} : vector<8x3xf32>, vector<3x512xf32>, vector<8x512xf32> -> vector<8x512xf32>
    %114 = arith.addf %111, %113 : vector<8x512xf32>
    %115 = vector.broadcast %8 : vector<8x1xf32> to vector<8x512xf32>
    %116 = arith.addf %114, %115 : vector<8x512xf32>
    %117 = arith.addf %65, %116 : vector<8x512xf32>
    %cst_53 = arith.constant 0.707106769 : f32
    %118 = vector.broadcast %cst_53 : f32 to vector<8x512xf32>
    %119 = arith.mulf %117, %118 : vector<8x512xf32>
    %c0_54 = arith.constant 0 : index
    %c0_55 = arith.constant 0 : index
    %c0_56 = arith.constant 0 : index
    %120 = vector.load %arg12[%c0_54, %c0_55, %c0_56] : memref<8x8x24xf32, #tpu.memory_space<vmem>>, vector<1x8x24xf32>
    %121 = vector.shape_cast %120 : vector<1x8x24xf32> to vector<8x24xf32>
    %c0_57 = arith.constant 0 : index
    %c0_58 = arith.constant 0 : index
    %c0_59 = arith.constant 0 : index
    %122 = vector.load %arg13[%c0_57, %c0_58, %c0_59] : memref<8x8x1xf32, #tpu.memory_space<vmem>>, vector<1x8x1xf32>
    %123 = vector.shape_cast %122 : vector<1x8x1xf32> to vector<8x1xf32>
    %c0_60 = arith.constant 0 : index
    %c0_61 = arith.constant 0 : index
    %c0_62 = arith.constant 0 : index
    %124 = vector.load %arg14[%c0_60, %c0_61, %c0_62] : memref<8x8x1xf32, #tpu.memory_space<vmem>>, vector<1x8x1xf32>
    %125 = vector.shape_cast %124 : vector<1x8x1xf32> to vector<8x1xf32>
    %c0_63 = arith.constant 0 : index
    %c0_64 = arith.constant 0 : index
    %c0_65 = arith.constant 0 : index
    %126 = vector.load %arg15[%c0_63, %c0_64, %c0_65] : memref<8x8x1xf32, #tpu.memory_space<vmem>>, vector<1x8x1xf32>
    %127 = vector.shape_cast %126 : vector<1x8x1xf32> to vector<8x1xf32>
    %c0_66 = arith.constant 0 : index
    %c0_67 = arith.constant 0 : index
    %c0_68 = arith.constant 0 : index
    %128 = vector.load %arg16[%c0_66, %c0_67, %c0_68] : memref<8x8x24xf32, #tpu.memory_space<vmem>>, vector<1x8x24xf32>
    %129 = vector.shape_cast %128 : vector<1x8x24xf32> to vector<8x24xf32>
    %c0_69 = arith.constant 0 : index
    %c0_70 = arith.constant 0 : index
    %c0_71 = arith.constant 0 : index
    %130 = vector.load %arg17[%c0_69, %c0_70, %c0_71] : memref<8x8x1xf32, #tpu.memory_space<vmem>>, vector<1x8x1xf32>
    %131 = vector.shape_cast %130 : vector<1x8x1xf32> to vector<8x1xf32>
    %c0_72 = arith.constant 0 : index
    %c0_73 = arith.constant 0 : index
    %c0_74 = arith.constant 0 : index
    %132 = vector.load %arg18[%c0_72, %c0_73, %c0_74] : memref<8x8x1xf32, #tpu.memory_space<vmem>>, vector<1x8x1xf32>
    %133 = vector.shape_cast %132 : vector<1x8x1xf32> to vector<8x1xf32>
    %c0_75 = arith.constant 0 : index
    %c0_76 = arith.constant 0 : index
    %c0_77 = arith.constant 0 : index
    %134 = vector.load %arg19[%c0_75, %c0_76, %c0_77] : memref<8x8x1xf32, #tpu.memory_space<vmem>>, vector<1x8x1xf32>
    %135 = vector.shape_cast %134 : vector<1x8x1xf32> to vector<8x1xf32>
    %c0_78 = arith.constant 0 : index
    %c0_79 = arith.constant 0 : index
    %136 = vector.load %arg2[%c0_78, %c0_79] : memref<1024x512xf32, #tpu.memory_space<vmem>>, vector<512x256xf32>
    %cst_80 = arith.constant dense<0.000000e+00> : vector<8xf32>
    %137 = vector.multi_reduction <add>, %119, %cst_80 [1] : vector<8x512xf32> to vector<8xf32>
    %138 = vector.shape_cast %137 : vector<8xf32> to vector<8x1xf32>
    %cst_81 = arith.constant 0.001953125 : f32
    %139 = vector.broadcast %cst_81 : f32 to vector<8x1xf32>
    %140 = arith.mulf %138, %139 : vector<8x1xf32>
    %141 = arith.mulf %119, %119 : vector<8x512xf32>
    %cst_82 = arith.constant dense<0.000000e+00> : vector<8xf32>
    %142 = vector.multi_reduction <add>, %141, %cst_82 [1] : vector<8x512xf32> to vector<8xf32>
    %143 = vector.shape_cast %142 : vector<8xf32> to vector<8x1xf32>
    %cst_83 = arith.constant 0.001953125 : f32
    %144 = vector.broadcast %cst_83 : f32 to vector<8x1xf32>
    %145 = arith.mulf %143, %144 : vector<8x1xf32>
    %146 = arith.mulf %140, %140 : vector<8x1xf32>
    %147 = arith.subf %145, %146 : vector<8x1xf32>
    %cst_84 = arith.constant 9.99999974E-6 : f32
    %148 = vector.broadcast %cst_84 : f32 to vector<8x1xf32>
    %149 = arith.addf %147, %148 : vector<8x1xf32>
    %150 = math.rsqrt %149 : vector<8x1xf32>
    %151 = arith.mulf %150, %125 : vector<8x1xf32>
    %152 = vector.broadcast %140 : vector<8x1xf32> to vector<8x512xf32>
    %153 = arith.subf %119, %152 : vector<8x512xf32>
    %154 = vector.broadcast %151 : vector<8x1xf32> to vector<8x512xf32>
    %155 = arith.mulf %153, %154 : vector<8x512xf32>
    %156 = vector.broadcast %127 : vector<8x1xf32> to vector<8x512xf32>
    %157 = arith.addf %155, %156 : vector<8x512xf32>
    %cst_85 = arith.constant 0.000000e+00 : f32
    %158 = vector.broadcast %cst_85 : f32 to vector<8x512xf32>
    %159 = arith.cmpf oge, %157, %158 : vector<8x512xf32>
    %cst_86 = arith.constant 2.000000e-01 : f32
    %160 = vector.broadcast %cst_86 : f32 to vector<8x512xf32>
    %161 = arith.mulf %160, %157 : vector<8x512xf32>
    %162 = arith.select %159, %157, %161 : vector<8x512xi1>, vector<8x512xf32>
    %163 = tpu.iota {dimensions = array<i32: 1>} : vector<1x512xi32>
    %c1_i32_87 = arith.constant 1 : i32
    %164 = vector.broadcast %c1_i32_87 : i32 to vector<1x512xi32>
    %165 = arith.cmpi sge, %163, %164 : vector<1x512xi32>
    %c1_i32_88 = arith.constant 1 : i32
    %166 = tpu.dynamic_rotate %162 by %c1_i32_88 dim 1 : vector<8x512xf32>, i32 -> vector<8x512xf32>
    %cst_89 = arith.constant 0.000000e+00 : f32
    %167 = vector.shape_cast %165 : vector<1x512xi1> to vector<1x512xi1>
    %168 = vector.broadcast %167 : vector<1x512xi1> to vector<8x512xi1>
    %169 = vector.broadcast %cst_89 : f32 to vector<8x512xf32>
    %170 = arith.select %168, %166, %169 : vector<8x512xi1>, vector<8x512xf32>
    %c511_i32_90 = arith.constant 511 : i32
    %171 = vector.broadcast %c511_i32_90 : i32 to vector<1x512xi32>
    %172 = arith.cmpi slt, %163, %171 : vector<1x512xi32>
    %c511_i32_91 = arith.constant 511 : i32
    %173 = tpu.dynamic_rotate %162 by %c511_i32_91 dim 1 : vector<8x512xf32>, i32 -> vector<8x512xf32>
    %cst_92 = arith.constant 0.000000e+00 : f32
    %174 = vector.shape_cast %172 : vector<1x512xi1> to vector<1x512xi1>
    %175 = vector.broadcast %174 : vector<1x512xi1> to vector<8x512xi1>
    %176 = vector.broadcast %cst_92 : f32 to vector<8x512xf32>
    %177 = arith.select %175, %173, %176 : vector<8x512xi1>, vector<8x512xf32>
    %178 = tpu.concatenate %170, %162, %177 in 0 : vector<8x512xf32>, vector<8x512xf32>, vector<8x512xf32> -> vector<24x512xf32>
    %cst_93 = arith.constant dense<0.000000e+00> : vector<8x512xf32>
    %179 = tpu.matmul %121, %178, %cst_93 {dimension_numbers = #tpu.dot_dimension_numbers<[1], [0], [0], [1], [0, 0, 1, 1], [], []>} : vector<8x24xf32>, vector<24x512xf32>, vector<8x512xf32> -> vector<8x512xf32>
    %180 = vector.broadcast %123 : vector<8x1xf32> to vector<8x512xf32>
    %181 = arith.addf %179, %180 : vector<8x512xf32>
    %182 = tpu.concatenate %119, %181 in 0 : vector<8x512xf32>, vector<8x512xf32> -> vector<16x512xf32>
    %cst_94 = arith.constant dense<0.000000e+00> : vector<16x256xf32>
    %183 = tpu.matmul %182, %136, %cst_94 {dimension_numbers = #tpu.dot_dimension_numbers<[1], [0], [0], [1], [0, 0, 1, 1], [], []>} : vector<16x512xf32>, vector<512x256xf32>, vector<16x256xf32> -> vector<16x256xf32>
    %184 = vector.extract_strided_slice %183 {offsets = [0, 0], sizes = [8, 256], strides = [1, 1]} : vector<16x256xf32> to vector<8x256xf32>
    %185 = vector.extract_strided_slice %183 {offsets = [8, 0], sizes = [8, 256], strides = [1, 1]} : vector<16x256xf32> to vector<8x256xf32>
    %cst_95 = arith.constant dense<0.000000e+00> : vector<8xf32>
    %186 = vector.multi_reduction <add>, %185, %cst_95 [1] : vector<8x256xf32> to vector<8xf32>
    %187 = vector.shape_cast %186 : vector<8xf32> to vector<8x1xf32>
    %cst_96 = arith.constant 3.906250e-03 : f32
    %188 = vector.broadcast %cst_96 : f32 to vector<8x1xf32>
    %189 = arith.mulf %187, %188 : vector<8x1xf32>
    %190 = arith.mulf %185, %185 : vector<8x256xf32>
    %cst_97 = arith.constant dense<0.000000e+00> : vector<8xf32>
    %191 = vector.multi_reduction <add>, %190, %cst_97 [1] : vector<8x256xf32> to vector<8xf32>
    %192 = vector.shape_cast %191 : vector<8xf32> to vector<8x1xf32>
    %cst_98 = arith.constant 3.906250e-03 : f32
    %193 = vector.broadcast %cst_98 : f32 to vector<8x1xf32>
    %194 = arith.mulf %192, %193 : vector<8x1xf32>
    %195 = arith.mulf %189, %189 : vector<8x1xf32>
    %196 = arith.subf %194, %195 : vector<8x1xf32>
    %cst_99 = arith.constant 9.99999974E-6 : f32
    %197 = vector.broadcast %cst_99 : f32 to vector<8x1xf32>
    %198 = arith.addf %196, %197 : vector<8x1xf32>
    %199 = math.rsqrt %198 : vector<8x1xf32>
    %200 = arith.mulf %199, %133 : vector<8x1xf32>
    %201 = vector.broadcast %189 : vector<8x1xf32> to vector<8x256xf32>
    %202 = arith.subf %185, %201 : vector<8x256xf32>
    %203 = vector.broadcast %200 : vector<8x1xf32> to vector<8x256xf32>
    %204 = arith.mulf %202, %203 : vector<8x256xf32>
    %205 = vector.broadcast %135 : vector<8x1xf32> to vector<8x256xf32>
    %206 = arith.addf %204, %205 : vector<8x256xf32>
    %cst_100 = arith.constant 0.000000e+00 : f32
    %207 = vector.broadcast %cst_100 : f32 to vector<8x256xf32>
    %208 = arith.cmpf oge, %206, %207 : vector<8x256xf32>
    %cst_101 = arith.constant 2.000000e-01 : f32
    %209 = vector.broadcast %cst_101 : f32 to vector<8x256xf32>
    %210 = arith.mulf %209, %206 : vector<8x256xf32>
    %211 = arith.select %208, %206, %210 : vector<8x256xi1>, vector<8x256xf32>
    %212 = tpu.iota {dimensions = array<i32: 1>} : vector<1x256xi32>
    %c1_i32_102 = arith.constant 1 : i32
    %213 = vector.broadcast %c1_i32_102 : i32 to vector<1x256xi32>
    %214 = arith.cmpi sge, %212, %213 : vector<1x256xi32>
    %c1_i32_103 = arith.constant 1 : i32
    %215 = tpu.dynamic_rotate %211 by %c1_i32_103 dim 1 : vector<8x256xf32>, i32 -> vector<8x256xf32>
    %cst_104 = arith.constant 0.000000e+00 : f32
    %216 = vector.shape_cast %214 : vector<1x256xi1> to vector<1x256xi1>
    %217 = vector.broadcast %216 : vector<1x256xi1> to vector<8x256xi1>
    %218 = vector.broadcast %cst_104 : f32 to vector<8x256xf32>
    %219 = arith.select %217, %215, %218 : vector<8x256xi1>, vector<8x256xf32>
    %c255_i32 = arith.constant 255 : i32
    %220 = vector.broadcast %c255_i32 : i32 to vector<1x256xi32>
    %221 = arith.cmpi slt, %212, %220 : vector<1x256xi32>
    %c255_i32_105 = arith.constant 255 : i32
    %222 = tpu.dynamic_rotate %211 by %c255_i32_105 dim 1 : vector<8x256xf32>, i32 -> vector<8x256xf32>
    %cst_106 = arith.constant 0.000000e+00 : f32
    %223 = vector.shape_cast %221 : vector<1x256xi1> to vector<1x256xi1>
    %224 = vector.broadcast %223 : vector<1x256xi1> to vector<8x256xi1>
    %225 = vector.broadcast %cst_106 : f32 to vector<8x256xf32>
    %226 = arith.select %224, %222, %225 : vector<8x256xi1>, vector<8x256xf32>
    %227 = tpu.concatenate %219, %211, %226 in 0 : vector<8x256xf32>, vector<8x256xf32>, vector<8x256xf32> -> vector<24x256xf32>
    %cst_107 = arith.constant dense<0.000000e+00> : vector<8x256xf32>
    %228 = tpu.matmul %129, %227, %cst_107 {dimension_numbers = #tpu.dot_dimension_numbers<[1], [0], [0], [1], [0, 0, 1, 1], [], []>} : vector<8x24xf32>, vector<24x256xf32>, vector<8x256xf32> -> vector<8x256xf32>
    %229 = vector.broadcast %131 : vector<8x1xf32> to vector<8x256xf32>
    %230 = arith.addf %228, %229 : vector<8x256xf32>
    %231 = arith.addf %184, %230 : vector<8x256xf32>
    %cst_108 = arith.constant 0.707106769 : f32
    %232 = vector.broadcast %cst_108 : f32 to vector<8x256xf32>
    %233 = arith.mulf %231, %232 : vector<8x256xf32>
    %c1 = arith.constant 1 : index
    %c0_109 = arith.constant 0 : index
    %c0_110 = arith.constant 0 : index
    %234 = vector.load %arg12[%c1, %c0_109, %c0_110] : memref<8x8x24xf32, #tpu.memory_space<vmem>>, vector<1x8x24xf32>
    %235 = vector.shape_cast %234 : vector<1x8x24xf32> to vector<8x24xf32>
    %c1_111 = arith.constant 1 : index
    %c0_112 = arith.constant 0 : index
    %c0_113 = arith.constant 0 : index
    %236 = vector.load %arg13[%c1_111, %c0_112, %c0_113] : memref<8x8x1xf32, #tpu.memory_space<vmem>>, vector<1x8x1xf32>
    %237 = vector.shape_cast %236 : vector<1x8x1xf32> to vector<8x1xf32>
    %c1_114 = arith.constant 1 : index
    %c0_115 = arith.constant 0 : index
    %c0_116 = arith.constant 0 : index
    %238 = vector.load %arg14[%c1_114, %c0_115, %c0_116] : memref<8x8x1xf32, #tpu.memory_space<vmem>>, vector<1x8x1xf32>
    %239 = vector.shape_cast %238 : vector<1x8x1xf32> to vector<8x1xf32>
    %c1_117 = arith.constant 1 : index
    %c0_118 = arith.constant 0 : index
    %c0_119 = arith.constant 0 : index
    %240 = vector.load %arg15[%c1_117, %c0_118, %c0_119] : memref<8x8x1xf32, #tpu.memory_space<vmem>>, vector<1x8x1xf32>
    %241 = vector.shape_cast %240 : vector<1x8x1xf32> to vector<8x1xf32>
    %c1_120 = arith.constant 1 : index
    %c0_121 = arith.constant 0 : index
    %c0_122 = arith.constant 0 : index
    %242 = vector.load %arg16[%c1_120, %c0_121, %c0_122] : memref<8x8x24xf32, #tpu.memory_space<vmem>>, vector<1x8x24xf32>
    %243 = vector.shape_cast %242 : vector<1x8x24xf32> to vector<8x24xf32>
    %c1_123 = arith.constant 1 : index
    %c0_124 = arith.constant 0 : index
    %c0_125 = arith.constant 0 : index
    %244 = vector.load %arg17[%c1_123, %c0_124, %c0_125] : memref<8x8x1xf32, #tpu.memory_space<vmem>>, vector<1x8x1xf32>
    %245 = vector.shape_cast %244 : vector<1x8x1xf32> to vector<8x1xf32>
    %c1_126 = arith.constant 1 : index
    %c0_127 = arith.constant 0 : index
    %c0_128 = arith.constant 0 : index
    %246 = vector.load %arg18[%c1_126, %c0_127, %c0_128] : memref<8x8x1xf32, #tpu.memory_space<vmem>>, vector<1x8x1xf32>
    %247 = vector.shape_cast %246 : vector<1x8x1xf32> to vector<8x1xf32>
    %c1_129 = arith.constant 1 : index
    %c0_130 = arith.constant 0 : index
    %c0_131 = arith.constant 0 : index
    %248 = vector.load %arg19[%c1_129, %c0_130, %c0_131] : memref<8x8x1xf32, #tpu.memory_space<vmem>>, vector<1x8x1xf32>
    %249 = vector.shape_cast %248 : vector<1x8x1xf32> to vector<8x1xf32>
    %c0_132 = arith.constant 0 : index
    %c0_133 = arith.constant 0 : index
    %250 = vector.load %arg2[%c0_132, %c0_133] : memref<1024x512xf32, #tpu.memory_space<vmem>>, vector<256x128xf32>
    %cst_134 = arith.constant dense<0.000000e+00> : vector<8xf32>
    %251 = vector.multi_reduction <add>, %233, %cst_134 [1] : vector<8x256xf32> to vector<8xf32>
    %252 = vector.shape_cast %251 : vector<8xf32> to vector<8x1xf32>
    %cst_135 = arith.constant 3.906250e-03 : f32
    %253 = vector.broadcast %cst_135 : f32 to vector<8x1xf32>
    %254 = arith.mulf %252, %253 : vector<8x1xf32>
    %255 = arith.mulf %233, %233 : vector<8x256xf32>
    %cst_136 = arith.constant dense<0.000000e+00> : vector<8xf32>
    %256 = vector.multi_reduction <add>, %255, %cst_136 [1] : vector<8x256xf32> to vector<8xf32>
    %257 = vector.shape_cast %256 : vector<8xf32> to vector<8x1xf32>
    %cst_137 = arith.constant 3.906250e-03 : f32
    %258 = vector.broadcast %cst_137 : f32 to vector<8x1xf32>
    %259 = arith.mulf %257, %258 : vector<8x1xf32>
    %260 = arith.mulf %254, %254 : vector<8x1xf32>
    %261 = arith.subf %259, %260 : vector<8x1xf32>
    %cst_138 = arith.constant 9.99999974E-6 : f32
    %262 = vector.broadcast %cst_138 : f32 to vector<8x1xf32>
    %263 = arith.addf %261, %262 : vector<8x1xf32>
    %264 = math.rsqrt %263 : vector<8x1xf32>
    %265 = arith.mulf %264, %239 : vector<8x1xf32>
    %266 = vector.broadcast %254 : vector<8x1xf32> to vector<8x256xf32>
    %267 = arith.subf %233, %266 : vector<8x256xf32>
    %268 = vector.broadcast %265 : vector<8x1xf32> to vector<8x256xf32>
    %269 = arith.mulf %267, %268 : vector<8x256xf32>
    %270 = vector.broadcast %241 : vector<8x1xf32> to vector<8x256xf32>
    %271 = arith.addf %269, %270 : vector<8x256xf32>
    %cst_139 = arith.constant 0.000000e+00 : f32
    %272 = vector.broadcast %cst_139 : f32 to vector<8x256xf32>
    %273 = arith.cmpf oge, %271, %272 : vector<8x256xf32>
    %cst_140 = arith.constant 2.000000e-01 : f32
    %274 = vector.broadcast %cst_140 : f32 to vector<8x256xf32>
    %275 = arith.mulf %274, %271 : vector<8x256xf32>
    %276 = arith.select %273, %271, %275 : vector<8x256xi1>, vector<8x256xf32>
    %277 = tpu.iota {dimensions = array<i32: 1>} : vector<1x256xi32>
    %c1_i32_141 = arith.constant 1 : i32
    %278 = vector.broadcast %c1_i32_141 : i32 to vector<1x256xi32>
    %279 = arith.cmpi sge, %277, %278 : vector<1x256xi32>
    %c1_i32_142 = arith.constant 1 : i32
    %280 = tpu.dynamic_rotate %276 by %c1_i32_142 dim 1 : vector<8x256xf32>, i32 -> vector<8x256xf32>
    %cst_143 = arith.constant 0.000000e+00 : f32
    %281 = vector.shape_cast %279 : vector<1x256xi1> to vector<1x256xi1>
    %282 = vector.broadcast %281 : vector<1x256xi1> to vector<8x256xi1>
    %283 = vector.broadcast %cst_143 : f32 to vector<8x256xf32>
    %284 = arith.select %282, %280, %283 : vector<8x256xi1>, vector<8x256xf32>
    %c255_i32_144 = arith.constant 255 : i32
    %285 = vector.broadcast %c255_i32_144 : i32 to vector<1x256xi32>
    %286 = arith.cmpi slt, %277, %285 : vector<1x256xi32>
    %c255_i32_145 = arith.constant 255 : i32
    %287 = tpu.dynamic_rotate %276 by %c255_i32_145 dim 1 : vector<8x256xf32>, i32 -> vector<8x256xf32>
    %cst_146 = arith.constant 0.000000e+00 : f32
    %288 = vector.shape_cast %286 : vector<1x256xi1> to vector<1x256xi1>
    %289 = vector.broadcast %288 : vector<1x256xi1> to vector<8x256xi1>
    %290 = vector.broadcast %cst_146 : f32 to vector<8x256xf32>
    %291 = arith.select %289, %287, %290 : vector<8x256xi1>, vector<8x256xf32>
    %292 = tpu.concatenate %284, %276, %291 in 0 : vector<8x256xf32>, vector<8x256xf32>, vector<8x256xf32> -> vector<24x256xf32>
    %cst_147 = arith.constant dense<0.000000e+00> : vector<8x256xf32>
    %293 = tpu.matmul %235, %292, %cst_147 {dimension_numbers = #tpu.dot_dimension_numbers<[1], [0], [0], [1], [0, 0, 1, 1], [], []>} : vector<8x24xf32>, vector<24x256xf32>, vector<8x256xf32> -> vector<8x256xf32>
    %294 = vector.broadcast %237 : vector<8x1xf32> to vector<8x256xf32>
    %295 = arith.addf %293, %294 : vector<8x256xf32>
    %296 = tpu.concatenate %233, %295 in 0 : vector<8x256xf32>, vector<8x256xf32> -> vector<16x256xf32>
    %cst_148 = arith.constant dense<0.000000e+00> : vector<16x128xf32>
    %297 = tpu.matmul %296, %250, %cst_148 {dimension_numbers = #tpu.dot_dimension_numbers<[1], [0], [0], [1], [0, 0, 1, 1], [], []>} : vector<16x256xf32>, vector<256x128xf32>, vector<16x128xf32> -> vector<16x128xf32>
    %298 = vector.extract_strided_slice %297 {offsets = [0, 0], sizes = [8, 128], strides = [1, 1]} : vector<16x128xf32> to vector<8x128xf32>
    %299 = vector.extract_strided_slice %297 {offsets = [8, 0], sizes = [8, 128], strides = [1, 1]} : vector<16x128xf32> to vector<8x128xf32>
    %cst_149 = arith.constant dense<0.000000e+00> : vector<8xf32>
    %300 = vector.multi_reduction <add>, %299, %cst_149 [1] : vector<8x128xf32> to vector<8xf32>
    %301 = vector.shape_cast %300 : vector<8xf32> to vector<8x1xf32>
    %cst_150 = arith.constant 7.812500e-03 : f32
    %302 = vector.broadcast %cst_150 : f32 to vector<8x1xf32>
    %303 = arith.mulf %301, %302 : vector<8x1xf32>
    %304 = arith.mulf %299, %299 : vector<8x128xf32>
    %cst_151 = arith.constant dense<0.000000e+00> : vector<8xf32>
    %305 = vector.multi_reduction <add>, %304, %cst_151 [1] : vector<8x128xf32> to vector<8xf32>
    %306 = vector.shape_cast %305 : vector<8xf32> to vector<8x1xf32>
    %cst_152 = arith.constant 7.812500e-03 : f32
    %307 = vector.broadcast %cst_152 : f32 to vector<8x1xf32>
    %308 = arith.mulf %306, %307 : vector<8x1xf32>
    %309 = arith.mulf %303, %303 : vector<8x1xf32>
    %310 = arith.subf %308, %309 : vector<8x1xf32>
    %cst_153 = arith.constant 9.99999974E-6 : f32
    %311 = vector.broadcast %cst_153 : f32 to vector<8x1xf32>
    %312 = arith.addf %310, %311 : vector<8x1xf32>
    %313 = math.rsqrt %312 : vector<8x1xf32>
    %314 = arith.mulf %313, %247 : vector<8x1xf32>
    %315 = vector.broadcast %303 : vector<8x1xf32> to vector<8x128xf32>
    %316 = arith.subf %299, %315 : vector<8x128xf32>
    %317 = vector.broadcast %314 : vector<8x1xf32> to vector<8x128xf32>
    %318 = arith.mulf %316, %317 : vector<8x128xf32>
    %319 = vector.broadcast %249 : vector<8x1xf32> to vector<8x128xf32>
    %320 = arith.addf %318, %319 : vector<8x128xf32>
    %cst_154 = arith.constant 0.000000e+00 : f32
    %321 = vector.broadcast %cst_154 : f32 to vector<8x128xf32>
    %322 = arith.cmpf oge, %320, %321 : vector<8x128xf32>
    %cst_155 = arith.constant 2.000000e-01 : f32
    %323 = vector.broadcast %cst_155 : f32 to vector<8x128xf32>
    %324 = arith.mulf %323, %320 : vector<8x128xf32>
    %325 = arith.select %322, %320, %324 : vector<8x128xi1>, vector<8x128xf32>
    %326 = tpu.iota {dimensions = array<i32: 1>} : vector<1x128xi32>
    %c1_i32_156 = arith.constant 1 : i32
    %327 = vector.broadcast %c1_i32_156 : i32 to vector<1x128xi32>
    %328 = arith.cmpi sge, %326, %327 : vector<1x128xi32>
    %c1_i32_157 = arith.constant 1 : i32
    %329 = tpu.dynamic_rotate %325 by %c1_i32_157 dim 1 : vector<8x128xf32>, i32 -> vector<8x128xf32>
    %cst_158 = arith.constant 0.000000e+00 : f32
    %330 = vector.shape_cast %328 : vector<1x128xi1> to vector<1x128xi1>
    %331 = vector.broadcast %330 : vector<1x128xi1> to vector<8x128xi1>
    %332 = vector.broadcast %cst_158 : f32 to vector<8x128xf32>
    %333 = arith.select %331, %329, %332 : vector<8x128xi1>, vector<8x128xf32>
    %c127_i32 = arith.constant 127 : i32
    %334 = vector.broadcast %c127_i32 : i32 to vector<1x128xi32>
    %335 = arith.cmpi slt, %326, %334 : vector<1x128xi32>
    %c127_i32_159 = arith.constant 127 : i32
    %336 = tpu.dynamic_rotate %325 by %c127_i32_159 dim 1 : vector<8x128xf32>, i32 -> vector<8x128xf32>
    %cst_160 = arith.constant 0.000000e+00 : f32
    %337 = vector.shape_cast %335 : vector<1x128xi1> to vector<1x128xi1>
    %338 = vector.broadcast %337 : vector<1x128xi1> to vector<8x128xi1>
    %339 = vector.broadcast %cst_160 : f32 to vector<8x128xf32>
    %340 = arith.select %338, %336, %339 : vector<8x128xi1>, vector<8x128xf32>
    %341 = tpu.concatenate %333, %325, %340 in 0 : vector<8x128xf32>, vector<8x128xf32>, vector<8x128xf32> -> vector<24x128xf32>
    %cst_161 = arith.constant dense<0.000000e+00> : vector<8x128xf32>
    %342 = tpu.matmul %243, %341, %cst_161 {dimension_numbers = #tpu.dot_dimension_numbers<[1], [0], [0], [1], [0, 0, 1, 1], [], []>} : vector<8x24xf32>, vector<24x128xf32>, vector<8x128xf32> -> vector<8x128xf32>
    %343 = vector.broadcast %245 : vector<8x1xf32> to vector<8x128xf32>
    %344 = arith.addf %342, %343 : vector<8x128xf32>
    %345 = arith.addf %298, %344 : vector<8x128xf32>
    %cst_162 = arith.constant 0.707106769 : f32
    %346 = vector.broadcast %cst_162 : f32 to vector<8x128xf32>
    %347 = arith.mulf %345, %346 : vector<8x128xf32>
    %c2 = arith.constant 2 : index
    %c0_163 = arith.constant 0 : index
    %c0_164 = arith.constant 0 : index
    %348 = vector.load %arg12[%c2, %c0_163, %c0_164] : memref<8x8x24xf32, #tpu.memory_space<vmem>>, vector<1x8x24xf32>
    %349 = vector.shape_cast %348 : vector<1x8x24xf32> to vector<8x24xf32>
    %c2_165 = arith.constant 2 : index
    %c0_166 = arith.constant 0 : index
    %c0_167 = arith.constant 0 : index
    %350 = vector.load %arg13[%c2_165, %c0_166, %c0_167] : memref<8x8x1xf32, #tpu.memory_space<vmem>>, vector<1x8x1xf32>
    %351 = vector.shape_cast %350 : vector<1x8x1xf32> to vector<8x1xf32>
    %c2_168 = arith.constant 2 : index
    %c0_169 = arith.constant 0 : index
    %c0_170 = arith.constant 0 : index
    %352 = vector.load %arg14[%c2_168, %c0_169, %c0_170] : memref<8x8x1xf32, #tpu.memory_space<vmem>>, vector<1x8x1xf32>
    %353 = vector.shape_cast %352 : vector<1x8x1xf32> to vector<8x1xf32>
    %c2_171 = arith.constant 2 : index
    %c0_172 = arith.constant 0 : index
    %c0_173 = arith.constant 0 : index
    %354 = vector.load %arg15[%c2_171, %c0_172, %c0_173] : memref<8x8x1xf32, #tpu.memory_space<vmem>>, vector<1x8x1xf32>
    %355 = vector.shape_cast %354 : vector<1x8x1xf32> to vector<8x1xf32>
    %c2_174 = arith.constant 2 : index
    %c0_175 = arith.constant 0 : index
    %c0_176 = arith.constant 0 : index
    %356 = vector.load %arg16[%c2_174, %c0_175, %c0_176] : memref<8x8x24xf32, #tpu.memory_space<vmem>>, vector<1x8x24xf32>
    %357 = vector.shape_cast %356 : vector<1x8x24xf32> to vector<8x24xf32>
    %c2_177 = arith.constant 2 : index
    %c0_178 = arith.constant 0 : index
    %c0_179 = arith.constant 0 : index
    %358 = vector.load %arg17[%c2_177, %c0_178, %c0_179] : memref<8x8x1xf32, #tpu.memory_space<vmem>>, vector<1x8x1xf32>
    %359 = vector.shape_cast %358 : vector<1x8x1xf32> to vector<8x1xf32>
    %c2_180 = arith.constant 2 : index
    %c0_181 = arith.constant 0 : index
    %c0_182 = arith.constant 0 : index
    %360 = vector.load %arg18[%c2_180, %c0_181, %c0_182] : memref<8x8x1xf32, #tpu.memory_space<vmem>>, vector<1x8x1xf32>
    %361 = vector.shape_cast %360 : vector<1x8x1xf32> to vector<8x1xf32>
    %c2_183 = arith.constant 2 : index
    %c0_184 = arith.constant 0 : index
    %c0_185 = arith.constant 0 : index
    %362 = vector.load %arg19[%c2_183, %c0_184, %c0_185] : memref<8x8x1xf32, #tpu.memory_space<vmem>>, vector<1x8x1xf32>
    %363 = vector.shape_cast %362 : vector<1x8x1xf32> to vector<8x1xf32>
    %c0_186 = arith.constant 0 : index
    %c0_187 = arith.constant 0 : index
    %364 = vector.load %arg2[%c0_186, %c0_187] : memref<1024x512xf32, #tpu.memory_space<vmem>>, vector<128x64xf32>
    %cst_188 = arith.constant dense<0.000000e+00> : vector<8xf32>
    %365 = vector.multi_reduction <add>, %347, %cst_188 [1] : vector<8x128xf32> to vector<8xf32>
    %366 = vector.shape_cast %365 : vector<8xf32> to vector<8x1xf32>
    %cst_189 = arith.constant 7.812500e-03 : f32
    %367 = vector.broadcast %cst_189 : f32 to vector<8x1xf32>
    %368 = arith.mulf %366, %367 : vector<8x1xf32>
    %369 = arith.mulf %347, %347 : vector<8x128xf32>
    %cst_190 = arith.constant dense<0.000000e+00> : vector<8xf32>
    %370 = vector.multi_reduction <add>, %369, %cst_190 [1] : vector<8x128xf32> to vector<8xf32>
    %371 = vector.shape_cast %370 : vector<8xf32> to vector<8x1xf32>
    %cst_191 = arith.constant 7.812500e-03 : f32
    %372 = vector.broadcast %cst_191 : f32 to vector<8x1xf32>
    %373 = arith.mulf %371, %372 : vector<8x1xf32>
    %374 = arith.mulf %368, %368 : vector<8x1xf32>
    %375 = arith.subf %373, %374 : vector<8x1xf32>
    %cst_192 = arith.constant 9.99999974E-6 : f32
    %376 = vector.broadcast %cst_192 : f32 to vector<8x1xf32>
    %377 = arith.addf %375, %376 : vector<8x1xf32>
    %378 = math.rsqrt %377 : vector<8x1xf32>
    %379 = arith.mulf %378, %353 : vector<8x1xf32>
    %380 = vector.broadcast %368 : vector<8x1xf32> to vector<8x128xf32>
    %381 = arith.subf %347, %380 : vector<8x128xf32>
    %382 = vector.broadcast %379 : vector<8x1xf32> to vector<8x128xf32>
    %383 = arith.mulf %381, %382 : vector<8x128xf32>
    %384 = vector.broadcast %355 : vector<8x1xf32> to vector<8x128xf32>
    %385 = arith.addf %383, %384 : vector<8x128xf32>
    %cst_193 = arith.constant 0.000000e+00 : f32
    %386 = vector.broadcast %cst_193 : f32 to vector<8x128xf32>
    %387 = arith.cmpf oge, %385, %386 : vector<8x128xf32>
    %cst_194 = arith.constant 2.000000e-01 : f32
    %388 = vector.broadcast %cst_194 : f32 to vector<8x128xf32>
    %389 = arith.mulf %388, %385 : vector<8x128xf32>
    %390 = arith.select %387, %385, %389 : vector<8x128xi1>, vector<8x128xf32>
    %391 = tpu.iota {dimensions = array<i32: 1>} : vector<1x128xi32>
    %c1_i32_195 = arith.constant 1 : i32
    %392 = vector.broadcast %c1_i32_195 : i32 to vector<1x128xi32>
    %393 = arith.cmpi sge, %391, %392 : vector<1x128xi32>
    %c1_i32_196 = arith.constant 1 : i32
    %394 = tpu.dynamic_rotate %390 by %c1_i32_196 dim 1 : vector<8x128xf32>, i32 -> vector<8x128xf32>
    %cst_197 = arith.constant 0.000000e+00 : f32
    %395 = vector.shape_cast %393 : vector<1x128xi1> to vector<1x128xi1>
    %396 = vector.broadcast %395 : vector<1x128xi1> to vector<8x128xi1>
    %397 = vector.broadcast %cst_197 : f32 to vector<8x128xf32>
    %398 = arith.select %396, %394, %397 : vector<8x128xi1>, vector<8x128xf32>
    %c127_i32_198 = arith.constant 127 : i32
    %399 = vector.broadcast %c127_i32_198 : i32 to vector<1x128xi32>
    %400 = arith.cmpi slt, %391, %399 : vector<1x128xi32>
    %c127_i32_199 = arith.constant 127 : i32
    %401 = tpu.dynamic_rotate %390 by %c127_i32_199 dim 1 : vector<8x128xf32>, i32 -> vector<8x128xf32>
    %cst_200 = arith.constant 0.000000e+00 : f32
    %402 = vector.shape_cast %400 : vector<1x128xi1> to vector<1x128xi1>
    %403 = vector.broadcast %402 : vector<1x128xi1> to vector<8x128xi1>
    %404 = vector.broadcast %cst_200 : f32 to vector<8x128xf32>
    %405 = arith.select %403, %401, %404 : vector<8x128xi1>, vector<8x128xf32>
    %406 = tpu.concatenate %398, %390, %405 in 0 : vector<8x128xf32>, vector<8x128xf32>, vector<8x128xf32> -> vector<24x128xf32>
    %cst_201 = arith.constant dense<0.000000e+00> : vector<8x128xf32>
    %407 = tpu.matmul %349, %406, %cst_201 {dimension_numbers = #tpu.dot_dimension_numbers<[1], [0], [0], [1], [0, 0, 1, 1], [], []>} : vector<8x24xf32>, vector<24x128xf32>, vector<8x128xf32> -> vector<8x128xf32>
    %408 = vector.broadcast %351 : vector<8x1xf32> to vector<8x128xf32>
    %409 = arith.addf %407, %408 : vector<8x128xf32>
    %410 = tpu.concatenate %347, %409 in 0 : vector<8x128xf32>, vector<8x128xf32> -> vector<16x128xf32>
    %cst_202 = arith.constant dense<0.000000e+00> : vector<16x64xf32>
    %411 = tpu.matmul %410, %364, %cst_202 {dimension_numbers = #tpu.dot_dimension_numbers<[1], [0], [0], [1], [0, 0, 1, 1], [], []>} : vector<16x128xf32>, vector<128x64xf32>, vector<16x64xf32> -> vector<16x64xf32>
    %412 = vector.extract_strided_slice %411 {offsets = [0, 0], sizes = [8, 64], strides = [1, 1]} : vector<16x64xf32> to vector<8x64xf32>
    %413 = vector.extract_strided_slice %411 {offsets = [8, 0], sizes = [8, 64], strides = [1, 1]} : vector<16x64xf32> to vector<8x64xf32>
    %cst_203 = arith.constant dense<0.000000e+00> : vector<8xf32>
    %414 = vector.multi_reduction <add>, %413, %cst_203 [1] : vector<8x64xf32> to vector<8xf32>
    %415 = vector.shape_cast %414 : vector<8xf32> to vector<8x1xf32>
    %cst_204 = arith.constant 1.562500e-02 : f32
    %416 = vector.broadcast %cst_204 : f32 to vector<8x1xf32>
    %417 = arith.mulf %415, %416 : vector<8x1xf32>
    %418 = arith.mulf %413, %413 : vector<8x64xf32>
    %cst_205 = arith.constant dense<0.000000e+00> : vector<8xf32>
    %419 = vector.multi_reduction <add>, %418, %cst_205 [1] : vector<8x64xf32> to vector<8xf32>
    %420 = vector.shape_cast %419 : vector<8xf32> to vector<8x1xf32>
    %cst_206 = arith.constant 1.562500e-02 : f32
    %421 = vector.broadcast %cst_206 : f32 to vector<8x1xf32>
    %422 = arith.mulf %420, %421 : vector<8x1xf32>
    %423 = arith.mulf %417, %417 : vector<8x1xf32>
    %424 = arith.subf %422, %423 : vector<8x1xf32>
    %cst_207 = arith.constant 9.99999974E-6 : f32
    %425 = vector.broadcast %cst_207 : f32 to vector<8x1xf32>
    %426 = arith.addf %424, %425 : vector<8x1xf32>
    %427 = math.rsqrt %426 : vector<8x1xf32>
    %428 = arith.mulf %427, %361 : vector<8x1xf32>
    %429 = vector.broadcast %417 : vector<8x1xf32> to vector<8x64xf32>
    %430 = arith.subf %413, %429 : vector<8x64xf32>
    %431 = vector.broadcast %428 : vector<8x1xf32> to vector<8x64xf32>
    %432 = arith.mulf %430, %431 : vector<8x64xf32>
    %433 = vector.broadcast %363 : vector<8x1xf32> to vector<8x64xf32>
    %434 = arith.addf %432, %433 : vector<8x64xf32>
    %cst_208 = arith.constant 0.000000e+00 : f32
    %435 = vector.broadcast %cst_208 : f32 to vector<8x64xf32>
    %436 = arith.cmpf oge, %434, %435 : vector<8x64xf32>
    %cst_209 = arith.constant 2.000000e-01 : f32
    %437 = vector.broadcast %cst_209 : f32 to vector<8x64xf32>
    %438 = arith.mulf %437, %434 : vector<8x64xf32>
    %439 = arith.select %436, %434, %438 : vector<8x64xi1>, vector<8x64xf32>
    %440 = tpu.iota {dimensions = array<i32: 1>} : vector<1x64xi32>
    %c1_i32_210 = arith.constant 1 : i32
    %441 = vector.broadcast %c1_i32_210 : i32 to vector<1x64xi32>
    %442 = arith.cmpi sge, %440, %441 : vector<1x64xi32>
    %c1_i32_211 = arith.constant 1 : i32
    %443 = tpu.dynamic_rotate %439 by %c1_i32_211 dim 1 : vector<8x64xf32>, i32 -> vector<8x64xf32>
    %cst_212 = arith.constant 0.000000e+00 : f32
    %444 = vector.shape_cast %442 : vector<1x64xi1> to vector<1x64xi1>
    %445 = vector.broadcast %444 : vector<1x64xi1> to vector<8x64xi1>
    %446 = vector.broadcast %cst_212 : f32 to vector<8x64xf32>
    %447 = arith.select %445, %443, %446 : vector<8x64xi1>, vector<8x64xf32>
    %c63_i32 = arith.constant 63 : i32
    %448 = vector.broadcast %c63_i32 : i32 to vector<1x64xi32>
    %449 = arith.cmpi slt, %440, %448 : vector<1x64xi32>
    %c63_i32_213 = arith.constant 63 : i32
    %450 = tpu.dynamic_rotate %439 by %c63_i32_213 dim 1 : vector<8x64xf32>, i32 -> vector<8x64xf32>
    %cst_214 = arith.constant 0.000000e+00 : f32
    %451 = vector.shape_cast %449 : vector<1x64xi1> to vector<1x64xi1>
    %452 = vector.broadcast %451 : vector<1x64xi1> to vector<8x64xi1>
    %453 = vector.broadcast %cst_214 : f32 to vector<8x64xf32>
    %454 = arith.select %452, %450, %453 : vector<8x64xi1>, vector<8x64xf32>
    %455 = tpu.concatenate %447, %439, %454 in 0 : vector<8x64xf32>, vector<8x64xf32>, vector<8x64xf32> -> vector<24x64xf32>
    %cst_215 = arith.constant dense<0.000000e+00> : vector<8x64xf32>
    %456 = tpu.matmul %357, %455, %cst_215 {dimension_numbers = #tpu.dot_dimension_numbers<[1], [0], [0], [1], [0, 0, 1, 1], [], []>} : vector<8x24xf32>, vector<24x64xf32>, vector<8x64xf32> -> vector<8x64xf32>
    %457 = vector.broadcast %359 : vector<8x1xf32> to vector<8x64xf32>
    %458 = arith.addf %456, %457 : vector<8x64xf32>
    %459 = arith.addf %412, %458 : vector<8x64xf32>
    %cst_216 = arith.constant 0.707106769 : f32
    %460 = vector.broadcast %cst_216 : f32 to vector<8x64xf32>
    %461 = arith.mulf %459, %460 : vector<8x64xf32>
    %c3 = arith.constant 3 : index
    %c0_217 = arith.constant 0 : index
    %c0_218 = arith.constant 0 : index
    %462 = vector.load %arg12[%c3, %c0_217, %c0_218] : memref<8x8x24xf32, #tpu.memory_space<vmem>>, vector<1x8x24xf32>
    %463 = vector.shape_cast %462 : vector<1x8x24xf32> to vector<8x24xf32>
    %c3_219 = arith.constant 3 : index
    %c0_220 = arith.constant 0 : index
    %c0_221 = arith.constant 0 : index
    %464 = vector.load %arg13[%c3_219, %c0_220, %c0_221] : memref<8x8x1xf32, #tpu.memory_space<vmem>>, vector<1x8x1xf32>
    %465 = vector.shape_cast %464 : vector<1x8x1xf32> to vector<8x1xf32>
    %c3_222 = arith.constant 3 : index
    %c0_223 = arith.constant 0 : index
    %c0_224 = arith.constant 0 : index
    %466 = vector.load %arg14[%c3_222, %c0_223, %c0_224] : memref<8x8x1xf32, #tpu.memory_space<vmem>>, vector<1x8x1xf32>
    %467 = vector.shape_cast %466 : vector<1x8x1xf32> to vector<8x1xf32>
    %c3_225 = arith.constant 3 : index
    %c0_226 = arith.constant 0 : index
    %c0_227 = arith.constant 0 : index
    %468 = vector.load %arg15[%c3_225, %c0_226, %c0_227] : memref<8x8x1xf32, #tpu.memory_space<vmem>>, vector<1x8x1xf32>
    %469 = vector.shape_cast %468 : vector<1x8x1xf32> to vector<8x1xf32>
    %c3_228 = arith.constant 3 : index
    %c0_229 = arith.constant 0 : index
    %c0_230 = arith.constant 0 : index
    %470 = vector.load %arg16[%c3_228, %c0_229, %c0_230] : memref<8x8x24xf32, #tpu.memory_space<vmem>>, vector<1x8x24xf32>
    %471 = vector.shape_cast %470 : vector<1x8x24xf32> to vector<8x24xf32>
    %c3_231 = arith.constant 3 : index
    %c0_232 = arith.constant 0 : index
    %c0_233 = arith.constant 0 : index
    %472 = vector.load %arg17[%c3_231, %c0_232, %c0_233] : memref<8x8x1xf32, #tpu.memory_space<vmem>>, vector<1x8x1xf32>
    %473 = vector.shape_cast %472 : vector<1x8x1xf32> to vector<8x1xf32>
    %c3_234 = arith.constant 3 : index
    %c0_235 = arith.constant 0 : index
    %c0_236 = arith.constant 0 : index
    %474 = vector.load %arg18[%c3_234, %c0_235, %c0_236] : memref<8x8x1xf32, #tpu.memory_space<vmem>>, vector<1x8x1xf32>
    %475 = vector.shape_cast %474 : vector<1x8x1xf32> to vector<8x1xf32>
    %c3_237 = arith.constant 3 : index
    %c0_238 = arith.constant 0 : index
    %c0_239 = arith.constant 0 : index
    %476 = vector.load %arg19[%c3_237, %c0_238, %c0_239] : memref<8x8x1xf32, #tpu.memory_space<vmem>>, vector<1x8x1xf32>
    %477 = vector.shape_cast %476 : vector<1x8x1xf32> to vector<8x1xf32>
    %c0_240 = arith.constant 0 : index
    %c0_241 = arith.constant 0 : index
    %478 = vector.load %arg2[%c0_240, %c0_241] : memref<1024x512xf32, #tpu.memory_space<vmem>>, vector<64x32xf32>
    %cst_242 = arith.constant dense<0.000000e+00> : vector<8xf32>
    %479 = vector.multi_reduction <add>, %461, %cst_242 [1] : vector<8x64xf32> to vector<8xf32>
    %480 = vector.shape_cast %479 : vector<8xf32> to vector<8x1xf32>
    %cst_243 = arith.constant 1.562500e-02 : f32
    %481 = vector.broadcast %cst_243 : f32 to vector<8x1xf32>
    %482 = arith.mulf %480, %481 : vector<8x1xf32>
    %483 = arith.mulf %461, %461 : vector<8x64xf32>
    %cst_244 = arith.constant dense<0.000000e+00> : vector<8xf32>
    %484 = vector.multi_reduction <add>, %483, %cst_244 [1] : vector<8x64xf32> to vector<8xf32>
    %485 = vector.shape_cast %484 : vector<8xf32> to vector<8x1xf32>
    %cst_245 = arith.constant 1.562500e-02 : f32
    %486 = vector.broadcast %cst_245 : f32 to vector<8x1xf32>
    %487 = arith.mulf %485, %486 : vector<8x1xf32>
    %488 = arith.mulf %482, %482 : vector<8x1xf32>
    %489 = arith.subf %487, %488 : vector<8x1xf32>
    %cst_246 = arith.constant 9.99999974E-6 : f32
    %490 = vector.broadcast %cst_246 : f32 to vector<8x1xf32>
    %491 = arith.addf %489, %490 : vector<8x1xf32>
    %492 = math.rsqrt %491 : vector<8x1xf32>
    %493 = arith.mulf %492, %467 : vector<8x1xf32>
    %494 = vector.broadcast %482 : vector<8x1xf32> to vector<8x64xf32>
    %495 = arith.subf %461, %494 : vector<8x64xf32>
    %496 = vector.broadcast %493 : vector<8x1xf32> to vector<8x64xf32>
    %497 = arith.mulf %495, %496 : vector<8x64xf32>
    %498 = vector.broadcast %469 : vector<8x1xf32> to vector<8x64xf32>
    %499 = arith.addf %497, %498 : vector<8x64xf32>
    %cst_247 = arith.constant 0.000000e+00 : f32
    %500 = vector.broadcast %cst_247 : f32 to vector<8x64xf32>
    %501 = arith.cmpf oge, %499, %500 : vector<8x64xf32>
    %cst_248 = arith.constant 2.000000e-01 : f32
    %502 = vector.broadcast %cst_248 : f32 to vector<8x64xf32>
    %503 = arith.mulf %502, %499 : vector<8x64xf32>
    %504 = arith.select %501, %499, %503 : vector<8x64xi1>, vector<8x64xf32>
    %505 = tpu.iota {dimensions = array<i32: 1>} : vector<1x64xi32>
    %c1_i32_249 = arith.constant 1 : i32
    %506 = vector.broadcast %c1_i32_249 : i32 to vector<1x64xi32>
    %507 = arith.cmpi sge, %505, %506 : vector<1x64xi32>
    %c1_i32_250 = arith.constant 1 : i32
    %508 = tpu.dynamic_rotate %504 by %c1_i32_250 dim 1 : vector<8x64xf32>, i32 -> vector<8x64xf32>
    %cst_251 = arith.constant 0.000000e+00 : f32
    %509 = vector.shape_cast %507 : vector<1x64xi1> to vector<1x64xi1>
    %510 = vector.broadcast %509 : vector<1x64xi1> to vector<8x64xi1>
    %511 = vector.broadcast %cst_251 : f32 to vector<8x64xf32>
    %512 = arith.select %510, %508, %511 : vector<8x64xi1>, vector<8x64xf32>
    %c63_i32_252 = arith.constant 63 : i32
    %513 = vector.broadcast %c63_i32_252 : i32 to vector<1x64xi32>
    %514 = arith.cmpi slt, %505, %513 : vector<1x64xi32>
    %c63_i32_253 = arith.constant 63 : i32
    %515 = tpu.dynamic_rotate %504 by %c63_i32_253 dim 1 : vector<8x64xf32>, i32 -> vector<8x64xf32>
    %cst_254 = arith.constant 0.000000e+00 : f32
    %516 = vector.shape_cast %514 : vector<1x64xi1> to vector<1x64xi1>
    %517 = vector.broadcast %516 : vector<1x64xi1> to vector<8x64xi1>
    %518 = vector.broadcast %cst_254 : f32 to vector<8x64xf32>
    %519 = arith.select %517, %515, %518 : vector<8x64xi1>, vector<8x64xf32>
    %520 = tpu.concatenate %512, %504, %519 in 0 : vector<8x64xf32>, vector<8x64xf32>, vector<8x64xf32> -> vector<24x64xf32>
    %cst_255 = arith.constant dense<0.000000e+00> : vector<8x64xf32>
    %521 = tpu.matmul %463, %520, %cst_255 {dimension_numbers = #tpu.dot_dimension_numbers<[1], [0], [0], [1], [0, 0, 1, 1], [], []>} : vector<8x24xf32>, vector<24x64xf32>, vector<8x64xf32> -> vector<8x64xf32>
    %522 = vector.broadcast %465 : vector<8x1xf32> to vector<8x64xf32>
    %523 = arith.addf %521, %522 : vector<8x64xf32>
    %524 = tpu.concatenate %461, %523 in 0 : vector<8x64xf32>, vector<8x64xf32> -> vector<16x64xf32>
    %cst_256 = arith.constant dense<0.000000e+00> : vector<16x32xf32>
    %525 = tpu.matmul %524, %478, %cst_256 {dimension_numbers = #tpu.dot_dimension_numbers<[1], [0], [0], [1], [0, 0, 1, 1], [], []>} : vector<16x64xf32>, vector<64x32xf32>, vector<16x32xf32> -> vector<16x32xf32>
    %526 = vector.extract_strided_slice %525 {offsets = [0, 0], sizes = [8, 32], strides = [1, 1]} : vector<16x32xf32> to vector<8x32xf32>
    %527 = vector.extract_strided_slice %525 {offsets = [8, 0], sizes = [8, 32], strides = [1, 1]} : vector<16x32xf32> to vector<8x32xf32>
    %cst_257 = arith.constant dense<0.000000e+00> : vector<8xf32>
    %528 = vector.multi_reduction <add>, %527, %cst_257 [1] : vector<8x32xf32> to vector<8xf32>
    %529 = vector.shape_cast %528 : vector<8xf32> to vector<8x1xf32>
    %cst_258 = arith.constant 3.125000e-02 : f32
    %530 = vector.broadcast %cst_258 : f32 to vector<8x1xf32>
    %531 = arith.mulf %529, %530 : vector<8x1xf32>
    %532 = arith.mulf %527, %527 : vector<8x32xf32>
    %cst_259 = arith.constant dense<0.000000e+00> : vector<8xf32>
    %533 = vector.multi_reduction <add>, %532, %cst_259 [1] : vector<8x32xf32> to vector<8xf32>
    %534 = vector.shape_cast %533 : vector<8xf32> to vector<8x1xf32>
    %cst_260 = arith.constant 3.125000e-02 : f32
    %535 = vector.broadcast %cst_260 : f32 to vector<8x1xf32>
    %536 = arith.mulf %534, %535 : vector<8x1xf32>
    %537 = arith.mulf %531, %531 : vector<8x1xf32>
    %538 = arith.subf %536, %537 : vector<8x1xf32>
    %cst_261 = arith.constant 9.99999974E-6 : f32
    %539 = vector.broadcast %cst_261 : f32 to vector<8x1xf32>
    %540 = arith.addf %538, %539 : vector<8x1xf32>
    %541 = math.rsqrt %540 : vector<8x1xf32>
    %542 = arith.mulf %541, %475 : vector<8x1xf32>
    %543 = vector.broadcast %531 : vector<8x1xf32> to vector<8x32xf32>
    %544 = arith.subf %527, %543 : vector<8x32xf32>
    %545 = vector.broadcast %542 : vector<8x1xf32> to vector<8x32xf32>
    %546 = arith.mulf %544, %545 : vector<8x32xf32>
    %547 = vector.broadcast %477 : vector<8x1xf32> to vector<8x32xf32>
    %548 = arith.addf %546, %547 : vector<8x32xf32>
    %cst_262 = arith.constant 0.000000e+00 : f32
    %549 = vector.broadcast %cst_262 : f32 to vector<8x32xf32>
    %550 = arith.cmpf oge, %548, %549 : vector<8x32xf32>
    %cst_263 = arith.constant 2.000000e-01 : f32
    %551 = vector.broadcast %cst_263 : f32 to vector<8x32xf32>
    %552 = arith.mulf %551, %548 : vector<8x32xf32>
    %553 = arith.select %550, %548, %552 : vector<8x32xi1>, vector<8x32xf32>
    %554 = tpu.iota {dimensions = array<i32: 1>} : vector<1x32xi32>
    %c1_i32_264 = arith.constant 1 : i32
    %555 = vector.broadcast %c1_i32_264 : i32 to vector<1x32xi32>
    %556 = arith.cmpi sge, %554, %555 : vector<1x32xi32>
    %c1_i32_265 = arith.constant 1 : i32
    %557 = tpu.dynamic_rotate %553 by %c1_i32_265 dim 1 : vector<8x32xf32>, i32 -> vector<8x32xf32>
    %cst_266 = arith.constant 0.000000e+00 : f32
    %558 = vector.shape_cast %556 : vector<1x32xi1> to vector<1x32xi1>
    %559 = vector.broadcast %558 : vector<1x32xi1> to vector<8x32xi1>
    %560 = vector.broadcast %cst_266 : f32 to vector<8x32xf32>
    %561 = arith.select %559, %557, %560 : vector<8x32xi1>, vector<8x32xf32>
    %c31_i32 = arith.constant 31 : i32
    %562 = vector.broadcast %c31_i32 : i32 to vector<1x32xi32>
    %563 = arith.cmpi slt, %554, %562 : vector<1x32xi32>
    %c31_i32_267 = arith.constant 31 : i32
    %564 = tpu.dynamic_rotate %553 by %c31_i32_267 dim 1 : vector<8x32xf32>, i32 -> vector<8x32xf32>
    %cst_268 = arith.constant 0.000000e+00 : f32
    %565 = vector.shape_cast %563 : vector<1x32xi1> to vector<1x32xi1>
    %566 = vector.broadcast %565 : vector<1x32xi1> to vector<8x32xi1>
    %567 = vector.broadcast %cst_268 : f32 to vector<8x32xf32>
    %568 = arith.select %566, %564, %567 : vector<8x32xi1>, vector<8x32xf32>
    %569 = tpu.concatenate %561, %553, %568 in 0 : vector<8x32xf32>, vector<8x32xf32>, vector<8x32xf32> -> vector<24x32xf32>
    %cst_269 = arith.constant dense<0.000000e+00> : vector<8x32xf32>
    %570 = tpu.matmul %471, %569, %cst_269 {dimension_numbers = #tpu.dot_dimension_numbers<[1], [0], [0], [1], [0, 0, 1, 1], [], []>} : vector<8x24xf32>, vector<24x32xf32>, vector<8x32xf32> -> vector<8x32xf32>
    %571 = vector.broadcast %473 : vector<8x1xf32> to vector<8x32xf32>
    %572 = arith.addf %570, %571 : vector<8x32xf32>
    %573 = arith.addf %526, %572 : vector<8x32xf32>
    %cst_270 = arith.constant 0.707106769 : f32
    %574 = vector.broadcast %cst_270 : f32 to vector<8x32xf32>
    %575 = arith.mulf %573, %574 : vector<8x32xf32>
    %c4 = arith.constant 4 : index
    %c0_271 = arith.constant 0 : index
    %c0_272 = arith.constant 0 : index
    %576 = vector.load %arg12[%c4, %c0_271, %c0_272] : memref<8x8x24xf32, #tpu.memory_space<vmem>>, vector<1x8x24xf32>
    %577 = vector.shape_cast %576 : vector<1x8x24xf32> to vector<8x24xf32>
    %c4_273 = arith.constant 4 : index
    %c0_274 = arith.constant 0 : index
    %c0_275 = arith.constant 0 : index
    %578 = vector.load %arg13[%c4_273, %c0_274, %c0_275] : memref<8x8x1xf32, #tpu.memory_space<vmem>>, vector<1x8x1xf32>
    %579 = vector.shape_cast %578 : vector<1x8x1xf32> to vector<8x1xf32>
    %c4_276 = arith.constant 4 : index
    %c0_277 = arith.constant 0 : index
    %c0_278 = arith.constant 0 : index
    %580 = vector.load %arg14[%c4_276, %c0_277, %c0_278] : memref<8x8x1xf32, #tpu.memory_space<vmem>>, vector<1x8x1xf32>
    %581 = vector.shape_cast %580 : vector<1x8x1xf32> to vector<8x1xf32>
    %c4_279 = arith.constant 4 : index
    %c0_280 = arith.constant 0 : index
    %c0_281 = arith.constant 0 : index
    %582 = vector.load %arg15[%c4_279, %c0_280, %c0_281] : memref<8x8x1xf32, #tpu.memory_space<vmem>>, vector<1x8x1xf32>
    %583 = vector.shape_cast %582 : vector<1x8x1xf32> to vector<8x1xf32>
    %c4_282 = arith.constant 4 : index
    %c0_283 = arith.constant 0 : index
    %c0_284 = arith.constant 0 : index
    %584 = vector.load %arg16[%c4_282, %c0_283, %c0_284] : memref<8x8x24xf32, #tpu.memory_space<vmem>>, vector<1x8x24xf32>
    %585 = vector.shape_cast %584 : vector<1x8x24xf32> to vector<8x24xf32>
    %c4_285 = arith.constant 4 : index
    %c0_286 = arith.constant 0 : index
    %c0_287 = arith.constant 0 : index
    %586 = vector.load %arg17[%c4_285, %c0_286, %c0_287] : memref<8x8x1xf32, #tpu.memory_space<vmem>>, vector<1x8x1xf32>
    %587 = vector.shape_cast %586 : vector<1x8x1xf32> to vector<8x1xf32>
    %c4_288 = arith.constant 4 : index
    %c0_289 = arith.constant 0 : index
    %c0_290 = arith.constant 0 : index
    %588 = vector.load %arg18[%c4_288, %c0_289, %c0_290] : memref<8x8x1xf32, #tpu.memory_space<vmem>>, vector<1x8x1xf32>
    %589 = vector.shape_cast %588 : vector<1x8x1xf32> to vector<8x1xf32>
    %c4_291 = arith.constant 4 : index
    %c0_292 = arith.constant 0 : index
    %c0_293 = arith.constant 0 : index
    %590 = vector.load %arg19[%c4_291, %c0_292, %c0_293] : memref<8x8x1xf32, #tpu.memory_space<vmem>>, vector<1x8x1xf32>
    %591 = vector.shape_cast %590 : vector<1x8x1xf32> to vector<8x1xf32>
    %c0_294 = arith.constant 0 : index
    %c0_295 = arith.constant 0 : index
    %592 = vector.load %arg2[%c0_294, %c0_295] : memref<1024x512xf32, #tpu.memory_space<vmem>>, vector<32x16xf32>
    %cst_296 = arith.constant dense<0.000000e+00> : vector<8xf32>
    %593 = vector.multi_reduction <add>, %575, %cst_296 [1] : vector<8x32xf32> to vector<8xf32>
    %594 = vector.shape_cast %593 : vector<8xf32> to vector<8x1xf32>
    %cst_297 = arith.constant 3.125000e-02 : f32
    %595 = vector.broadcast %cst_297 : f32 to vector<8x1xf32>
    %596 = arith.mulf %594, %595 : vector<8x1xf32>
    %597 = arith.mulf %575, %575 : vector<8x32xf32>
    %cst_298 = arith.constant dense<0.000000e+00> : vector<8xf32>
    %598 = vector.multi_reduction <add>, %597, %cst_298 [1] : vector<8x32xf32> to vector<8xf32>
    %599 = vector.shape_cast %598 : vector<8xf32> to vector<8x1xf32>
    %cst_299 = arith.constant 3.125000e-02 : f32
    %600 = vector.broadcast %cst_299 : f32 to vector<8x1xf32>
    %601 = arith.mulf %599, %600 : vector<8x1xf32>
    %602 = arith.mulf %596, %596 : vector<8x1xf32>
    %603 = arith.subf %601, %602 : vector<8x1xf32>
    %cst_300 = arith.constant 9.99999974E-6 : f32
    %604 = vector.broadcast %cst_300 : f32 to vector<8x1xf32>
    %605 = arith.addf %603, %604 : vector<8x1xf32>
    %606 = math.rsqrt %605 : vector<8x1xf32>
    %607 = arith.mulf %606, %581 : vector<8x1xf32>
    %608 = vector.broadcast %596 : vector<8x1xf32> to vector<8x32xf32>
    %609 = arith.subf %575, %608 : vector<8x32xf32>
    %610 = vector.broadcast %607 : vector<8x1xf32> to vector<8x32xf32>
    %611 = arith.mulf %609, %610 : vector<8x32xf32>
    %612 = vector.broadcast %583 : vector<8x1xf32> to vector<8x32xf32>
    %613 = arith.addf %611, %612 : vector<8x32xf32>
    %cst_301 = arith.constant 0.000000e+00 : f32
    %614 = vector.broadcast %cst_301 : f32 to vector<8x32xf32>
    %615 = arith.cmpf oge, %613, %614 : vector<8x32xf32>
    %cst_302 = arith.constant 2.000000e-01 : f32
    %616 = vector.broadcast %cst_302 : f32 to vector<8x32xf32>
    %617 = arith.mulf %616, %613 : vector<8x32xf32>
    %618 = arith.select %615, %613, %617 : vector<8x32xi1>, vector<8x32xf32>
    %619 = tpu.iota {dimensions = array<i32: 1>} : vector<1x32xi32>
    %c1_i32_303 = arith.constant 1 : i32
    %620 = vector.broadcast %c1_i32_303 : i32 to vector<1x32xi32>
    %621 = arith.cmpi sge, %619, %620 : vector<1x32xi32>
    %c1_i32_304 = arith.constant 1 : i32
    %622 = tpu.dynamic_rotate %618 by %c1_i32_304 dim 1 : vector<8x32xf32>, i32 -> vector<8x32xf32>
    %cst_305 = arith.constant 0.000000e+00 : f32
    %623 = vector.shape_cast %621 : vector<1x32xi1> to vector<1x32xi1>
    %624 = vector.broadcast %623 : vector<1x32xi1> to vector<8x32xi1>
    %625 = vector.broadcast %cst_305 : f32 to vector<8x32xf32>
    %626 = arith.select %624, %622, %625 : vector<8x32xi1>, vector<8x32xf32>
    %c31_i32_306 = arith.constant 31 : i32
    %627 = vector.broadcast %c31_i32_306 : i32 to vector<1x32xi32>
    %628 = arith.cmpi slt, %619, %627 : vector<1x32xi32>
    %c31_i32_307 = arith.constant 31 : i32
    %629 = tpu.dynamic_rotate %618 by %c31_i32_307 dim 1 : vector<8x32xf32>, i32 -> vector<8x32xf32>
    %cst_308 = arith.constant 0.000000e+00 : f32
    %630 = vector.shape_cast %628 : vector<1x32xi1> to vector<1x32xi1>
    %631 = vector.broadcast %630 : vector<1x32xi1> to vector<8x32xi1>
    %632 = vector.broadcast %cst_308 : f32 to vector<8x32xf32>
    %633 = arith.select %631, %629, %632 : vector<8x32xi1>, vector<8x32xf32>
    %634 = tpu.concatenate %626, %618, %633 in 0 : vector<8x32xf32>, vector<8x32xf32>, vector<8x32xf32> -> vector<24x32xf32>
    %cst_309 = arith.constant dense<0.000000e+00> : vector<8x32xf32>
    %635 = tpu.matmul %577, %634, %cst_309 {dimension_numbers = #tpu.dot_dimension_numbers<[1], [0], [0], [1], [0, 0, 1, 1], [], []>} : vector<8x24xf32>, vector<24x32xf32>, vector<8x32xf32> -> vector<8x32xf32>
    %636 = vector.broadcast %579 : vector<8x1xf32> to vector<8x32xf32>
    %637 = arith.addf %635, %636 : vector<8x32xf32>
    %638 = tpu.concatenate %575, %637 in 0 : vector<8x32xf32>, vector<8x32xf32> -> vector<16x32xf32>
    %cst_310 = arith.constant dense<0.000000e+00> : vector<16x16xf32>
    %639 = tpu.matmul %638, %592, %cst_310 {dimension_numbers = #tpu.dot_dimension_numbers<[1], [0], [0], [1], [0, 0, 1, 1], [], []>} : vector<16x32xf32>, vector<32x16xf32>, vector<16x16xf32> -> vector<16x16xf32>
    %640 = vector.extract_strided_slice %639 {offsets = [0, 0], sizes = [8, 16], strides = [1, 1]} : vector<16x16xf32> to vector<8x16xf32>
    %641 = vector.extract_strided_slice %639 {offsets = [8, 0], sizes = [8, 16], strides = [1, 1]} : vector<16x16xf32> to vector<8x16xf32>
    %cst_311 = arith.constant dense<0.000000e+00> : vector<8xf32>
    %642 = vector.multi_reduction <add>, %641, %cst_311 [1] : vector<8x16xf32> to vector<8xf32>
    %643 = vector.shape_cast %642 : vector<8xf32> to vector<8x1xf32>
    %cst_312 = arith.constant 6.250000e-02 : f32
    %644 = vector.broadcast %cst_312 : f32 to vector<8x1xf32>
    %645 = arith.mulf %643, %644 : vector<8x1xf32>
    %646 = arith.mulf %641, %641 : vector<8x16xf32>
    %cst_313 = arith.constant dense<0.000000e+00> : vector<8xf32>
    %647 = vector.multi_reduction <add>, %646, %cst_313 [1] : vector<8x16xf32> to vector<8xf32>
    %648 = vector.shape_cast %647 : vector<8xf32> to vector<8x1xf32>
    %cst_314 = arith.constant 6.250000e-02 : f32
    %649 = vector.broadcast %cst_314 : f32 to vector<8x1xf32>
    %650 = arith.mulf %648, %649 : vector<8x1xf32>
    %651 = arith.mulf %645, %645 : vector<8x1xf32>
    %652 = arith.subf %650, %651 : vector<8x1xf32>
    %cst_315 = arith.constant 9.99999974E-6 : f32
    %653 = vector.broadcast %cst_315 : f32 to vector<8x1xf32>
    %654 = arith.addf %652, %653 : vector<8x1xf32>
    %655 = math.rsqrt %654 : vector<8x1xf32>
    %656 = arith.mulf %655, %589 : vector<8x1xf32>
    %657 = vector.broadcast %645 : vector<8x1xf32> to vector<8x16xf32>
    %658 = arith.subf %641, %657 : vector<8x16xf32>
    %659 = vector.broadcast %656 : vector<8x1xf32> to vector<8x16xf32>
    %660 = arith.mulf %658, %659 : vector<8x16xf32>
    %661 = vector.broadcast %591 : vector<8x1xf32> to vector<8x16xf32>
    %662 = arith.addf %660, %661 : vector<8x16xf32>
    %cst_316 = arith.constant 0.000000e+00 : f32
    %663 = vector.broadcast %cst_316 : f32 to vector<8x16xf32>
    %664 = arith.cmpf oge, %662, %663 : vector<8x16xf32>
    %cst_317 = arith.constant 2.000000e-01 : f32
    %665 = vector.broadcast %cst_317 : f32 to vector<8x16xf32>
    %666 = arith.mulf %665, %662 : vector<8x16xf32>
    %667 = arith.select %664, %662, %666 : vector<8x16xi1>, vector<8x16xf32>
    %668 = tpu.iota {dimensions = array<i32: 1>} : vector<1x16xi32>
    %c1_i32_318 = arith.constant 1 : i32
    %669 = vector.broadcast %c1_i32_318 : i32 to vector<1x16xi32>
    %670 = arith.cmpi sge, %668, %669 : vector<1x16xi32>
    %c1_i32_319 = arith.constant 1 : i32
    %671 = tpu.dynamic_rotate %667 by %c1_i32_319 dim 1 : vector<8x16xf32>, i32 -> vector<8x16xf32>
    %cst_320 = arith.constant 0.000000e+00 : f32
    %672 = vector.shape_cast %670 : vector<1x16xi1> to vector<1x16xi1>
    %673 = vector.broadcast %672 : vector<1x16xi1> to vector<8x16xi1>
    %674 = vector.broadcast %cst_320 : f32 to vector<8x16xf32>
    %675 = arith.select %673, %671, %674 : vector<8x16xi1>, vector<8x16xf32>
    %c15_i32 = arith.constant 15 : i32
    %676 = vector.broadcast %c15_i32 : i32 to vector<1x16xi32>
    %677 = arith.cmpi slt, %668, %676 : vector<1x16xi32>
    %c15_i32_321 = arith.constant 15 : i32
    %678 = tpu.dynamic_rotate %667 by %c15_i32_321 dim 1 : vector<8x16xf32>, i32 -> vector<8x16xf32>
    %cst_322 = arith.constant 0.000000e+00 : f32
    %679 = vector.shape_cast %677 : vector<1x16xi1> to vector<1x16xi1>
    %680 = vector.broadcast %679 : vector<1x16xi1> to vector<8x16xi1>
    %681 = vector.broadcast %cst_322 : f32 to vector<8x16xf32>
    %682 = arith.select %680, %678, %681 : vector<8x16xi1>, vector<8x16xf32>
    %683 = tpu.concatenate %675, %667, %682 in 0 : vector<8x16xf32>, vector<8x16xf32>, vector<8x16xf32> -> vector<24x16xf32>
    %cst_323 = arith.constant dense<0.000000e+00> : vector<8x16xf32>
    %684 = tpu.matmul %585, %683, %cst_323 {dimension_numbers = #tpu.dot_dimension_numbers<[1], [0], [0], [1], [0, 0, 1, 1], [], []>} : vector<8x24xf32>, vector<24x16xf32>, vector<8x16xf32> -> vector<8x16xf32>
    %685 = vector.broadcast %587 : vector<8x1xf32> to vector<8x16xf32>
    %686 = arith.addf %684, %685 : vector<8x16xf32>
    %687 = arith.addf %640, %686 : vector<8x16xf32>
    %cst_324 = arith.constant 0.707106769 : f32
    %688 = vector.broadcast %cst_324 : f32 to vector<8x16xf32>
    %689 = arith.mulf %687, %688 : vector<8x16xf32>
    %c5 = arith.constant 5 : index
    %c0_325 = arith.constant 0 : index
    %c0_326 = arith.constant 0 : index
    %690 = vector.load %arg12[%c5, %c0_325, %c0_326] : memref<8x8x24xf32, #tpu.memory_space<vmem>>, vector<1x8x24xf32>
    %691 = vector.shape_cast %690 : vector<1x8x24xf32> to vector<8x24xf32>
    %c5_327 = arith.constant 5 : index
    %c0_328 = arith.constant 0 : index
    %c0_329 = arith.constant 0 : index
    %692 = vector.load %arg13[%c5_327, %c0_328, %c0_329] : memref<8x8x1xf32, #tpu.memory_space<vmem>>, vector<1x8x1xf32>
    %693 = vector.shape_cast %692 : vector<1x8x1xf32> to vector<8x1xf32>
    %c5_330 = arith.constant 5 : index
    %c0_331 = arith.constant 0 : index
    %c0_332 = arith.constant 0 : index
    %694 = vector.load %arg14[%c5_330, %c0_331, %c0_332] : memref<8x8x1xf32, #tpu.memory_space<vmem>>, vector<1x8x1xf32>
    %695 = vector.shape_cast %694 : vector<1x8x1xf32> to vector<8x1xf32>
    %c5_333 = arith.constant 5 : index
    %c0_334 = arith.constant 0 : index
    %c0_335 = arith.constant 0 : index
    %696 = vector.load %arg15[%c5_333, %c0_334, %c0_335] : memref<8x8x1xf32, #tpu.memory_space<vmem>>, vector<1x8x1xf32>
    %697 = vector.shape_cast %696 : vector<1x8x1xf32> to vector<8x1xf32>
    %c5_336 = arith.constant 5 : index
    %c0_337 = arith.constant 0 : index
    %c0_338 = arith.constant 0 : index
    %698 = vector.load %arg16[%c5_336, %c0_337, %c0_338] : memref<8x8x24xf32, #tpu.memory_space<vmem>>, vector<1x8x24xf32>
    %699 = vector.shape_cast %698 : vector<1x8x24xf32> to vector<8x24xf32>
    %c5_339 = arith.constant 5 : index
    %c0_340 = arith.constant 0 : index
    %c0_341 = arith.constant 0 : index
    %700 = vector.load %arg17[%c5_339, %c0_340, %c0_341] : memref<8x8x1xf32, #tpu.memory_space<vmem>>, vector<1x8x1xf32>
    %701 = vector.shape_cast %700 : vector<1x8x1xf32> to vector<8x1xf32>
    %c5_342 = arith.constant 5 : index
    %c0_343 = arith.constant 0 : index
    %c0_344 = arith.constant 0 : index
    %702 = vector.load %arg18[%c5_342, %c0_343, %c0_344] : memref<8x8x1xf32, #tpu.memory_space<vmem>>, vector<1x8x1xf32>
    %703 = vector.shape_cast %702 : vector<1x8x1xf32> to vector<8x1xf32>
    %c5_345 = arith.constant 5 : index
    %c0_346 = arith.constant 0 : index
    %c0_347 = arith.constant 0 : index
    %704 = vector.load %arg19[%c5_345, %c0_346, %c0_347] : memref<8x8x1xf32, #tpu.memory_space<vmem>>, vector<1x8x1xf32>
    %705 = vector.shape_cast %704 : vector<1x8x1xf32> to vector<8x1xf32>
    %c0_348 = arith.constant 0 : index
    %c0_349 = arith.constant 0 : index
    %706 = vector.load %arg2[%c0_348, %c0_349] : memref<1024x512xf32, #tpu.memory_space<vmem>>, vector<16x8xf32>
    %cst_350 = arith.constant dense<0.000000e+00> : vector<8xf32>
    %707 = vector.multi_reduction <add>, %689, %cst_350 [1] : vector<8x16xf32> to vector<8xf32>
    %708 = vector.shape_cast %707 : vector<8xf32> to vector<8x1xf32>
    %cst_351 = arith.constant 6.250000e-02 : f32
    %709 = vector.broadcast %cst_351 : f32 to vector<8x1xf32>
    %710 = arith.mulf %708, %709 : vector<8x1xf32>
    %711 = arith.mulf %689, %689 : vector<8x16xf32>
    %cst_352 = arith.constant dense<0.000000e+00> : vector<8xf32>
    %712 = vector.multi_reduction <add>, %711, %cst_352 [1] : vector<8x16xf32> to vector<8xf32>
    %713 = vector.shape_cast %712 : vector<8xf32> to vector<8x1xf32>
    %cst_353 = arith.constant 6.250000e-02 : f32
    %714 = vector.broadcast %cst_353 : f32 to vector<8x1xf32>
    %715 = arith.mulf %713, %714 : vector<8x1xf32>
    %716 = arith.mulf %710, %710 : vector<8x1xf32>
    %717 = arith.subf %715, %716 : vector<8x1xf32>
    %cst_354 = arith.constant 9.99999974E-6 : f32
    %718 = vector.broadcast %cst_354 : f32 to vector<8x1xf32>
    %719 = arith.addf %717, %718 : vector<8x1xf32>
    %720 = math.rsqrt %719 : vector<8x1xf32>
    %721 = arith.mulf %720, %695 : vector<8x1xf32>
    %722 = vector.broadcast %710 : vector<8x1xf32> to vector<8x16xf32>
    %723 = arith.subf %689, %722 : vector<8x16xf32>
    %724 = vector.broadcast %721 : vector<8x1xf32> to vector<8x16xf32>
    %725 = arith.mulf %723, %724 : vector<8x16xf32>
    %726 = vector.broadcast %697 : vector<8x1xf32> to vector<8x16xf32>
    %727 = arith.addf %725, %726 : vector<8x16xf32>
    %cst_355 = arith.constant 0.000000e+00 : f32
    %728 = vector.broadcast %cst_355 : f32 to vector<8x16xf32>
    %729 = arith.cmpf oge, %727, %728 : vector<8x16xf32>
    %cst_356 = arith.constant 2.000000e-01 : f32
    %730 = vector.broadcast %cst_356 : f32 to vector<8x16xf32>
    %731 = arith.mulf %730, %727 : vector<8x16xf32>
    %732 = arith.select %729, %727, %731 : vector<8x16xi1>, vector<8x16xf32>
    %733 = tpu.iota {dimensions = array<i32: 1>} : vector<1x16xi32>
    %c1_i32_357 = arith.constant 1 : i32
    %734 = vector.broadcast %c1_i32_357 : i32 to vector<1x16xi32>
    %735 = arith.cmpi sge, %733, %734 : vector<1x16xi32>
    %c1_i32_358 = arith.constant 1 : i32
    %736 = tpu.dynamic_rotate %732 by %c1_i32_358 dim 1 : vector<8x16xf32>, i32 -> vector<8x16xf32>
    %cst_359 = arith.constant 0.000000e+00 : f32
    %737 = vector.shape_cast %735 : vector<1x16xi1> to vector<1x16xi1>
    %738 = vector.broadcast %737 : vector<1x16xi1> to vector<8x16xi1>
    %739 = vector.broadcast %cst_359 : f32 to vector<8x16xf32>
    %740 = arith.select %738, %736, %739 : vector<8x16xi1>, vector<8x16xf32>
    %c15_i32_360 = arith.constant 15 : i32
    %741 = vector.broadcast %c15_i32_360 : i32 to vector<1x16xi32>
    %742 = arith.cmpi slt, %733, %741 : vector<1x16xi32>
    %c15_i32_361 = arith.constant 15 : i32
    %743 = tpu.dynamic_rotate %732 by %c15_i32_361 dim 1 : vector<8x16xf32>, i32 -> vector<8x16xf32>
    %cst_362 = arith.constant 0.000000e+00 : f32
    %744 = vector.shape_cast %742 : vector<1x16xi1> to vector<1x16xi1>
    %745 = vector.broadcast %744 : vector<1x16xi1> to vector<8x16xi1>
    %746 = vector.broadcast %cst_362 : f32 to vector<8x16xf32>
    %747 = arith.select %745, %743, %746 : vector<8x16xi1>, vector<8x16xf32>
    %748 = tpu.concatenate %740, %732, %747 in 0 : vector<8x16xf32>, vector<8x16xf32>, vector<8x16xf32> -> vector<24x16xf32>
    %cst_363 = arith.constant dense<0.000000e+00> : vector<8x16xf32>
    %749 = tpu.matmul %691, %748, %cst_363 {dimension_numbers = #tpu.dot_dimension_numbers<[1], [0], [0], [1], [0, 0, 1, 1], [], []>} : vector<8x24xf32>, vector<24x16xf32>, vector<8x16xf32> -> vector<8x16xf32>
    %750 = vector.broadcast %693 : vector<8x1xf32> to vector<8x16xf32>
    %751 = arith.addf %749, %750 : vector<8x16xf32>
    %752 = tpu.concatenate %689, %751 in 0 : vector<8x16xf32>, vector<8x16xf32> -> vector<16x16xf32>
    %cst_364 = arith.constant dense<0.000000e+00> : vector<16x8xf32>
    %753 = tpu.matmul %752, %706, %cst_364 {dimension_numbers = #tpu.dot_dimension_numbers<[1], [0], [0], [1], [0, 0, 1, 1], [], []>} : vector<16x16xf32>, vector<16x8xf32>, vector<16x8xf32> -> vector<16x8xf32>
    %754 = vector.extract_strided_slice %753 {offsets = [0, 0], sizes = [8, 8], strides = [1, 1]} : vector<16x8xf32> to vector<8x8xf32>
    %755 = vector.extract_strided_slice %753 {offsets = [8, 0], sizes = [8, 8], strides = [1, 1]} : vector<16x8xf32> to vector<8x8xf32>
    %cst_365 = arith.constant dense<0.000000e+00> : vector<8xf32>
    %756 = vector.multi_reduction <add>, %755, %cst_365 [1] : vector<8x8xf32> to vector<8xf32>
    %757 = vector.shape_cast %756 : vector<8xf32> to vector<8x1xf32>
    %cst_366 = arith.constant 1.250000e-01 : f32
    %758 = vector.broadcast %cst_366 : f32 to vector<8x1xf32>
    %759 = arith.mulf %757, %758 : vector<8x1xf32>
    %760 = arith.mulf %755, %755 : vector<8x8xf32>
    %cst_367 = arith.constant dense<0.000000e+00> : vector<8xf32>
    %761 = vector.multi_reduction <add>, %760, %cst_367 [1] : vector<8x8xf32> to vector<8xf32>
    %762 = vector.shape_cast %761 : vector<8xf32> to vector<8x1xf32>
    %cst_368 = arith.constant 1.250000e-01 : f32
    %763 = vector.broadcast %cst_368 : f32 to vector<8x1xf32>
    %764 = arith.mulf %762, %763 : vector<8x1xf32>
    %765 = arith.mulf %759, %759 : vector<8x1xf32>
    %766 = arith.subf %764, %765 : vector<8x1xf32>
    %cst_369 = arith.constant 9.99999974E-6 : f32
    %767 = vector.broadcast %cst_369 : f32 to vector<8x1xf32>
    %768 = arith.addf %766, %767 : vector<8x1xf32>
    %769 = math.rsqrt %768 : vector<8x1xf32>
    %770 = arith.mulf %769, %703 : vector<8x1xf32>
    %771 = vector.broadcast %759 : vector<8x1xf32> to vector<8x8xf32>
    %772 = arith.subf %755, %771 : vector<8x8xf32>
    %773 = vector.broadcast %770 : vector<8x1xf32> to vector<8x8xf32>
    %774 = arith.mulf %772, %773 : vector<8x8xf32>
    %775 = vector.broadcast %705 : vector<8x1xf32> to vector<8x8xf32>
    %776 = arith.addf %774, %775 : vector<8x8xf32>
    %cst_370 = arith.constant 0.000000e+00 : f32
    %777 = vector.broadcast %cst_370 : f32 to vector<8x8xf32>
    %778 = arith.cmpf oge, %776, %777 : vector<8x8xf32>
    %cst_371 = arith.constant 2.000000e-01 : f32
    %779 = vector.broadcast %cst_371 : f32 to vector<8x8xf32>
    %780 = arith.mulf %779, %776 : vector<8x8xf32>
    %781 = arith.select %778, %776, %780 : vector<8x8xi1>, vector<8x8xf32>
    %782 = tpu.iota {dimensions = array<i32: 1>} : vector<1x8xi32>
    %c1_i32_372 = arith.constant 1 : i32
    %783 = vector.broadcast %c1_i32_372 : i32 to vector<1x8xi32>
    %784 = arith.cmpi sge, %782, %783 : vector<1x8xi32>
    %c1_i32_373 = arith.constant 1 : i32
    %785 = tpu.dynamic_rotate %781 by %c1_i32_373 dim 1 : vector<8x8xf32>, i32 -> vector<8x8xf32>
    %cst_374 = arith.constant 0.000000e+00 : f32
    %786 = vector.shape_cast %784 : vector<1x8xi1> to vector<1x8xi1>
    %787 = vector.broadcast %786 : vector<1x8xi1> to vector<8x8xi1>
    %788 = vector.broadcast %cst_374 : f32 to vector<8x8xf32>
    %789 = arith.select %787, %785, %788 : vector<8x8xi1>, vector<8x8xf32>
    %c7_i32 = arith.constant 7 : i32
    %790 = vector.broadcast %c7_i32 : i32 to vector<1x8xi32>
    %791 = arith.cmpi slt, %782, %790 : vector<1x8xi32>
    %c7_i32_375 = arith.constant 7 : i32
    %792 = tpu.dynamic_rotate %781 by %c7_i32_375 dim 1 : vector<8x8xf32>, i32 -> vector<8x8xf32>
    %cst_376 = arith.constant 0.000000e+00 : f32
    %793 = vector.shape_cast %791 : vector<1x8xi1> to vector<1x8xi1>
    %794 = vector.broadcast %793 : vector<1x8xi1> to vector<8x8xi1>
    %795 = vector.broadcast %cst_376 : f32 to vector<8x8xf32>
    %796 = arith.select %794, %792, %795 : vector<8x8xi1>, vector<8x8xf32>
    %797 = tpu.concatenate %789, %781, %796 in 0 : vector<8x8xf32>, vector<8x8xf32>, vector<8x8xf32> -> vector<24x8xf32>
    %cst_377 = arith.constant dense<0.000000e+00> : vector<8x8xf32>
    %798 = tpu.matmul %699, %797, %cst_377 {dimension_numbers = #tpu.dot_dimension_numbers<[1], [0], [0], [1], [0, 0, 1, 1], [], []>} : vector<8x24xf32>, vector<24x8xf32>, vector<8x8xf32> -> vector<8x8xf32>
    %799 = vector.broadcast %701 : vector<8x1xf32> to vector<8x8xf32>
    %800 = arith.addf %798, %799 : vector<8x8xf32>
    %801 = arith.addf %754, %800 : vector<8x8xf32>
    %cst_378 = arith.constant 0.707106769 : f32
    %802 = vector.broadcast %cst_378 : f32 to vector<8x8xf32>
    %803 = arith.mulf %801, %802 : vector<8x8xf32>
    %c6 = arith.constant 6 : index
    %c0_379 = arith.constant 0 : index
    %c0_380 = arith.constant 0 : index
    %804 = vector.load %arg12[%c6, %c0_379, %c0_380] : memref<8x8x24xf32, #tpu.memory_space<vmem>>, vector<1x8x24xf32>
    %805 = vector.shape_cast %804 : vector<1x8x24xf32> to vector<8x24xf32>
    %c6_381 = arith.constant 6 : index
    %c0_382 = arith.constant 0 : index
    %c0_383 = arith.constant 0 : index
    %806 = vector.load %arg13[%c6_381, %c0_382, %c0_383] : memref<8x8x1xf32, #tpu.memory_space<vmem>>, vector<1x8x1xf32>
    %807 = vector.shape_cast %806 : vector<1x8x1xf32> to vector<8x1xf32>
    %c6_384 = arith.constant 6 : index
    %c0_385 = arith.constant 0 : index
    %c0_386 = arith.constant 0 : index
    %808 = vector.load %arg14[%c6_384, %c0_385, %c0_386] : memref<8x8x1xf32, #tpu.memory_space<vmem>>, vector<1x8x1xf32>
    %809 = vector.shape_cast %808 : vector<1x8x1xf32> to vector<8x1xf32>
    %c6_387 = arith.constant 6 : index
    %c0_388 = arith.constant 0 : index
    %c0_389 = arith.constant 0 : index
    %810 = vector.load %arg15[%c6_387, %c0_388, %c0_389] : memref<8x8x1xf32, #tpu.memory_space<vmem>>, vector<1x8x1xf32>
    %811 = vector.shape_cast %810 : vector<1x8x1xf32> to vector<8x1xf32>
    %c6_390 = arith.constant 6 : index
    %c0_391 = arith.constant 0 : index
    %c0_392 = arith.constant 0 : index
    %812 = vector.load %arg16[%c6_390, %c0_391, %c0_392] : memref<8x8x24xf32, #tpu.memory_space<vmem>>, vector<1x8x24xf32>
    %813 = vector.shape_cast %812 : vector<1x8x24xf32> to vector<8x24xf32>
    %c6_393 = arith.constant 6 : index
    %c0_394 = arith.constant 0 : index
    %c0_395 = arith.constant 0 : index
    %814 = vector.load %arg17[%c6_393, %c0_394, %c0_395] : memref<8x8x1xf32, #tpu.memory_space<vmem>>, vector<1x8x1xf32>
    %815 = vector.shape_cast %814 : vector<1x8x1xf32> to vector<8x1xf32>
    %c6_396 = arith.constant 6 : index
    %c0_397 = arith.constant 0 : index
    %c0_398 = arith.constant 0 : index
    %816 = vector.load %arg18[%c6_396, %c0_397, %c0_398] : memref<8x8x1xf32, #tpu.memory_space<vmem>>, vector<1x8x1xf32>
    %817 = vector.shape_cast %816 : vector<1x8x1xf32> to vector<8x1xf32>
    %c6_399 = arith.constant 6 : index
    %c0_400 = arith.constant 0 : index
    %c0_401 = arith.constant 0 : index
    %818 = vector.load %arg19[%c6_399, %c0_400, %c0_401] : memref<8x8x1xf32, #tpu.memory_space<vmem>>, vector<1x8x1xf32>
    %819 = vector.shape_cast %818 : vector<1x8x1xf32> to vector<8x1xf32>
    %c0_402 = arith.constant 0 : index
    %c0_403 = arith.constant 0 : index
    %820 = vector.load %arg2[%c0_402, %c0_403] : memref<1024x512xf32, #tpu.memory_space<vmem>>, vector<8x4xf32>
    %cst_404 = arith.constant dense<0.000000e+00> : vector<8xf32>
    %821 = vector.multi_reduction <add>, %803, %cst_404 [1] : vector<8x8xf32> to vector<8xf32>
    %822 = vector.shape_cast %821 : vector<8xf32> to vector<8x1xf32>
    %cst_405 = arith.constant 1.250000e-01 : f32
    %823 = vector.broadcast %cst_405 : f32 to vector<8x1xf32>
    %824 = arith.mulf %822, %823 : vector<8x1xf32>
    %825 = arith.mulf %803, %803 : vector<8x8xf32>
    %cst_406 = arith.constant dense<0.000000e+00> : vector<8xf32>
    %826 = vector.multi_reduction <add>, %825, %cst_406 [1] : vector<8x8xf32> to vector<8xf32>
    %827 = vector.shape_cast %826 : vector<8xf32> to vector<8x1xf32>
    %cst_407 = arith.constant 1.250000e-01 : f32
    %828 = vector.broadcast %cst_407 : f32 to vector<8x1xf32>
    %829 = arith.mulf %827, %828 : vector<8x1xf32>
    %830 = arith.mulf %824, %824 : vector<8x1xf32>
    %831 = arith.subf %829, %830 : vector<8x1xf32>
    %cst_408 = arith.constant 9.99999974E-6 : f32
    %832 = vector.broadcast %cst_408 : f32 to vector<8x1xf32>
    %833 = arith.addf %831, %832 : vector<8x1xf32>
    %834 = math.rsqrt %833 : vector<8x1xf32>
    %835 = arith.mulf %834, %809 : vector<8x1xf32>
    %836 = vector.broadcast %824 : vector<8x1xf32> to vector<8x8xf32>
    %837 = arith.subf %803, %836 : vector<8x8xf32>
    %838 = vector.broadcast %835 : vector<8x1xf32> to vector<8x8xf32>
    %839 = arith.mulf %837, %838 : vector<8x8xf32>
    %840 = vector.broadcast %811 : vector<8x1xf32> to vector<8x8xf32>
    %841 = arith.addf %839, %840 : vector<8x8xf32>
    %cst_409 = arith.constant 0.000000e+00 : f32
    %842 = vector.broadcast %cst_409 : f32 to vector<8x8xf32>
    %843 = arith.cmpf oge, %841, %842 : vector<8x8xf32>
    %cst_410 = arith.constant 2.000000e-01 : f32
    %844 = vector.broadcast %cst_410 : f32 to vector<8x8xf32>
    %845 = arith.mulf %844, %841 : vector<8x8xf32>
    %846 = arith.select %843, %841, %845 : vector<8x8xi1>, vector<8x8xf32>
    %847 = tpu.iota {dimensions = array<i32: 1>} : vector<1x8xi32>
    %c1_i32_411 = arith.constant 1 : i32
    %848 = vector.broadcast %c1_i32_411 : i32 to vector<1x8xi32>
    %849 = arith.cmpi sge, %847, %848 : vector<1x8xi32>
    %c1_i32_412 = arith.constant 1 : i32
    %850 = tpu.dynamic_rotate %846 by %c1_i32_412 dim 1 : vector<8x8xf32>, i32 -> vector<8x8xf32>
    %cst_413 = arith.constant 0.000000e+00 : f32
    %851 = vector.shape_cast %849 : vector<1x8xi1> to vector<1x8xi1>
    %852 = vector.broadcast %851 : vector<1x8xi1> to vector<8x8xi1>
    %853 = vector.broadcast %cst_413 : f32 to vector<8x8xf32>
    %854 = arith.select %852, %850, %853 : vector<8x8xi1>, vector<8x8xf32>
    %c7_i32_414 = arith.constant 7 : i32
    %855 = vector.broadcast %c7_i32_414 : i32 to vector<1x8xi32>
    %856 = arith.cmpi slt, %847, %855 : vector<1x8xi32>
    %c7_i32_415 = arith.constant 7 : i32
    %857 = tpu.dynamic_rotate %846 by %c7_i32_415 dim 1 : vector<8x8xf32>, i32 -> vector<8x8xf32>
    %cst_416 = arith.constant 0.000000e+00 : f32
    %858 = vector.shape_cast %856 : vector<1x8xi1> to vector<1x8xi1>
    %859 = vector.broadcast %858 : vector<1x8xi1> to vector<8x8xi1>
    %860 = vector.broadcast %cst_416 : f32 to vector<8x8xf32>
    %861 = arith.select %859, %857, %860 : vector<8x8xi1>, vector<8x8xf32>
    %862 = tpu.concatenate %854, %846, %861 in 0 : vector<8x8xf32>, vector<8x8xf32>, vector<8x8xf32> -> vector<24x8xf32>
    %cst_417 = arith.constant dense<0.000000e+00> : vector<8x8xf32>
    %863 = tpu.matmul %805, %862, %cst_417 {dimension_numbers = #tpu.dot_dimension_numbers<[1], [0], [0], [1], [0, 0, 1, 1], [], []>} : vector<8x24xf32>, vector<24x8xf32>, vector<8x8xf32> -> vector<8x8xf32>
    %864 = vector.broadcast %807 : vector<8x1xf32> to vector<8x8xf32>
    %865 = arith.addf %863, %864 : vector<8x8xf32>
    %866 = tpu.concatenate %803, %865 in 0 : vector<8x8xf32>, vector<8x8xf32> -> vector<16x8xf32>
    %cst_418 = arith.constant dense<0.000000e+00> : vector<16x4xf32>
    %867 = tpu.matmul %866, %820, %cst_418 {dimension_numbers = #tpu.dot_dimension_numbers<[1], [0], [0], [1], [0, 0, 1, 1], [], []>} : vector<16x8xf32>, vector<8x4xf32>, vector<16x4xf32> -> vector<16x4xf32>
    %868 = vector.extract_strided_slice %867 {offsets = [0, 0], sizes = [8, 4], strides = [1, 1]} : vector<16x4xf32> to vector<8x4xf32>
    %869 = vector.extract_strided_slice %867 {offsets = [8, 0], sizes = [8, 4], strides = [1, 1]} : vector<16x4xf32> to vector<8x4xf32>
    %cst_419 = arith.constant dense<0.000000e+00> : vector<8xf32>
    %870 = vector.multi_reduction <add>, %869, %cst_419 [1] : vector<8x4xf32> to vector<8xf32>
    %871 = vector.shape_cast %870 : vector<8xf32> to vector<8x1xf32>
    %cst_420 = arith.constant 2.500000e-01 : f32
    %872 = vector.broadcast %cst_420 : f32 to vector<8x1xf32>
    %873 = arith.mulf %871, %872 : vector<8x1xf32>
    %874 = arith.mulf %869, %869 : vector<8x4xf32>
    %cst_421 = arith.constant dense<0.000000e+00> : vector<8xf32>
    %875 = vector.multi_reduction <add>, %874, %cst_421 [1] : vector<8x4xf32> to vector<8xf32>
    %876 = vector.shape_cast %875 : vector<8xf32> to vector<8x1xf32>
    %cst_422 = arith.constant 2.500000e-01 : f32
    %877 = vector.broadcast %cst_422 : f32 to vector<8x1xf32>
    %878 = arith.mulf %876, %877 : vector<8x1xf32>
    %879 = arith.mulf %873, %873 : vector<8x1xf32>
    %880 = arith.subf %878, %879 : vector<8x1xf32>
    %cst_423 = arith.constant 9.99999974E-6 : f32
    %881 = vector.broadcast %cst_423 : f32 to vector<8x1xf32>
    %882 = arith.addf %880, %881 : vector<8x1xf32>
    %883 = math.rsqrt %882 : vector<8x1xf32>
    %884 = arith.mulf %883, %817 : vector<8x1xf32>
    %885 = vector.broadcast %873 : vector<8x1xf32> to vector<8x4xf32>
    %886 = arith.subf %869, %885 : vector<8x4xf32>
    %887 = vector.broadcast %884 : vector<8x1xf32> to vector<8x4xf32>
    %888 = arith.mulf %886, %887 : vector<8x4xf32>
    %889 = vector.broadcast %819 : vector<8x1xf32> to vector<8x4xf32>
    %890 = arith.addf %888, %889 : vector<8x4xf32>
    %cst_424 = arith.constant 0.000000e+00 : f32
    %891 = vector.broadcast %cst_424 : f32 to vector<8x4xf32>
    %892 = arith.cmpf oge, %890, %891 : vector<8x4xf32>
    %cst_425 = arith.constant 2.000000e-01 : f32
    %893 = vector.broadcast %cst_425 : f32 to vector<8x4xf32>
    %894 = arith.mulf %893, %890 : vector<8x4xf32>
    %895 = arith.select %892, %890, %894 : vector<8x4xi1>, vector<8x4xf32>
    %896 = tpu.iota {dimensions = array<i32: 1>} : vector<1x4xi32>
    %c1_i32_426 = arith.constant 1 : i32
    %897 = vector.broadcast %c1_i32_426 : i32 to vector<1x4xi32>
    %898 = arith.cmpi sge, %896, %897 : vector<1x4xi32>
    %c1_i32_427 = arith.constant 1 : i32
    %899 = tpu.dynamic_rotate %895 by %c1_i32_427 dim 1 : vector<8x4xf32>, i32 -> vector<8x4xf32>
    %cst_428 = arith.constant 0.000000e+00 : f32
    %900 = vector.shape_cast %898 : vector<1x4xi1> to vector<1x4xi1>
    %901 = vector.broadcast %900 : vector<1x4xi1> to vector<8x4xi1>
    %902 = vector.broadcast %cst_428 : f32 to vector<8x4xf32>
    %903 = arith.select %901, %899, %902 : vector<8x4xi1>, vector<8x4xf32>
    %c3_i32 = arith.constant 3 : i32
    %904 = vector.broadcast %c3_i32 : i32 to vector<1x4xi32>
    %905 = arith.cmpi slt, %896, %904 : vector<1x4xi32>
    %c3_i32_429 = arith.constant 3 : i32
    %906 = tpu.dynamic_rotate %895 by %c3_i32_429 dim 1 : vector<8x4xf32>, i32 -> vector<8x4xf32>
    %cst_430 = arith.constant 0.000000e+00 : f32
    %907 = vector.shape_cast %905 : vector<1x4xi1> to vector<1x4xi1>
    %908 = vector.broadcast %907 : vector<1x4xi1> to vector<8x4xi1>
    %909 = vector.broadcast %cst_430 : f32 to vector<8x4xf32>
    %910 = arith.select %908, %906, %909 : vector<8x4xi1>, vector<8x4xf32>
    %911 = tpu.concatenate %903, %895, %910 in 0 : vector<8x4xf32>, vector<8x4xf32>, vector<8x4xf32> -> vector<24x4xf32>
    %cst_431 = arith.constant dense<0.000000e+00> : vector<8x4xf32>
    %912 = tpu.matmul %813, %911, %cst_431 {dimension_numbers = #tpu.dot_dimension_numbers<[1], [0], [0], [1], [0, 0, 1, 1], [], []>} : vector<8x24xf32>, vector<24x4xf32>, vector<8x4xf32> -> vector<8x4xf32>
    %913 = vector.broadcast %815 : vector<8x1xf32> to vector<8x4xf32>
    %914 = arith.addf %912, %913 : vector<8x4xf32>
    %915 = arith.addf %868, %914 : vector<8x4xf32>
    %cst_432 = arith.constant 0.707106769 : f32
    %916 = vector.broadcast %cst_432 : f32 to vector<8x4xf32>
    %917 = arith.mulf %915, %916 : vector<8x4xf32>
    %c7 = arith.constant 7 : index
    %c0_433 = arith.constant 0 : index
    %c0_434 = arith.constant 0 : index
    %918 = vector.load %arg12[%c7, %c0_433, %c0_434] : memref<8x8x24xf32, #tpu.memory_space<vmem>>, vector<1x8x24xf32>
    %919 = vector.shape_cast %918 : vector<1x8x24xf32> to vector<8x24xf32>
    %c7_435 = arith.constant 7 : index
    %c0_436 = arith.constant 0 : index
    %c0_437 = arith.constant 0 : index
    %920 = vector.load %arg13[%c7_435, %c0_436, %c0_437] : memref<8x8x1xf32, #tpu.memory_space<vmem>>, vector<1x8x1xf32>
    %921 = vector.shape_cast %920 : vector<1x8x1xf32> to vector<8x1xf32>
    %c7_438 = arith.constant 7 : index
    %c0_439 = arith.constant 0 : index
    %c0_440 = arith.constant 0 : index
    %922 = vector.load %arg14[%c7_438, %c0_439, %c0_440] : memref<8x8x1xf32, #tpu.memory_space<vmem>>, vector<1x8x1xf32>
    %923 = vector.shape_cast %922 : vector<1x8x1xf32> to vector<8x1xf32>
    %c7_441 = arith.constant 7 : index
    %c0_442 = arith.constant 0 : index
    %c0_443 = arith.constant 0 : index
    %924 = vector.load %arg15[%c7_441, %c0_442, %c0_443] : memref<8x8x1xf32, #tpu.memory_space<vmem>>, vector<1x8x1xf32>
    %925 = vector.shape_cast %924 : vector<1x8x1xf32> to vector<8x1xf32>
    %c7_444 = arith.constant 7 : index
    %c0_445 = arith.constant 0 : index
    %c0_446 = arith.constant 0 : index
    %926 = vector.load %arg16[%c7_444, %c0_445, %c0_446] : memref<8x8x24xf32, #tpu.memory_space<vmem>>, vector<1x8x24xf32>
    %927 = vector.shape_cast %926 : vector<1x8x24xf32> to vector<8x24xf32>
    %c7_447 = arith.constant 7 : index
    %c0_448 = arith.constant 0 : index
    %c0_449 = arith.constant 0 : index
    %928 = vector.load %arg17[%c7_447, %c0_448, %c0_449] : memref<8x8x1xf32, #tpu.memory_space<vmem>>, vector<1x8x1xf32>
    %929 = vector.shape_cast %928 : vector<1x8x1xf32> to vector<8x1xf32>
    %c7_450 = arith.constant 7 : index
    %c0_451 = arith.constant 0 : index
    %c0_452 = arith.constant 0 : index
    %930 = vector.load %arg18[%c7_450, %c0_451, %c0_452] : memref<8x8x1xf32, #tpu.memory_space<vmem>>, vector<1x8x1xf32>
    %931 = vector.shape_cast %930 : vector<1x8x1xf32> to vector<8x1xf32>
    %c7_453 = arith.constant 7 : index
    %c0_454 = arith.constant 0 : index
    %c0_455 = arith.constant 0 : index
    %932 = vector.load %arg19[%c7_453, %c0_454, %c0_455] : memref<8x8x1xf32, #tpu.memory_space<vmem>>, vector<1x8x1xf32>
    %933 = vector.shape_cast %932 : vector<1x8x1xf32> to vector<8x1xf32>
    %c0_456 = arith.constant 0 : index
    %c0_457 = arith.constant 0 : index
    %934 = vector.load %arg2[%c0_456, %c0_457] : memref<1024x512xf32, #tpu.memory_space<vmem>>, vector<4x2xf32>
    %cst_458 = arith.constant dense<0.000000e+00> : vector<8xf32>
    %935 = vector.multi_reduction <add>, %917, %cst_458 [1] : vector<8x4xf32> to vector<8xf32>
    %936 = vector.shape_cast %935 : vector<8xf32> to vector<8x1xf32>
    %cst_459 = arith.constant 2.500000e-01 : f32
    %937 = vector.broadcast %cst_459 : f32 to vector<8x1xf32>
    %938 = arith.mulf %936, %937 : vector<8x1xf32>
    %939 = arith.mulf %917, %917 : vector<8x4xf32>
    %cst_460 = arith.constant dense<0.000000e+00> : vector<8xf32>
    %940 = vector.multi_reduction <add>, %939, %cst_460 [1] : vector<8x4xf32> to vector<8xf32>
    %941 = vector.shape_cast %940 : vector<8xf32> to vector<8x1xf32>
    %cst_461 = arith.constant 2.500000e-01 : f32
    %942 = vector.broadcast %cst_461 : f32 to vector<8x1xf32>
    %943 = arith.mulf %941, %942 : vector<8x1xf32>
    %944 = arith.mulf %938, %938 : vector<8x1xf32>
    %945 = arith.subf %943, %944 : vector<8x1xf32>
    %cst_462 = arith.constant 9.99999974E-6 : f32
    %946 = vector.broadcast %cst_462 : f32 to vector<8x1xf32>
    %947 = arith.addf %945, %946 : vector<8x1xf32>
    %948 = math.rsqrt %947 : vector<8x1xf32>
    %949 = arith.mulf %948, %923 : vector<8x1xf32>
    %950 = vector.broadcast %938 : vector<8x1xf32> to vector<8x4xf32>
    %951 = arith.subf %917, %950 : vector<8x4xf32>
    %952 = vector.broadcast %949 : vector<8x1xf32> to vector<8x4xf32>
    %953 = arith.mulf %951, %952 : vector<8x4xf32>
    %954 = vector.broadcast %925 : vector<8x1xf32> to vector<8x4xf32>
    %955 = arith.addf %953, %954 : vector<8x4xf32>
    %cst_463 = arith.constant 0.000000e+00 : f32
    %956 = vector.broadcast %cst_463 : f32 to vector<8x4xf32>
    %957 = arith.cmpf oge, %955, %956 : vector<8x4xf32>
    %cst_464 = arith.constant 2.000000e-01 : f32
    %958 = vector.broadcast %cst_464 : f32 to vector<8x4xf32>
    %959 = arith.mulf %958, %955 : vector<8x4xf32>
    %960 = arith.select %957, %955, %959 : vector<8x4xi1>, vector<8x4xf32>
    %961 = tpu.iota {dimensions = array<i32: 1>} : vector<1x4xi32>
    %c1_i32_465 = arith.constant 1 : i32
    %962 = vector.broadcast %c1_i32_465 : i32 to vector<1x4xi32>
    %963 = arith.cmpi sge, %961, %962 : vector<1x4xi32>
    %c1_i32_466 = arith.constant 1 : i32
    %964 = tpu.dynamic_rotate %960 by %c1_i32_466 dim 1 : vector<8x4xf32>, i32 -> vector<8x4xf32>
    %cst_467 = arith.constant 0.000000e+00 : f32
    %965 = vector.shape_cast %963 : vector<1x4xi1> to vector<1x4xi1>
    %966 = vector.broadcast %965 : vector<1x4xi1> to vector<8x4xi1>
    %967 = vector.broadcast %cst_467 : f32 to vector<8x4xf32>
    %968 = arith.select %966, %964, %967 : vector<8x4xi1>, vector<8x4xf32>
    %c3_i32_468 = arith.constant 3 : i32
    %969 = vector.broadcast %c3_i32_468 : i32 to vector<1x4xi32>
    %970 = arith.cmpi slt, %961, %969 : vector<1x4xi32>
    %c3_i32_469 = arith.constant 3 : i32
    %971 = tpu.dynamic_rotate %960 by %c3_i32_469 dim 1 : vector<8x4xf32>, i32 -> vector<8x4xf32>
    %cst_470 = arith.constant 0.000000e+00 : f32
    %972 = vector.shape_cast %970 : vector<1x4xi1> to vector<1x4xi1>
    %973 = vector.broadcast %972 : vector<1x4xi1> to vector<8x4xi1>
    %974 = vector.broadcast %cst_470 : f32 to vector<8x4xf32>
    %975 = arith.select %973, %971, %974 : vector<8x4xi1>, vector<8x4xf32>
    %976 = tpu.concatenate %968, %960, %975 in 0 : vector<8x4xf32>, vector<8x4xf32>, vector<8x4xf32> -> vector<24x4xf32>
    %cst_471 = arith.constant dense<0.000000e+00> : vector<8x4xf32>
    %977 = tpu.matmul %919, %976, %cst_471 {dimension_numbers = #tpu.dot_dimension_numbers<[1], [0], [0], [1], [0, 0, 1, 1], [], []>} : vector<8x24xf32>, vector<24x4xf32>, vector<8x4xf32> -> vector<8x4xf32>
    %978 = vector.broadcast %921 : vector<8x1xf32> to vector<8x4xf32>
    %979 = arith.addf %977, %978 : vector<8x4xf32>
    %980 = tpu.concatenate %917, %979 in 0 : vector<8x4xf32>, vector<8x4xf32> -> vector<16x4xf32>
    %cst_472 = arith.constant dense<0.000000e+00> : vector<16x2xf32>
    %981 = tpu.matmul %980, %934, %cst_472 {dimension_numbers = #tpu.dot_dimension_numbers<[1], [0], [0], [1], [0, 0, 1, 1], [], []>} : vector<16x4xf32>, vector<4x2xf32>, vector<16x2xf32> -> vector<16x2xf32>
    %982 = vector.extract_strided_slice %981 {offsets = [0, 0], sizes = [8, 2], strides = [1, 1]} : vector<16x2xf32> to vector<8x2xf32>
    %983 = vector.extract_strided_slice %981 {offsets = [8, 0], sizes = [8, 2], strides = [1, 1]} : vector<16x2xf32> to vector<8x2xf32>
    %cst_473 = arith.constant dense<0.000000e+00> : vector<8xf32>
    %984 = vector.multi_reduction <add>, %983, %cst_473 [1] : vector<8x2xf32> to vector<8xf32>
    %985 = vector.shape_cast %984 : vector<8xf32> to vector<8x1xf32>
    %cst_474 = arith.constant 5.000000e-01 : f32
    %986 = vector.broadcast %cst_474 : f32 to vector<8x1xf32>
    %987 = arith.mulf %985, %986 : vector<8x1xf32>
    %988 = arith.mulf %983, %983 : vector<8x2xf32>
    %cst_475 = arith.constant dense<0.000000e+00> : vector<8xf32>
    %989 = vector.multi_reduction <add>, %988, %cst_475 [1] : vector<8x2xf32> to vector<8xf32>
    %990 = vector.shape_cast %989 : vector<8xf32> to vector<8x1xf32>
    %cst_476 = arith.constant 5.000000e-01 : f32
    %991 = vector.broadcast %cst_476 : f32 to vector<8x1xf32>
    %992 = arith.mulf %990, %991 : vector<8x1xf32>
    %993 = arith.mulf %987, %987 : vector<8x1xf32>
    %994 = arith.subf %992, %993 : vector<8x1xf32>
    %cst_477 = arith.constant 9.99999974E-6 : f32
    %995 = vector.broadcast %cst_477 : f32 to vector<8x1xf32>
    %996 = arith.addf %994, %995 : vector<8x1xf32>
    %997 = math.rsqrt %996 : vector<8x1xf32>
    %998 = arith.mulf %997, %931 : vector<8x1xf32>
    %999 = vector.broadcast %987 : vector<8x1xf32> to vector<8x2xf32>
    %1000 = arith.subf %983, %999 : vector<8x2xf32>
    %1001 = vector.broadcast %998 : vector<8x1xf32> to vector<8x2xf32>
    %1002 = arith.mulf %1000, %1001 : vector<8x2xf32>
    %1003 = vector.broadcast %933 : vector<8x1xf32> to vector<8x2xf32>
    %1004 = arith.addf %1002, %1003 : vector<8x2xf32>
    %cst_478 = arith.constant 0.000000e+00 : f32
    %1005 = vector.broadcast %cst_478 : f32 to vector<8x2xf32>
    %1006 = arith.cmpf oge, %1004, %1005 : vector<8x2xf32>
    %cst_479 = arith.constant 2.000000e-01 : f32
    %1007 = vector.broadcast %cst_479 : f32 to vector<8x2xf32>
    %1008 = arith.mulf %1007, %1004 : vector<8x2xf32>
    %1009 = arith.select %1006, %1004, %1008 : vector<8x2xi1>, vector<8x2xf32>
    %1010 = tpu.iota {dimensions = array<i32: 1>} : vector<1x2xi32>
    %c1_i32_480 = arith.constant 1 : i32
    %1011 = vector.broadcast %c1_i32_480 : i32 to vector<1x2xi32>
    %1012 = arith.cmpi sge, %1010, %1011 : vector<1x2xi32>
    %c1_i32_481 = arith.constant 1 : i32
    %1013 = tpu.dynamic_rotate %1009 by %c1_i32_481 dim 1 : vector<8x2xf32>, i32 -> vector<8x2xf32>
    %cst_482 = arith.constant 0.000000e+00 : f32
    %1014 = vector.shape_cast %1012 : vector<1x2xi1> to vector<1x2xi1>
    %1015 = vector.broadcast %1014 : vector<1x2xi1> to vector<8x2xi1>
    %1016 = vector.broadcast %cst_482 : f32 to vector<8x2xf32>
    %1017 = arith.select %1015, %1013, %1016 : vector<8x2xi1>, vector<8x2xf32>
    %c1_i32_483 = arith.constant 1 : i32
    %1018 = vector.broadcast %c1_i32_483 : i32 to vector<1x2xi32>
    %1019 = arith.cmpi slt, %1010, %1018 : vector<1x2xi32>
    %c1_i32_484 = arith.constant 1 : i32
    %1020 = tpu.dynamic_rotate %1009 by %c1_i32_484 dim 1 : vector<8x2xf32>, i32 -> vector<8x2xf32>
    %cst_485 = arith.constant 0.000000e+00 : f32
    %1021 = vector.shape_cast %1019 : vector<1x2xi1> to vector<1x2xi1>
    %1022 = vector.broadcast %1021 : vector<1x2xi1> to vector<8x2xi1>
    %1023 = vector.broadcast %cst_485 : f32 to vector<8x2xf32>
    %1024 = arith.select %1022, %1020, %1023 : vector<8x2xi1>, vector<8x2xf32>
    %1025 = tpu.concatenate %1017, %1009, %1024 in 0 : vector<8x2xf32>, vector<8x2xf32>, vector<8x2xf32> -> vector<24x2xf32>
    %cst_486 = arith.constant dense<0.000000e+00> : vector<8x2xf32>
    %1026 = tpu.matmul %927, %1025, %cst_486 {dimension_numbers = #tpu.dot_dimension_numbers<[1], [0], [0], [1], [0, 0, 1, 1], [], []>} : vector<8x24xf32>, vector<24x2xf32>, vector<8x2xf32> -> vector<8x2xf32>
    %1027 = vector.broadcast %929 : vector<8x1xf32> to vector<8x2xf32>
    %1028 = arith.addf %1026, %1027 : vector<8x2xf32>
    %1029 = arith.addf %982, %1028 : vector<8x2xf32>
    %cst_487 = arith.constant 0.707106769 : f32
    %1030 = vector.broadcast %cst_487 : f32 to vector<8x2xf32>
    %1031 = arith.mulf %1029, %1030 : vector<8x2xf32>
    %c0_488 = arith.constant 0 : index
    %c0_489 = arith.constant 0 : index
    %1032 = vector.load %arg21[%c0_488, %c0_489] : memref<16x1xf32, #tpu.memory_space<vmem>>, vector<16x1xf32>
    %c0_490 = arith.constant 0 : index
    %c0_491 = arith.constant 0 : index
    %c0_492 = arith.constant 0 : index
    %1033 = vector.load %arg20[%c0_490, %c0_491, %c0_492] : memref<2x16x8xf32, #tpu.memory_space<vmem>>, vector<1x16x8xf32>
    %1034 = vector.shape_cast %1033 : vector<1x16x8xf32> to vector<16x8xf32>
    %1035 = vector.extract_strided_slice %1031 {offsets = [0, 0], sizes = [8, 1], strides = [1, 1]} : vector<8x2xf32> to vector<8x1xf32>
    %cst_493 = arith.constant dense<0.000000e+00> : vector<16x1xf32>
    %1036 = tpu.matmul %1034, %1035, %cst_493 {dimension_numbers = #tpu.dot_dimension_numbers<[1], [0], [0], [1], [0, 0, 1, 1], [], []>} : vector<16x8xf32>, vector<8x1xf32>, vector<16x1xf32> -> vector<16x1xf32>
    %1037 = arith.addf %1032, %1036 : vector<16x1xf32>
    %c1_494 = arith.constant 1 : index
    %c0_495 = arith.constant 0 : index
    %c0_496 = arith.constant 0 : index
    %1038 = vector.load %arg20[%c1_494, %c0_495, %c0_496] : memref<2x16x8xf32, #tpu.memory_space<vmem>>, vector<1x16x8xf32>
    %1039 = vector.shape_cast %1038 : vector<1x16x8xf32> to vector<16x8xf32>
    %1040 = vector.extract_strided_slice %1031 {offsets = [0, 1], sizes = [8, 1], strides = [1, 1]} : vector<8x2xf32> to vector<8x1xf32>
    %cst_497 = arith.constant dense<0.000000e+00> : vector<16x1xf32>
    %1041 = tpu.matmul %1039, %1040, %cst_497 {dimension_numbers = #tpu.dot_dimension_numbers<[1], [0], [0], [1], [0, 0, 1, 1], [], []>} : vector<16x8xf32>, vector<8x1xf32>, vector<16x1xf32> -> vector<16x1xf32>
    %1042 = arith.addf %1037, %1041 : vector<16x1xf32>
    %cst_498 = arith.constant 0.000000e+00 : f32
    %1043 = vector.broadcast %cst_498 : f32 to vector<16x1xf32>
    %1044 = arith.cmpf oge, %1042, %1043 : vector<16x1xf32>
    %cst_499 = arith.constant 2.000000e-01 : f32
    %1045 = vector.broadcast %cst_499 : f32 to vector<16x1xf32>
    %1046 = arith.mulf %1045, %1042 : vector<16x1xf32>
    %1047 = arith.select %1044, %1042, %1046 : vector<16x1xi1>, vector<16x1xf32>
    %c0_500 = arith.constant 0 : index
    %c0_501 = arith.constant 0 : index
    %1048 = vector.load %arg22[%c0_500, %c0_501] : memref<2x16xf32, #tpu.memory_space<vmem>>, vector<2x16xf32>
    %cst_502 = arith.constant dense<0.000000e+00> : vector<2x1xf32>
    %1049 = tpu.matmul %1048, %1047, %cst_502 {dimension_numbers = #tpu.dot_dimension_numbers<[1], [0], [0], [1], [0, 0, 1, 1], [], []>} : vector<2x16xf32>, vector<16x1xf32>, vector<2x1xf32> -> vector<2x1xf32>
    %c0_503 = arith.constant 0 : index
    %c0_504 = arith.constant 0 : index
    %1050 = vector.load %arg23[%c0_503, %c0_504] : memref<2x1xf32, #tpu.memory_space<vmem>>, vector<2x1xf32>
    %1051 = arith.addf %1049, %1050 : vector<2x1xf32>
    %c0_505 = arith.constant 0 : index
    %c0_506 = arith.constant 0 : index
    %c0_507 = arith.constant 0 : index
    %1052 = vector.load %arg24[%c0_505, %c0_506, %c0_507] : memref<1x2x1xf32, #tpu.memory_space<vmem>>, vector<1x2x1xf32>
    %1053 = vector.shape_cast %1052 : vector<1x2x1xf32> to vector<2x1xf32>
    %1054 = vector.shape_cast %1051 : vector<2x1xf32> to vector<1x2x1xf32>
    tpu.vector_store %arg24[%c0_505, %c0_506, %c0_507], %1054 {strides = array<i32>} : memref<1x2x1xf32, #tpu.memory_space<vmem>>, vector<1x2x1xf32>,
    return
  }
  func.func @transform_0(%arg0: i32) -> (i32, i32, i32) {
    %c0_i32 = arith.constant 0 : i32
    %c0_i32_0 = arith.constant 0 : i32
    %c0_i32_1 = arith.constant 0 : i32
    return %arg0, %c0_i32, %c0_i32_0 : i32, i32, i32
  }
  func.func @transform_1(%arg0: i32) -> (i32, i32) {
    %c0_i32 = arith.constant 0 : i32
    %c0_i32_0 = arith.constant 0 : i32
    %c0_i32_1 = arith.constant 0 : i32
    return %c0_i32, %c0_i32_0 : i32, i32
  }
  func.func @transform_2(%arg0: i32) -> (i32, i32) {
    %c0_i32 = arith.constant 0 : i32
    %c0_i32_0 = arith.constant 0 : i32
    %c0_i32_1 = arith.constant 0 : i32
    return %c0_i32, %c0_i32_0 : i32, i32
  }
  func.func @transform_3(%arg0: i32) -> (i32, i32) {
    %c0_i32 = arith.constant 0 : i32
    %c0_i32_0 = arith.constant 0 : i32
    %c0_i32_1 = arith.constant 0 : i32
    return %c0_i32, %c0_i32_0 : i32, i32
  }
  func.func @transform_4(%arg0: i32) -> (i32, i32) {
    %c0_i32 = arith.constant 0 : i32
    %c0_i32_0 = arith.constant 0 : i32
    %c0_i32_1 = arith.constant 0 : i32
    return %c0_i32, %c0_i32_0 : i32, i32
  }
  func.func @transform_5(%arg0: i32) -> (i32, i32) {
    %c0_i32 = arith.constant 0 : i32
    %c0_i32_0 = arith.constant 0 : i32
    %c0_i32_1 = arith.constant 0 : i32
    return %c0_i32, %c0_i32_0 : i32, i32
  }
  func.func @transform_6(%arg0: i32) -> (i32, i32) {
    %c0_i32 = arith.constant 0 : i32
    %c0_i32_0 = arith.constant 0 : i32
    %c0_i32_1 = arith.constant 0 : i32
    return %c0_i32, %c0_i32_0 : i32, i32
  }
  func.func @transform_7(%arg0: i32) -> (i32, i32) {
    %c0_i32 = arith.constant 0 : i32
    %c0_i32_0 = arith.constant 0 : i32
    %c0_i32_1 = arith.constant 0 : i32
    return %c0_i32, %c0_i32_0 : i32, i32
  }
  func.func @transform_8(%arg0: i32) -> (i32, i32) {
    %c0_i32 = arith.constant 0 : i32
    %c0_i32_0 = arith.constant 0 : i32
    %c0_i32_1 = arith.constant 0 : i32
    return %c0_i32, %c0_i32_0 : i32, i32
  }
  func.func @transform_9(%arg0: i32) -> (i32, i32) {
    %c0_i32 = arith.constant 0 : i32
    %c0_i32_0 = arith.constant 0 : i32
    %c0_i32_1 = arith.constant 0 : i32
    return %c0_i32, %c0_i32_0 : i32, i32
  }
  func.func @transform_10(%arg0: i32) -> (i32, i32) {
    %c0_i32 = arith.constant 0 : i32
    %c0_i32_0 = arith.constant 0 : i32
    %c0_i32_1 = arith.constant 0 : i32
    return %c0_i32, %c0_i32_0 : i32, i32
  }
  func.func @transform_11(%arg0: i32) -> (i32, i32, i32) {
    %c0_i32 = arith.constant 0 : i32
    %c0_i32_0 = arith.constant 0 : i32
    %c0_i32_1 = arith.constant 0 : i32
    %c0_i32_2 = arith.constant 0 : i32
    return %c0_i32, %c0_i32_0, %c0_i32_1 : i32, i32, i32
  }
  func.func @transform_12(%arg0: i32) -> (i32, i32, i32) {
    %c0_i32 = arith.constant 0 : i32
    %c0_i32_0 = arith.constant 0 : i32
    %c0_i32_1 = arith.constant 0 : i32
    %c0_i32_2 = arith.constant 0 : i32
    return %c0_i32, %c0_i32_0, %c0_i32_1 : i32, i32, i32
  }
  func.func @transform_13(%arg0: i32) -> (i32, i32, i32) {
    %c0_i32 = arith.constant 0 : i32
    %c0_i32_0 = arith.constant 0 : i32
    %c0_i32_1 = arith.constant 0 : i32
    %c0_i32_2 = arith.constant 0 : i32
    return %c0_i32, %c0_i32_0, %c0_i32_1 : i32, i32, i32
  }
  func.func @transform_14(%arg0: i32) -> (i32, i32, i32) {
    %c0_i32 = arith.constant 0 : i32
    %c0_i32_0 = arith.constant 0 : i32
    %c0_i32_1 = arith.constant 0 : i32
    %c0_i32_2 = arith.constant 0 : i32
    return %c0_i32, %c0_i32_0, %c0_i32_1 : i32, i32, i32
  }
  func.func @transform_15(%arg0: i32) -> (i32, i32, i32) {
    %c0_i32 = arith.constant 0 : i32
    %c0_i32_0 = arith.constant 0 : i32
    %c0_i32_1 = arith.constant 0 : i32
    %c0_i32_2 = arith.constant 0 : i32
    return %c0_i32, %c0_i32_0, %c0_i32_1 : i32, i32, i32
  }
  func.func @transform_16(%arg0: i32) -> (i32, i32, i32) {
    %c0_i32 = arith.constant 0 : i32
    %c0_i32_0 = arith.constant 0 : i32
    %c0_i32_1 = arith.constant 0 : i32
    %c0_i32_2 = arith.constant 0 : i32
    return %c0_i32, %c0_i32_0, %c0_i32_1 : i32, i32, i32
  }
  func.func @transform_17(%arg0: i32) -> (i32, i32, i32) {
    %c0_i32 = arith.constant 0 : i32
    %c0_i32_0 = arith.constant 0 : i32
    %c0_i32_1 = arith.constant 0 : i32
    %c0_i32_2 = arith.constant 0 : i32
    return %c0_i32, %c0_i32_0, %c0_i32_1 : i32, i32, i32
  }
  func.func @transform_18(%arg0: i32) -> (i32, i32, i32) {
    %c0_i32 = arith.constant 0 : i32
    %c0_i32_0 = arith.constant 0 : i32
    %c0_i32_1 = arith.constant 0 : i32
    %c0_i32_2 = arith.constant 0 : i32
    return %c0_i32, %c0_i32_0, %c0_i32_1 : i32, i32, i32
  }
  func.func @transform_19(%arg0: i32) -> (i32, i32, i32) {
    %c0_i32 = arith.constant 0 : i32
    %c0_i32_0 = arith.constant 0 : i32
    %c0_i32_1 = arith.constant 0 : i32
    %c0_i32_2 = arith.constant 0 : i32
    return %c0_i32, %c0_i32_0, %c0_i32_1 : i32, i32, i32
  }
  func.func @transform_20(%arg0: i32) -> (i32, i32) {
    %c0_i32 = arith.constant 0 : i32
    %c0_i32_0 = arith.constant 0 : i32
    %c0_i32_1 = arith.constant 0 : i32
    return %c0_i32, %c0_i32_0 : i32, i32
  }
  func.func @transform_21(%arg0: i32) -> (i32, i32) {
    %c0_i32 = arith.constant 0 : i32
    %c0_i32_0 = arith.constant 0 : i32
    %c0_i32_1 = arith.constant 0 : i32
    return %c0_i32, %c0_i32_0 : i32, i32
  }
  func.func @transform_22(%arg0: i32) -> (i32, i32) {
    %c0_i32 = arith.constant 0 : i32
    %c0_i32_0 = arith.constant 0 : i32
    %c0_i32_1 = arith.constant 0 : i32
    return %c0_i32, %c0_i32_0 : i32, i32
  }
  func.func @transform_23(%arg0: i32) -> (i32, i32, i32) {
    %c0_i32 = arith.constant 0 : i32
    %c0_i32_0 = arith.constant 0 : i32
    %c0_i32_1 = arith.constant 0 : i32
    return %arg0, %c0_i32, %c0_i32_0 : i32, i32, i32
  }
}

</mosaic_0001>

<llo_original>
// kernel: model_forward.1
$region0: #{model_forward.1}
  #allocation0 [shape = 'u32[]', space=smem, size = 0x4, offset = 0x4, fixed_abs, tag = 'smem constant byte address 0x4 - core index']
  #allocation1 [shape = 'u32[72,128]{1,0:T(1,128)}', space=vmem, size = 0x9000, scoped, tag = 'internal scratch']
  %s0 = inlined_call_operand.vmem [shape: f32[2,3,1024], index: 0, kind: input, shape index: {}]
  %s1 = inlined_call_operand.hbm [shape: f32[1024,512], index: 1, kind: input, shape index: {}]
  %s2 = inlined_call_operand.vmem [shape: f32[8,3], index: 2, kind: input, shape index: {}]
  %s3 = inlined_call_operand.hbm [shape: f32[3,9], index: 3, kind: input, shape index: {}]
  %s4 = inlined_call_operand.vmem [shape: f32[3,1], index: 4, kind: input, shape index: {}]
  %s5 = inlined_call_operand.vmem [shape: f32[3,1], index: 5, kind: input, shape index: {}]
  %s6 = inlined_call_operand.vmem [shape: f32[3,1], index: 6, kind: input, shape index: {}]
  %s7 = inlined_call_operand.hbm [shape: f32[8,9], index: 7, kind: input, shape index: {}]
  %s8 = inlined_call_operand.vmem [shape: f32[8,1], index: 8, kind: input, shape index: {}]
  %s9 = inlined_call_operand.vmem [shape: f32[3,1], index: 9, kind: input, shape index: {}]
  %s10 = inlined_call_operand.vmem [shape: f32[3,1], index: 10, kind: input, shape index: {}]
  %s11 = inlined_call_operand.hbm [shape: f32[8,8,24], index: 11, kind: input, shape index: {}]
  %s12 = inlined_call_operand.vmem [shape: f32[8,8,1], index: 12, kind: input, shape index: {}]
  %s13 = inlined_call_operand.vmem [shape: f32[8,8,1], index: 13, kind: input, shape index: {}]
  %s14 = inlined_call_operand.vmem [shape: f32[8,8,1], index: 14, kind: input, shape index: {}]
  %s15 = inlined_call_operand.hbm [shape: f32[8,8,24], index: 15, kind: input, shape index: {}]
  %s16 = inlined_call_operand.vmem [shape: f32[8,8,1], index: 16, kind: input, shape index: {}]
  %s17 = inlined_call_operand.vmem [shape: f32[8,8,1], index: 17, kind: input, shape index: {}]
  %s18 = inlined_call_operand.vmem [shape: f32[8,8,1], index: 18, kind: input, shape index: {}]
  %s19 = inlined_call_operand.vmem [shape: f32[2,16,8], index: 19, kind: input, shape index: {}]
  %s20 = inlined_call_operand.vmem [shape: f32[16,1], index: 20, kind: input, shape index: {}]
  %s21 = inlined_call_operand.hbm [shape: f32[2,16], index: 21, kind: input, shape index: {}]
  %s22 = inlined_call_operand.vmem [shape: f32[2,1], index: 22, kind: input, shape index: {}]
  %s23 = inlined_call_operand.vmem [shape: f32[2,2,1], index: 23, kind: output, shape index: {}]
  %s24 = sld [smem:[#allocation0]]
  $region149: #{model_forward.1} parent=0
    _
  %s26 = ssub.s32 1, %s24
  %s27 = scalar_select 0, %s26, %s24
  $region1: #{model_forward.1} parent=0
    #allocation2 [shape = 'u8[2097152]{0}', space=vmem, size = 0x200000, scoped, tag = 'input window, operand 1, single buffered']
    #allocation3 [shape = 's32[2]{0}', space=sflag, size = 0x8, scoped, tag = 'scoped memory for model_forward.1']
    #allocation4 [shape = 'u8[2048]{0}', space=vmem, size = 0x800, scoped, tag = 'input window, operand 3, single buffered']
    #allocation5 [shape = 's32[1]{0}', space=sflag, size = 0x4, scoped, tag = 'scoped memory for model_forward.1']
    #allocation6 [shape = 'u8[4096]{0}', space=vmem, size = 0x1000, scoped, tag = 'input window, operand 7, single buffered']
    #allocation7 [shape = 'u8[32768]{0}', space=vmem, size = 0x8000, scoped, tag = 'input window, operand 11, single buffered']
    #allocation8 [shape = 's32[1]{0}', space=sflag, size = 0x4, scoped, tag = 'scoped memory for model_forward.1']
    #allocation9 [shape = 'u8[32768]{0}', space=vmem, size = 0x8000, scoped, tag = 'input window, operand 15, single buffered']
    #allocation10 [shape = 'u8[1024]{0}', space=vmem, size = 0x400, scoped, tag = 'input window, operand 21, single buffered']
    #allocation11 [shape = 's32[1]{0}', space=sflag, size = 0x4, scoped, tag = 'scoped memory for model_forward.1']
    %28 = vsyncpa [#allocation3], 0
    %29 = vsyncpa [#allocation5], 0
    %30 = vsyncpa [#allocation8], 0
    %31 = vsyncpa [#allocation11], 0
    loop: start=0, step=1, limit=4
    $region2: #{model_forward.1} parent=1 // loop_pre_header
      _
    $region3: #{model_forward.1} parent=1 // loop_header
      %s33 = sphi 0, %s37
      %p34 = scmp.ge.s32.totalorder %s33, 4
      %s43 = sphi 0, %s45
      %s46 = sphi 0, %s43
      %s47 = sphi 0, %s46
      %s63 = sphi 0, %s47
      %s67 = sphi 0, %s67
      %s69 = sphi 0, %s67
      %s70 = sphi 0, %s69
      %s84 = sphi 0, %s70
      %s88 = sphi 0, %s88
      %s90 = sphi 0, %s88
      %s91 = sphi 0, %s90
      %s105 = sphi 0, %s91
      %s109 = sphi 0, %s109
      %s111 = sphi 0, %s109
      %s112 = sphi 0, %s111
      %s126 = sphi 0, %s112
      %s130 = sphi 0, %s130
      %s132 = sphi 0, %s130
      %s133 = sphi 0, %s132
      %s147 = sphi 0, %s133
      %s151 = sphi 0, %s151
      %s153 = sphi 0, %s151
      %s154 = sphi 0, %s153
      %s168 = sphi 0, %s154
      %s172 = sphi 0, %s172
      %s174 = sphi 0, %s172
      %s175 = sphi 0, %s174
      %s189 = sphi 0, %s175
      %s193 = sphi 0, %s193
      %s195 = sphi 0, %s193
      %s196 = sphi 0, %s195
      %s210 = sphi 0, %s196
      %s214 = sphi 0, %s214
      %s216 = sphi 0, %s214
      %s217 = sphi 0, %s216
      %s231 = sphi 0, %s217
      %s235 = sphi 0, %s235
      %s237 = sphi 0, %s235
      %s238 = sphi 0, %s237
      %s252 = sphi 0, %s238
      %s256 = sphi 0, %s256
      %s258 = sphi 0, %s256
      %s259 = sphi 0, %s258
      %s273 = sphi 0, %s259
      %s277 = sphi 0, %s277
      %s279 = sphi 0, %s277
      %s280 = sphi 0, %s279
      %s294 = sphi 0, %s280
      %s298 = sphi 0, %s298
      %s300 = sphi 0, %s298
      %s301 = sphi 0, %s300
      %s315 = sphi 0, %s301
      %s319 = sphi 0, %s319
      %s321 = sphi 0, %s319
      %s322 = sphi 0, %s321
      %s336 = sphi 0, %s322
      %s340 = sphi 0, %s340
      %s342 = sphi 0, %s340
      %s343 = sphi 0, %s342
      %s357 = sphi 0, %s343
      %s361 = sphi 0, %s361
      %s363 = sphi 0, %s361
      %s364 = sphi 0, %s363
      %s378 = sphi 0, %s364
      %s382 = sphi 0, %s382
      %s384 = sphi 0, %s382
      %s385 = sphi 0, %s384
      %s399 = sphi 0, %s385
      %s403 = sphi 0, %s403
      %s405 = sphi 0, %s403
      %s406 = sphi 0, %s405
      %s420 = sphi 0, %s406
      %s424 = sphi 0, %s424
      %s426 = sphi 0, %s424
      %s427 = sphi 0, %s426
      %s441 = sphi 0, %s427
      %s445 = sphi 0, %s445
      %s447 = sphi 0, %s445
      %s448 = sphi 0, %s447
      %s462 = sphi 0, %s448
      %s466 = sphi 0, %s466
      %s468 = sphi 0, %s466
      %s469 = sphi 0, %s468
      %s483 = sphi 0, %s469
      %s487 = sphi 0, %s487
      %s489 = sphi 0, %s487
      %s490 = sphi 0, %s489
      %s504 = sphi 0, %s490
      %s508 = sphi 0, %s508
      %s510 = sphi 0, %s508
      %s511 = sphi 0, %s510
      %s525 = sphi 0, %s511
      %s531 = sphi 0, %s533
      %s534 = sphi 0, %s531
      %s535 = sphi 0, %s534
      %s551 = sphi 0, %s535
    $region4: #{model_forward.1} parent=1 // loop_header_branch
      %36 = sbr.rel (%p34) target = $region8
    $region5: #{model_forward.1} parent=1 // loop_body
      %s38 = ssub.s32 %s33, 1
      %s39 = ssub.s32 %s33, 2
      %s40 = sadd.s32 %s33, 1
      %s41 = ssub.s32 %s33, %s40
      %p42 = scmp.eq.s32.totalorder %s41, 0
      %s44 = sadd.s32 %s43, 1
      %s45 = scalar_select %p42, %s43, %s44
      %p48 = pneg %p42
      %p49 = scmp.eq.s32.totalorder %s33, 1
      %p50 = por %p48, %p49
      %p51 = scmp.ne.s32.totalorder %s43, %s46
      %p52 = scmp.eq.s32.totalorder %s33, 0
      %p53 = por %p51, %p52
      %p54 = scmp.ne.s32.totalorder %s43, %s46
      %p55 = scmp.eq.s32.totalorder %s38, 1
      %p56 = por %p54, %p55
      %p57 = scmp.ne.s32.totalorder %s46, %s47
      %p58 = scmp.eq.s32.totalorder %s38, 0
      %p59 = por %p57, %p58
      %p60 = scmp.ne.s32.totalorder %s46, %s47
      %p61 = scmp.eq.s32.totalorder %s39, 1
      %p62 = por %p60, %p61
      %p64 = scmp.ne.s32.totalorder %s47, %s63
      %p65 = scmp.eq.s32.totalorder %s39, 0
      %p66 = por %p64, %p65
      %s68 = sadd.s32 %s67, 1
      %p71 = scmp.eq.s32.totalorder %s33, 1
      %p72 = scmp.ne.s32.totalorder %s67, %s69
      %p73 = scmp.eq.s32.totalorder %s33, 0
      %p74 = por %p72, %p73
      %p75 = scmp.ne.s32.totalorder %s67, %s69
      %p76 = scmp.eq.s32.totalorder %s38, 1
      %p77 = por %p75, %p76
      %p78 = scmp.ne.s32.totalorder %s69, %s70
      %p79 = scmp.eq.s32.totalorder %s38, 0
      %p80 = por %p78, %p79
      %p81 = scmp.ne.s32.totalorder %s69, %s70
      %p82 = scmp.eq.s32.totalorder %s39, 1
      %p83 = por %p81, %p82
      %p85 = scmp.ne.s32.totalorder %s70, %s84
      %p86 = scmp.eq.s32.totalorder %s39, 0
      %p87 = por %p85, %p86
      %s89 = sadd.s32 %s88, 1
      %p92 = scmp.eq.s32.totalorder %s33, 1
      %p93 = scmp.ne.s32.totalorder %s88, %s90
      %p94 = scmp.eq.s32.totalorder %s33, 0
      %p95 = por %p93, %p94
      %p96 = scmp.ne.s32.totalorder %s88, %s90
      %p97 = scmp.eq.s32.totalorder %s38, 1
      %p98 = por %p96, %p97
      %p99 = scmp.ne.s32.totalorder %s90, %s91
      %p100 = scmp.eq.s32.totalorder %s38, 0
      %p101 = por %p99, %p100
      %p102 = scmp.ne.s32.totalorder %s90, %s91
      %p103 = scmp.eq.s32.totalorder %s39, 1
      %p104 = por %p102, %p103
      %p106 = scmp.ne.s32.totalorder %s91, %s105
      %p107 = scmp.eq.s32.totalorder %s39, 0
      %p108 = por %p106, %p107
      %s110 = sadd.s32 %s109, 1
      %p113 = scmp.eq.s32.totalorder %s33, 1
      %p114 = scmp.ne.s32.totalorder %s109, %s111
      %p115 = scmp.eq.s32.totalorder %s33, 0
      %p116 = por %p114, %p115
      %p117 = scmp.ne.s32.totalorder %s109, %s111
      %p118 = scmp.eq.s32.totalorder %s38, 1
      %p119 = por %p117, %p118
      %p120 = scmp.ne.s32.totalorder %s111, %s112
      %p121 = scmp.eq.s32.totalorder %s38, 0
      %p122 = por %p120, %p121
      %p123 = scmp.ne.s32.totalorder %s111, %s112
      %p124 = scmp.eq.s32.totalorder %s39, 1
      %p125 = por %p123, %p124
      %p127 = scmp.ne.s32.totalorder %s112, %s126
      %p128 = scmp.eq.s32.totalorder %s39, 0
      %p129 = por %p127, %p128
      %s131 = sadd.s32 %s130, 1
      %p134 = scmp.eq.s32.totalorder %s33, 1
      %p135 = scmp.ne.s32.totalorder %s130, %s132
      %p136 = scmp.eq.s32.totalorder %s33, 0
      %p137 = por %p135, %p136
      %p138 = scmp.ne.s32.totalorder %s130, %s132
      %p139 = scmp.eq.s32.totalorder %s38, 1
      %p140 = por %p138, %p139
      %p141 = scmp.ne.s32.totalorder %s132, %s133
      %p142 = scmp.eq.s32.totalorder %s38, 0
      %p143 = por %p141, %p142
      %p144 = scmp.ne.s32.totalorder %s132, %s133
      %p145 = scmp.eq.s32.totalorder %s39, 1
      %p146 = por %p144, %p145
      %p148 = scmp.ne.s32.totalorder %s133, %s147
      %p149 = scmp.eq.s32.totalorder %s39, 0
      %p150 = por %p148, %p149
      %s152 = sadd.s32 %s151, 1
      %p155 = scmp.eq.s32.totalorder %s33, 1
      %p156 = scmp.ne.s32.totalorder %s151, %s153
      %p157 = scmp.eq.s32.totalorder %s33, 0
      %p158 = por %p156, %p157
      %p159 = scmp.ne.s32.totalorder %s151, %s153
      %p160 = scmp.eq.s32.totalorder %s38, 1
      %p161 = por %p159, %p160
      %p162 = scmp.ne.s32.totalorder %s153, %s154
      %p163 = scmp.eq.s32.totalorder %s38, 0
      %p164 = por %p162, %p163
      %p165 = scmp.ne.s32.totalorder %s153, %s154
      %p166 = scmp.eq.s32.totalorder %s39, 1
      %p167 = por %p165, %p166
      %p169 = scmp.ne.s32.totalorder %s154, %s168
      %p170 = scmp.eq.s32.totalorder %s39, 0
      %p171 = por %p169, %p170
      %s173 = sadd.s32 %s172, 1
      %p176 = scmp.eq.s32.totalorder %s33, 1
      %p177 = scmp.ne.s32.totalorder %s172, %s174
      %p178 = scmp.eq.s32.totalorder %s33, 0
      %p179 = por %p177, %p178
      %p180 = scmp.ne.s32.totalorder %s172, %s174
      %p181 = scmp.eq.s32.totalorder %s38, 1
      %p182 = por %p180, %p181
      %p183 = scmp.ne.s32.totalorder %s174, %s175
      %p184 = scmp.eq.s32.totalorder %s38, 0
      %p185 = por %p183, %p184
      %p186 = scmp.ne.s32.totalorder %s174, %s175
      %p187 = scmp.eq.s32.totalorder %s39, 1
      %p188 = por %p186, %p187
      %p190 = scmp.ne.s32.totalorder %s175, %s189
      %p191 = scmp.eq.s32.totalorder %s39, 0
      %p192 = por %p190, %p191
      %s194 = sadd.s32 %s193, 1
      %p197 = scmp.eq.s32.totalorder %s33, 1
      %p198 = scmp.ne.s32.totalorder %s193, %s195
      %p199 = scmp.eq.s32.totalorder %s33, 0
      %p200 = por %p198, %p199
      %p201 = scmp.ne.s32.totalorder %s193, %s195
      %p202 = scmp.eq.s32.totalorder %s38, 1
      %p203 = por %p201, %p202
      %p204 = scmp.ne.s32.totalorder %s195, %s196
      %p205 = scmp.eq.s32.totalorder %s38, 0
      %p206 = por %p204, %p205
      %p207 = scmp.ne.s32.totalorder %s195, %s196
      %p208 = scmp.eq.s32.totalorder %s39, 1
      %p209 = por %p207, %p208
      %p211 = scmp.ne.s32.totalorder %s196, %s210
      %p212 = scmp.eq.s32.totalorder %s39, 0
      %p213 = por %p211, %p212
      %s215 = sadd.s32 %s214, 1
      %p218 = scmp.eq.s32.totalorder %s33, 1
      %p219 = scmp.ne.s32.totalorder %s214, %s216
      %p220 = scmp.eq.s32.totalorder %s33, 0
      %p221 = por %p219, %p220
      %p222 = scmp.ne.s32.totalorder %s214, %s216
      %p223 = scmp.eq.s32.totalorder %s38, 1
      %p224 = por %p222, %p223
      %p225 = scmp.ne.s32.totalorder %s216, %s217
      %p226 = scmp.eq.s32.totalorder %s38, 0
      %p227 = por %p225, %p226
      %p228 = scmp.ne.s32.totalorder %s216, %s217
      %p229 = scmp.eq.s32.totalorder %s39, 1
      %p230 = por %p228, %p229
      %p232 = scmp.ne.s32.totalorder %s217, %s231
      %p233 = scmp.eq.s32.totalorder %s39, 0
      %p234 = por %p232, %p233
      %s236 = sadd.s32 %s235, 1
      %p239 = scmp.eq.s32.totalorder %s33, 1
      %p240 = scmp.ne.s32.totalorder %s235, %s237
      %p241 = scmp.eq.s32.totalorder %s33, 0
      %p242 = por %p240, %p241
      %p243 = scmp.ne.s32.totalorder %s235, %s237
      %p244 = scmp.eq.s32.totalorder %s38, 1
      %p245 = por %p243, %p244
      %p246 = scmp.ne.s32.totalorder %s237, %s238
      %p247 = scmp.eq.s32.totalorder %s38, 0
      %p248 = por %p246, %p247
      %p249 = scmp.ne.s32.totalorder %s237, %s238
      %p250 = scmp.eq.s32.totalorder %s39, 1
      %p251 = por %p249, %p250
      %p253 = scmp.ne.s32.totalorder %s238, %s252
      %p254 = scmp.eq.s32.totalorder %s39, 0
      %p255 = por %p253, %p254
      %s257 = sadd.s32 %s256, 1
      %p260 = scmp.eq.s32.totalorder %s33, 1
      %p261 = scmp.ne.s32.totalorder %s256, %s258
      %p262 = scmp.eq.s32.totalorder %s33, 0
      %p263 = por %p261, %p262
      %p264 = scmp.ne.s32.totalorder %s256, %s258
      %p265 = scmp.eq.s32.totalorder %s38, 1
      %p266 = por %p264, %p265
      %p267 = scmp.ne.s32.totalorder %s258, %s259
      %p268 = scmp.eq.s32.totalorder %s38, 0
      %p269 = por %p267, %p268
      %p270 = scmp.ne.s32.totalorder %s258, %s259
      %p271 = scmp.eq.s32.totalorder %s39, 1
      %p272 = por %p270, %p271
      %p274 = scmp.ne.s32.totalorder %s259, %s273
      %p275 = scmp.eq.s32.totalorder %s39, 0
      %p276 = por %p274, %p275
      %s278 = sadd.s32 %s277, 1
      %p281 = scmp.eq.s32.totalorder %s33, 1
      %p282 = scmp.ne.s32.totalorder %s277, %s279
      %p283 = scmp.eq.s32.totalorder %s33, 0
      %p284 = por %p282, %p283
      %p285 = scmp.ne.s32.totalorder %s277, %s279
      %p286 = scmp.eq.s32.totalorder %s38, 1
      %p287 = por %p285, %p286
      %p288 = scmp.ne.s32.totalorder %s279, %s280
      %p289 = scmp.eq.s32.totalorder %s38, 0
      %p290 = por %p288, %p289
      %p291 = scmp.ne.s32.totalorder %s279, %s280
      %p292 = scmp.eq.s32.totalorder %s39, 1
      %p293 = por %p291, %p292
      %p295 = scmp.ne.s32.totalorder %s280, %s294
      %p296 = scmp.eq.s32.totalorder %s39, 0
      %p297 = por %p295, %p296
      %s299 = sadd.s32 %s298, 1
      %p302 = scmp.eq.s32.totalorder %s33, 1
      %p303 = scmp.ne.s32.totalorder %s298, %s300
      %p304 = scmp.eq.s32.totalorder %s33, 0
      %p305 = por %p303, %p304
      %p306 = scmp.ne.s32.totalorder %s298, %s300
      %p307 = scmp.eq.s32.totalorder %s38, 1
      %p308 = por %p306, %p307
      %p309 = scmp.ne.s32.totalorder %s300, %s301
      %p310 = scmp.eq.s32.totalorder %s38, 0
      %p311 = por %p309, %p310
      %p312 = scmp.ne.s32.totalorder %s300, %s301
      %p313 = scmp.eq.s32.totalorder %s39, 1
      %p314 = por %p312, %p313
      %p316 = scmp.ne.s32.totalorder %s301, %s315
      %p317 = scmp.eq.s32.totalorder %s39, 0
      %p318 = por %p316, %p317
      %s320 = sadd.s32 %s319, 1
      %p323 = scmp.eq.s32.totalorder %s33, 1
      %p324 = scmp.ne.s32.totalorder %s319, %s321
      %p325 = scmp.eq.s32.totalorder %s33, 0
      %p326 = por %p324, %p325
      %p327 = scmp.ne.s32.totalorder %s319, %s321
      %p328 = scmp.eq.s32.totalorder %s38, 1
      %p329 = por %p327, %p328
      %p330 = scmp.ne.s32.totalorder %s321, %s322
      %p331 = scmp.eq.s32.totalorder %s38, 0
      %p332 = por %p330, %p331
      %p333 = scmp.ne.s32.totalorder %s321, %s322
      %p334 = scmp.eq.s32.totalorder %s39, 1
      %p335 = por %p333, %p334
      %p337 = scmp.ne.s32.totalorder %s322, %s336
      %p338 = scmp.eq.s32.totalorder %s39, 0
      %p339 = por %p337, %p338
      %s341 = sadd.s32 %s340, 1
      %p344 = scmp.eq.s32.totalorder %s33, 1
      %p345 = scmp.ne.s32.totalorder %s340, %s342
      %p346 = scmp.eq.s32.totalorder %s33, 0
      %p347 = por %p345, %p346
      %p348 = scmp.ne.s32.totalorder %s340, %s342
      %p349 = scmp.eq.s32.totalorder %s38, 1
      %p350 = por %p348, %p349
      %p351 = scmp.ne.s32.totalorder %s342, %s343
      %p352 = scmp.eq.s32.totalorder %s38, 0
      %p353 = por %p351, %p352
      %p354 = scmp.ne.s32.totalorder %s342, %s343
      %p355 = scmp.eq.s32.totalorder %s39, 1
      %p356 = por %p354, %p355
      %p358 = scmp.ne.s32.totalorder %s343, %s357
      %p359 = scmp.eq.s32.totalorder %s39, 0
      %p360 = por %p358, %p359
      %s362 = sadd.s32 %s361, 1
      %p365 = scmp.eq.s32.totalorder %s33, 1
      %p366 = scmp.ne.s32.totalorder %s361, %s363
      %p367 = scmp.eq.s32.totalorder %s33, 0
      %p368 = por %p366, %p367
      %p369 = scmp.ne.s32.totalorder %s361, %s363
      %p370 = scmp.eq.s32.totalorder %s38, 1
      %p371 = por %p369, %p370
      %p372 = scmp.ne.s32.totalorder %s363, %s364
      %p373 = scmp.eq.s32.totalorder %s38, 0
      %p374 = por %p372, %p373
      %p375 = scmp.ne.s32.totalorder %s363, %s364
      %p376 = scmp.eq.s32.totalorder %s39, 1
      %p377 = por %p375, %p376
      %p379 = scmp.ne.s32.totalorder %s364, %s378
      %p380 = scmp.eq.s32.totalorder %s39, 0
      %p381 = por %p379, %p380
      %s383 = sadd.s32 %s382, 1
      %p386 = scmp.eq.s32.totalorder %s33, 1
      %p387 = scmp.ne.s32.totalorder %s382, %s384
      %p388 = scmp.eq.s32.totalorder %s33, 0
      %p389 = por %p387, %p388
      %p390 = scmp.ne.s32.totalorder %s382, %s384
      %p391 = scmp.eq.s32.totalorder %s38, 1
      %p392 = por %p390, %p391
      %p393 = scmp.ne.s32.totalorder %s384, %s385
      %p394 = scmp.eq.s32.totalorder %s38, 0
      %p395 = por %p393, %p394
      %p396 = scmp.ne.s32.totalorder %s384, %s385
      %p397 = scmp.eq.s32.totalorder %s39, 1
      %p398 = por %p396, %p397
      %p400 = scmp.ne.s32.totalorder %s385, %s399
      %p401 = scmp.eq.s32.totalorder %s39, 0
      %p402 = por %p400, %p401
      %s404 = sadd.s32 %s403, 1
      %p407 = scmp.eq.s32.totalorder %s33, 1
      %p408 = scmp.ne.s32.totalorder %s403, %s405
      %p409 = scmp.eq.s32.totalorder %s33, 0
      %p410 = por %p408, %p409
      %p411 = scmp.ne.s32.totalorder %s403, %s405
      %p412 = scmp.eq.s32.totalorder %s38, 1
      %p413 = por %p411, %p412
      %p414 = scmp.ne.s32.totalorder %s405, %s406
      %p415 = scmp.eq.s32.totalorder %s38, 0
      %p416 = por %p414, %p415
      %p417 = scmp.ne.s32.totalorder %s405, %s406
      %p418 = scmp.eq.s32.totalorder %s39, 1
      %p419 = por %p417, %p418
      %p421 = scmp.ne.s32.totalorder %s406, %s420
      %p422 = scmp.eq.s32.totalorder %s39, 0
      %p423 = por %p421, %p422
      %s425 = sadd.s32 %s424, 1
      %p428 = scmp.eq.s32.totalorder %s33, 1
      %p429 = scmp.ne.s32.totalorder %s424, %s426
      %p430 = scmp.eq.s32.totalorder %s33, 0
      %p431 = por %p429, %p430
      %p432 = scmp.ne.s32.totalorder %s424, %s426
      %p433 = scmp.eq.s32.totalorder %s38, 1
      %p434 = por %p432, %p433
      %p435 = scmp.ne.s32.totalorder %s426, %s427
      %p436 = scmp.eq.s32.totalorder %s38, 0
      %p437 = por %p435, %p436
      %p438 = scmp.ne.s32.totalorder %s426, %s427
      %p439 = scmp.eq.s32.totalorder %s39, 1
      %p440 = por %p438, %p439
      %p442 = scmp.ne.s32.totalorder %s427, %s441
      %p443 = scmp.eq.s32.totalorder %s39, 0
      %p444 = por %p442, %p443
      %s446 = sadd.s32 %s445, 1
      %p449 = scmp.eq.s32.totalorder %s33, 1
      %p450 = scmp.ne.s32.totalorder %s445, %s447
      %p451 = scmp.eq.s32.totalorder %s33, 0
      %p452 = por %p450, %p451
      %p453 = scmp.ne.s32.totalorder %s445, %s447
      %p454 = scmp.eq.s32.totalorder %s38, 1
      %p455 = por %p453, %p454
      %p456 = scmp.ne.s32.totalorder %s447, %s448
      %p457 = scmp.eq.s32.totalorder %s38, 0
      %p458 = por %p456, %p457
      %p459 = scmp.ne.s32.totalorder %s447, %s448
      %p460 = scmp.eq.s32.totalorder %s39, 1
      %p461 = por %p459, %p460
      %p463 = scmp.ne.s32.totalorder %s448, %s462
      %p464 = scmp.eq.s32.totalorder %s39, 0
      %p465 = por %p463, %p464
      %s467 = sadd.s32 %s466, 1
      %p470 = scmp.eq.s32.totalorder %s33, 1
      %p471 = scmp.ne.s32.totalorder %s466, %s468
      %p472 = scmp.eq.s32.totalorder %s33, 0
      %p473 = por %p471, %p472
      %p474 = scmp.ne.s32.totalorder %s466, %s468
      %p475 = scmp.eq.s32.totalorder %s38, 1
      %p476 = por %p474, %p475
      %p477 = scmp.ne.s32.totalorder %s468, %s469
      %p478 = scmp.eq.s32.totalorder %s38, 0
      %p479 = por %p477, %p478
      %p480 = scmp.ne.s32.totalorder %s468, %s469
      %p481 = scmp.eq.s32.totalorder %s39, 1
      %p482 = por %p480, %p481
      %p484 = scmp.ne.s32.totalorder %s469, %s483
      %p485 = scmp.eq.s32.totalorder %s39, 0
      %p486 = por %p484, %p485
      %s488 = sadd.s32 %s487, 1
      %p491 = scmp.eq.s32.totalorder %s33, 1
      %p492 = scmp.ne.s32.totalorder %s487, %s489
      %p493 = scmp.eq.s32.totalorder %s33, 0
      %p494 = por %p492, %p493
      %p495 = scmp.ne.s32.totalorder %s487, %s489
      %p496 = scmp.eq.s32.totalorder %s38, 1
      %p497 = por %p495, %p496
      %p498 = scmp.ne.s32.totalorder %s489, %s490
      %p499 = scmp.eq.s32.totalorder %s38, 0
      %p500 = por %p498, %p499
      %p501 = scmp.ne.s32.totalorder %s489, %s490
      %p502 = scmp.eq.s32.totalorder %s39, 1
      %p503 = por %p501, %p502
      %p505 = scmp.ne.s32.totalorder %s490, %s504
      %p506 = scmp.eq.s32.totalorder %s39, 0
      %p507 = por %p505, %p506
      %s509 = sadd.s32 %s508, 1
      %p512 = scmp.eq.s32.totalorder %s33, 1
      %p513 = scmp.ne.s32.totalorder %s508, %s510
      %p514 = scmp.eq.s32.totalorder %s33, 0
      %p515 = por %p513, %p514
      %p516 = scmp.ne.s32.totalorder %s508, %s510
      %p517 = scmp.eq.s32.totalorder %s38, 1
      %p518 = por %p516, %p517
      %p519 = scmp.ne.s32.totalorder %s510, %s511
      %p520 = scmp.eq.s32.totalorder %s38, 0
      %p521 = por %p519, %p520
      %p522 = scmp.ne.s32.totalorder %s510, %s511
      %p523 = scmp.eq.s32.totalorder %s39, 1
      %p524 = por %p522, %p523
      %p526 = scmp.ne.s32.totalorder %s511, %s525
      %p527 = scmp.eq.s32.totalorder %s39, 0
      %p528 = por %p526, %p527
      %s529 = ssub.s32 %s33, %s40
      %p530 = scmp.eq.s32.totalorder %s529, 0
      %s532 = sadd.s32 %s531, 1
      %s533 = scalar_select %p530, %s531, %s532
      %p536 = pneg %p530
      %p537 = scmp.eq.s32.totalorder %s33, 1
      %p538 = por %p536, %p537
      %p539 = scmp.ne.s32.totalorder %s531, %s534
      %p540 = scmp.eq.s32.totalorder %s33, 0
      %p541 = por %p539, %p540
      %p542 = scmp.ne.s32.totalorder %s531, %s534
      %p543 = scmp.eq.s32.totalorder %s38, 1
      %p544 = por %p542, %p543
      %p545 = scmp.ne.s32.totalorder %s534, %s535
      %p546 = scmp.eq.s32.totalorder %s38, 0
      %p547 = por %p545, %p546
      %p548 = scmp.ne.s32.totalorder %s534, %s535
      %p549 = scmp.eq.s32.totalorder %s39, 1
      %p550 = por %p548, %p549
      %p552 = scmp.ne.s32.totalorder %s535, %s551
      %p553 = scmp.eq.s32.totalorder %s39, 0
      %p554 = por %p552, %p553
      %p555 = scmp.le.s32.totalorder 1, %s33
      %p556 = scmp.lt.s32.totalorder %s33, 3
      %p557 = pnand %p555, %p556
      %p558 = pneg %p557
      // Predicated region
      $region9: #{model_forward.1} parent=5 // pred_check
        _
      $region10: #{model_forward.1} parent=5 // pred_check_branch
        %560 = sbr.rel (%p557) target = $region12
      $region11: #{model_forward.1} parent=5 // pred_region
        %s561 = ssub.s32 %s33, 1
        // Predicated region
        $region13: #{model_forward.1} parent=11 // pred_check
          %p562 = pneg %p80
        $region14: #{model_forward.1} parent=11 // pred_check_branch
          %564 = sbr.rel (%p562) target = $region16
        $region15: #{model_forward.1} parent=11 // pred_region
          %566 = vsyncadd [#allocation3], 0
          %s567 = sshll.u32 %s1, 4
          %s568 = int_to_ptr.hbm [resolvable:$true] %s567
          %s569 = sshll.u32 [#allocation2], 4
          %s570 = int_to_ptr.vmem [resolvable:$true] %s569
          %575 = dma.hbm_to_vmem [thread:$0]  %s568, 65536, %s570, [#allocation3], 512, 512, 32
        $region16: #{model_forward.1} parent=11 // pred_fallthru
          _
        // Predicated region
        $region17: #{model_forward.1} parent=11 // pred_check
          %p576 = pneg %p101
        $region18: #{model_forward.1} parent=11 // pred_check_branch
          %578 = sbr.rel (%p576) target = $region20
        $region19: #{model_forward.1} parent=11 // pred_region
          _
        $region20: #{model_forward.1} parent=11 // pred_fallthru
          _
        // Predicated region
        $region21: #{model_forward.1} parent=11 // pred_check
          %p579 = pneg %p122
        $region22: #{model_forward.1} parent=11 // pred_check_branch
          %581 = sbr.rel (%p579) target = $region24
        $region23: #{model_forward.1} parent=11 // pred_region
          %583 = vsyncadd [#allocation5], 0
          %s585 = sshll.u32 %s3, 4
          %s586 = int_to_ptr.hbm [resolvable:$true] %s585
          %s587 = sshll.u32 [#allocation4], 4
          %s588 = int_to_ptr.vmem [resolvable:$true] %s587
          %590 = dma.hbm_to_vmem [thread:$0]  %s586, 64, %s588, [#allocation5]
        $region24: #{model_forward.1} parent=11 // pred_fallthru
          _
        // Predicated region
        $region25: #{model_forward.1} parent=11 // pred_check
          %p591 = pneg %p143
        $region26: #{model_forward.1} parent=11 // pred_check_branch
          %593 = sbr.rel (%p591) target = $region28
        $region27: #{model_forward.1} parent=11 // pred_region
          _
        $region28: #{model_forward.1} parent=11 // pred_fallthru
          _
        // Predicated region
        $region29: #{model_forward.1} parent=11 // pred_check
          %p594 = pneg %p164
        $region30: #{model_forward.1} parent=11 // pred_check_branch
          %596 = sbr.rel (%p594) target = $region32
        $region31: #{model_forward.1} parent=11 // pred_region
          _
        $region32: #{model_forward.1} parent=11 // pred_fallthru
          _
        // Predicated region
        $region33: #{model_forward.1} parent=11 // pred_check
          %p597 = pneg %p185
        $region34: #{model_forward.1} parent=11 // pred_check_branch
          %599 = sbr.rel (%p597) target = $region36
        $region35: #{model_forward.1} parent=11 // pred_region
          _
        $region36: #{model_forward.1} parent=11 // pred_fallthru
          _
        // Predicated region
        $region37: #{model_forward.1} parent=11 // pred_check
          %p600 = pneg %p206
        $region38: #{model_forward.1} parent=11 // pred_check_branch
          %602 = sbr.rel (%p600) target = $region40
        $region39: #{model_forward.1} parent=11 // pred_region
          %604 = vsyncadd [#allocation5], 0
          %s606 = sshll.u32 %s7, 4
          %s607 = int_to_ptr.hbm [resolvable:$true] %s606
          %s608 = sshll.u32 [#allocation6], 4
          %s609 = int_to_ptr.vmem [resolvable:$true] %s608
          %611 = dma.hbm_to_vmem [thread:$0]  %s607, 128, %s609, [#allocation5]
        $region40: #{model_forward.1} parent=11 // pred_fallthru
          _
        // Predicated region
        $region41: #{model_forward.1} parent=11 // pred_check
          %p612 = pneg %p227
        $region42: #{model_forward.1} parent=11 // pred_check_branch
          %614 = sbr.rel (%p612) target = $region44
        $region43: #{model_forward.1} parent=11 // pred_region
          _
        $region44: #{model_forward.1} parent=11 // pred_fallthru
          _
        // Predicated region
        $region45: #{model_forward.1} parent=11 // pred_check
          %p615 = pneg %p248
        $region46: #{model_forward.1} parent=11 // pred_check_branch
          %617 = sbr.rel (%p615) target = $region48
        $region47: #{model_forward.1} parent=11 // pred_region
          _
        $region48: #{model_forward.1} parent=11 // pred_fallthru
          _
        // Predicated region
        $region49: #{model_forward.1} parent=11 // pred_check
          %p618 = pneg %p269
        $region50: #{model_forward.1} parent=11 // pred_check_branch
          %620 = sbr.rel (%p618) target = $region52
        $region51: #{model_forward.1} parent=11 // pred_region
          _
        $region52: #{model_forward.1} parent=11 // pred_fallthru
          _
        // Predicated region
        $region53: #{model_forward.1} parent=11 // pred_check
          %p621 = pneg %p290
        $region54: #{model_forward.1} parent=11 // pred_check_branch
          %623 = sbr.rel (%p621) target = $region56
        $region55: #{model_forward.1} parent=11 // pred_region
          %625 = vsyncadd [#allocation8], 0
          %s626 = sshll.u32 %s11, 4
          %s627 = int_to_ptr.hbm [resolvable:$true] %s626
          %s628 = sshll.u32 [#allocation7], 4
          %s629 = int_to_ptr.vmem [resolvable:$true] %s628
          %634 = dma.hbm_to_vmem [thread:$0]  %s627, 1024, %s629, [#allocation8], 128, 128, 8
        $region56: #{model_forward.1} parent=11 // pred_fallthru
          _
        // Predicated region
        $region57: #{model_forward.1} parent=11 // pred_check
          %p635 = pneg %p311
        $region58: #{model_forward.1} parent=11 // pred_check_branch
          %637 = sbr.rel (%p635) target = $region60
        $region59: #{model_forward.1} parent=11 // pred_region
          _
        $region60: #{model_forward.1} parent=11 // pred_fallthru
          _
        // Predicated region
        $region61: #{model_forward.1} parent=11 // pred_check
          %p638 = pneg %p332
        $region62: #{model_forward.1} parent=11 // pred_check_branch
          %640 = sbr.rel (%p638) target = $region64
        $region63: #{model_forward.1} parent=11 // pred_region
          _
        $region64: #{model_forward.1} parent=11 // pred_fallthru
          _
        // Predicated region
        $region65: #{model_forward.1} parent=11 // pred_check
          %p641 = pneg %p353
        $region66: #{model_forward.1} parent=11 // pred_check_branch
          %643 = sbr.rel (%p641) target = $region68
        $region67: #{model_forward.1} parent=11 // pred_region
          _
        $region68: #{model_forward.1} parent=11 // pred_fallthru
          _
        // Predicated region
        $region69: #{model_forward.1} parent=11 // pred_check
          %p644 = pneg %p374
        $region70: #{model_forward.1} parent=11 // pred_check_branch
          %646 = sbr.rel (%p644) target = $region72
        $region71: #{model_forward.1} parent=11 // pred_region
          %648 = vsyncadd [#allocation8], 0
          %s649 = sshll.u32 %s15, 4
          %s650 = int_to_ptr.hbm [resolvable:$true] %s649
          %s651 = sshll.u32 [#allocation9], 4
          %s652 = int_to_ptr.vmem [resolvable:$true] %s651
          %657 = dma.hbm_to_vmem [thread:$0]  %s650, 1024, %s652, [#allocation8], 128, 128, 8
        $region72: #{model_forward.1} parent=11 // pred_fallthru
          _
        // Predicated region
        $region73: #{model_forward.1} parent=11 // pred_check
          %p658 = pneg %p395
        $region74: #{model_forward.1} parent=11 // pred_check_branch
          %660 = sbr.rel (%p658) target = $region76
        $region75: #{model_forward.1} parent=11 // pred_region
          _
        $region76: #{model_forward.1} parent=11 // pred_fallthru
          _
        // Predicated region
        $region77: #{model_forward.1} parent=11 // pred_check
          %p661 = pneg %p416
        $region78: #{model_forward.1} parent=11 // pred_check_branch
          %663 = sbr.rel (%p661) target = $region80
        $region79: #{model_forward.1} parent=11 // pred_region
          _
        $region80: #{model_forward.1} parent=11 // pred_fallthru
          _
        // Predicated region
        $region81: #{model_forward.1} parent=11 // pred_check
          %p664 = pneg %p437
        $region82: #{model_forward.1} parent=11 // pred_check_branch
          %666 = sbr.rel (%p664) target = $region84
        $region83: #{model_forward.1} parent=11 // pred_region
          _
        $region84: #{model_forward.1} parent=11 // pred_fallthru
          _
        // Predicated region
        $region85: #{model_forward.1} parent=11 // pred_check
          %p667 = pneg %p458
        $region86: #{model_forward.1} parent=11 // pred_check_branch
          %669 = sbr.rel (%p667) target = $region88
        $region87: #{model_forward.1} parent=11 // pred_region
          _
        $region88: #{model_forward.1} parent=11 // pred_fallthru
          _
        // Predicated region
        $region89: #{model_forward.1} parent=11 // pred_check
          %p670 = pneg %p479
        $region90: #{model_forward.1} parent=11 // pred_check_branch
          %672 = sbr.rel (%p670) target = $region92
        $region91: #{model_forward.1} parent=11 // pred_region
          _
        $region92: #{model_forward.1} parent=11 // pred_fallthru
          _
        // Predicated region
        $region93: #{model_forward.1} parent=11 // pred_check
          %p673 = pneg %p500
        $region94: #{model_forward.1} parent=11 // pred_check_branch
          %675 = sbr.rel (%p673) target = $region96
        $region95: #{model_forward.1} parent=11 // pred_region
          %677 = vsyncadd [#allocation11], 0
          %s679 = sshll.u32 %s21, 4
          %s680 = int_to_ptr.hbm [resolvable:$true] %s679
          %s681 = sshll.u32 [#allocation10], 4
          %s682 = int_to_ptr.vmem [resolvable:$true] %s681
          %684 = dma.hbm_to_vmem [thread:$0]  %s680, 32, %s682, [#allocation11]
        $region96: #{model_forward.1} parent=11 // pred_fallthru
          _
        // Predicated region
        $region97: #{model_forward.1} parent=11 // pred_check
          %p685 = pneg %p521
        $region98: #{model_forward.1} parent=11 // pred_check_branch
          %687 = sbr.rel (%p685) target = $region100
        $region99: #{model_forward.1} parent=11 // pred_region
          _
        $region100: #{model_forward.1} parent=11 // pred_fallthru
          _
      $region12: #{model_forward.1} parent=5 // pred_fallthru
        _
      %p688 = scmp.lt.s32.totalorder %s33, 2
      // Predicated region
      $region101: #{model_forward.1} parent=5 // pred_check
        %p689 = pneg %p688
      $region102: #{model_forward.1} parent=5 // pred_check_branch
        %691 = sbr.rel (%p689) target = $region104
      $region103: #{model_forward.1} parent=5 // pred_region
        // Predicated region
        $region105: #{model_forward.1} parent=103 // pred_check
          %p692 = pneg %p53
        $region106: #{model_forward.1} parent=103 // pred_check_branch
          %694 = sbr.rel (%p692) target = $region108
        $region107: #{model_forward.1} parent=103 // pred_region
          %p695 = scmp.lt.s32.totalorder %s33, 1
          %s696 = scalar_select %p695, %s33, 1
          %s697 = smul.addr %s696, 8
          %s698 = smul.addr %s697, 4
          %s699 = scalar_lea.vmem %s0, %s698
        $region108: #{model_forward.1} parent=103 // pred_fallthru
          _
      $region104: #{model_forward.1} parent=5 // pred_fallthru
        _
      %p700 = scmp.le.s32.totalorder 1, %s33
      %p701 = scmp.lt.s32.totalorder %s33, 3
      %p702 = pnand %p700, %p701
      %p703 = pneg %p702
      // Predicated region
      $region109: #{model_forward.1} parent=5 // pred_check
        _
      $region110: #{model_forward.1} parent=5 // pred_check_branch
        %705 = sbr.rel (%p702) target = $region112
      $region111: #{model_forward.1} parent=5 // pred_region
        %s706 = ssub.s32 %s33, 1
        // Predicated region
        $region113: #{model_forward.1} parent=111 // pred_check
          %p707 = pneg %p80
        $region114: #{model_forward.1} parent=111 // pred_check_branch
          %709 = sbr.rel (%p707) target = $region116
        $region115: #{model_forward.1} parent=111 // pred_region
          %711 = dma.done [#allocation3], 65536
        $region116: #{model_forward.1} parent=111 // pred_fallthru
          _
        // Predicated region
        $region117: #{model_forward.1} parent=111 // pred_check
          %p712 = pneg %p122
        $region118: #{model_forward.1} parent=111 // pred_check_branch
          %714 = sbr.rel (%p712) target = $region120
        $region119: #{model_forward.1} parent=111 // pred_region
          %716 = dma.done [#allocation5], 64
        $region120: #{model_forward.1} parent=111 // pred_fallthru
          _
        // Predicated region
        $region121: #{model_forward.1} parent=111 // pred_check
          %p717 = pneg %p206
        $region122: #{model_forward.1} parent=111 // pred_check_branch
          %719 = sbr.rel (%p717) target = $region124
        $region123: #{model_forward.1} parent=111 // pred_region
          %721 = dma.done [#allocation5], 128
        $region124: #{model_forward.1} parent=111 // pred_fallthru
          _
        // Predicated region
        $region125: #{model_forward.1} parent=111 // pred_check
          %p722 = pneg %p290
        $region126: #{model_forward.1} parent=111 // pred_check_branch
          %724 = sbr.rel (%p722) target = $region128
        $region127: #{model_forward.1} parent=111 // pred_region
          %726 = dma.done [#allocation8], 1024
        $region128: #{model_forward.1} parent=111 // pred_fallthru
          _
        // Predicated region
        $region129: #{model_forward.1} parent=111 // pred_check
          %p727 = pneg %p374
        $region130: #{model_forward.1} parent=111 // pred_check_branch
          %729 = sbr.rel (%p727) target = $region132
        $region131: #{model_forward.1} parent=111 // pred_region
          %731 = dma.done [#allocation8], 1024
        $region132: #{model_forward.1} parent=111 // pred_fallthru
          _
        // Predicated region
        $region133: #{model_forward.1} parent=111 // pred_check
          %p732 = pneg %p500
        $region134: #{model_forward.1} parent=111 // pred_check_branch
          %734 = sbr.rel (%p732) target = $region136
        $region135: #{model_forward.1} parent=111 // pred_region
          %736 = dma.done [#allocation11], 32
        $region136: #{model_forward.1} parent=111 // pred_fallthru
          _
        %p737 = scmp.lt.s32.totalorder %s38, 1
        %s738 = scalar_select %p737, %s38, 1
        %s739 = smul.addr %s738, 8
        %s740 = smul.addr %s739, 4
        %s741 = scalar_lea.vmem %s0, %s740
        %p742 = pneg %p59
        %p743 = pneg %p56
        %p744 = pneg %p80
        %p745 = pneg %p77
        %p746 = pneg %p101
        %p747 = pneg %p98
        %p748 = pneg %p122
        %p749 = pneg %p119
        %p750 = pneg %p143
        %p751 = pneg %p140
        %p752 = pneg %p164
        %p753 = pneg %p161
        %p754 = pneg %p185
        %p755 = pneg %p182
        %p756 = pneg %p206
        %p757 = pneg %p203
        %p758 = pneg %p227
        %p759 = pneg %p224
        %p760 = pneg %p248
        %p761 = pneg %p245
        %p762 = pneg %p269
        %p763 = pneg %p266
        %p764 = pneg %p290
        %p765 = pneg %p287
        %p766 = pneg %p311
        %p767 = pneg %p308
        %p768 = pneg %p332
        %p769 = pneg %p329
        %p770 = pneg %p353
        %p771 = pneg %p350
        %p772 = pneg %p374
        %p773 = pneg %p371
        %p774 = pneg %p395
        %p775 = pneg %p392
        %p776 = pneg %p416
        %p777 = pneg %p413
        %p778 = pneg %p437
        %p779 = pneg %p434
        %p780 = pneg %p458
        %p781 = pneg %p455
        %p782 = pneg %p479
        %p783 = pneg %p476
        %p784 = pneg %p500
        %p785 = pneg %p497
        %p786 = pneg %p521
        %p787 = pneg %p518
        %p788 = pneg %p547
        %p789 = pneg %p544
        %p790 = scmp.lt.s32.totalorder %s38, 1
        %s791 = scalar_select %p790, %s38, 1
        %s792 = smul.addr %s791, 2
        %s793 = scalar_lea.vmem %s23, %s792
        %p794 = scmp.lt.s32.totalorder %s38, 1
        %s795 = scalar_select %p794, %s38, 1
        %s796 = smul.addr %s795, 8
        %s797 = smul.addr %s796, 4
        %s798 = scalar_lea.vmem %s0, %s797
        %p799 = scmp.lt.s32.totalorder %s38, 1
        %s800 = scalar_select %p799, %s38, 1
        %s801 = smul.addr %s800, 2
        %s802 = scalar_lea.vmem %s23, %s801
        %v803 = vld [vmem:[%s798] sm:$0x77]
        %v804 = vld [vmem:[%s798 + $0x8] sm:$0x77]
        %v805 = vld [vmem:[%s798 + $0x10] sm:$0x77]
        %v806 = vld [vmem:[%s798 + $0x18] sm:$0x77]
        %v807 = vld [vmem:[%s2] sm:$0xff]
        %v808 = vld [vmem:[#allocation4] sm:$0x7]
        %v809 = vld [vmem:[%s4] sm:$0x7]
        %v810 = vld [vmem:[%s5] sm:$0x7]
        %v811 = vld [vmem:[%s6] sm:$0x7]
        %v812 = vld [vmem:[#allocation6] sm:$0xff]
        %v813 = vld [vmem:[%s8] sm:$0xff]
        %v814 = vld [vmem:[%s9] sm:$0x7]
        %v815 = vld [vmem:[%s10] sm:$0x7]
        %v816 = vld [vmem:[#allocation2] sm:$0xff]
        %v817 = vld [vmem:[#allocation2 + $0x8] sm:$0xff]
        %v818 = vld [vmem:[#allocation2 + $0x10] sm:$0xff]
        %v819 = vld [vmem:[#allocation2 + $0x18] sm:$0xff]
        %v820 = vld [vmem:[#allocation2 + $0x20] sm:$0xff]
        %v821 = vld [vmem:[#allocation2 + $0x28] sm:$0xff]
        %v822 = vld [vmem:[#allocation2 + $0x30] sm:$0xff]
        %v823 = vld [vmem:[#allocation2 + $0x38] sm:$0xff]
        %v824 = vld [vmem:[#allocation2 + $0x40] sm:$0xff]
        %v825 = vld [vmem:[#allocation2 + $0x48] sm:$0xff]
        %v826 = vld [vmem:[#allocation2 + $0x50] sm:$0xff]
        %v827 = vld [vmem:[#allocation2 + $0x58] sm:$0xff]
        %v828 = vld [vmem:[#allocation2 + $0x60] sm:$0xff]
        %v829 = vld [vmem:[#allocation2 + $0x68] sm:$0xff]
        %v830 = vld [vmem:[#allocation2 + $0x70] sm:$0xff]
        %v831 = vld [vmem:[#allocation2 + $0x78] sm:$0xff]
        %v832 = vld [vmem:[#allocation2 + $0x80] sm:$0xff]
        %v833 = vld [vmem:[#allocation2 + $0x88] sm:$0xff]
        %v834 = vld [vmem:[#allocation2 + $0x90] sm:$0xff]
        %v835 = vld [vmem:[#allocation2 + $0x98] sm:$0xff]
        %v836 = vld [vmem:[#allocation2 + $0xa0] sm:$0xff]
        %v837 = vld [vmem:[#allocation2 + $0xa8] sm:$0xff]
        %v838 = vld [vmem:[#allocation2 + $0xb0] sm:$0xff]
        %v839 = vld [vmem:[#allocation2 + $0xb8] sm:$0xff]
        %v840 = vld [vmem:[#allocation2 + $0xc0] sm:$0xff]
        %v841 = vld [vmem:[#allocation2 + $0xc8] sm:$0xff]
        %v842 = vld [vmem:[#allocation2 + $0xd0] sm:$0xff]
        %v843 = vld [vmem:[#allocation2 + $0xd8] sm:$0xff]
        %v844 = vld [vmem:[#allocation2 + $0xe0] sm:$0xff]
        %v845 = vld [vmem:[#allocation2 + $0xe8] sm:$0xff]
        %v846 = vld [vmem:[#allocation2 + $0xf0] sm:$0xff]
        %v847 = vld [vmem:[#allocation2 + $0xf8] sm:$0xff]
        %v848 = vld [vmem:[#allocation2 + $0x100] sm:$0xff]
        %v849 = vld [vmem:[#allocation2 + $0x108] sm:$0xff]
        %v850 = vld [vmem:[#allocation2 + $0x110] sm:$0xff]
        %v851 = vld [vmem:[#allocation2 + $0x118] sm:$0xff]
        %v852 = vld [vmem:[#allocation2 + $0x120] sm:$0xff]
        %v853 = vld [vmem:[#allocation2 + $0x128] sm:$0xff]
        %v854 = vld [vmem:[#allocation2 + $0x130] sm:$0xff]
        %v855 = vld [vmem:[#allocation2 + $0x138] sm:$0xff]
        %v856 = vld [vmem:[#allocation2 + $0x140] sm:$0xff]
        %v857 = vld [vmem:[#allocation2 + $0x148] sm:$0xff]
        %v858 = vld [vmem:[#allocation2 + $0x150] sm:$0xff]
        %v859 = vld [vmem:[#allocation2 + $0x158] sm:$0xff]
        %v860 = vld [vmem:[#allocation2 + $0x160] sm:$0xff]
        %v861 = vld [vmem:[#allocation2 + $0x168] sm:$0xff]
        %v862 = vld [vmem:[#allocation2 + $0x170] sm:$0xff]
        %v863 = vld [vmem:[#allocation2 + $0x178] sm:$0xff]
        %v864 = vld [vmem:[#allocation2 + $0x180] sm:$0xff]
        %v865 = vld [vmem:[#allocation2 + $0x188] sm:$0xff]
        %v866 = vld [vmem:[#allocation2 + $0x190] sm:$0xff]
        %v867 = vld [vmem:[#allocation2 + $0x198] sm:$0xff]
        %v868 = vld [vmem:[#allocation2 + $0x1a0] sm:$0xff]
        %v869 = vld [vmem:[#allocation2 + $0x1a8] sm:$0xff]
        %v870 = vld [vmem:[#allocation2 + $0x1b0] sm:$0xff]
        %v871 = vld [vmem:[#allocation2 + $0x1b8] sm:$0xff]
        %v872 = vld [vmem:[#allocation2 + $0x1c0] sm:$0xff]
        %v873 = vld [vmem:[#allocation2 + $0x1c8] sm:$0xff]
        %v874 = vld [vmem:[#allocation2 + $0x1d0] sm:$0xff]
        %v875 = vld [vmem:[#allocation2 + $0x1d8] sm:$0xff]
        %v876 = vld [vmem:[#allocation2 + $0x1e0] sm:$0xff]
        %v877 = vld [vmem:[#allocation2 + $0x1e8] sm:$0xff]
        %v878 = vld [vmem:[#allocation2 + $0x1f0] sm:$0xff]
        %v879 = vld [vmem:[#allocation2 + $0x1f8] sm:$0xff]
        %v880 = vld [vmem:[#allocation2 + $0x200] sm:$0xff]
        %v881 = vld [vmem:[#allocation2 + $0x208] sm:$0xff]
        %v882 = vld [vmem:[#allocation2 + $0x210] sm:$0xff]
        %v883 = vld [vmem:[#allocation2 + $0x218] sm:$0xff]
        %v884 = vld [vmem:[#allocation2 + $0x220] sm:$0xff]
        %v885 = vld [vmem:[#allocation2 + $0x228] sm:$0xff]
        %v886 = vld [vmem:[#allocation2 + $0x230] sm:$0xff]
        %v887 = vld [vmem:[#allocation2 + $0x238] sm:$0xff]
        %v888 = vld [vmem:[#allocation2 + $0x240] sm:$0xff]
        %v889 = vld [vmem:[#allocation2 + $0x248] sm:$0xff]
        %v890 = vld [vmem:[#allocation2 + $0x250] sm:$0xff]
        %v891 = vld [vmem:[#allocation2 + $0x258] sm:$0xff]
        %v892 = vld [vmem:[#allocation2 + $0x260] sm:$0xff]
        %v893 = vld [vmem:[#allocation2 + $0x268] sm:$0xff]
        %v894 = vld [vmem:[#allocation2 + $0x270] sm:$0xff]
        %v895 = vld [vmem:[#allocation2 + $0x278] sm:$0xff]
        %v896 = vld [vmem:[#allocation2 + $0x280] sm:$0xff]
        %v897 = vld [vmem:[#allocation2 + $0x288] sm:$0xff]
        %v898 = vld [vmem:[#allocation2 + $0x290] sm:$0xff]
        %v899 = vld [vmem:[#allocation2 + $0x298] sm:$0xff]
        %v900 = vld [vmem:[#allocation2 + $0x2a0] sm:$0xff]
        %v901 = vld [vmem:[#allocation2 + $0x2a8] sm:$0xff]
        %v902 = vld [vmem:[#allocation2 + $0x2b0] sm:$0xff]
        %v903 = vld [vmem:[#allocation2 + $0x2b8] sm:$0xff]
        %v904 = vld [vmem:[#allocation2 + $0x2c0] sm:$0xff]
        %v905 = vld [vmem:[#allocation2 + $0x2c8] sm:$0xff]
        %v906 = vld [vmem:[#allocation2 + $0x2d0] sm:$0xff]
        %v907 = vld [vmem:[#allocation2 + $0x2d8] sm:$0xff]
        %v908 = vld [vmem:[#allocation2 + $0x2e0] sm:$0xff]
        %v909 = vld [vmem:[#allocation2 + $0x2e8] sm:$0xff]
        %v910 = vld [vmem:[#allocation2 + $0x2f0] sm:$0xff]
        %v911 = vld [vmem:[#allocation2 + $0x2f8] sm:$0xff]
        %v912 = vld [vmem:[#allocation2 + $0x300] sm:$0xff]
        %v913 = vld [vmem:[#allocation2 + $0x308] sm:$0xff]
        %v914 = vld [vmem:[#allocation2 + $0x310] sm:$0xff]
        %v915 = vld [vmem:[#allocation2 + $0x318] sm:$0xff]
        %v916 = vld [vmem:[#allocation2 + $0x320] sm:$0xff]
        %v917 = vld [vmem:[#allocation2 + $0x328] sm:$0xff]
        %v918 = vld [vmem:[#allocation2 + $0x330] sm:$0xff]
        %v919 = vld [vmem:[#allocation2 + $0x338] sm:$0xff]
        %v920 = vld [vmem:[#allocation2 + $0x340] sm:$0xff]
        %v921 = vld [vmem:[#allocation2 + $0x348] sm:$0xff]
        %v922 = vld [vmem:[#allocation2 + $0x350] sm:$0xff]
        %v923 = vld [vmem:[#allocation2 + $0x358] sm:$0xff]
        %v924 = vld [vmem:[#allocation2 + $0x360] sm:$0xff]
        %v925 = vld [vmem:[#allocation2 + $0x368] sm:$0xff]
        %v926 = vld [vmem:[#allocation2 + $0x370] sm:$0xff]
        %v927 = vld [vmem:[#allocation2 + $0x378] sm:$0xff]
        %v928 = vld [vmem:[#allocation2 + $0x380] sm:$0xff]
        %v929 = vld [vmem:[#allocation2 + $0x388] sm:$0xff]
        %v930 = vld [vmem:[#allocation2 + $0x390] sm:$0xff]
        %v931 = vld [vmem:[#allocation2 + $0x398] sm:$0xff]
        %v932 = vld [vmem:[#allocation2 + $0x3a0] sm:$0xff]
        %v933 = vld [vmem:[#allocation2 + $0x3a8] sm:$0xff]
        %v934 = vld [vmem:[#allocation2 + $0x3b0] sm:$0xff]
        %v935 = vld [vmem:[#allocation2 + $0x3b8] sm:$0xff]
        %v936 = vld [vmem:[#allocation2 + $0x3c0] sm:$0xff]
        %v937 = vld [vmem:[#allocation2 + $0x3c8] sm:$0xff]
        %v938 = vld [vmem:[#allocation2 + $0x3d0] sm:$0xff]
        %v939 = vld [vmem:[#allocation2 + $0x3d8] sm:$0xff]
        %v940 = vld [vmem:[#allocation2 + $0x3e0] sm:$0xff]
        %v941 = vld [vmem:[#allocation2 + $0x3e8] sm:$0xff]
        %v942 = vld [vmem:[#allocation2 + $0x3f0] sm:$0xff]
        %v943 = vld [vmem:[#allocation2 + $0x3f8] sm:$0xff]
        %v944 = vld [vmem:[#allocation2 + $0x400] sm:$0xff]
        %v945 = vld [vmem:[#allocation2 + $0x408] sm:$0xff]
        %v946 = vld [vmem:[#allocation2 + $0x410] sm:$0xff]
        %v947 = vld [vmem:[#allocation2 + $0x418] sm:$0xff]
        %v948 = vld [vmem:[#allocation2 + $0x420] sm:$0xff]
        %v949 = vld [vmem:[#allocation2 + $0x428] sm:$0xff]
        %v950 = vld [vmem:[#allocation2 + $0x430] sm:$0xff]
        %v951 = vld [vmem:[#allocation2 + $0x438] sm:$0xff]
        %v952 = vld [vmem:[#allocation2 + $0x440] sm:$0xff]
        %v953 = vld [vmem:[#allocation2 + $0x448] sm:$0xff]
        %v954 = vld [vmem:[#allocation2 + $0x450] sm:$0xff]
        %v955 = vld [vmem:[#allocation2 + $0x458] sm:$0xff]
        %v956 = vld [vmem:[#allocation2 + $0x460] sm:$0xff]
        %v957 = vld [vmem:[#allocation2 + $0x468] sm:$0xff]
        %v958 = vld [vmem:[#allocation2 + $0x470] sm:$0xff]
        %v959 = vld [vmem:[#allocation2 + $0x478] sm:$0xff]
        %v960 = vld [vmem:[#allocation2 + $0x480] sm:$0xff]
        %v961 = vld [vmem:[#allocation2 + $0x488] sm:$0xff]
        %v962 = vld [vmem:[#allocation2 + $0x490] sm:$0xff]
        %v963 = vld [vmem:[#allocation2 + $0x498] sm:$0xff]
        %v964 = vld [vmem:[#allocation2 + $0x4a0] sm:$0xff]
        %v965 = vld [vmem:[#allocation2 + $0x4a8] sm:$0xff]
        %v966 = vld [vmem:[#allocation2 + $0x4b0] sm:$0xff]
        %v967 = vld [vmem:[#allocation2 + $0x4b8] sm:$0xff]
        %v968 = vld [vmem:[#allocation2 + $0x4c0] sm:$0xff]
        %v969 = vld [vmem:[#allocation2 + $0x4c8] sm:$0xff]
        %v970 = vld [vmem:[#allocation2 + $0x4d0] sm:$0xff]
        %v971 = vld [vmem:[#allocation2 + $0x4d8] sm:$0xff]
        %v972 = vld [vmem:[#allocation2 + $0x4e0] sm:$0xff]
        %v973 = vld [vmem:[#allocation2 + $0x4e8] sm:$0xff]
        %v974 = vld [vmem:[#allocation2 + $0x4f0] sm:$0xff]
        %v975 = vld [vmem:[#allocation2 + $0x4f8] sm:$0xff]
        %v976 = vld [vmem:[#allocation2 + $0x500] sm:$0xff]
        %v977 = vld [vmem:[#allocation2 + $0x508] sm:$0xff]
        %v978 = vld [vmem:[#allocation2 + $0x510] sm:$0xff]
        %v979 = vld [vmem:[#allocation2 + $0x518] sm:$0xff]
        %v980 = vld [vmem:[#allocation2 + $0x520] sm:$0xff]
        %v981 = vld [vmem:[#allocation2 + $0x528] sm:$0xff]
        %v982 = vld [vmem:[#allocation2 + $0x530] sm:$0xff]
        %v983 = vld [vmem:[#allocation2 + $0x538] sm:$0xff]
        %v984 = vld [vmem:[#allocation2 + $0x540] sm:$0xff]
        %v985 = vld [vmem:[#allocation2 + $0x548] sm:$0xff]
        %v986 = vld [vmem:[#allocation2 + $0x550] sm:$0xff]
        %v987 = vld [vmem:[#allocation2 + $0x558] sm:$0xff]
        %v988 = vld [vmem:[#allocation2 + $0x560] sm:$0xff]
        %v989 = vld [vmem:[#allocation2 + $0x568] sm:$0xff]
        %v990 = vld [vmem:[#allocation2 + $0x570] sm:$0xff]
        %v991 = vld [vmem:[#allocation2 + $0x578] sm:$0xff]
        %v992 = vld [vmem:[#allocation2 + $0x580] sm:$0xff]
        %v993 = vld [vmem:[#allocation2 + $0x588] sm:$0xff]
        %v994 = vld [vmem:[#allocation2 + $0x590] sm:$0xff]
        %v995 = vld [vmem:[#allocation2 + $0x598] sm:$0xff]
        %v996 = vld [vmem:[#allocation2 + $0x5a0] sm:$0xff]
        %v997 = vld [vmem:[#allocation2 + $0x5a8] sm:$0xff]
        %v998 = vld [vmem:[#allocation2 + $0x5b0] sm:$0xff]
        %v999 = vld [vmem:[#allocation2 + $0x5b8] sm:$0xff]
        %v1000 = vld [vmem:[#allocation2 + $0x5c0] sm:$0xff]
        %v1001 = vld [vmem:[#allocation2 + $0x5c8] sm:$0xff]
        %v1002 = vld [vmem:[#allocation2 + $0x5d0] sm:$0xff]
        %v1003 = vld [vmem:[#allocation2 + $0x5d8] sm:$0xff]
        %v1004 = vld [vmem:[#allocation2 + $0x5e0] sm:$0xff]
        %v1005 = vld [vmem:[#allocation2 + $0x5e8] sm:$0xff]
        %v1006 = vld [vmem:[#allocation2 + $0x5f0] sm:$0xff]
        %v1007 = vld [vmem:[#allocation2 + $0x5f8] sm:$0xff]
        %v1008 = vld [vmem:[#allocation2 + $0x600] sm:$0xff]
        %v1009 = vld [vmem:[#allocation2 + $0x608] sm:$0xff]
        %v1010 = vld [vmem:[#allocation2 + $0x610] sm:$0xff]
        %v1011 = vld [vmem:[#allocation2 + $0x618] sm:$0xff]
        %v1012 = vld [vmem:[#allocation2 + $0x620] sm:$0xff]
        %v1013 = vld [vmem:[#allocation2 + $0x628] sm:$0xff]
        %v1014 = vld [vmem:[#allocation2 + $0x630] sm:$0xff]
        %v1015 = vld [vmem:[#allocation2 + $0x638] sm:$0xff]
        %v1016 = vld [vmem:[#allocation2 + $0x640] sm:$0xff]
        %v1017 = vld [vmem:[#allocation2 + $0x648] sm:$0xff]
        %v1018 = vld [vmem:[#allocation2 + $0x650] sm:$0xff]
        %v1019 = vld [vmem:[#allocation2 + $0x658] sm:$0xff]
        %v1020 = vld [vmem:[#allocation2 + $0x660] sm:$0xff]
        %v1021 = vld [vmem:[#allocation2 + $0x668] sm:$0xff]
        %v1022 = vld [vmem:[#allocation2 + $0x670] sm:$0xff]
        %v1023 = vld [vmem:[#allocation2 + $0x678] sm:$0xff]
        %v1024 = vld [vmem:[#allocation2 + $0x680] sm:$0xff]
        %v1025 = vld [vmem:[#allocation2 + $0x688] sm:$0xff]
        %v1026 = vld [vmem:[#allocation2 + $0x690] sm:$0xff]
        %v1027 = vld [vmem:[#allocation2 + $0x698] sm:$0xff]
        %v1028 = vld [vmem:[#allocation2 + $0x6a0] sm:$0xff]
        %v1029 = vld [vmem:[#allocation2 + $0x6a8] sm:$0xff]
        %v1030 = vld [vmem:[#allocation2 + $0x6b0] sm:$0xff]
        %v1031 = vld [vmem:[#allocation2 + $0x6b8] sm:$0xff]
        %v1032 = vld [vmem:[#allocation2 + $0x6c0] sm:$0xff]
        %v1033 = vld [vmem:[#allocation2 + $0x6c8] sm:$0xff]
        %v1034 = vld [vmem:[#allocation2 + $0x6d0] sm:$0xff]
        %v1035 = vld [vmem:[#allocation2 + $0x6d8] sm:$0xff]
        %v1036 = vld [vmem:[#allocation2 + $0x6e0] sm:$0xff]
        %v1037 = vld [vmem:[#allocation2 + $0x6e8] sm:$0xff]
        %v1038 = vld [vmem:[#allocation2 + $0x6f0] sm:$0xff]
        %v1039 = vld [vmem:[#allocation2 + $0x6f8] sm:$0xff]
        %v1040 = vld [vmem:[#allocation2 + $0x700] sm:$0xff]
        %v1041 = vld [vmem:[#allocation2 + $0x708] sm:$0xff]
        %v1042 = vld [vmem:[#allocation2 + $0x710] sm:$0xff]
        %v1043 = vld [vmem:[#allocation2 + $0x718] sm:$0xff]
        %v1044 = vld [vmem:[#allocation2 + $0x720] sm:$0xff]
        %v1045 = vld [vmem:[#allocation2 + $0x728] sm:$0xff]
        %v1046 = vld [vmem:[#allocation2 + $0x730] sm:$0xff]
        %v1047 = vld [vmem:[#allocation2 + $0x738] sm:$0xff]
        %v1048 = vld [vmem:[#allocation2 + $0x740] sm:$0xff]
        %v1049 = vld [vmem:[#allocation2 + $0x748] sm:$0xff]
        %v1050 = vld [vmem:[#allocation2 + $0x750] sm:$0xff]
        %v1051 = vld [vmem:[#allocation2 + $0x758] sm:$0xff]
        %v1052 = vld [vmem:[#allocation2 + $0x760] sm:$0xff]
        %v1053 = vld [vmem:[#allocation2 + $0x768] sm:$0xff]
        %v1054 = vld [vmem:[#allocation2 + $0x770] sm:$0xff]
        %v1055 = vld [vmem:[#allocation2 + $0x778] sm:$0xff]
        %v1056 = vld [vmem:[#allocation2 + $0x780] sm:$0xff]
        %v1057 = vld [vmem:[#allocation2 + $0x788] sm:$0xff]
        %v1058 = vld [vmem:[#allocation2 + $0x790] sm:$0xff]
        %v1059 = vld [vmem:[#allocation2 + $0x798] sm:$0xff]
        %v1060 = vld [vmem:[#allocation2 + $0x7a0] sm:$0xff]
        %v1061 = vld [vmem:[#allocation2 + $0x7a8] sm:$0xff]
        %v1062 = vld [vmem:[#allocation2 + $0x7b0] sm:$0xff]
        %v1063 = vld [vmem:[#allocation2 + $0x7b8] sm:$0xff]
        %v1064 = vld [vmem:[#allocation2 + $0x7c0] sm:$0xff]
        %v1065 = vld [vmem:[#allocation2 + $0x7c8] sm:$0xff]
        %v1066 = vld [vmem:[#allocation2 + $0x7d0] sm:$0xff]
        %v1067 = vld [vmem:[#allocation2 + $0x7d8] sm:$0xff]
        %v1068 = vld [vmem:[#allocation2 + $0x7e0] sm:$0xff]
        %v1069 = vld [vmem:[#allocation2 + $0x7e8] sm:$0xff]
        %v1070 = vld [vmem:[#allocation2 + $0x7f0] sm:$0xff]
        %v1071 = vld [vmem:[#allocation2 + $0x7f8] sm:$0xff]
        %v1072 = vld [vmem:[#allocation2 + $0x800] sm:$0xff]
        %v1073 = vld [vmem:[#allocation2 + $0x808] sm:$0xff]
        %v1074 = vld [vmem:[#allocation2 + $0x810] sm:$0xff]
        %v1075 = vld [vmem:[#allocation2 + $0x818] sm:$0xff]
        %v1076 = vld [vmem:[#allocation2 + $0x820] sm:$0xff]
        %v1077 = vld [vmem:[#allocation2 + $0x828] sm:$0xff]
        %v1078 = vld [vmem:[#allocation2 + $0x830] sm:$0xff]
        %v1079 = vld [vmem:[#allocation2 + $0x838] sm:$0xff]
        %v1080 = vld [vmem:[#allocation2 + $0x840] sm:$0xff]
        %v1081 = vld [vmem:[#allocation2 + $0x848] sm:$0xff]
        %v1082 = vld [vmem:[#allocation2 + $0x850] sm:$0xff]
        %v1083 = vld [vmem:[#allocation2 + $0x858] sm:$0xff]
        %v1084 = vld [vmem:[#allocation2 + $0x860] sm:$0xff]
        %v1085 = vld [vmem:[#allocation2 + $0x868] sm:$0xff]
        %v1086 = vld [vmem:[#allocation2 + $0x870] sm:$0xff]
        %v1087 = vld [vmem:[#allocation2 + $0x878] sm:$0xff]
        %v1088 = vld [vmem:[#allocation2 + $0x880] sm:$0xff]
        %v1089 = vld [vmem:[#allocation2 + $0x888] sm:$0xff]
        %v1090 = vld [vmem:[#allocation2 + $0x890] sm:$0xff]
        %v1091 = vld [vmem:[#allocation2 + $0x898] sm:$0xff]
        %v1092 = vld [vmem:[#allocation2 + $0x8a0] sm:$0xff]
        %v1093 = vld [vmem:[#allocation2 + $0x8a8] sm:$0xff]
        %v1094 = vld [vmem:[#allocation2 + $0x8b0] sm:$0xff]
        %v1095 = vld [vmem:[#allocation2 + $0x8b8] sm:$0xff]
        %v1096 = vld [vmem:[#allocation2 + $0x8c0] sm:$0xff]
        %v1097 = vld [vmem:[#allocation2 + $0x8c8] sm:$0xff]
        %v1098 = vld [vmem:[#allocation2 + $0x8d0] sm:$0xff]
        %v1099 = vld [vmem:[#allocation2 + $0x8d8] sm:$0xff]
        %v1100 = vld [vmem:[#allocation2 + $0x8e0] sm:$0xff]
        %v1101 = vld [vmem:[#allocation2 + $0x8e8] sm:$0xff]
        %v1102 = vld [vmem:[#allocation2 + $0x8f0] sm:$0xff]
        %v1103 = vld [vmem:[#allocation2 + $0x8f8] sm:$0xff]
        %v1104 = vld [vmem:[#allocation2 + $0x900] sm:$0xff]
        %v1105 = vld [vmem:[#allocation2 + $0x908] sm:$0xff]
        %v1106 = vld [vmem:[#allocation2 + $0x910] sm:$0xff]
        %v1107 = vld [vmem:[#allocation2 + $0x918] sm:$0xff]
        %v1108 = vld [vmem:[#allocation2 + $0x920] sm:$0xff]
        %v1109 = vld [vmem:[#allocation2 + $0x928] sm:$0xff]
        %v1110 = vld [vmem:[#allocation2 + $0x930] sm:$0xff]
        %v1111 = vld [vmem:[#allocation2 + $0x938] sm:$0xff]
        %v1112 = vld [vmem:[#allocation2 + $0x940] sm:$0xff]
        %v1113 = vld [vmem:[#allocation2 + $0x948] sm:$0xff]
        %v1114 = vld [vmem:[#allocation2 + $0x950] sm:$0xff]
        %v1115 = vld [vmem:[#allocation2 + $0x958] sm:$0xff]
        %v1116 = vld [vmem:[#allocation2 + $0x960] sm:$0xff]
        %v1117 = vld [vmem:[#allocation2 + $0x968] sm:$0xff]
        %v1118 = vld [vmem:[#allocation2 + $0x970] sm:$0xff]
        %v1119 = vld [vmem:[#allocation2 + $0x978] sm:$0xff]
        %v1120 = vld [vmem:[#allocation2 + $0x980] sm:$0xff]
        %v1121 = vld [vmem:[#allocation2 + $0x988] sm:$0xff]
        %v1122 = vld [vmem:[#allocation2 + $0x990] sm:$0xff]
        %v1123 = vld [vmem:[#allocation2 + $0x998] sm:$0xff]
        %v1124 = vld [vmem:[#allocation2 + $0x9a0] sm:$0xff]
        %v1125 = vld [vmem:[#allocation2 + $0x9a8] sm:$0xff]
        %v1126 = vld [vmem:[#allocation2 + $0x9b0] sm:$0xff]
        %v1127 = vld [vmem:[#allocation2 + $0x9b8] sm:$0xff]
        %v1128 = vld [vmem:[#allocation2 + $0x9c0] sm:$0xff]
        %v1129 = vld [vmem:[#allocation2 + $0x9c8] sm:$0xff]
        %v1130 = vld [vmem:[#allocation2 + $0x9d0] sm:$0xff]
        %v1131 = vld [vmem:[#allocation2 + $0x9d8] sm:$0xff]
        %v1132 = vld [vmem:[#allocation2 + $0x9e0] sm:$0xff]
        %v1133 = vld [vmem:[#allocation2 + $0x9e8] sm:$0xff]
        %v1134 = vld [vmem:[#allocation2 + $0x9f0] sm:$0xff]
        %v1135 = vld [vmem:[#allocation2 + $0x9f8] sm:$0xff]
        %v1136 = vld [vmem:[#allocation2 + $0xa00] sm:$0xff]
        %v1137 = vld [vmem:[#allocation2 + $0xa08] sm:$0xff]
        %v1138 = vld [vmem:[#allocation2 + $0xa10] sm:$0xff]
        %v1139 = vld [vmem:[#allocation2 + $0xa18] sm:$0xff]
        %v1140 = vld [vmem:[#allocation2 + $0xa20] sm:$0xff]
        %v1141 = vld [vmem:[#allocation2 + $0xa28] sm:$0xff]
        %v1142 = vld [vmem:[#allocation2 + $0xa30] sm:$0xff]
        %v1143 = vld [vmem:[#allocation2 + $0xa38] sm:$0xff]
        %v1144 = vld [vmem:[#allocation2 + $0xa40] sm:$0xff]
        %v1145 = vld [vmem:[#allocation2 + $0xa48] sm:$0xff]
        %v1146 = vld [vmem:[#allocation2 + $0xa50] sm:$0xff]
        %v1147 = vld [vmem:[#allocation2 + $0xa58] sm:$0xff]
        %v1148 = vld [vmem:[#allocation2 + $0xa60] sm:$0xff]
        %v1149 = vld [vmem:[#allocation2 + $0xa68] sm:$0xff]
        %v1150 = vld [vmem:[#allocation2 + $0xa70] sm:$0xff]
        %v1151 = vld [vmem:[#allocation2 + $0xa78] sm:$0xff]
        %v1152 = vld [vmem:[#allocation2 + $0xa80] sm:$0xff]
        %v1153 = vld [vmem:[#allocation2 + $0xa88] sm:$0xff]
        %v1154 = vld [vmem:[#allocation2 + $0xa90] sm:$0xff]
        %v1155 = vld [vmem:[#allocation2 + $0xa98] sm:$0xff]
        %v1156 = vld [vmem:[#allocation2 + $0xaa0] sm:$0xff]
        %v1157 = vld [vmem:[#allocation2 + $0xaa8] sm:$0xff]
        %v1158 = vld [vmem:[#allocation2 + $0xab0] sm:$0xff]
        %v1159 = vld [vmem:[#allocation2 + $0xab8] sm:$0xff]
        %v1160 = vld [vmem:[#allocation2 + $0xac0] sm:$0xff]
        %v1161 = vld [vmem:[#allocation2 + $0xac8] sm:$0xff]
        %v1162 = vld [vmem:[#allocation2 + $0xad0] sm:$0xff]
        %v1163 = vld [vmem:[#allocation2 + $0xad8] sm:$0xff]
        %v1164 = vld [vmem:[#allocation2 + $0xae0] sm:$0xff]
        %v1165 = vld [vmem:[#allocation2 + $0xae8] sm:$0xff]
        %v1166 = vld [vmem:[#allocation2 + $0xaf0] sm:$0xff]
        %v1167 = vld [vmem:[#allocation2 + $0xaf8] sm:$0xff]
        %v1168 = vld [vmem:[#allocation2 + $0xb00] sm:$0xff]
        %v1169 = vld [vmem:[#allocation2 + $0xb08] sm:$0xff]
        %v1170 = vld [vmem:[#allocation2 + $0xb10] sm:$0xff]
        %v1171 = vld [vmem:[#allocation2 + $0xb18] sm:$0xff]
        %v1172 = vld [vmem:[#allocation2 + $0xb20] sm:$0xff]
        %v1173 = vld [vmem:[#allocation2 + $0xb28] sm:$0xff]
        %v1174 = vld [vmem:[#allocation2 + $0xb30] sm:$0xff]
        %v1175 = vld [vmem:[#allocation2 + $0xb38] sm:$0xff]
        %v1176 = vld [vmem:[#allocation2 + $0xb40] sm:$0xff]
        %v1177 = vld [vmem:[#allocation2 + $0xb48] sm:$0xff]
        %v1178 = vld [vmem:[#allocation2 + $0xb50] sm:$0xff]
        %v1179 = vld [vmem:[#allocation2 + $0xb58] sm:$0xff]
        %v1180 = vld [vmem:[#allocation2 + $0xb60] sm:$0xff]
        %v1181 = vld [vmem:[#allocation2 + $0xb68] sm:$0xff]
        %v1182 = vld [vmem:[#allocation2 + $0xb70] sm:$0xff]
        %v1183 = vld [vmem:[#allocation2 + $0xb78] sm:$0xff]
        %v1184 = vld [vmem:[#allocation2 + $0xb80] sm:$0xff]
        %v1185 = vld [vmem:[#allocation2 + $0xb88] sm:$0xff]
        %v1186 = vld [vmem:[#allocation2 + $0xb90] sm:$0xff]
        %v1187 = vld [vmem:[#allocation2 + $0xb98] sm:$0xff]
        %v1188 = vld [vmem:[#allocation2 + $0xba0] sm:$0xff]
        %v1189 = vld [vmem:[#allocation2 + $0xba8] sm:$0xff]
        %v1190 = vld [vmem:[#allocation2 + $0xbb0] sm:$0xff]
        %v1191 = vld [vmem:[#allocation2 + $0xbb8] sm:$0xff]
        %v1192 = vld [vmem:[#allocation2 + $0xbc0] sm:$0xff]
        %v1193 = vld [vmem:[#allocation2 + $0xbc8] sm:$0xff]
        %v1194 = vld [vmem:[#allocation2 + $0xbd0] sm:$0xff]
        %v1195 = vld [vmem:[#allocation2 + $0xbd8] sm:$0xff]
        %v1196 = vld [vmem:[#allocation2 + $0xbe0] sm:$0xff]
        %v1197 = vld [vmem:[#allocation2 + $0xbe8] sm:$0xff]
        %v1198 = vld [vmem:[#allocation2 + $0xbf0] sm:$0xff]
        %v1199 = vld [vmem:[#allocation2 + $0xbf8] sm:$0xff]
        %v1200 = vld [vmem:[#allocation2 + $0xc00] sm:$0xff]
        %v1201 = vld [vmem:[#allocation2 + $0xc08] sm:$0xff]
        %v1202 = vld [vmem:[#allocation2 + $0xc10] sm:$0xff]
        %v1203 = vld [vmem:[#allocation2 + $0xc18] sm:$0xff]
        %v1204 = vld [vmem:[#allocation2 + $0xc20] sm:$0xff]
        %v1205 = vld [vmem:[#allocation2 + $0xc28] sm:$0xff]
        %v1206 = vld [vmem:[#allocation2 + $0xc30] sm:$0xff]
        %v1207 = vld [vmem:[#allocation2 + $0xc38] sm:$0xff]
        %v1208 = vld [vmem:[#allocation2 + $0xc40] sm:$0xff]
        %v1209 = vld [vmem:[#allocation2 + $0xc48] sm:$0xff]
        %v1210 = vld [vmem:[#allocation2 + $0xc50] sm:$0xff]
        %v1211 = vld [vmem:[#allocation2 + $0xc58] sm:$0xff]
        %v1212 = vld [vmem:[#allocation2 + $0xc60] sm:$0xff]
        %v1213 = vld [vmem:[#allocation2 + $0xc68] sm:$0xff]
        %v1214 = vld [vmem:[#allocation2 + $0xc70] sm:$0xff]
        %v1215 = vld [vmem:[#allocation2 + $0xc78] sm:$0xff]
        %v1216 = vld [vmem:[#allocation2 + $0xc80] sm:$0xff]
        %v1217 = vld [vmem:[#allocation2 + $0xc88] sm:$0xff]
        %v1218 = vld [vmem:[#allocation2 + $0xc90] sm:$0xff]
        %v1219 = vld [vmem:[#allocation2 + $0xc98] sm:$0xff]
        %v1220 = vld [vmem:[#allocation2 + $0xca0] sm:$0xff]
        %v1221 = vld [vmem:[#allocation2 + $0xca8] sm:$0xff]
        %v1222 = vld [vmem:[#allocation2 + $0xcb0] sm:$0xff]
        %v1223 = vld [vmem:[#allocation2 + $0xcb8] sm:$0xff]
        %v1224 = vld [vmem:[#allocation2 + $0xcc0] sm:$0xff]
        %v1225 = vld [vmem:[#allocation2 + $0xcc8] sm:$0xff]
        %v1226 = vld [vmem:[#allocation2 + $0xcd0] sm:$0xff]
        %v1227 = vld [vmem:[#allocation2 + $0xcd8] sm:$0xff]
        %v1228 = vld [vmem:[#allocation2 + $0xce0] sm:$0xff]
        %v1229 = vld [vmem:[#allocation2 + $0xce8] sm:$0xff]
        %v1230 = vld [vmem:[#allocation2 + $0xcf0] sm:$0xff]
        %v1231 = vld [vmem:[#allocation2 + $0xcf8] sm:$0xff]
        %v1232 = vld [vmem:[#allocation2 + $0xd00] sm:$0xff]
        %v1233 = vld [vmem:[#allocation2 + $0xd08] sm:$0xff]
        %v1234 = vld [vmem:[#allocation2 + $0xd10] sm:$0xff]
        %v1235 = vld [vmem:[#allocation2 + $0xd18] sm:$0xff]
        %v1236 = vld [vmem:[#allocation2 + $0xd20] sm:$0xff]
        %v1237 = vld [vmem:[#allocation2 + $0xd28] sm:$0xff]
        %v1238 = vld [vmem:[#allocation2 + $0xd30] sm:$0xff]
        %v1239 = vld [vmem:[#allocation2 + $0xd38] sm:$0xff]
        %v1240 = vld [vmem:[#allocation2 + $0xd40] sm:$0xff]
        %v1241 = vld [vmem:[#allocation2 + $0xd48] sm:$0xff]
        %v1242 = vld [vmem:[#allocation2 + $0xd50] sm:$0xff]
        %v1243 = vld [vmem:[#allocation2 + $0xd58] sm:$0xff]
        %v1244 = vld [vmem:[#allocation2 + $0xd60] sm:$0xff]
        %v1245 = vld [vmem:[#allocation2 + $0xd68] sm:$0xff]
        %v1246 = vld [vmem:[#allocation2 + $0xd70] sm:$0xff]
        %v1247 = vld [vmem:[#allocation2 + $0xd78] sm:$0xff]
        %v1248 = vld [vmem:[#allocation2 + $0xd80] sm:$0xff]
        %v1249 = vld [vmem:[#allocation2 + $0xd88] sm:$0xff]
        %v1250 = vld [vmem:[#allocation2 + $0xd90] sm:$0xff]
        %v1251 = vld [vmem:[#allocation2 + $0xd98] sm:$0xff]
        %v1252 = vld [vmem:[#allocation2 + $0xda0] sm:$0xff]
        %v1253 = vld [vmem:[#allocation2 + $0xda8] sm:$0xff]
        %v1254 = vld [vmem:[#allocation2 + $0xdb0] sm:$0xff]
        %v1255 = vld [vmem:[#allocation2 + $0xdb8] sm:$0xff]
        %v1256 = vld [vmem:[#allocation2 + $0xdc0] sm:$0xff]
        %v1257 = vld [vmem:[#allocation2 + $0xdc8] sm:$0xff]
        %v1258 = vld [vmem:[#allocation2 + $0xdd0] sm:$0xff]
        %v1259 = vld [vmem:[#allocation2 + $0xdd8] sm:$0xff]
        %v1260 = vld [vmem:[#allocation2 + $0xde0] sm:$0xff]
        %v1261 = vld [vmem:[#allocation2 + $0xde8] sm:$0xff]
        %v1262 = vld [vmem:[#allocation2 + $0xdf0] sm:$0xff]
        %v1263 = vld [vmem:[#allocation2 + $0xdf8] sm:$0xff]
        %v1264 = vld [vmem:[#allocation2 + $0xe00] sm:$0xff]
        %v1265 = vld [vmem:[#allocation2 + $0xe08] sm:$0xff]
        %v1266 = vld [vmem:[#allocation2 + $0xe10] sm:$0xff]
        %v1267 = vld [vmem:[#allocation2 + $0xe18] sm:$0xff]
        %v1268 = vld [vmem:[#allocation2 + $0xe20] sm:$0xff]
        %v1269 = vld [vmem:[#allocation2 + $0xe28] sm:$0xff]
        %v1270 = vld [vmem:[#allocation2 + $0xe30] sm:$0xff]
        %v1271 = vld [vmem:[#allocation2 + $0xe38] sm:$0xff]
        %v1272 = vld [vmem:[#allocation2 + $0xe40] sm:$0xff]
        %v1273 = vld [vmem:[#allocation2 + $0xe48] sm:$0xff]
        %v1274 = vld [vmem:[#allocation2 + $0xe50] sm:$0xff]
        %v1275 = vld [vmem:[#allocation2 + $0xe58] sm:$0xff]
        %v1276 = vld [vmem:[#allocation2 + $0xe60] sm:$0xff]
        %v1277 = vld [vmem:[#allocation2 + $0xe68] sm:$0xff]
        %v1278 = vld [vmem:[#allocation2 + $0xe70] sm:$0xff]
        %v1279 = vld [vmem:[#allocation2 + $0xe78] sm:$0xff]
        %v1280 = vld [vmem:[#allocation2 + $0xe80] sm:$0xff]
        %v1281 = vld [vmem:[#allocation2 + $0xe88] sm:$0xff]
        %v1282 = vld [vmem:[#allocation2 + $0xe90] sm:$0xff]
        %v1283 = vld [vmem:[#allocation2 + $0xe98] sm:$0xff]
        %v1284 = vld [vmem:[#allocation2 + $0xea0] sm:$0xff]
        %v1285 = vld [vmem:[#allocation2 + $0xea8] sm:$0xff]
        %v1286 = vld [vmem:[#allocation2 + $0xeb0] sm:$0xff]
        %v1287 = vld [vmem:[#allocation2 + $0xeb8] sm:$0xff]
        %v1288 = vld [vmem:[#allocation2 + $0xec0] sm:$0xff]
        %v1289 = vld [vmem:[#allocation2 + $0xec8] sm:$0xff]
        %v1290 = vld [vmem:[#allocation2 + $0xed0] sm:$0xff]
        %v1291 = vld [vmem:[#allocation2 + $0xed8] sm:$0xff]
        %v1292 = vld [vmem:[#allocation2 + $0xee0] sm:$0xff]
        %v1293 = vld [vmem:[#allocation2 + $0xee8] sm:$0xff]
        %v1294 = vld [vmem:[#allocation2 + $0xef0] sm:$0xff]
        %v1295 = vld [vmem:[#allocation2 + $0xef8] sm:$0xff]
        %v1296 = vld [vmem:[#allocation2 + $0xf00] sm:$0xff]
        %v1297 = vld [vmem:[#allocation2 + $0xf08] sm:$0xff]
        %v1298 = vld [vmem:[#allocation2 + $0xf10] sm:$0xff]
        %v1299 = vld [vmem:[#allocation2 + $0xf18] sm:$0xff]
        %v1300 = vld [vmem:[#allocation2 + $0xf20] sm:$0xff]
        %v1301 = vld [vmem:[#allocation2 + $0xf28] sm:$0xff]
        %v1302 = vld [vmem:[#allocation2 + $0xf30] sm:$0xff]
        %v1303 = vld [vmem:[#allocation2 + $0xf38] sm:$0xff]
        %v1304 = vld [vmem:[#allocation2 + $0xf40] sm:$0xff]
        %v1305 = vld [vmem:[#allocation2 + $0xf48] sm:$0xff]
        %v1306 = vld [vmem:[#allocation2 + $0xf50] sm:$0xff]
        %v1307 = vld [vmem:[#allocation2 + $0xf58] sm:$0xff]
        %v1308 = vld [vmem:[#allocation2 + $0xf60] sm:$0xff]
        %v1309 = vld [vmem:[#allocation2 + $0xf68] sm:$0xff]
        %v1310 = vld [vmem:[#allocation2 + $0xf70] sm:$0xff]
        %v1311 = vld [vmem:[#allocation2 + $0xf78] sm:$0xff]
        %v1312 = vld [vmem:[#allocation2 + $0xf80] sm:$0xff]
        %v1313 = vld [vmem:[#allocation2 + $0xf88] sm:$0xff]
        %v1314 = vld [vmem:[#allocation2 + $0xf90] sm:$0xff]
        %v1315 = vld [vmem:[#allocation2 + $0xf98] sm:$0xff]
        %v1316 = vld [vmem:[#allocation2 + $0xfa0] sm:$0xff]
        %v1317 = vld [vmem:[#allocation2 + $0xfa8] sm:$0xff]
        %v1318 = vld [vmem:[#allocation2 + $0xfb0] sm:$0xff]
        %v1319 = vld [vmem:[#allocation2 + $0xfb8] sm:$0xff]
        %v1320 = vld [vmem:[#allocation2 + $0xfc0] sm:$0xff]
        %v1321 = vld [vmem:[#allocation2 + $0xfc8] sm:$0xff]
        %v1322 = vld [vmem:[#allocation2 + $0xfd0] sm:$0xff]
        %v1323 = vld [vmem:[#allocation2 + $0xfd8] sm:$0xff]
        %v1324 = vld [vmem:[#allocation2 + $0xfe0] sm:$0xff]
        %v1325 = vld [vmem:[#allocation2 + $0xfe8] sm:$0xff]
        %v1326 = vld [vmem:[#allocation2 + $0xff0] sm:$0xff]
        %v1327 = vld [vmem:[#allocation2 + $0xff8] sm:$0xff]
        %1332 = vst [vmem:[#allocation1] ss:$2 sm:$0xff] %v803
        %s1333 = scalar_lea.vmem [#allocation1], 16
        %1334 = vst [vmem:[%s1333] ss:$2 sm:$0xff] %v804
        %s1335 = scalar_lea.vmem [#allocation1], 32
        %1336 = vst [vmem:[%s1335] ss:$2 sm:$0xff] %v805
        %s1337 = scalar_lea.vmem [#allocation1], 48
        %1338 = vst [vmem:[%s1337] ss:$2 sm:$0xff] %v806
        %v1339 = vld.sshfl [vmem:[#allocation1] sm:$0xff pattern:$0x75316420]
        %v1340 = vld.sshfl [vmem:[#allocation1 + $0x8] sm:$0xff pattern:$0x75316420]
        %v1341 = vld.sshfl [vmem:[#allocation1 + $0x10] sm:$0xff pattern:$0x75316420]
        %v1342 = vld.sshfl [vmem:[#allocation1 + $0x18] sm:$0xff pattern:$0x75316420]
        %v1343 = vld.sshfl [vmem:[#allocation1 + $0x20] sm:$0xff pattern:$0x75316420]
        %v1344 = vld.sshfl [vmem:[#allocation1 + $0x28] sm:$0xff pattern:$0x75316420]
        %v1345 = vld.sshfl [vmem:[#allocation1 + $0x30] sm:$0xff pattern:$0x75316420]
        %v1346 = vld.sshfl [vmem:[#allocation1 + $0x38] sm:$0xff pattern:$0x75316420]
        %vm1355 = vcmask 1042432
        %v1356 = vsel %vm1355, %v1339, 0.0
        %v1357 = vsel %vm1355, %v1340, 0.0
        %v1358 = vadd.f32 %v1356, %v1357
        %v1359 = vsel %vm1355, %v1341, 0.0
        %v1360 = vadd.f32 %v1358, %v1359
        %v1361 = vsel %vm1355, %v1342, 0.0
        %v1362 = vadd.f32 %v1360, %v1361
        %v1363 = vsel %vm1355, %v1343, 0.0
        %v1364 = vadd.f32 %v1362, %v1363
        %v1365 = vsel %vm1355, %v1344, 0.0
        %v1366 = vadd.f32 %v1364, %v1365
        %v1367 = vsel %vm1355, %v1345, 0.0
        %v1368 = vadd.f32 %v1366, %v1367
        %v1369 = vsel %vm1355, %v1346, 0.0
        %v1370 = vadd.f32 %v1368, %v1369
        %1371 = vadd.xlane.f32.xlu0 %v1370
        %v1372 = vpop.xlane.xlu0 %1371
        %v1373 = vmul.f32 %v1372, 0.0009765625
        %v1374 = vmul.f32 %v803, %v803
        %v1375 = vmul.f32 %v804, %v804
        %v1376 = vmul.f32 %v805, %v805
        %v1377 = vmul.f32 %v806, %v806
        %1382 = vst [vmem:[#allocation1] ss:$2 sm:$0xff] %v1374
        %s1383 = scalar_lea.vmem [#allocation1], 16
        %1384 = vst [vmem:[%s1383] ss:$2 sm:$0xff] %v1375
        %s1385 = scalar_lea.vmem [#allocation1], 32
        %1386 = vst [vmem:[%s1385] ss:$2 sm:$0xff] %v1376
        %s1387 = scalar_lea.vmem [#allocation1], 48
        %1388 = vst [vmem:[%s1387] ss:$2 sm:$0xff] %v1377
        %v1389 = vld.sshfl [vmem:[#allocation1] sm:$0xff pattern:$0x75316420]
        %v1390 = vld.sshfl [vmem:[#allocation1 + $0x8] sm:$0xff pattern:$0x75316420]
        %v1391 = vld.sshfl [vmem:[#allocation1 + $0x10] sm:$0xff pattern:$0x75316420]
        %v1392 = vld.sshfl [vmem:[#allocation1 + $0x18] sm:$0xff pattern:$0x75316420]
        %v1393 = vld.sshfl [vmem:[#allocation1 + $0x20] sm:$0xff pattern:$0x75316420]
        %v1394 = vld.sshfl [vmem:[#allocation1 + $0x28] sm:$0xff pattern:$0x75316420]
        %v1395 = vld.sshfl [vmem:[#allocation1 + $0x30] sm:$0xff pattern:$0x75316420]
        %v1396 = vld.sshfl [vmem:[#allocation1 + $0x38] sm:$0xff pattern:$0x75316420]
        %v1405 = vsel %vm1355, %v1389, 0.0
        %v1406 = vsel %vm1355, %v1390, 0.0
        %v1407 = vadd.f32 %v1405, %v1406
        %v1408 = vsel %vm1355, %v1391, 0.0
        %v1409 = vadd.f32 %v1407, %v1408
        %v1410 = vsel %vm1355, %v1392, 0.0
        %v1411 = vadd.f32 %v1409, %v1410
        %v1412 = vsel %vm1355, %v1393, 0.0
        %v1413 = vadd.f32 %v1411, %v1412
        %v1414 = vsel %vm1355, %v1394, 0.0
        %v1415 = vadd.f32 %v1413, %v1414
        %v1416 = vsel %vm1355, %v1395, 0.0
        %v1417 = vadd.f32 %v1415, %v1416
        %v1418 = vsel %vm1355, %v1396, 0.0
        %v1419 = vadd.f32 %v1417, %v1418
        %1420 = vadd.xlane.f32.xlu0 %v1419
        %v1421 = vpop.xlane.xlu0 %1420
        %v1422 = vmul.f32 %v1421, 0.0009765625
        %v1423 = vmul.f32 %v1373, %v1373
        %v1424 = vsub.f32 %v1422, %v1423
        %v1425 = vadd.f32 %v1424, 1e-05
        %v1426 = vrsqrt.pop %v1425
        %v1427 = vmul.f32 %v1426, %v1425
        %v1428 = vmul.f32 %v1427, %v1426
        %v1429 = vmul.f32 0.5, %v1428
        %v1430 = vsub.f32 1.5, %v1429
        %v1431 = vmul.f32 %v1426, %v1430
        %vm1432 = vweird.f32 %v1425
        %vm1433 = vweird.f32 %v1426
        %vm1434 = vmor %vm1432, %vm1433
        %v1435 = vsel %vm1434, %v1426, %v1431
        %v1436 = vmul.f32 %v1435, %v810
        %v1439 = vunpack.c.l.s4 839922192
        %v1440 = vunpack.c.0.s8 %v1439
        %v1441 = vperm.slane %v1373, %v1440
        %v1443 = vsub.f32 %v803, %v1441
        %v1444 = vsub.f32 %v804, %v1441
        %v1445 = vsub.f32 %v805, %v1441
        %v1446 = vsub.f32 %v806, %v1441
        %1448 = vset.pattern.permute.xlu0 0
        %1449 = vperm.xlu0 %1448, %v1436
        %v1450 = vpop.permute.xlu0 %1449
        %v1452 = vunpack.c.l.s4 839922192
        %v1453 = vunpack.c.0.s8 %v1452
        %v1454 = vperm.slane %v1450, %v1453
        %v1456 = vmul.f32 %v1443, %v1454
        %v1457 = vmul.f32 %v1444, %v1454
        %v1458 = vmul.f32 %v1445, %v1454
        %v1459 = vmul.f32 %v1446, %v1454
        %1461 = vset.pattern.permute.xlu0 0
        %1462 = vperm.xlu0 %1461, %v811
        %v1463 = vpop.permute.xlu0 %1462
        %v1465 = vunpack.c.l.s4 839922192
        %v1466 = vunpack.c.0.s8 %v1465
        %v1467 = vperm.slane %v1463, %v1466
        %v1469 = vadd.f32 %v1456, %v1467
        %v1470 = vadd.f32 %v1457, %v1467
        %v1471 = vadd.f32 %v1458, %v1467
        %v1472 = vadd.f32 %v1459, %v1467
        %vm1473 = vcmp.ge.f32.partialorder %v1469, 0.0
        %vm1474 = vcmp.ge.f32.partialorder %v1470, 0.0
        %vm1475 = vcmp.ge.f32.partialorder %v1471, 0.0
        %vm1476 = vcmp.ge.f32.partialorder %v1472, 0.0
        %v1477 = vmul.f32 %v1469, 0.2
        %v1478 = vmul.f32 %v1470, 0.2
        %v1479 = vmul.f32 %v1471, 0.2
        %v1480 = vmul.f32 %v1472, 0.2
        %v1481 = vsel %vm1473, %v1469, %v1477
        %v1482 = vsel %vm1474, %v1470, %v1478
        %v1483 = vsel %vm1475, %v1471, %v1479
        %v1484 = vsel %vm1476, %v1472, %v1480
        %v1485 = vlaneseq
        %v1486 = vand.u32 %v1485, 127
        %v1487 = vadd.s32 %v1486, 128
        %v1488 = vadd.s32 %v1486, 256
        %v1489 = vadd.s32 %v1486, 384
        %v1490 = vadd.s32 %v1486, 512
        %v1491 = vadd.s32 %v1486, 640
        %v1492 = vadd.s32 %v1486, 768
        %v1493 = vadd.s32 %v1486, 896
        %vm1494 = vcmp.ge.s32.totalorder %v1486, 1
        %vm1495 = vcmp.ge.s32.totalorder %v1487, 1
        %vm1496 = vcmp.ge.s32.totalorder %v1488, 1
        %vm1497 = vcmp.ge.s32.totalorder %v1489, 1
        %vm1498 = vcmp.ge.s32.totalorder %v1490, 1
        %vm1499 = vcmp.ge.s32.totalorder %v1491, 1
        %vm1500 = vcmp.ge.s32.totalorder %v1492, 1
        %vm1501 = vcmp.ge.s32.totalorder %v1493, 1
        %1506 = vst [vmem:[#allocation1] ss:$2 sm:$0xff] %v1481
        %s1507 = scalar_lea.vmem [#allocation1], 16
        %1508 = vst [vmem:[%s1507] ss:$2 sm:$0xff] %v1482
        %s1509 = scalar_lea.vmem [#allocation1], 32
        %1510 = vst [vmem:[%s1509] ss:$2 sm:$0xff] %v1483
        %s1511 = scalar_lea.vmem [#allocation1], 48
        %1512 = vst [vmem:[%s1511] ss:$2 sm:$0xff] %v1484
        %v1513 = vld.sshfl [vmem:[#allocation1] sm:$0xff pattern:$0x75316420]
        %v1514 = vld.sshfl [vmem:[#allocation1 + $0x8] sm:$0xff pattern:$0x75316420]
        %v1515 = vld.sshfl [vmem:[#allocation1 + $0x10] sm:$0xff pattern:$0x75316420]
        %v1516 = vld.sshfl [vmem:[#allocation1 + $0x18] sm:$0xff pattern:$0x75316420]
        %v1517 = vld.sshfl [vmem:[#allocation1 + $0x20] sm:$0xff pattern:$0x75316420]
        %v1518 = vld.sshfl [vmem:[#allocation1 + $0x28] sm:$0xff pattern:$0x75316420]
        %v1519 = vld.sshfl [vmem:[#allocation1 + $0x30] sm:$0xff pattern:$0x75316420]
        %v1520 = vld.sshfl [vmem:[#allocation1 + $0x38] sm:$0xff pattern:$0x75316420]
        %1529 = vrot.lane.b32.xlu0 %v1513, 1
        %v1530 = vpop.permute.xlu0 %1529
        %1531 = vrot.lane.b32.xlu0 %v1514, 1
        %v1532 = vpop.permute.xlu0 %1531
        %1533 = vrot.lane.b32.xlu0 %v1515, 1
        %v1534 = vpop.permute.xlu0 %1533
        %1535 = vrot.lane.b32.xlu0 %v1516, 1
        %v1536 = vpop.permute.xlu0 %1535
        %1537 = vrot.lane.b32.xlu0 %v1517, 1
        %v1538 = vpop.permute.xlu0 %1537
        %1539 = vrot.lane.b32.xlu0 %v1518, 1
        %v1540 = vpop.permute.xlu0 %1539
        %1541 = vrot.lane.b32.xlu0 %v1519, 1
        %v1542 = vpop.permute.xlu0 %1541
        %1543 = vrot.lane.b32.xlu0 %v1520, 1
        %v1544 = vpop.permute.xlu0 %1543
        %vm1545 = vcmp.lt.s32.totalorder %v1486, 1
        %v1546 = vsel %vm1545, %v1542, %v1544
        %v1547 = vsel %vm1545, %v1540, %v1542
        %v1548 = vsel %vm1545, %v1538, %v1540
        %v1549 = vsel %vm1545, %v1536, %v1538
        %v1550 = vsel %vm1545, %v1534, %v1536
        %v1551 = vsel %vm1545, %v1532, %v1534
        %v1552 = vsel %vm1545, %v1530, %v1532
        %v1553 = vsel %vm1545, %v1544, %v1530
        %v1554 = vsel %vm1494, 1, 0
        %v1555 = vsel %vm1495, 1, 0
        %v1556 = vsel %vm1496, 1, 0
        %v1557 = vsel %vm1497, 1, 0
        %v1558 = vsel %vm1498, 1, 0
        %v1559 = vsel %vm1499, 1, 0
        %v1560 = vsel %vm1500, 1, 0
        %v1561 = vsel %vm1501, 1, 0
        %vm1562 = vcmp.eq.s32.totalorder %v1554, 1
        %vm1563 = vcmp.eq.s32.totalorder %v1555, 1
        %vm1564 = vcmp.eq.s32.totalorder %v1556, 1
        %vm1565 = vcmp.eq.s32.totalorder %v1557, 1
        %vm1566 = vcmp.eq.s32.totalorder %v1558, 1
        %vm1567 = vcmp.eq.s32.totalorder %v1559, 1
        %vm1568 = vcmp.eq.s32.totalorder %v1560, 1
        %vm1569 = vcmp.eq.s32.totalorder %v1561, 1
        %v1570 = vsel %vm1562, %v1553, 0.0
        %v1571 = vsel %vm1563, %v1552, 0.0
        %v1572 = vsel %vm1564, %v1551, 0.0
        %v1573 = vsel %vm1565, %v1550, 0.0
        %v1574 = vsel %vm1566, %v1549, 0.0
        %v1575 = vsel %vm1567, %v1548, 0.0
        %v1576 = vsel %vm1568, %v1547, 0.0
        %v1577 = vsel %vm1569, %v1546, 0.0
        %vm1578 = vcmp.lt.s32.totalorder %v1486, 1023
        %vm1579 = vcmp.lt.s32.totalorder %v1487, 1023
        %vm1580 = vcmp.lt.s32.totalorder %v1488, 1023
        %vm1581 = vcmp.lt.s32.totalorder %v1489, 1023
        %vm1582 = vcmp.lt.s32.totalorder %v1490, 1023
        %vm1583 = vcmp.lt.s32.totalorder %v1491, 1023
        %vm1584 = vcmp.lt.s32.totalorder %v1492, 1023
        %vm1585 = vcmp.lt.s32.totalorder %v1493, 1023
        %1586 = vst [vmem:[#allocation1] ss:$2 sm:$0xff] %v1481
        %s1587 = scalar_lea.vmem [#allocation1], 16
        %1588 = vst [vmem:[%s1587] ss:$2 sm:$0xff] %v1482
        %s1589 = scalar_lea.vmem [#allocation1], 32
        %1590 = vst [vmem:[%s1589] ss:$2 sm:$0xff] %v1483
        %s1591 = scalar_lea.vmem [#allocation1], 48
        %1592 = vst [vmem:[%s1591] ss:$2 sm:$0xff] %v1484
        %v1593 = vld.sshfl [vmem:[#allocation1] sm:$0xff pattern:$0x75316420]
        %v1594 = vld.sshfl [vmem:[#allocation1 + $0x8] sm:$0xff pattern:$0x75316420]
        %v1595 = vld.sshfl [vmem:[#allocation1 + $0x10] sm:$0xff pattern:$0x75316420]
        %v1596 = vld.sshfl [vmem:[#allocation1 + $0x18] sm:$0xff pattern:$0x75316420]
        %v1597 = vld.sshfl [vmem:[#allocation1 + $0x20] sm:$0xff pattern:$0x75316420]
        %v1598 = vld.sshfl [vmem:[#allocation1 + $0x28] sm:$0xff pattern:$0x75316420]
        %v1599 = vld.sshfl [vmem:[#allocation1 + $0x30] sm:$0xff pattern:$0x75316420]
        %v1600 = vld.sshfl [vmem:[#allocation1 + $0x38] sm:$0xff pattern:$0x75316420]
        %1609 = vrot.lane.b32.xlu0 %v1593, 127
        %v1610 = vpop.permute.xlu0 %1609
        %1611 = vrot.lane.b32.xlu0 %v1594, 127
        %v1612 = vpop.permute.xlu0 %1611
        %1613 = vrot.lane.b32.xlu0 %v1595, 127
        %v1614 = vpop.permute.xlu0 %1613
        %1615 = vrot.lane.b32.xlu0 %v1596, 127
        %v1616 = vpop.permute.xlu0 %1615
        %1617 = vrot.lane.b32.xlu0 %v1597, 127
        %v1618 = vpop.permute.xlu0 %1617
        %1619 = vrot.lane.b32.xlu0 %v1598, 127
        %v1620 = vpop.permute.xlu0 %1619
        %1621 = vrot.lane.b32.xlu0 %v1599, 127
        %v1622 = vpop.permute.xlu0 %1621
        %1623 = vrot.lane.b32.xlu0 %v1600, 127
        %v1624 = vpop.permute.xlu0 %1623
        %vm1625 = vcmp.lt.s32.totalorder %v1486, 127
        %v1626 = vsel %vm1625, %v1622, %v1624
        %v1627 = vsel %vm1625, %v1620, %v1622
        %v1628 = vsel %vm1625, %v1618, %v1620
        %v1629 = vsel %vm1625, %v1616, %v1618
        %v1630 = vsel %vm1625, %v1614, %v1616
        %v1631 = vsel %vm1625, %v1612, %v1614
        %v1632 = vsel %vm1625, %v1610, %v1612
        %v1633 = vsel %vm1625, %v1624, %v1610
        %v1634 = vsel %vm1578, 1, 0
        %v1635 = vsel %vm1579, 1, 0
        %v1636 = vsel %vm1580, 1, 0
        %v1637 = vsel %vm1581, 1, 0
        %v1638 = vsel %vm1582, 1, 0
        %v1639 = vsel %vm1583, 1, 0
        %v1640 = vsel %vm1584, 1, 0
        %v1641 = vsel %vm1585, 1, 0
        %vm1642 = vcmp.eq.s32.totalorder %v1634, 1
        %vm1643 = vcmp.eq.s32.totalorder %v1635, 1
        %vm1644 = vcmp.eq.s32.totalorder %v1636, 1
        %vm1645 = vcmp.eq.s32.totalorder %v1637, 1
        %vm1646 = vcmp.eq.s32.totalorder %v1638, 1
        %vm1647 = vcmp.eq.s32.totalorder %v1639, 1
        %vm1648 = vcmp.eq.s32.totalorder %v1640, 1
        %vm1649 = vcmp.eq.s32.totalorder %v1641, 1
        %v1650 = vsel %vm1642, %v1632, 0.0
        %v1651 = vsel %vm1643, %v1631, 0.0
        %v1652 = vsel %vm1644, %v1630, 0.0
        %v1653 = vsel %vm1645, %v1629, 0.0
        %v1654 = vsel %vm1646, %v1628, 0.0
        %v1655 = vsel %vm1647, %v1627, 0.0
        %v1656 = vsel %vm1648, %v1626, 0.0
        %v1657 = vsel %vm1649, %v1633, 0.0
        %1659 = vrot.lane.b32.xlu0 %v808, 125
        %v1660 = vpop.permute.xlu0 %1659
        %1661 = vst [vmem:[#allocation1] ss:$2 sm:$0xff] %v1481
        %s1662 = scalar_lea.vmem [#allocation1], 16
        %1663 = vst [vmem:[%s1662] ss:$2 sm:$0xff] %v1482
        %s1664 = scalar_lea.vmem [#allocation1], 32
        %1665 = vst [vmem:[%s1664] ss:$2 sm:$0xff] %v1483
        %s1666 = scalar_lea.vmem [#allocation1], 48
        %1667 = vst [vmem:[%s1666] ss:$2 sm:$0xff] %v1484
        %v1668 = vld.sshfl [vmem:[#allocation1] sm:$0xff pattern:$0x75316420]
        %v1669 = vld.sshfl [vmem:[#allocation1 + $0x8] sm:$0xff pattern:$0x75316420]
        %v1670 = vld.sshfl [vmem:[#allocation1 + $0x10] sm:$0xff pattern:$0x75316420]
        %v1671 = vld.sshfl [vmem:[#allocation1 + $0x18] sm:$0xff pattern:$0x75316420]
        %v1672 = vld.sshfl [vmem:[#allocation1 + $0x20] sm:$0xff pattern:$0x75316420]
        %v1673 = vld.sshfl [vmem:[#allocation1 + $0x28] sm:$0xff pattern:$0x75316420]
        %v1674 = vld.sshfl [vmem:[#allocation1 + $0x30] sm:$0xff pattern:$0x75316420]
        %v1675 = vld.sshfl [vmem:[#allocation1 + $0x38] sm:$0xff pattern:$0x75316420]
        %vm1676 = vcmask 23552
        %v1677 = vsel %vm1676, %v1660, 0
        %v1679 = vsel %vm1355, %v1668, 0
        %v1681 = vsel %vm1355, %v1669, 0
        %v1683 = vsel %vm1355, %v1670, 0
        %v1685 = vsel %vm1355, %v1671, 0
        %v1687 = vsel %vm1355, %v1672, 0
        %v1689 = vsel %vm1355, %v1673, 0
        %v1691 = vsel %vm1355, %v1674, 0
        %v1693 = vsel %vm1355, %v1675, 0
        %1695 = vmatpush.msra.mxu0 0.0
        %1696 = vmatpush.msra.mxu0 0.0
        %1697 = vmatpush.msra.mxu0 0.0
        %1698 = vmatpush.msra.mxu0 0.0
        %1699 = vmatpush.msra.mxu0 0.0
        %1700 = vmatpush.msra.mxu0 0.0
        %1701 = vmatpush.msra.mxu0 0.0
        %1702 = vmatpush.msra.mxu0 0.0
        %1703 = vmatpush.msra.mxu0 0.0
        %1704 = vmatpush.msra.mxu0 0.0
        %1705 = vmatpush.msra.mxu0 0.0
        %1706 = vmatpush.msra.mxu0 0.0
        %1707 = vmatpush.msra.mxu0 0.0
        %1708 = vmatpush.msra.mxu0 0.0
        %1709 = vmatpush.msra.mxu0 0.0
        %1710 = vmatpush.msra.mxu0 %v1679
        %1711 = vmatmul.f32.gmra.mxu0 %v1677
        %v1712 = vpop.f32.mrf.mxu0
        %v1713 = vadd.f32 0.0, %v1712
        %1714 = vdwg.mxu0
        %1715 = vmatpush.msra.mxu0 0.0
        %1716 = vmatpush.msra.mxu0 0.0
        %1717 = vmatpush.msra.mxu0 0.0
        %1718 = vmatpush.msra.mxu0 0.0
        %1719 = vmatpush.msra.mxu0 0.0
        %1720 = vmatpush.msra.mxu0 0.0
        %1721 = vmatpush.msra.mxu0 0.0
        %1722 = vmatpush.msra.mxu0 0.0
        %1723 = vmatpush.msra.mxu0 0.0
        %1724 = vmatpush.msra.mxu0 0.0
        %1725 = vmatpush.msra.mxu0 0.0
        %1726 = vmatpush.msra.mxu0 0.0
        %1727 = vmatpush.msra.mxu0 0.0
        %1728 = vmatpush.msra.mxu0 0.0
        %1729 = vmatpush.msra.mxu0 0.0
        %1730 = vmatpush.msra.mxu0 %v1681
        %1731 = vmatmul.f32.gmra.mxu0 %v1677
        %v1732 = vpop.f32.mrf.mxu0
        %v1733 = vadd.f32 0.0, %v1732
        %1734 = vdwg.mxu0
        %1735 = vmatpush.msra.mxu0 0.0
        %1736 = vmatpush.msra.mxu0 0.0
        %1737 = vmatpush.msra.mxu0 0.0
        %1738 = vmatpush.msra.mxu0 0.0
        %1739 = vmatpush.msra.mxu0 0.0
        %1740 = vmatpush.msra.mxu0 0.0
        %1741 = vmatpush.msra.mxu0 0.0
        %1742 = vmatpush.msra.mxu0 0.0
        %1743 = vmatpush.msra.mxu0 0.0
        %1744 = vmatpush.msra.mxu0 0.0
        %1745 = vmatpush.msra.mxu0 0.0
        %1746 = vmatpush.msra.mxu0 0.0
        %1747 = vmatpush.msra.mxu0 0.0
        %1748 = vmatpush.msra.mxu0 0.0
        %1749 = vmatpush.msra.mxu0 0.0
        %1750 = vmatpush.msra.mxu0 %v1683
        %1751 = vmatmul.f32.gmra.mxu0 %v1677
        %v1752 = vpop.f32.mrf.mxu0
        %v1753 = vadd.f32 0.0, %v1752
        %1754 = vdwg.mxu0
        %1755 = vmatpush.msra.mxu0 0.0
        %1756 = vmatpush.msra.mxu0 0.0
        %1757 = vmatpush.msra.mxu0 0.0
        %1758 = vmatpush.msra.mxu0 0.0
        %1759 = vmatpush.msra.mxu0 0.0
        %1760 = vmatpush.msra.mxu0 0.0
        %1761 = vmatpush.msra.mxu0 0.0
        %1762 = vmatpush.msra.mxu0 0.0
        %1763 = vmatpush.msra.mxu0 0.0
        %1764 = vmatpush.msra.mxu0 0.0
        %1765 = vmatpush.msra.mxu0 0.0
        %1766 = vmatpush.msra.mxu0 0.0
        %1767 = vmatpush.msra.mxu0 0.0
        %1768 = vmatpush.msra.mxu0 0.0
        %1769 = vmatpush.msra.mxu0 0.0
        %1770 = vmatpush.msra.mxu0 %v1685
        %1771 = vmatmul.f32.gmra.mxu0 %v1677
        %v1772 = vpop.f32.mrf.mxu0
        %v1773 = vadd.f32 0.0, %v1772
        %1774 = vdwg.mxu0
        %1775 = vmatpush.msra.mxu0 0.0
        %1776 = vmatpush.msra.mxu0 0.0
        %1777 = vmatpush.msra.mxu0 0.0
        %1778 = vmatpush.msra.mxu0 0.0
        %1779 = vmatpush.msra.mxu0 0.0
        %1780 = vmatpush.msra.mxu0 0.0
        %1781 = vmatpush.msra.mxu0 0.0
        %1782 = vmatpush.msra.mxu0 0.0
        %1783 = vmatpush.msra.mxu0 0.0
        %1784 = vmatpush.msra.mxu0 0.0
        %1785 = vmatpush.msra.mxu0 0.0
        %1786 = vmatpush.msra.mxu0 0.0
        %1787 = vmatpush.msra.mxu0 0.0
        %1788 = vmatpush.msra.mxu0 0.0
        %1789 = vmatpush.msra.mxu0 0.0
        %1790 = vmatpush.msra.mxu0 %v1687
        %1791 = vmatmul.f32.gmra.mxu0 %v1677
        %v1792 = vpop.f32.mrf.mxu0
        %v1793 = vadd.f32 0.0, %v1792
        %1794 = vdwg.mxu0
        %1795 = vmatpush.msra.mxu0 0.0
        %1796 = vmatpush.msra.mxu0 0.0
        %1797 = vmatpush.msra.mxu0 0.0
        %1798 = vmatpush.msra.mxu0 0.0
        %1799 = vmatpush.msra.mxu0 0.0
        %1800 = vmatpush.msra.mxu0 0.0
        %1801 = vmatpush.msra.mxu0 0.0
        %1802 = vmatpush.msra.mxu0 0.0
        %1803 = vmatpush.msra.mxu0 0.0
        %1804 = vmatpush.msra.mxu0 0.0
        %1805 = vmatpush.msra.mxu0 0.0
        %1806 = vmatpush.msra.mxu0 0.0
        %1807 = vmatpush.msra.mxu0 0.0
        %1808 = vmatpush.msra.mxu0 0.0
        %1809 = vmatpush.msra.mxu0 0.0
        %1810 = vmatpush.msra.mxu0 %v1689
        %1811 = vmatmul.f32.gmra.mxu0 %v1677
        %v1812 = vpop.f32.mrf.mxu0
        %v1813 = vadd.f32 0.0, %v1812
        %1814 = vdwg.mxu0
        %1815 = vmatpush.msra.mxu0 0.0
        %1816 = vmatpush.msra.mxu0 0.0
        %1817 = vmatpush.msra.mxu0 0.0
        %1818 = vmatpush.msra.mxu0 0.0
        %1819 = vmatpush.msra.mxu0 0.0
        %1820 = vmatpush.msra.mxu0 0.0
        %1821 = vmatpush.msra.mxu0 0.0
        %1822 = vmatpush.msra.mxu0 0.0
        %1823 = vmatpush.msra.mxu0 0.0
        %1824 = vmatpush.msra.mxu0 0.0
        %1825 = vmatpush.msra.mxu0 0.0
        %1826 = vmatpush.msra.mxu0 0.0
        %1827 = vmatpush.msra.mxu0 0.0
        %1828 = vmatpush.msra.mxu0 0.0
        %1829 = vmatpush.msra.mxu0 0.0
        %1830 = vmatpush.msra.mxu0 %v1691
        %1831 = vmatmul.f32.gmra.mxu0 %v1677
        %v1832 = vpop.f32.mrf.mxu0
        %v1833 = vadd.f32 0.0, %v1832
        %1834 = vdwg.mxu0
        %1835 = vmatpush.msra.mxu0 0.0
        %1836 = vmatpush.msra.mxu0 0.0
        %1837 = vmatpush.msra.mxu0 0.0
        %1838 = vmatpush.msra.mxu0 0.0
        %1839 = vmatpush.msra.mxu0 0.0
        %1840 = vmatpush.msra.mxu0 0.0
        %1841 = vmatpush.msra.mxu0 0.0
        %1842 = vmatpush.msra.mxu0 0.0
        %1843 = vmatpush.msra.mxu0 0.0
        %1844 = vmatpush.msra.mxu0 0.0
        %1845 = vmatpush.msra.mxu0 0.0
        %1846 = vmatpush.msra.mxu0 0.0
        %1847 = vmatpush.msra.mxu0 0.0
        %1848 = vmatpush.msra.mxu0 0.0
        %1849 = vmatpush.msra.mxu0 0.0
        %1850 = vmatpush.msra.mxu0 %v1693
        %1851 = vmatmul.f32.gmra.mxu0 %v1677
        %v1852 = vpop.f32.mrf.mxu0
        %v1853 = vadd.f32 0.0, %v1852
        %1854 = vdwg.mxu0
        %v1855 = vsel %vm1676, %v808, 0
        %v1858 = vsel %vm1355, %v1570, 0
        %v1861 = vsel %vm1355, %v1571, 0
        %v1864 = vsel %vm1355, %v1572, 0
        %v1867 = vsel %vm1355, %v1573, 0
        %v1870 = vsel %vm1355, %v1574, 0
        %v1873 = vsel %vm1355, %v1575, 0
        %v1876 = vsel %vm1355, %v1576, 0
        %v1879 = vsel %vm1355, %v1577, 0
        %1881 = vmatpush.msra.mxu0 0.0
        %1882 = vmatpush.msra.mxu0 0.0
        %1883 = vmatpush.msra.mxu0 0.0
        %1884 = vmatpush.msra.mxu0 0.0
        %1885 = vmatpush.msra.mxu0 0.0
        %1886 = vmatpush.msra.mxu0 0.0
        %1887 = vmatpush.msra.mxu0 0.0
        %1888 = vmatpush.msra.mxu0 0.0
        %1889 = vmatpush.msra.mxu0 0.0
        %1890 = vmatpush.msra.mxu0 0.0
        %1891 = vmatpush.msra.mxu0 0.0
        %1892 = vmatpush.msra.mxu0 0.0
        %1893 = vmatpush.msra.mxu0 0.0
        %1894 = vmatpush.msra.mxu0 0.0
        %1895 = vmatpush.msra.mxu0 0.0
        %1896 = vmatpush.msra.mxu0 %v1858
        %1897 = vmatmul.f32.gmra.mxu0 %v1855
        %v1898 = vpop.f32.mrf.mxu0
        %v1899 = vadd.f32 %v1713, %v1898
        %1900 = vdwg.mxu0
        %1901 = vmatpush.msra.mxu0 0.0
        %1902 = vmatpush.msra.mxu0 0.0
        %1903 = vmatpush.msra.mxu0 0.0
        %1904 = vmatpush.msra.mxu0 0.0
        %1905 = vmatpush.msra.mxu0 0.0
        %1906 = vmatpush.msra.mxu0 0.0
        %1907 = vmatpush.msra.mxu0 0.0
        %1908 = vmatpush.msra.mxu0 0.0
        %1909 = vmatpush.msra.mxu0 0.0
        %1910 = vmatpush.msra.mxu0 0.0
        %1911 = vmatpush.msra.mxu0 0.0
        %1912 = vmatpush.msra.mxu0 0.0
        %1913 = vmatpush.msra.mxu0 0.0
        %1914 = vmatpush.msra.mxu0 0.0
        %1915 = vmatpush.msra.mxu0 0.0
        %1916 = vmatpush.msra.mxu0 %v1861
        %1917 = vmatmul.f32.gmra.mxu0 %v1855
        %v1918 = vpop.f32.mrf.mxu0
        %v1919 = vadd.f32 %v1733, %v1918
        %1920 = vdwg.mxu0
        %1921 = vmatpush.msra.mxu0 0.0
        %1922 = vmatpush.msra.mxu0 0.0
        %1923 = vmatpush.msra.mxu0 0.0
        %1924 = vmatpush.msra.mxu0 0.0
        %1925 = vmatpush.msra.mxu0 0.0
        %1926 = vmatpush.msra.mxu0 0.0
        %1927 = vmatpush.msra.mxu0 0.0
        %1928 = vmatpush.msra.mxu0 0.0
        %1929 = vmatpush.msra.mxu0 0.0
        %1930 = vmatpush.msra.mxu0 0.0
        %1931 = vmatpush.msra.mxu0 0.0
        %1932 = vmatpush.msra.mxu0 0.0
        %1933 = vmatpush.msra.mxu0 0.0
        %1934 = vmatpush.msra.mxu0 0.0
        %1935 = vmatpush.msra.mxu0 0.0
        %1936 = vmatpush.msra.mxu0 %v1864
        %1937 = vmatmul.f32.gmra.mxu0 %v1855
        %v1938 = vpop.f32.mrf.mxu0
        %v1939 = vadd.f32 %v1753, %v1938
        %1940 = vdwg.mxu0
        %1941 = vmatpush.msra.mxu0 0.0
        %1942 = vmatpush.msra.mxu0 0.0
        %1943 = vmatpush.msra.mxu0 0.0
        %1944 = vmatpush.msra.mxu0 0.0
        %1945 = vmatpush.msra.mxu0 0.0
        %1946 = vmatpush.msra.mxu0 0.0
        %1947 = vmatpush.msra.mxu0 0.0
        %1948 = vmatpush.msra.mxu0 0.0
        %1949 = vmatpush.msra.mxu0 0.0
        %1950 = vmatpush.msra.mxu0 0.0
        %1951 = vmatpush.msra.mxu0 0.0
        %1952 = vmatpush.msra.mxu0 0.0
        %1953 = vmatpush.msra.mxu0 0.0
        %1954 = vmatpush.msra.mxu0 0.0
        %1955 = vmatpush.msra.mxu0 0.0
        %1956 = vmatpush.msra.mxu0 %v1867
        %1957 = vmatmul.f32.gmra.mxu0 %v1855
        %v1958 = vpop.f32.mrf.mxu0
        %v1959 = vadd.f32 %v1773, %v1958
        %1960 = vdwg.mxu0
        %1961 = vmatpush.msra.mxu0 0.0
        %1962 = vmatpush.msra.mxu0 0.0
        %1963 = vmatpush.msra.mxu0 0.0
        %1964 = vmatpush.msra.mxu0 0.0
        %1965 = vmatpush.msra.mxu0 0.0
        %1966 = vmatpush.msra.mxu0 0.0
        %1967 = vmatpush.msra.mxu0 0.0
        %1968 = vmatpush.msra.mxu0 0.0
        %1969 = vmatpush.msra.mxu0 0.0
        %1970 = vmatpush.msra.mxu0 0.0
        %1971 = vmatpush.msra.mxu0 0.0
        %1972 = vmatpush.msra.mxu0 0.0
        %1973 = vmatpush.msra.mxu0 0.0
        %1974 = vmatpush.msra.mxu0 0.0
        %1975 = vmatpush.msra.mxu0 0.0
        %1976 = vmatpush.msra.mxu0 %v1870
        %1977 = vmatmul.f32.gmra.mxu0 %v1855
        %v1978 = vpop.f32.mrf.mxu0
        %v1979 = vadd.f32 %v1793, %v1978
        %1980 = vdwg.mxu0
        %1981 = vmatpush.msra.mxu0 0.0
        %1982 = vmatpush.msra.mxu0 0.0
        %1983 = vmatpush.msra.mxu0 0.0
        %1984 = vmatpush.msra.mxu0 0.0
        %1985 = vmatpush.msra.mxu0 0.0
        %1986 = vmatpush.msra.mxu0 0.0
        %1987 = vmatpush.msra.mxu0 0.0
        %1988 = vmatpush.msra.mxu0 0.0
        %1989 = vmatpush.msra.mxu0 0.0
        %1990 = vmatpush.msra.mxu0 0.0
        %1991 = vmatpush.msra.mxu0 0.0
        %1992 = vmatpush.msra.mxu0 0.0
        %1993 = vmatpush.msra.mxu0 0.0
        %1994 = vmatpush.msra.mxu0 0.0
        %1995 = vmatpush.msra.mxu0 0.0
        %1996 = vmatpush.msra.mxu0 %v1873
        %1997 = vmatmul.f32.gmra.mxu0 %v1855
        %v1998 = vpop.f32.mrf.mxu0
        %v1999 = vadd.f32 %v1813, %v1998
        %2000 = vdwg.mxu0
        %2001 = vmatpush.msra.mxu0 0.0
        %2002 = vmatpush.msra.mxu0 0.0
        %2003 = vmatpush.msra.mxu0 0.0
        %2004 = vmatpush.msra.mxu0 0.0
        %2005 = vmatpush.msra.mxu0 0.0
        %2006 = vmatpush.msra.mxu0 0.0
        %2007 = vmatpush.msra.mxu0 0.0
        %2008 = vmatpush.msra.mxu0 0.0
        %2009 = vmatpush.msra.mxu0 0.0
        %2010 = vmatpush.msra.mxu0 0.0
        %2011 = vmatpush.msra.mxu0 0.0
        %2012 = vmatpush.msra.mxu0 0.0
        %2013 = vmatpush.msra.mxu0 0.0
        %2014 = vmatpush.msra.mxu0 0.0
        %2015 = vmatpush.msra.mxu0 0.0
        %2016 = vmatpush.msra.mxu0 %v1876
        %2017 = vmatmul.f32.gmra.mxu0 %v1855
        %v2018 = vpop.f32.mrf.mxu0
        %v2019 = vadd.f32 %v1833, %v2018
        %2020 = vdwg.mxu0
        %2021 = vmatpush.msra.mxu0 0.0
        %2022 = vmatpush.msra.mxu0 0.0
        %2023 = vmatpush.msra.mxu0 0.0
        %2024 = vmatpush.msra.mxu0 0.0
        %2025 = vmatpush.msra.mxu0 0.0
        %2026 = vmatpush.msra.mxu0 0.0
        %2027 = vmatpush.msra.mxu0 0.0
        %2028 = vmatpush.msra.mxu0 0.0
        %2029 = vmatpush.msra.mxu0 0.0
        %2030 = vmatpush.msra.mxu0 0.0
        %2031 = vmatpush.msra.mxu0 0.0
        %2032 = vmatpush.msra.mxu0 0.0
        %2033 = vmatpush.msra.mxu0 0.0
        %2034 = vmatpush.msra.mxu0 0.0
        %2035 = vmatpush.msra.mxu0 0.0
        %2036 = vmatpush.msra.mxu0 %v1879
        %2037 = vmatmul.f32.gmra.mxu0 %v1855
        %v2038 = vpop.f32.mrf.mxu0
        %v2039 = vadd.f32 %v1853, %v2038
        %2040 = vdwg.mxu0
        %2041 = vrot.lane.b32.xlu0 %v808, 122
        %v2042 = vpop.permute.xlu0 %2041
        %v2043 = vsel %vm1676, %v2042, 0
        %v2046 = vsel %vm1355, %v1650, 0
        %v2049 = vsel %vm1355, %v1651, 0
        %v2052 = vsel %vm1355, %v1652, 0
        %v2055 = vsel %vm1355, %v1653, 0
        %v2058 = vsel %vm1355, %v1654, 0
        %v2061 = vsel %vm1355, %v1655, 0
        %v2064 = vsel %vm1355, %v1656, 0
        %v2067 = vsel %vm1355, %v1657, 0
        %2069 = vmatpush.msra.mxu0 0.0
        %2070 = vmatpush.msra.mxu0 0.0
        %2071 = vmatpush.msra.mxu0 0.0
        %2072 = vmatpush.msra.mxu0 0.0
        %2073 = vmatpush.msra.mxu0 0.0
        %2074 = vmatpush.msra.mxu0 0.0
        %2075 = vmatpush.msra.mxu0 0.0
        %2076 = vmatpush.msra.mxu0 0.0
        %2077 = vmatpush.msra.mxu0 0.0
        %2078 = vmatpush.msra.mxu0 0.0
        %2079 = vmatpush.msra.mxu0 0.0
        %2080 = vmatpush.msra.mxu0 0.0
        %2081 = vmatpush.msra.mxu0 0.0
        %2082 = vmatpush.msra.mxu0 0.0
        %2083 = vmatpush.msra.mxu0 0.0
        %2084 = vmatpush.msra.mxu0 %v2046
        %2085 = vmatmul.f32.gmra.mxu0 %v2043
        %v2086 = vpop.f32.mrf.mxu0
        %v2087 = vadd.f32 0.0, %v2086
        %2088 = vdwg.mxu0
        %2089 = vmatpush.msra.mxu0 0.0
        %2090 = vmatpush.msra.mxu0 0.0
        %2091 = vmatpush.msra.mxu0 0.0
        %2092 = vmatpush.msra.mxu0 0.0
        %2093 = vmatpush.msra.mxu0 0.0
        %2094 = vmatpush.msra.mxu0 0.0
        %2095 = vmatpush.msra.mxu0 0.0
        %2096 = vmatpush.msra.mxu0 0.0
        %2097 = vmatpush.msra.mxu0 0.0
        %2098 = vmatpush.msra.mxu0 0.0
        %2099 = vmatpush.msra.mxu0 0.0
        %2100 = vmatpush.msra.mxu0 0.0
        %2101 = vmatpush.msra.mxu0 0.0
        %2102 = vmatpush.msra.mxu0 0.0
        %2103 = vmatpush.msra.mxu0 0.0
        %2104 = vmatpush.msra.mxu0 %v2049
        %2105 = vmatmul.f32.gmra.mxu0 %v2043
        %v2106 = vpop.f32.mrf.mxu0
        %v2107 = vadd.f32 0.0, %v2106
        %2108 = vdwg.mxu0
        %2109 = vmatpush.msra.mxu0 0.0
        %2110 = vmatpush.msra.mxu0 0.0
        %2111 = vmatpush.msra.mxu0 0.0
        %2112 = vmatpush.msra.mxu0 0.0
        %2113 = vmatpush.msra.mxu0 0.0
        %2114 = vmatpush.msra.mxu0 0.0
        %2115 = vmatpush.msra.mxu0 0.0
        %2116 = vmatpush.msra.mxu0 0.0
        %2117 = vmatpush.msra.mxu0 0.0
        %2118 = vmatpush.msra.mxu0 0.0
        %2119 = vmatpush.msra.mxu0 0.0
        %2120 = vmatpush.msra.mxu0 0.0
        %2121 = vmatpush.msra.mxu0 0.0
        %2122 = vmatpush.msra.mxu0 0.0
        %2123 = vmatpush.msra.mxu0 0.0
        %2124 = vmatpush.msra.mxu0 %v2052
        %2125 = vmatmul.f32.gmra.mxu0 %v2043
        %v2126 = vpop.f32.mrf.mxu0
        %v2127 = vadd.f32 0.0, %v2126
        %2128 = vdwg.mxu0
        %2129 = vmatpush.msra.mxu0 0.0
        %2130 = vmatpush.msra.mxu0 0.0
        %2131 = vmatpush.msra.mxu0 0.0
        %2132 = vmatpush.msra.mxu0 0.0
        %2133 = vmatpush.msra.mxu0 0.0
        %2134 = vmatpush.msra.mxu0 0.0
        %2135 = vmatpush.msra.mxu0 0.0
        %2136 = vmatpush.msra.mxu0 0.0
        %2137 = vmatpush.msra.mxu0 0.0
        %2138 = vmatpush.msra.mxu0 0.0
        %2139 = vmatpush.msra.mxu0 0.0
        %2140 = vmatpush.msra.mxu0 0.0
        %2141 = vmatpush.msra.mxu0 0.0
        %2142 = vmatpush.msra.mxu0 0.0
        %2143 = vmatpush.msra.mxu0 0.0
        %2144 = vmatpush.msra.mxu0 %v2055
        %2145 = vmatmul.f32.gmra.mxu0 %v2043
        %v2146 = vpop.f32.mrf.mxu0
        %v2147 = vadd.f32 0.0, %v2146
        %2148 = vdwg.mxu0
        %2149 = vmatpush.msra.mxu0 0.0
        %2150 = vmatpush.msra.mxu0 0.0
        %2151 = vmatpush.msra.mxu0 0.0
        %2152 = vmatpush.msra.mxu0 0.0
        %2153 = vmatpush.msra.mxu0 0.0
        %2154 = vmatpush.msra.mxu0 0.0
        %2155 = vmatpush.msra.mxu0 0.0
        %2156 = vmatpush.msra.mxu0 0.0
        %2157 = vmatpush.msra.mxu0 0.0
        %2158 = vmatpush.msra.mxu0 0.0
        %2159 = vmatpush.msra.mxu0 0.0
        %2160 = vmatpush.msra.mxu0 0.0
        %2161 = vmatpush.msra.mxu0 0.0
        %2162 = vmatpush.msra.mxu0 0.0
        %2163 = vmatpush.msra.mxu0 0.0
        %2164 = vmatpush.msra.mxu0 %v2058
        %2165 = vmatmul.f32.gmra.mxu0 %v2043
        %v2166 = vpop.f32.mrf.mxu0
        %v2167 = vadd.f32 0.0, %v2166
        %2168 = vdwg.mxu0
        %2169 = vmatpush.msra.mxu0 0.0
        %2170 = vmatpush.msra.mxu0 0.0
        %2171 = vmatpush.msra.mxu0 0.0
        %2172 = vmatpush.msra.mxu0 0.0
        %2173 = vmatpush.msra.mxu0 0.0
        %2174 = vmatpush.msra.mxu0 0.0
        %2175 = vmatpush.msra.mxu0 0.0
        %2176 = vmatpush.msra.mxu0 0.0
        %2177 = vmatpush.msra.mxu0 0.0
        %2178 = vmatpush.msra.mxu0 0.0
        %2179 = vmatpush.msra.mxu0 0.0
        %2180 = vmatpush.msra.mxu0 0.0
        %2181 = vmatpush.msra.mxu0 0.0
        %2182 = vmatpush.msra.mxu0 0.0
        %2183 = vmatpush.msra.mxu0 0.0
        %2184 = vmatpush.msra.mxu0 %v2061
        %2185 = vmatmul.f32.gmra.mxu0 %v2043
        %v2186 = vpop.f32.mrf.mxu0
        %v2187 = vadd.f32 0.0, %v2186
        %2188 = vdwg.mxu0
        %2189 = vmatpush.msra.mxu0 0.0
        %2190 = vmatpush.msra.mxu0 0.0
        %2191 = vmatpush.msra.mxu0 0.0
        %2192 = vmatpush.msra.mxu0 0.0
        %2193 = vmatpush.msra.mxu0 0.0
        %2194 = vmatpush.msra.mxu0 0.0
        %2195 = vmatpush.msra.mxu0 0.0
        %2196 = vmatpush.msra.mxu0 0.0
        %2197 = vmatpush.msra.mxu0 0.0
        %2198 = vmatpush.msra.mxu0 0.0
        %2199 = vmatpush.msra.mxu0 0.0
        %2200 = vmatpush.msra.mxu0 0.0
        %2201 = vmatpush.msra.mxu0 0.0
        %2202 = vmatpush.msra.mxu0 0.0
        %2203 = vmatpush.msra.mxu0 0.0
        %2204 = vmatpush.msra.mxu0 %v2064
        %2205 = vmatmul.f32.gmra.mxu0 %v2043
        %v2206 = vpop.f32.mrf.mxu0
        %v2207 = vadd.f32 0.0, %v2206
        %2208 = vdwg.mxu0
        %2209 = vmatpush.msra.mxu0 0.0
        %2210 = vmatpush.msra.mxu0 0.0
        %2211 = vmatpush.msra.mxu0 0.0
        %2212 = vmatpush.msra.mxu0 0.0
        %2213 = vmatpush.msra.mxu0 0.0
        %2214 = vmatpush.msra.mxu0 0.0
        %2215 = vmatpush.msra.mxu0 0.0
        %2216 = vmatpush.msra.mxu0 0.0
        %2217 = vmatpush.msra.mxu0 0.0
        %2218 = vmatpush.msra.mxu0 0.0
        %2219 = vmatpush.msra.mxu0 0.0
        %2220 = vmatpush.msra.mxu0 0.0
        %2221 = vmatpush.msra.mxu0 0.0
        %2222 = vmatpush.msra.mxu0 0.0
        %2223 = vmatpush.msra.mxu0 0.0
        %2224 = vmatpush.msra.mxu0 %v2067
        %2225 = vmatmul.f32.gmra.mxu0 %v2043
        %v2226 = vpop.f32.mrf.mxu0
        %v2227 = vadd.f32 0.0, %v2226
        %2228 = vdwg.mxu0
        %v2229 = vadd.f32 %v1899, %v2087
        %v2230 = vadd.f32 %v1919, %v2107
        %v2231 = vadd.f32 %v1939, %v2127
        %v2232 = vadd.f32 %v1959, %v2147
        %v2233 = vadd.f32 %v1979, %v2167
        %v2234 = vadd.f32 %v1999, %v2187
        %v2235 = vadd.f32 %v2019, %v2207
        %v2236 = vadd.f32 %v2039, %v2227
        %2238 = vset.pattern.permute.xlu0 0
        %2239 = vperm.xlu0 %2238, %v809
        %v2240 = vpop.permute.xlu0 %2239
        %v2242 = vadd.f32 %v2229, %v2240
        %v2243 = vadd.f32 %v2230, %v2240
        %v2244 = vadd.f32 %v2231, %v2240
        %v2245 = vadd.f32 %v2232, %v2240
        %v2246 = vadd.f32 %v2233, %v2240
        %v2247 = vadd.f32 %v2234, %v2240
        %v2248 = vadd.f32 %v2235, %v2240
        %v2249 = vadd.f32 %v2236, %v2240
        %2250 = vst [vmem:[#allocation1] ss:$2 sm:$0xff] %v803
        %s2251 = scalar_lea.vmem [#allocation1], 16
        %2252 = vst [vmem:[%s2251] ss:$2 sm:$0xff] %v804
        %s2253 = scalar_lea.vmem [#allocation1], 32
        %2254 = vst [vmem:[%s2253] ss:$2 sm:$0xff] %v805
        %s2255 = scalar_lea.vmem [#allocation1], 48
        %2256 = vst [vmem:[%s2255] ss:$2 sm:$0xff] %v806
        %v2257 = vld.sshfl [vmem:[#allocation1] sm:$0xff pattern:$0x75316420]
        %v2258 = vld.sshfl [vmem:[#allocation1 + $0x8] sm:$0xff pattern:$0x75316420]
        %v2259 = vld.sshfl [vmem:[#allocation1 + $0x10] sm:$0xff pattern:$0x75316420]
        %v2260 = vld.sshfl [vmem:[#allocation1 + $0x18] sm:$0xff pattern:$0x75316420]
        %v2261 = vld.sshfl [vmem:[#allocation1 + $0x20] sm:$0xff pattern:$0x75316420]
        %v2262 = vld.sshfl [vmem:[#allocation1 + $0x28] sm:$0xff pattern:$0x75316420]
        %v2263 = vld.sshfl [vmem:[#allocation1 + $0x30] sm:$0xff pattern:$0x75316420]
        %v2264 = vld.sshfl [vmem:[#allocation1 + $0x38] sm:$0xff pattern:$0x75316420]
        %2273 = vmatpush.msra.mxu0 %v876
        %2274 = vmatpush.msra.mxu0 %v872
        %2275 = vmatpush.msra.mxu0 %v868
        %2276 = vmatpush.msra.mxu0 %v864
        %2277 = vmatpush.msra.mxu0 %v860
        %2278 = vmatpush.msra.mxu0 %v856
        %2279 = vmatpush.msra.mxu0 %v852
        %2280 = vmatpush.msra.mxu0 %v848
        %2281 = vmatpush.msra.mxu0 %v844
        %2282 = vmatpush.msra.mxu0 %v840
        %2283 = vmatpush.msra.mxu0 %v836
        %2284 = vmatpush.msra.mxu0 %v832
        %2285 = vmatpush.msra.mxu0 %v828
        %2286 = vmatpush.msra.mxu0 %v824
        %2287 = vmatpush.msra.mxu0 %v820
        %2288 = vmatpush.msra.mxu0 %v816
        %2289 = vmatmul.f32.gmra.mxu0 %v2257
        %v2290 = vpop.f32.mrf.mxu0
        %v2291 = vadd.f32 0.0, %v2290
        %2292 = vdwg.mxu0
        %2293 = vmatpush.msra.mxu0 %v940
        %2294 = vmatpush.msra.mxu0 %v936
        %2295 = vmatpush.msra.mxu0 %v932
        %2296 = vmatpush.msra.mxu0 %v928
        %2297 = vmatpush.msra.mxu0 %v924
        %2298 = vmatpush.msra.mxu0 %v920
        %2299 = vmatpush.msra.mxu0 %v916
        %2300 = vmatpush.msra.mxu0 %v912
        %2301 = vmatpush.msra.mxu0 %v908
        %2302 = vmatpush.msra.mxu0 %v904
        %2303 = vmatpush.msra.mxu0 %v900
        %2304 = vmatpush.msra.mxu0 %v896
        %2305 = vmatpush.msra.mxu0 %v892
        %2306 = vmatpush.msra.mxu0 %v888
        %2307 = vmatpush.msra.mxu0 %v884
        %2308 = vmatpush.msra.mxu0 %v880
        %2309 = vmatmul.f32.gmra.mxu0 %v2258
        %v2310 = vpop.f32.mrf.mxu0
        %v2311 = vadd.f32 %v2291, %v2310
        %2312 = vdwg.mxu0
        %2313 = vmatpush.msra.mxu0 %v1004
        %2314 = vmatpush.msra.mxu0 %v1000
        %2315 = vmatpush.msra.mxu0 %v996
        %2316 = vmatpush.msra.mxu0 %v992
        %2317 = vmatpush.msra.mxu0 %v988
        %2318 = vmatpush.msra.mxu0 %v984
        %2319 = vmatpush.msra.mxu0 %v980
        %2320 = vmatpush.msra.mxu0 %v976
        %2321 = vmatpush.msra.mxu0 %v972
        %2322 = vmatpush.msra.mxu0 %v968
        %2323 = vmatpush.msra.mxu0 %v964
        %2324 = vmatpush.msra.mxu0 %v960
        %2325 = vmatpush.msra.mxu0 %v956
        %2326 = vmatpush.msra.mxu0 %v952
        %2327 = vmatpush.msra.mxu0 %v948
        %2328 = vmatpush.msra.mxu0 %v944
        %2329 = vmatmul.f32.gmra.mxu0 %v2259
        %v2330 = vpop.f32.mrf.mxu0
        %v2331 = vadd.f32 %v2311, %v2330
        %2332 = vdwg.mxu0
        %2333 = vmatpush.msra.mxu0 %v1068
        %2334 = vmatpush.msra.mxu0 %v1064
        %2335 = vmatpush.msra.mxu0 %v1060
        %2336 = vmatpush.msra.mxu0 %v1056
        %2337 = vmatpush.msra.mxu0 %v1052
        %2338 = vmatpush.msra.mxu0 %v1048
        %2339 = vmatpush.msra.mxu0 %v1044
        %2340 = vmatpush.msra.mxu0 %v1040
        %2341 = vmatpush.msra.mxu0 %v1036
        %2342 = vmatpush.msra.mxu0 %v1032
        %2343 = vmatpush.msra.mxu0 %v1028
        %2344 = vmatpush.msra.mxu0 %v1024
        %2345 = vmatpush.msra.mxu0 %v1020
        %2346 = vmatpush.msra.mxu0 %v1016
        %2347 = vmatpush.msra.mxu0 %v1012
        %2348 = vmatpush.msra.mxu0 %v1008
        %2349 = vmatmul.f32.gmra.mxu0 %v2260
        %v2350 = vpop.f32.mrf.mxu0
        %v2351 = vadd.f32 %v2331, %v2350
        %2352 = vdwg.mxu0
        %2353 = vmatpush.msra.mxu0 %v1132
        %2354 = vmatpush.msra.mxu0 %v1128
        %2355 = vmatpush.msra.mxu0 %v1124
        %2356 = vmatpush.msra.mxu0 %v1120
        %2357 = vmatpush.msra.mxu0 %v1116
        %2358 = vmatpush.msra.mxu0 %v1112
        %2359 = vmatpush.msra.mxu0 %v1108
        %2360 = vmatpush.msra.mxu0 %v1104
        %2361 = vmatpush.msra.mxu0 %v1100
        %2362 = vmatpush.msra.mxu0 %v1096
        %2363 = vmatpush.msra.mxu0 %v1092
        %2364 = vmatpush.msra.mxu0 %v1088
        %2365 = vmatpush.msra.mxu0 %v1084
        %2366 = vmatpush.msra.mxu0 %v1080
        %2367 = vmatpush.msra.mxu0 %v1076
        %2368 = vmatpush.msra.mxu0 %v1072
        %2369 = vmatmul.f32.gmra.mxu0 %v2261
        %v2370 = vpop.f32.mrf.mxu0
        %v2371 = vadd.f32 %v2351, %v2370
        %2372 = vdwg.mxu0
        %2373 = vmatpush.msra.mxu0 %v1196
        %2374 = vmatpush.msra.mxu0 %v1192
        %2375 = vmatpush.msra.mxu0 %v1188
        %2376 = vmatpush.msra.mxu0 %v1184
        %2377 = vmatpush.msra.mxu0 %v1180
        %2378 = vmatpush.msra.mxu0 %v1176
        %2379 = vmatpush.msra.mxu0 %v1172
        %2380 = vmatpush.msra.mxu0 %v1168
        %2381 = vmatpush.msra.mxu0 %v1164
        %2382 = vmatpush.msra.mxu0 %v1160
        %2383 = vmatpush.msra.mxu0 %v1156
        %2384 = vmatpush.msra.mxu0 %v1152
        %2385 = vmatpush.msra.mxu0 %v1148
        %2386 = vmatpush.msra.mxu0 %v1144
        %2387 = vmatpush.msra.mxu0 %v1140
        %2388 = vmatpush.msra.mxu0 %v1136
        %2389 = vmatmul.f32.gmra.mxu0 %v2262
        %v2390 = vpop.f32.mrf.mxu0
        %v2391 = vadd.f32 %v2371, %v2390
        %2392 = vdwg.mxu0
        %2393 = vmatpush.msra.mxu0 %v1260
        %2394 = vmatpush.msra.mxu0 %v1256
        %2395 = vmatpush.msra.mxu0 %v1252
        %2396 = vmatpush.msra.mxu0 %v1248
        %2397 = vmatpush.msra.mxu0 %v1244
        %2398 = vmatpush.msra.mxu0 %v1240
        %2399 = vmatpush.msra.mxu0 %v1236
        %2400 = vmatpush.msra.mxu0 %v1232
        %2401 = vmatpush.msra.mxu0 %v1228
        %2402 = vmatpush.msra.mxu0 %v1224
        %2403 = vmatpush.msra.mxu0 %v1220
        %2404 = vmatpush.msra.mxu0 %v1216
        %2405 = vmatpush.msra.mxu0 %v1212
        %2406 = vmatpush.msra.mxu0 %v1208
        %2407 = vmatpush.msra.mxu0 %v1204
        %2408 = vmatpush.msra.mxu0 %v1200
        %2409 = vmatmul.f32.gmra.mxu0 %v2263
        %v2410 = vpop.f32.mrf.mxu0
        %v2411 = vadd.f32 %v2391, %v2410
        %2412 = vdwg.mxu0
        %2413 = vmatpush.msra.mxu0 %v1324
        %2414 = vmatpush.msra.mxu0 %v1320
        %2415 = vmatpush.msra.mxu0 %v1316
        %2416 = vmatpush.msra.mxu0 %v1312
        %2417 = vmatpush.msra.mxu0 %v1308
        %2418 = vmatpush.msra.mxu0 %v1304
        %2419 = vmatpush.msra.mxu0 %v1300
        %2420 = vmatpush.msra.mxu0 %v1296
        %2421 = vmatpush.msra.mxu0 %v1292
        %2422 = vmatpush.msra.mxu0 %v1288
        %2423 = vmatpush.msra.mxu0 %v1284
        %2424 = vmatpush.msra.mxu0 %v1280
        %2425 = vmatpush.msra.mxu0 %v1276
        %2426 = vmatpush.msra.mxu0 %v1272
        %2427 = vmatpush.msra.mxu0 %v1268
        %2428 = vmatpush.msra.mxu0 %v1264
        %2429 = vmatmul.f32.gmra.mxu0 %v2264
        %v2430 = vpop.f32.mrf.mxu0
        %v2431 = vadd.f32 %v2411, %v2430
        %2432 = vdwg.mxu0
        %2433 = vmatpush.msra.mxu0 %v877
        %2434 = vmatpush.msra.mxu0 %v873
        %2435 = vmatpush.msra.mxu0 %v869
        %2436 = vmatpush.msra.mxu0 %v865
        %2437 = vmatpush.msra.mxu0 %v861
        %2438 = vmatpush.msra.mxu0 %v857
        %2439 = vmatpush.msra.mxu0 %v853
        %2440 = vmatpush.msra.mxu0 %v849
        %2441 = vmatpush.msra.mxu0 %v845
        %2442 = vmatpush.msra.mxu0 %v841
        %2443 = vmatpush.msra.mxu0 %v837
        %2444 = vmatpush.msra.mxu0 %v833
        %2445 = vmatpush.msra.mxu0 %v829
        %2446 = vmatpush.msra.mxu0 %v825
        %2447 = vmatpush.msra.mxu0 %v821
        %2448 = vmatpush.msra.mxu0 %v817
        %2449 = vmatmul.f32.gmra.mxu0 %v2257
        %v2450 = vpop.f32.mrf.mxu0
        %v2451 = vadd.f32 0.0, %v2450
        %2452 = vdwg.mxu0
        %2453 = vmatpush.msra.mxu0 %v941
        %2454 = vmatpush.msra.mxu0 %v937
        %2455 = vmatpush.msra.mxu0 %v933
        %2456 = vmatpush.msra.mxu0 %v929
        %2457 = vmatpush.msra.mxu0 %v925
        %2458 = vmatpush.msra.mxu0 %v921
        %2459 = vmatpush.msra.mxu0 %v917
        %2460 = vmatpush.msra.mxu0 %v913
        %2461 = vmatpush.msra.mxu0 %v909
        %2462 = vmatpush.msra.mxu0 %v905
        %2463 = vmatpush.msra.mxu0 %v901
        %2464 = vmatpush.msra.mxu0 %v897
        %2465 = vmatpush.msra.mxu0 %v893
        %2466 = vmatpush.msra.mxu0 %v889
        %2467 = vmatpush.msra.mxu0 %v885
        %2468 = vmatpush.msra.mxu0 %v881
        %2469 = vmatmul.f32.gmra.mxu0 %v2258
        %v2470 = vpop.f32.mrf.mxu0
        %v2471 = vadd.f32 %v2451, %v2470
        %2472 = vdwg.mxu0
        %2473 = vmatpush.msra.mxu0 %v1005
        %2474 = vmatpush.msra.mxu0 %v1001
        %2475 = vmatpush.msra.mxu0 %v997
        %2476 = vmatpush.msra.mxu0 %v993
        %2477 = vmatpush.msra.mxu0 %v989
        %2478 = vmatpush.msra.mxu0 %v985
        %2479 = vmatpush.msra.mxu0 %v981
        %2480 = vmatpush.msra.mxu0 %v977
        %2481 = vmatpush.msra.mxu0 %v973
        %2482 = vmatpush.msra.mxu0 %v969
        %2483 = vmatpush.msra.mxu0 %v965
        %2484 = vmatpush.msra.mxu0 %v961
        %2485 = vmatpush.msra.mxu0 %v957
        %2486 = vmatpush.msra.mxu0 %v953
        %2487 = vmatpush.msra.mxu0 %v949
        %2488 = vmatpush.msra.mxu0 %v945
        %2489 = vmatmul.f32.gmra.mxu0 %v2259
        %v2490 = vpop.f32.mrf.mxu0
        %v2491 = vadd.f32 %v2471, %v2490
        %2492 = vdwg.mxu0
        %2493 = vmatpush.msra.mxu0 %v1069
        %2494 = vmatpush.msra.mxu0 %v1065
        %2495 = vmatpush.msra.mxu0 %v1061
        %2496 = vmatpush.msra.mxu0 %v1057
        %2497 = vmatpush.msra.mxu0 %v1053
        %2498 = vmatpush.msra.mxu0 %v1049
        %2499 = vmatpush.msra.mxu0 %v1045
        %2500 = vmatpush.msra.mxu0 %v1041
        %2501 = vmatpush.msra.mxu0 %v1037
        %2502 = vmatpush.msra.mxu0 %v1033
        %2503 = vmatpush.msra.mxu0 %v1029
        %2504 = vmatpush.msra.mxu0 %v1025
        %2505 = vmatpush.msra.mxu0 %v1021
        %2506 = vmatpush.msra.mxu0 %v1017
        %2507 = vmatpush.msra.mxu0 %v1013
        %2508 = vmatpush.msra.mxu0 %v1009
        %2509 = vmatmul.f32.gmra.mxu0 %v2260
        %v2510 = vpop.f32.mrf.mxu0
        %v2511 = vadd.f32 %v2491, %v2510
        %2512 = vdwg.mxu0
        %2513 = vmatpush.msra.mxu0 %v1133
        %2514 = vmatpush.msra.mxu0 %v1129
        %2515 = vmatpush.msra.mxu0 %v1125
        %2516 = vmatpush.msra.mxu0 %v1121
        %2517 = vmatpush.msra.mxu0 %v1117
        %2518 = vmatpush.msra.mxu0 %v1113
        %2519 = vmatpush.msra.mxu0 %v1109
        %2520 = vmatpush.msra.mxu0 %v1105
        %2521 = vmatpush.msra.mxu0 %v1101
        %2522 = vmatpush.msra.mxu0 %v1097
        %2523 = vmatpush.msra.mxu0 %v1093
        %2524 = vmatpush.msra.mxu0 %v1089
        %2525 = vmatpush.msra.mxu0 %v1085
        %2526 = vmatpush.msra.mxu0 %v1081
        %2527 = vmatpush.msra.mxu0 %v1077
        %2528 = vmatpush.msra.mxu0 %v1073
        %2529 = vmatmul.f32.gmra.mxu0 %v2261
        %v2530 = vpop.f32.mrf.mxu0
        %v2531 = vadd.f32 %v2511, %v2530
        %2532 = vdwg.mxu0
        %2533 = vmatpush.msra.mxu0 %v1197
        %2534 = vmatpush.msra.mxu0 %v1193
        %2535 = vmatpush.msra.mxu0 %v1189
        %2536 = vmatpush.msra.mxu0 %v1185
        %2537 = vmatpush.msra.mxu0 %v1181
        %2538 = vmatpush.msra.mxu0 %v1177
        %2539 = vmatpush.msra.mxu0 %v1173
        %2540 = vmatpush.msra.mxu0 %v1169
        %2541 = vmatpush.msra.mxu0 %v1165
        %2542 = vmatpush.msra.mxu0 %v1161
        %2543 = vmatpush.msra.mxu0 %v1157
        %2544 = vmatpush.msra.mxu0 %v1153
        %2545 = vmatpush.msra.mxu0 %v1149
        %2546 = vmatpush.msra.mxu0 %v1145
        %2547 = vmatpush.msra.mxu0 %v1141
        %2548 = vmatpush.msra.mxu0 %v1137
        %2549 = vmatmul.f32.gmra.mxu0 %v2262
        %v2550 = vpop.f32.mrf.mxu0
        %v2551 = vadd.f32 %v2531, %v2550
        %2552 = vdwg.mxu0
        %2553 = vmatpush.msra.mxu0 %v1261
        %2554 = vmatpush.msra.mxu0 %v1257
        %2555 = vmatpush.msra.mxu0 %v1253
        %2556 = vmatpush.msra.mxu0 %v1249
        %2557 = vmatpush.msra.mxu0 %v1245
        %2558 = vmatpush.msra.mxu0 %v1241
        %2559 = vmatpush.msra.mxu0 %v1237
        %2560 = vmatpush.msra.mxu0 %v1233
        %2561 = vmatpush.msra.mxu0 %v1229
        %2562 = vmatpush.msra.mxu0 %v1225
        %2563 = vmatpush.msra.mxu0 %v1221
        %2564 = vmatpush.msra.mxu0 %v1217
        %2565 = vmatpush.msra.mxu0 %v1213
        %2566 = vmatpush.msra.mxu0 %v1209
        %2567 = vmatpush.msra.mxu0 %v1205
        %2568 = vmatpush.msra.mxu0 %v1201
        %2569 = vmatmul.f32.gmra.mxu0 %v2263
        %v2570 = vpop.f32.mrf.mxu0
        %v2571 = vadd.f32 %v2551, %v2570
        %2572 = vdwg.mxu0
        %2573 = vmatpush.msra.mxu0 %v1325
        %2574 = vmatpush.msra.mxu0 %v1321
        %2575 = vmatpush.msra.mxu0 %v1317
        %2576 = vmatpush.msra.mxu0 %v1313
        %2577 = vmatpush.msra.mxu0 %v1309
        %2578 = vmatpush.msra.mxu0 %v1305
        %2579 = vmatpush.msra.mxu0 %v1301
        %2580 = vmatpush.msra.mxu0 %v1297
        %2581 = vmatpush.msra.mxu0 %v1293
        %2582 = vmatpush.msra.mxu0 %v1289
        %2583 = vmatpush.msra.mxu0 %v1285
        %2584 = vmatpush.msra.mxu0 %v1281
        %2585 = vmatpush.msra.mxu0 %v1277
        %2586 = vmatpush.msra.mxu0 %v1273
        %2587 = vmatpush.msra.mxu0 %v1269
        %2588 = vmatpush.msra.mxu0 %v1265
        %2589 = vmatmul.f32.gmra.mxu0 %v2264
        %v2590 = vpop.f32.mrf.mxu0
        %v2591 = vadd.f32 %v2571, %v2590
        %2592 = vdwg.mxu0
        %2593 = vmatpush.msra.mxu0 %v878
        %2594 = vmatpush.msra.mxu0 %v874
        %2595 = vmatpush.msra.mxu0 %v870
        %2596 = vmatpush.msra.mxu0 %v866
        %2597 = vmatpush.msra.mxu0 %v862
        %2598 = vmatpush.msra.mxu0 %v858
        %2599 = vmatpush.msra.mxu0 %v854
        %2600 = vmatpush.msra.mxu0 %v850
        %2601 = vmatpush.msra.mxu0 %v846
        %2602 = vmatpush.msra.mxu0 %v842
        %2603 = vmatpush.msra.mxu0 %v838
        %2604 = vmatpush.msra.mxu0 %v834
        %2605 = vmatpush.msra.mxu0 %v830
        %2606 = vmatpush.msra.mxu0 %v826
        %2607 = vmatpush.msra.mxu0 %v822
        %2608 = vmatpush.msra.mxu0 %v818
        %2609 = vmatmul.f32.gmra.mxu0 %v2257
        %v2610 = vpop.f32.mrf.mxu0
        %v2611 = vadd.f32 0.0, %v2610
        %2612 = vdwg.mxu0
        %2613 = vmatpush.msra.mxu0 %v942
        %2614 = vmatpush.msra.mxu0 %v938
        %2615 = vmatpush.msra.mxu0 %v934
        %2616 = vmatpush.msra.mxu0 %v930
        %2617 = vmatpush.msra.mxu0 %v926
        %2618 = vmatpush.msra.mxu0 %v922
        %2619 = vmatpush.msra.mxu0 %v918
        %2620 = vmatpush.msra.mxu0 %v914
        %2621 = vmatpush.msra.mxu0 %v910
        %2622 = vmatpush.msra.mxu0 %v906
        %2623 = vmatpush.msra.mxu0 %v902
        %2624 = vmatpush.msra.mxu0 %v898
        %2625 = vmatpush.msra.mxu0 %v894
        %2626 = vmatpush.msra.mxu0 %v890
        %2627 = vmatpush.msra.mxu0 %v886
        %2628 = vmatpush.msra.mxu0 %v882
        %2629 = vmatmul.f32.gmra.mxu0 %v2258
        %v2630 = vpop.f32.mrf.mxu0
        %v2631 = vadd.f32 %v2611, %v2630
        %2632 = vdwg.mxu0
        %2633 = vmatpush.msra.mxu0 %v1006
        %2634 = vmatpush.msra.mxu0 %v1002
        %2635 = vmatpush.msra.mxu0 %v998
        %2636 = vmatpush.msra.mxu0 %v994
        %2637 = vmatpush.msra.mxu0 %v990
        %2638 = vmatpush.msra.mxu0 %v986
        %2639 = vmatpush.msra.mxu0 %v982
        %2640 = vmatpush.msra.mxu0 %v978
        %2641 = vmatpush.msra.mxu0 %v974
        %2642 = vmatpush.msra.mxu0 %v970
        %2643 = vmatpush.msra.mxu0 %v966
        %2644 = vmatpush.msra.mxu0 %v962
        %2645 = vmatpush.msra.mxu0 %v958
        %2646 = vmatpush.msra.mxu0 %v954
        %2647 = vmatpush.msra.mxu0 %v950
        %2648 = vmatpush.msra.mxu0 %v946
        %2649 = vmatmul.f32.gmra.mxu0 %v2259
        %v2650 = vpop.f32.mrf.mxu0
        %v2651 = vadd.f32 %v2631, %v2650
        %2652 = vdwg.mxu0
        %2653 = vmatpush.msra.mxu0 %v1070
        %2654 = vmatpush.msra.mxu0 %v1066
        %2655 = vmatpush.msra.mxu0 %v1062
        %2656 = vmatpush.msra.mxu0 %v1058
        %2657 = vmatpush.msra.mxu0 %v1054
        %2658 = vmatpush.msra.mxu0 %v1050
        %2659 = vmatpush.msra.mxu0 %v1046
        %2660 = vmatpush.msra.mxu0 %v1042
        %2661 = vmatpush.msra.mxu0 %v1038
        %2662 = vmatpush.msra.mxu0 %v1034
        %2663 = vmatpush.msra.mxu0 %v1030
        %2664 = vmatpush.msra.mxu0 %v1026
        %2665 = vmatpush.msra.mxu0 %v1022
        %2666 = vmatpush.msra.mxu0 %v1018
        %2667 = vmatpush.msra.mxu0 %v1014
        %2668 = vmatpush.msra.mxu0 %v1010
        %2669 = vmatmul.f32.gmra.mxu0 %v2260
        %v2670 = vpop.f32.mrf.mxu0
        %v2671 = vadd.f32 %v2651, %v2670
        %2672 = vdwg.mxu0
        %2673 = vmatpush.msra.mxu0 %v1134
        %2674 = vmatpush.msra.mxu0 %v1130
        %2675 = vmatpush.msra.mxu0 %v1126
        %2676 = vmatpush.msra.mxu0 %v1122
        %2677 = vmatpush.msra.mxu0 %v1118
        %2678 = vmatpush.msra.mxu0 %v1114
        %2679 = vmatpush.msra.mxu0 %v1110
        %2680 = vmatpush.msra.mxu0 %v1106
        %2681 = vmatpush.msra.mxu0 %v1102
        %2682 = vmatpush.msra.mxu0 %v1098
        %2683 = vmatpush.msra.mxu0 %v1094
        %2684 = vmatpush.msra.mxu0 %v1090
        %2685 = vmatpush.msra.mxu0 %v1086
        %2686 = vmatpush.msra.mxu0 %v1082
        %2687 = vmatpush.msra.mxu0 %v1078
        %2688 = vmatpush.msra.mxu0 %v1074
        %2689 = vmatmul.f32.gmra.mxu0 %v2261
        %v2690 = vpop.f32.mrf.mxu0
        %v2691 = vadd.f32 %v2671, %v2690
        %2692 = vdwg.mxu0
        %2693 = vmatpush.msra.mxu0 %v1198
        %2694 = vmatpush.msra.mxu0 %v1194
        %2695 = vmatpush.msra.mxu0 %v1190
        %2696 = vmatpush.msra.mxu0 %v1186
        %2697 = vmatpush.msra.mxu0 %v1182
        %2698 = vmatpush.msra.mxu0 %v1178
        %2699 = vmatpush.msra.mxu0 %v1174
        %2700 = vmatpush.msra.mxu0 %v1170
        %2701 = vmatpush.msra.mxu0 %v1166
        %2702 = vmatpush.msra.mxu0 %v1162
        %2703 = vmatpush.msra.mxu0 %v1158
        %2704 = vmatpush.msra.mxu0 %v1154
        %2705 = vmatpush.msra.mxu0 %v1150
        %2706 = vmatpush.msra.mxu0 %v1146
        %2707 = vmatpush.msra.mxu0 %v1142
        %2708 = vmatpush.msra.mxu0 %v1138
        %2709 = vmatmul.f32.gmra.mxu0 %v2262
        %v2710 = vpop.f32.mrf.mxu0
        %v2711 = vadd.f32 %v2691, %v2710
        %2712 = vdwg.mxu0
        %2713 = vmatpush.msra.mxu0 %v1262
        %2714 = vmatpush.msra.mxu0 %v1258
        %2715 = vmatpush.msra.mxu0 %v1254
        %2716 = vmatpush.msra.mxu0 %v1250
        %2717 = vmatpush.msra.mxu0 %v1246
        %2718 = vmatpush.msra.mxu0 %v1242
        %2719 = vmatpush.msra.mxu0 %v1238
        %2720 = vmatpush.msra.mxu0 %v1234
        %2721 = vmatpush.msra.mxu0 %v1230
        %2722 = vmatpush.msra.mxu0 %v1226
        %2723 = vmatpush.msra.mxu0 %v1222
        %2724 = vmatpush.msra.mxu0 %v1218
        %2725 = vmatpush.msra.mxu0 %v1214
        %2726 = vmatpush.msra.mxu0 %v1210
        %2727 = vmatpush.msra.mxu0 %v1206
        %2728 = vmatpush.msra.mxu0 %v1202
        %2729 = vmatmul.f32.gmra.mxu0 %v2263
        %v2730 = vpop.f32.mrf.mxu0
        %v2731 = vadd.f32 %v2711, %v2730
        %2732 = vdwg.mxu0
        %2733 = vmatpush.msra.mxu0 %v1326
        %2734 = vmatpush.msra.mxu0 %v1322
        %2735 = vmatpush.msra.mxu0 %v1318
        %2736 = vmatpush.msra.mxu0 %v1314
        %2737 = vmatpush.msra.mxu0 %v1310
        %2738 = vmatpush.msra.mxu0 %v1306
        %2739 = vmatpush.msra.mxu0 %v1302
        %2740 = vmatpush.msra.mxu0 %v1298
        %2741 = vmatpush.msra.mxu0 %v1294
        %2742 = vmatpush.msra.mxu0 %v1290
        %2743 = vmatpush.msra.mxu0 %v1286
        %2744 = vmatpush.msra.mxu0 %v1282
        %2745 = vmatpush.msra.mxu0 %v1278
        %2746 = vmatpush.msra.mxu0 %v1274
        %2747 = vmatpush.msra.mxu0 %v1270
        %2748 = vmatpush.msra.mxu0 %v1266
        %2749 = vmatmul.f32.gmra.mxu0 %v2264
        %v2750 = vpop.f32.mrf.mxu0
        %v2751 = vadd.f32 %v2731, %v2750
        %2752 = vdwg.mxu0
        %2753 = vmatpush.msra.mxu0 %v879
        %2754 = vmatpush.msra.mxu0 %v875
        %2755 = vmatpush.msra.mxu0 %v871
        %2756 = vmatpush.msra.mxu0 %v867
        %2757 = vmatpush.msra.mxu0 %v863
        %2758 = vmatpush.msra.mxu0 %v859
        %2759 = vmatpush.msra.mxu0 %v855
        %2760 = vmatpush.msra.mxu0 %v851
        %2761 = vmatpush.msra.mxu0 %v847
        %2762 = vmatpush.msra.mxu0 %v843
        %2763 = vmatpush.msra.mxu0 %v839
        %2764 = vmatpush.msra.mxu0 %v835
        %2765 = vmatpush.msra.mxu0 %v831
        %2766 = vmatpush.msra.mxu0 %v827
        %2767 = vmatpush.msra.mxu0 %v823
        %2768 = vmatpush.msra.mxu0 %v819
        %2769 = vmatmul.f32.gmra.mxu0 %v2257
        %v2770 = vpop.f32.mrf.mxu0
        %v2771 = vadd.f32 0.0, %v2770
        %2772 = vdwg.mxu0
        %2773 = vmatpush.msra.mxu0 %v943
        %2774 = vmatpush.msra.mxu0 %v939
        %2775 = vmatpush.msra.mxu0 %v935
        %2776 = vmatpush.msra.mxu0 %v931
        %2777 = vmatpush.msra.mxu0 %v927
        %2778 = vmatpush.msra.mxu0 %v923
        %2779 = vmatpush.msra.mxu0 %v919
        %2780 = vmatpush.msra.mxu0 %v915
        %2781 = vmatpush.msra.mxu0 %v911
        %2782 = vmatpush.msra.mxu0 %v907
        %2783 = vmatpush.msra.mxu0 %v903
        %2784 = vmatpush.msra.mxu0 %v899
        %2785 = vmatpush.msra.mxu0 %v895
        %2786 = vmatpush.msra.mxu0 %v891
        %2787 = vmatpush.msra.mxu0 %v887
        %2788 = vmatpush.msra.mxu0 %v883
        %2789 = vmatmul.f32.gmra.mxu0 %v2258
        %v2790 = vpop.f32.mrf.mxu0
        %v2791 = vadd.f32 %v2771, %v2790
        %2792 = vdwg.mxu0
        %2793 = vmatpush.msra.mxu0 %v1007
        %2794 = vmatpush.msra.mxu0 %v1003
        %2795 = vmatpush.msra.mxu0 %v999
        %2796 = vmatpush.msra.mxu0 %v995
        %2797 = vmatpush.msra.mxu0 %v991
        %2798 = vmatpush.msra.mxu0 %v987
        %2799 = vmatpush.msra.mxu0 %v983
        %2800 = vmatpush.msra.mxu0 %v979
        %2801 = vmatpush.msra.mxu0 %v975
        %2802 = vmatpush.msra.mxu0 %v971
        %2803 = vmatpush.msra.mxu0 %v967
        %2804 = vmatpush.msra.mxu0 %v963
        %2805 = vmatpush.msra.mxu0 %v959
        %2806 = vmatpush.msra.mxu0 %v955
        %2807 = vmatpush.msra.mxu0 %v951
        %2808 = vmatpush.msra.mxu0 %v947
        %2809 = vmatmul.f32.gmra.mxu0 %v2259
        %v2810 = vpop.f32.mrf.mxu0
        %v2811 = vadd.f32 %v2791, %v2810
        %2812 = vdwg.mxu0
        %2813 = vmatpush.msra.mxu0 %v1071
        %2814 = vmatpush.msra.mxu0 %v1067
        %2815 = vmatpush.msra.mxu0 %v1063
        %2816 = vmatpush.msra.mxu0 %v1059
        %2817 = vmatpush.msra.mxu0 %v1055
        %2818 = vmatpush.msra.mxu0 %v1051
        %2819 = vmatpush.msra.mxu0 %v1047
        %2820 = vmatpush.msra.mxu0 %v1043
        %2821 = vmatpush.msra.mxu0 %v1039
        %2822 = vmatpush.msra.mxu0 %v1035
        %2823 = vmatpush.msra.mxu0 %v1031
        %2824 = vmatpush.msra.mxu0 %v1027
        %2825 = vmatpush.msra.mxu0 %v1023
        %2826 = vmatpush.msra.mxu0 %v1019
        %2827 = vmatpush.msra.mxu0 %v1015
        %2828 = vmatpush.msra.mxu0 %v1011
        %2829 = vmatmul.f32.gmra.mxu0 %v2260
        %v2830 = vpop.f32.mrf.mxu0
        %v2831 = vadd.f32 %v2811, %v2830
        %2832 = vdwg.mxu0
        %2833 = vmatpush.msra.mxu0 %v1135
        %2834 = vmatpush.msra.mxu0 %v1131
        %2835 = vmatpush.msra.mxu0 %v1127
        %2836 = vmatpush.msra.mxu0 %v1123
        %2837 = vmatpush.msra.mxu0 %v1119
        %2838 = vmatpush.msra.mxu0 %v1115
        %2839 = vmatpush.msra.mxu0 %v1111
        %2840 = vmatpush.msra.mxu0 %v1107
        %2841 = vmatpush.msra.mxu0 %v1103
        %2842 = vmatpush.msra.mxu0 %v1099
        %2843 = vmatpush.msra.mxu0 %v1095
        %2844 = vmatpush.msra.mxu0 %v1091
        %2845 = vmatpush.msra.mxu0 %v1087
        %2846 = vmatpush.msra.mxu0 %v1083
        %2847 = vmatpush.msra.mxu0 %v1079
        %2848 = vmatpush.msra.mxu0 %v1075
        %2849 = vmatmul.f32.gmra.mxu0 %v2261
        %v2850 = vpop.f32.mrf.mxu0
        %v2851 = vadd.f32 %v2831, %v2850
        %2852 = vdwg.mxu0
        %2853 = vmatpush.msra.mxu0 %v1199
        %2854 = vmatpush.msra.mxu0 %v1195
        %2855 = vmatpush.msra.mxu0 %v1191
        %2856 = vmatpush.msra.mxu0 %v1187
        %2857 = vmatpush.msra.mxu0 %v1183
        %2858 = vmatpush.msra.mxu0 %v1179
        %2859 = vmatpush.msra.mxu0 %v1175
        %2860 = vmatpush.msra.mxu0 %v1171
        %2861 = vmatpush.msra.mxu0 %v1167
        %2862 = vmatpush.msra.mxu0 %v1163
        %2863 = vmatpush.msra.mxu0 %v1159
        %2864 = vmatpush.msra.mxu0 %v1155
        %2865 = vmatpush.msra.mxu0 %v1151
        %2866 = vmatpush.msra.mxu0 %v1147
        %2867 = vmatpush.msra.mxu0 %v1143
        %2868 = vmatpush.msra.mxu0 %v1139
        %2869 = vmatmul.f32.gmra.mxu0 %v2262
        %v2870 = vpop.f32.mrf.mxu0
        %v2871 = vadd.f32 %v2851, %v2870
        %2872 = vdwg.mxu0
        %2873 = vmatpush.msra.mxu0 %v1263
        %2874 = vmatpush.msra.mxu0 %v1259
        %2875 = vmatpush.msra.mxu0 %v1255
        %2876 = vmatpush.msra.mxu0 %v1251
        %2877 = vmatpush.msra.mxu0 %v1247
        %2878 = vmatpush.msra.mxu0 %v1243
        %2879 = vmatpush.msra.mxu0 %v1239
        %2880 = vmatpush.msra.mxu0 %v1235
        %2881 = vmatpush.msra.mxu0 %v1231
        %2882 = vmatpush.msra.mxu0 %v1227
        %2883 = vmatpush.msra.mxu0 %v1223
        %2884 = vmatpush.msra.mxu0 %v1219
        %2885 = vmatpush.msra.mxu0 %v1215
        %2886 = vmatpush.msra.mxu0 %v1211
        %2887 = vmatpush.msra.mxu0 %v1207
        %2888 = vmatpush.msra.mxu0 %v1203
        %2889 = vmatmul.f32.gmra.mxu0 %v2263
        %v2890 = vpop.f32.mrf.mxu0
        %v2891 = vadd.f32 %v2871, %v2890
        %2892 = vdwg.mxu0
        %2893 = vmatpush.msra.mxu0 %v1327
        %2894 = vmatpush.msra.mxu0 %v1323
        %2895 = vmatpush.msra.mxu0 %v1319
        %2896 = vmatpush.msra.mxu0 %v1315
        %2897 = vmatpush.msra.mxu0 %v1311
        %2898 = vmatpush.msra.mxu0 %v1307
        %2899 = vmatpush.msra.mxu0 %v1303
        %2900 = vmatpush.msra.mxu0 %v1299
        %2901 = vmatpush.msra.mxu0 %v1295
        %2902 = vmatpush.msra.mxu0 %v1291
        %2903 = vmatpush.msra.mxu0 %v1287
        %2904 = vmatpush.msra.mxu0 %v1283
        %2905 = vmatpush.msra.mxu0 %v1279
        %2906 = vmatpush.msra.mxu0 %v1275
        %2907 = vmatpush.msra.mxu0 %v1271
        %2908 = vmatpush.msra.mxu0 %v1267
        %2909 = vmatmul.f32.gmra.mxu0 %v2264
        %v2910 = vpop.f32.mrf.mxu0
        %v2911 = vadd.f32 %v2891, %v2910
        %2912 = vdwg.mxu0
        %2913 = vmatpush.msra.mxu0 %v876
        %2914 = vmatpush.msra.mxu0 %v872
        %2915 = vmatpush.msra.mxu0 %v868
        %2916 = vmatpush.msra.mxu0 %v864
        %2917 = vmatpush.msra.mxu0 %v860
        %2918 = vmatpush.msra.mxu0 %v856
        %2919 = vmatpush.msra.mxu0 %v852
        %2920 = vmatpush.msra.mxu0 %v848
        %2921 = vmatpush.msra.mxu0 %v844
        %2922 = vmatpush.msra.mxu0 %v840
        %2923 = vmatpush.msra.mxu0 %v836
        %2924 = vmatpush.msra.mxu0 %v832
        %2925 = vmatpush.msra.mxu0 %v828
        %2926 = vmatpush.msra.mxu0 %v824
        %2927 = vmatpush.msra.mxu0 %v820
        %2928 = vmatpush.msra.mxu0 %v816
        %2929 = vmatmul.f32.gmra.mxu0 %v2242
        %v2930 = vpop.f32.mrf.mxu0
        %v2931 = vadd.f32 0.0, %v2930
        %2932 = vdwg.mxu0
        %2933 = vmatpush.msra.mxu0 %v940
        %2934 = vmatpush.msra.mxu0 %v936
        %2935 = vmatpush.msra.mxu0 %v932
        %2936 = vmatpush.msra.mxu0 %v928
        %2937 = vmatpush.msra.mxu0 %v924
        %2938 = vmatpush.msra.mxu0 %v920
        %2939 = vmatpush.msra.mxu0 %v916
        %2940 = vmatpush.msra.mxu0 %v912
        %2941 = vmatpush.msra.mxu0 %v908
        %2942 = vmatpush.msra.mxu0 %v904
        %2943 = vmatpush.msra.mxu0 %v900
        %2944 = vmatpush.msra.mxu0 %v896
        %2945 = vmatpush.msra.mxu0 %v892
        %2946 = vmatpush.msra.mxu0 %v888
        %2947 = vmatpush.msra.mxu0 %v884
        %2948 = vmatpush.msra.mxu0 %v880
        %2949 = vmatmul.f32.gmra.mxu0 %v2243
        %v2950 = vpop.f32.mrf.mxu0
        %v2951 = vadd.f32 %v2931, %v2950
        %2952 = vdwg.mxu0
        %2953 = vmatpush.msra.mxu0 %v1004
        %2954 = vmatpush.msra.mxu0 %v1000
        %2955 = vmatpush.msra.mxu0 %v996
        %2956 = vmatpush.msra.mxu0 %v992
        %2957 = vmatpush.msra.mxu0 %v988
        %2958 = vmatpush.msra.mxu0 %v984
        %2959 = vmatpush.msra.mxu0 %v980
        %2960 = vmatpush.msra.mxu0 %v976
        %2961 = vmatpush.msra.mxu0 %v972
        %2962 = vmatpush.msra.mxu0 %v968
        %2963 = vmatpush.msra.mxu0 %v964
        %2964 = vmatpush.msra.mxu0 %v960
        %2965 = vmatpush.msra.mxu0 %v956
        %2966 = vmatpush.msra.mxu0 %v952
        %2967 = vmatpush.msra.mxu0 %v948
        %2968 = vmatpush.msra.mxu0 %v944
        %2969 = vmatmul.f32.gmra.mxu0 %v2244
        %v2970 = vpop.f32.mrf.mxu0
        %v2971 = vadd.f32 %v2951, %v2970
        %2972 = vdwg.mxu0
        %2973 = vmatpush.msra.mxu0 %v1068
        %2974 = vmatpush.msra.mxu0 %v1064
        %2975 = vmatpush.msra.mxu0 %v1060
        %2976 = vmatpush.msra.mxu0 %v1056
        %2977 = vmatpush.msra.mxu0 %v1052
        %2978 = vmatpush.msra.mxu0 %v1048
        %2979 = vmatpush.msra.mxu0 %v1044
        %2980 = vmatpush.msra.mxu0 %v1040
        %2981 = vmatpush.msra.mxu0 %v1036
        %2982 = vmatpush.msra.mxu0 %v1032
        %2983 = vmatpush.msra.mxu0 %v1028
        %2984 = vmatpush.msra.mxu0 %v1024
        %2985 = vmatpush.msra.mxu0 %v1020
        %2986 = vmatpush.msra.mxu0 %v1016
        %2987 = vmatpush.msra.mxu0 %v1012
        %2988 = vmatpush.msra.mxu0 %v1008
        %2989 = vmatmul.f32.gmra.mxu0 %v2245
        %v2990 = vpop.f32.mrf.mxu0
        %v2991 = vadd.f32 %v2971, %v2990
        %2992 = vdwg.mxu0
        %2993 = vmatpush.msra.mxu0 %v1132
        %2994 = vmatpush.msra.mxu0 %v1128
        %2995 = vmatpush.msra.mxu0 %v1124
        %2996 = vmatpush.msra.mxu0 %v1120
        %2997 = vmatpush.msra.mxu0 %v1116
        %2998 = vmatpush.msra.mxu0 %v1112
        %2999 = vmatpush.msra.mxu0 %v1108
        %3000 = vmatpush.msra.mxu0 %v1104
        %3001 = vmatpush.msra.mxu0 %v1100
        %3002 = vmatpush.msra.mxu0 %v1096
        %3003 = vmatpush.msra.mxu0 %v1092
        %3004 = vmatpush.msra.mxu0 %v1088
        %3005 = vmatpush.msra.mxu0 %v1084
        %3006 = vmatpush.msra.mxu0 %v1080
        %3007 = vmatpush.msra.mxu0 %v1076
        %3008 = vmatpush.msra.mxu0 %v1072
        %3009 = vmatmul.f32.gmra.mxu0 %v2246
        %v3010 = vpop.f32.mrf.mxu0
        %v3011 = vadd.f32 %v2991, %v3010
        %3012 = vdwg.mxu0
        %3013 = vmatpush.msra.mxu0 %v1196
        %3014 = vmatpush.msra.mxu0 %v1192
        %3015 = vmatpush.msra.mxu0 %v1188
        %3016 = vmatpush.msra.mxu0 %v1184
        %3017 = vmatpush.msra.mxu0 %v1180
        %3018 = vmatpush.msra.mxu0 %v1176
        %3019 = vmatpush.msra.mxu0 %v1172
        %3020 = vmatpush.msra.mxu0 %v1168
        %3021 = vmatpush.msra.mxu0 %v1164
        %3022 = vmatpush.msra.mxu0 %v1160
        %3023 = vmatpush.msra.mxu0 %v1156
        %3024 = vmatpush.msra.mxu0 %v1152
        %3025 = vmatpush.msra.mxu0 %v1148
        %3026 = vmatpush.msra.mxu0 %v1144
        %3027 = vmatpush.msra.mxu0 %v1140
        %3028 = vmatpush.msra.mxu0 %v1136
        %3029 = vmatmul.f32.gmra.mxu0 %v2247
        %v3030 = vpop.f32.mrf.mxu0
        %v3031 = vadd.f32 %v3011, %v3030
        %3032 = vdwg.mxu0
        %3033 = vmatpush.msra.mxu0 %v1260
        %3034 = vmatpush.msra.mxu0 %v1256
        %3035 = vmatpush.msra.mxu0 %v1252
        %3036 = vmatpush.msra.mxu0 %v1248
        %3037 = vmatpush.msra.mxu0 %v1244
        %3038 = vmatpush.msra.mxu0 %v1240
        %3039 = vmatpush.msra.mxu0 %v1236
        %3040 = vmatpush.msra.mxu0 %v1232
        %3041 = vmatpush.msra.mxu0 %v1228
        %3042 = vmatpush.msra.mxu0 %v1224
        %3043 = vmatpush.msra.mxu0 %v1220
        %3044 = vmatpush.msra.mxu0 %v1216
        %3045 = vmatpush.msra.mxu0 %v1212
        %3046 = vmatpush.msra.mxu0 %v1208
        %3047 = vmatpush.msra.mxu0 %v1204
        %3048 = vmatpush.msra.mxu0 %v1200
        %3049 = vmatmul.f32.gmra.mxu0 %v2248
        %v3050 = vpop.f32.mrf.mxu0
        %v3051 = vadd.f32 %v3031, %v3050
        %3052 = vdwg.mxu0
        %3053 = vmatpush.msra.mxu0 %v1324
        %3054 = vmatpush.msra.mxu0 %v1320
        %3055 = vmatpush.msra.mxu0 %v1316
        %3056 = vmatpush.msra.mxu0 %v1312
        %3057 = vmatpush.msra.mxu0 %v1308
        %3058 = vmatpush.msra.mxu0 %v1304
        %3059 = vmatpush.msra.mxu0 %v1300
        %3060 = vmatpush.msra.mxu0 %v1296
        %3061 = vmatpush.msra.mxu0 %v1292
        %3062 = vmatpush.msra.mxu0 %v1288
        %3063 = vmatpush.msra.mxu0 %v1284
        %3064 = vmatpush.msra.mxu0 %v1280
        %3065 = vmatpush.msra.mxu0 %v1276
        %3066 = vmatpush.msra.mxu0 %v1272
        %3067 = vmatpush.msra.mxu0 %v1268
        %3068 = vmatpush.msra.mxu0 %v1264
        %3069 = vmatmul.f32.gmra.mxu0 %v2249
        %v3070 = vpop.f32.mrf.mxu0
        %v3071 = vadd.f32 %v3051, %v3070
        %3072 = vdwg.mxu0
        %3073 = vmatpush.msra.mxu0 %v877
        %3074 = vmatpush.msra.mxu0 %v873
        %3075 = vmatpush.msra.mxu0 %v869
        %3076 = vmatpush.msra.mxu0 %v865
        %3077 = vmatpush.msra.mxu0 %v861
        %3078 = vmatpush.msra.mxu0 %v857
        %3079 = vmatpush.msra.mxu0 %v853
        %3080 = vmatpush.msra.mxu0 %v849
        %3081 = vmatpush.msra.mxu0 %v845
        %3082 = vmatpush.msra.mxu0 %v841
        %3083 = vmatpush.msra.mxu0 %v837
        %3084 = vmatpush.msra.mxu0 %v833
        %3085 = vmatpush.msra.mxu0 %v829
        %3086 = vmatpush.msra.mxu0 %v825
        %3087 = vmatpush.msra.mxu0 %v821
        %3088 = vmatpush.msra.mxu0 %v817
        %3089 = vmatmul.f32.gmra.mxu0 %v2242
        %v3090 = vpop.f32.mrf.mxu0
        %v3091 = vadd.f32 0.0, %v3090
        %3092 = vdwg.mxu0
        %3093 = vmatpush.msra.mxu0 %v941
        %3094 = vmatpush.msra.mxu0 %v937
        %3095 = vmatpush.msra.mxu0 %v933
        %3096 = vmatpush.msra.mxu0 %v929
        %3097 = vmatpush.msra.mxu0 %v925
        %3098 = vmatpush.msra.mxu0 %v921
        %3099 = vmatpush.msra.mxu0 %v917
        %3100 = vmatpush.msra.mxu0 %v913
        %3101 = vmatpush.msra.mxu0 %v909
        %3102 = vmatpush.msra.mxu0 %v905
        %3103 = vmatpush.msra.mxu0 %v901
        %3104 = vmatpush.msra.mxu0 %v897
        %3105 = vmatpush.msra.mxu0 %v893
        %3106 = vmatpush.msra.mxu0 %v889
        %3107 = vmatpush.msra.mxu0 %v885
        %3108 = vmatpush.msra.mxu0 %v881
        %3109 = vmatmul.f32.gmra.mxu0 %v2243
        %v3110 = vpop.f32.mrf.mxu0
        %v3111 = vadd.f32 %v3091, %v3110
        %3112 = vdwg.mxu0
        %3113 = vmatpush.msra.mxu0 %v1005
        %3114 = vmatpush.msra.mxu0 %v1001
        %3115 = vmatpush.msra.mxu0 %v997
        %3116 = vmatpush.msra.mxu0 %v993
        %3117 = vmatpush.msra.mxu0 %v989
        %3118 = vmatpush.msra.mxu0 %v985
        %3119 = vmatpush.msra.mxu0 %v981
        %3120 = vmatpush.msra.mxu0 %v977
        %3121 = vmatpush.msra.mxu0 %v973
        %3122 = vmatpush.msra.mxu0 %v969
        %3123 = vmatpush.msra.mxu0 %v965
        %3124 = vmatpush.msra.mxu0 %v961
        %3125 = vmatpush.msra.mxu0 %v957
        %3126 = vmatpush.msra.mxu0 %v953
        %3127 = vmatpush.msra.mxu0 %v949
        %3128 = vmatpush.msra.mxu0 %v945
        %3129 = vmatmul.f32.gmra.mxu0 %v2244
        %v3130 = vpop.f32.mrf.mxu0
        %v3131 = vadd.f32 %v3111, %v3130
        %3132 = vdwg.mxu0
        %3133 = vmatpush.msra.mxu0 %v1069
        %3134 = vmatpush.msra.mxu0 %v1065
        %3135 = vmatpush.msra.mxu0 %v1061
        %3136 = vmatpush.msra.mxu0 %v1057
        %3137 = vmatpush.msra.mxu0 %v1053
        %3138 = vmatpush.msra.mxu0 %v1049
        %3139 = vmatpush.msra.mxu0 %v1045
        %3140 = vmatpush.msra.mxu0 %v1041
        %3141 = vmatpush.msra.mxu0 %v1037
        %3142 = vmatpush.msra.mxu0 %v1033
        %3143 = vmatpush.msra.mxu0 %v1029
        %3144 = vmatpush.msra.mxu0 %v1025
        %3145 = vmatpush.msra.mxu0 %v1021
        %3146 = vmatpush.msra.mxu0 %v1017
        %3147 = vmatpush.msra.mxu0 %v1013
        %3148 = vmatpush.msra.mxu0 %v1009
        %3149 = vmatmul.f32.gmra.mxu0 %v2245
        %v3150 = vpop.f32.mrf.mxu0
        %v3151 = vadd.f32 %v3131, %v3150
        %3152 = vdwg.mxu0
        %3153 = vmatpush.msra.mxu0 %v1133
        %3154 = vmatpush.msra.mxu0 %v1129
        %3155 = vmatpush.msra.mxu0 %v1125
        %3156 = vmatpush.msra.mxu0 %v1121
        %3157 = vmatpush.msra.mxu0 %v1117
        %3158 = vmatpush.msra.mxu0 %v1113
        %3159 = vmatpush.msra.mxu0 %v1109
        %3160 = vmatpush.msra.mxu0 %v1105
        %3161 = vmatpush.msra.mxu0 %v1101
        %3162 = vmatpush.msra.mxu0 %v1097
        %3163 = vmatpush.msra.mxu0 %v1093
        %3164 = vmatpush.msra.mxu0 %v1089
        %3165 = vmatpush.msra.mxu0 %v1085
        %3166 = vmatpush.msra.mxu0 %v1081
        %3167 = vmatpush.msra.mxu0 %v1077
        %3168 = vmatpush.msra.mxu0 %v1073
        %3169 = vmatmul.f32.gmra.mxu0 %v2246
        %v3170 = vpop.f32.mrf.mxu0
        %v3171 = vadd.f32 %v3151, %v3170
        %3172 = vdwg.mxu0
        %3173 = vmatpush.msra.mxu0 %v1197
        %3174 = vmatpush.msra.mxu0 %v1193
        %3175 = vmatpush.msra.mxu0 %v1189
        %3176 = vmatpush.msra.mxu0 %v1185
        %3177 = vmatpush.msra.mxu0 %v1181
        %3178 = vmatpush.msra.mxu0 %v1177
        %3179 = vmatpush.msra.mxu0 %v1173
        %3180 = vmatpush.msra.mxu0 %v1169
        %3181 = vmatpush.msra.mxu0 %v1165
        %3182 = vmatpush.msra.mxu0 %v1161
        %3183 = vmatpush.msra.mxu0 %v1157
        %3184 = vmatpush.msra.mxu0 %v1153
        %3185 = vmatpush.msra.mxu0 %v1149
        %3186 = vmatpush.msra.mxu0 %v1145
        %3187 = vmatpush.msra.mxu0 %v1141
        %3188 = vmatpush.msra.mxu0 %v1137
        %3189 = vmatmul.f32.gmra.mxu0 %v2247
        %v3190 = vpop.f32.mrf.mxu0
        %v3191 = vadd.f32 %v3171, %v3190
        %3192 = vdwg.mxu0
        %3193 = vmatpush.msra.mxu0 %v1261
        %3194 = vmatpush.msra.mxu0 %v1257
        %3195 = vmatpush.msra.mxu0 %v1253
        %3196 = vmatpush.msra.mxu0 %v1249
        %3197 = vmatpush.msra.mxu0 %v1245
        %3198 = vmatpush.msra.mxu0 %v1241
        %3199 = vmatpush.msra.mxu0 %v1237
        %3200 = vmatpush.msra.mxu0 %v1233
        %3201 = vmatpush.msra.mxu0 %v1229
        %3202 = vmatpush.msra.mxu0 %v1225
        %3203 = vmatpush.msra.mxu0 %v1221
        %3204 = vmatpush.msra.mxu0 %v1217
        %3205 = vmatpush.msra.mxu0 %v1213
        %3206 = vmatpush.msra.mxu0 %v1209
        %3207 = vmatpush.msra.mxu0 %v1205
        %3208 = vmatpush.msra.mxu0 %v1201
        %3209 = vmatmul.f32.gmra.mxu0 %v2248
        %v3210 = vpop.f32.mrf.mxu0
        %v3211 = vadd.f32 %v3191, %v3210
        %3212 = vdwg.mxu0
        %3213 = vmatpush.msra.mxu0 %v1325
        %3214 = vmatpush.msra.mxu0 %v1321
        %3215 = vmatpush.msra.mxu0 %v1317
        %3216 = vmatpush.msra.mxu0 %v1313
        %3217 = vmatpush.msra.mxu0 %v1309
        %3218 = vmatpush.msra.mxu0 %v1305
        %3219 = vmatpush.msra.mxu0 %v1301
        %3220 = vmatpush.msra.mxu0 %v1297
        %3221 = vmatpush.msra.mxu0 %v1293
        %3222 = vmatpush.msra.mxu0 %v1289
        %3223 = vmatpush.msra.mxu0 %v1285
        %3224 = vmatpush.msra.mxu0 %v1281
        %3225 = vmatpush.msra.mxu0 %v1277
        %3226 = vmatpush.msra.mxu0 %v1273
        %3227 = vmatpush.msra.mxu0 %v1269
        %3228 = vmatpush.msra.mxu0 %v1265
        %3229 = vmatmul.f32.gmra.mxu0 %v2249
        %v3230 = vpop.f32.mrf.mxu0
        %v3231 = vadd.f32 %v3211, %v3230
        %3232 = vdwg.mxu0
        %3233 = vmatpush.msra.mxu0 %v878
        %3234 = vmatpush.msra.mxu0 %v874
        %3235 = vmatpush.msra.mxu0 %v870
        %3236 = vmatpush.msra.mxu0 %v866
        %3237 = vmatpush.msra.mxu0 %v862
        %3238 = vmatpush.msra.mxu0 %v858
        %3239 = vmatpush.msra.mxu0 %v854
        %3240 = vmatpush.msra.mxu0 %v850
        %3241 = vmatpush.msra.mxu0 %v846
        %3242 = vmatpush.msra.mxu0 %v842
        %3243 = vmatpush.msra.mxu0 %v838
        %3244 = vmatpush.msra.mxu0 %v834
        %3245 = vmatpush.msra.mxu0 %v830
        %3246 = vmatpush.msra.mxu0 %v826
        %3247 = vmatpush.msra.mxu0 %v822
        %3248 = vmatpush.msra.mxu0 %v818
        %3249 = vmatmul.f32.gmra.mxu0 %v2242
        %v3250 = vpop.f32.mrf.mxu0
        %v3251 = vadd.f32 0.0, %v3250
        %3252 = vdwg.mxu0
        %3253 = vmatpush.msra.mxu0 %v942
        %3254 = vmatpush.msra.mxu0 %v938
        %3255 = vmatpush.msra.mxu0 %v934
        %3256 = vmatpush.msra.mxu0 %v930
        %3257 = vmatpush.msra.mxu0 %v926
        %3258 = vmatpush.msra.mxu0 %v922
        %3259 = vmatpush.msra.mxu0 %v918
        %3260 = vmatpush.msra.mxu0 %v914
        %3261 = vmatpush.msra.mxu0 %v910
        %3262 = vmatpush.msra.mxu0 %v906
        %3263 = vmatpush.msra.mxu0 %v902
        %3264 = vmatpush.msra.mxu0 %v898
        %3265 = vmatpush.msra.mxu0 %v894
        %3266 = vmatpush.msra.mxu0 %v890
        %3267 = vmatpush.msra.mxu0 %v886
        %3268 = vmatpush.msra.mxu0 %v882
        %3269 = vmatmul.f32.gmra.mxu0 %v2243
        %v3270 = vpop.f32.mrf.mxu0
        %v3271 = vadd.f32 %v3251, %v3270
        %3272 = vdwg.mxu0
        %3273 = vmatpush.msra.mxu0 %v1006
        %3274 = vmatpush.msra.mxu0 %v1002
        %3275 = vmatpush.msra.mxu0 %v998
        %3276 = vmatpush.msra.mxu0 %v994
        %3277 = vmatpush.msra.mxu0 %v990
        %3278 = vmatpush.msra.mxu0 %v986
        %3279 = vmatpush.msra.mxu0 %v982
        %3280 = vmatpush.msra.mxu0 %v978
        %3281 = vmatpush.msra.mxu0 %v974
        %3282 = vmatpush.msra.mxu0 %v970
        %3283 = vmatpush.msra.mxu0 %v966
        %3284 = vmatpush.msra.mxu0 %v962
        %3285 = vmatpush.msra.mxu0 %v958
        %3286 = vmatpush.msra.mxu0 %v954
        %3287 = vmatpush.msra.mxu0 %v950
        %3288 = vmatpush.msra.mxu0 %v946
        %3289 = vmatmul.f32.gmra.mxu0 %v2244
        %v3290 = vpop.f32.mrf.mxu0
        %v3291 = vadd.f32 %v3271, %v3290
        %3292 = vdwg.mxu0
        %3293 = vmatpush.msra.mxu0 %v1070
        %3294 = vmatpush.msra.mxu0 %v1066
        %3295 = vmatpush.msra.mxu0 %v1062
        %3296 = vmatpush.msra.mxu0 %v1058
        %3297 = vmatpush.msra.mxu0 %v1054
        %3298 = vmatpush.msra.mxu0 %v1050
        %3299 = vmatpush.msra.mxu0 %v1046
        %3300 = vmatpush.msra.mxu0 %v1042
        %3301 = vmatpush.msra.mxu0 %v1038
        %3302 = vmatpush.msra.mxu0 %v1034
        %3303 = vmatpush.msra.mxu0 %v1030
        %3304 = vmatpush.msra.mxu0 %v1026
        %3305 = vmatpush.msra.mxu0 %v1022
        %3306 = vmatpush.msra.mxu0 %v1018
        %3307 = vmatpush.msra.mxu0 %v1014
        %3308 = vmatpush.msra.mxu0 %v1010
        %3309 = vmatmul.f32.gmra.mxu0 %v2245
        %v3310 = vpop.f32.mrf.mxu0
        %v3311 = vadd.f32 %v3291, %v3310
        %3312 = vdwg.mxu0
        %3313 = vmatpush.msra.mxu0 %v1134
        %3314 = vmatpush.msra.mxu0 %v1130
        %3315 = vmatpush.msra.mxu0 %v1126
        %3316 = vmatpush.msra.mxu0 %v1122
        %3317 = vmatpush.msra.mxu0 %v1118
        %3318 = vmatpush.msra.mxu0 %v1114
        %3319 = vmatpush.msra.mxu0 %v1110
        %3320 = vmatpush.msra.mxu0 %v1106
        %3321 = vmatpush.msra.mxu0 %v1102
        %3322 = vmatpush.msra.mxu0 %v1098
        %3323 = vmatpush.msra.mxu0 %v1094
        %3324 = vmatpush.msra.mxu0 %v1090
        %3325 = vmatpush.msra.mxu0 %v1086
        %3326 = vmatpush.msra.mxu0 %v1082
        %3327 = vmatpush.msra.mxu0 %v1078
        %3328 = vmatpush.msra.mxu0 %v1074
        %3329 = vmatmul.f32.gmra.mxu0 %v2246
        %v3330 = vpop.f32.mrf.mxu0
        %v3331 = vadd.f32 %v3311, %v3330
        %3332 = vdwg.mxu0
        %3333 = vmatpush.msra.mxu0 %v1198
        %3334 = vmatpush.msra.mxu0 %v1194
        %3335 = vmatpush.msra.mxu0 %v1190
        %3336 = vmatpush.msra.mxu0 %v1186
        %3337 = vmatpush.msra.mxu0 %v1182
        %3338 = vmatpush.msra.mxu0 %v1178
        %3339 = vmatpush.msra.mxu0 %v1174
        %3340 = vmatpush.msra.mxu0 %v1170
        %3341 = vmatpush.msra.mxu0 %v1166
        %3342 = vmatpush.msra.mxu0 %v1162
        %3343 = vmatpush.msra.mxu0 %v1158
        %3344 = vmatpush.msra.mxu0 %v1154
        %3345 = vmatpush.msra.mxu0 %v1150
        %3346 = vmatpush.msra.mxu0 %v1146
        %3347 = vmatpush.msra.mxu0 %v1142
        %3348 = vmatpush.msra.mxu0 %v1138
        %3349 = vmatmul.f32.gmra.mxu0 %v2247
        %v3350 = vpop.f32.mrf.mxu0
        %v3351 = vadd.f32 %v3331, %v3350
        %3352 = vdwg.mxu0
        %3353 = vmatpush.msra.mxu0 %v1262
        %3354 = vmatpush.msra.mxu0 %v1258
        %3355 = vmatpush.msra.mxu0 %v1254
        %3356 = vmatpush.msra.mxu0 %v1250
        %3357 = vmatpush.msra.mxu0 %v1246
        %3358 = vmatpush.msra.mxu0 %v1242
        %3359 = vmatpush.msra.mxu0 %v1238
        %3360 = vmatpush.msra.mxu0 %v1234
        %3361 = vmatpush.msra.mxu0 %v1230
        %3362 = vmatpush.msra.mxu0 %v1226
        %3363 = vmatpush.msra.mxu0 %v1222
        %3364 = vmatpush.msra.mxu0 %v1218
        %3365 = vmatpush.msra.mxu0 %v1214
        %3366 = vmatpush.msra.mxu0 %v1210
        %3367 = vmatpush.msra.mxu0 %v1206
        %3368 = vmatpush.msra.mxu0 %v1202
        %3369 = vmatmul.f32.gmra.mxu0 %v2248
        %v3370 = vpop.f32.mrf.mxu0
        %v3371 = vadd.f32 %v3351, %v3370
        %3372 = vdwg.mxu0
        %3373 = vmatpush.msra.mxu0 %v1326
        %3374 = vmatpush.msra.mxu0 %v1322
        %3375 = vmatpush.msra.mxu0 %v1318
        %3376 = vmatpush.msra.mxu0 %v1314
        %3377 = vmatpush.msra.mxu0 %v1310
        %3378 = vmatpush.msra.mxu0 %v1306
        %3379 = vmatpush.msra.mxu0 %v1302
        %3380 = vmatpush.msra.mxu0 %v1298
        %3381 = vmatpush.msra.mxu0 %v1294
        %3382 = vmatpush.msra.mxu0 %v1290
        %3383 = vmatpush.msra.mxu0 %v1286
        %3384 = vmatpush.msra.mxu0 %v1282
        %3385 = vmatpush.msra.mxu0 %v1278
        %3386 = vmatpush.msra.mxu0 %v1274
        %3387 = vmatpush.msra.mxu0 %v1270
        %3388 = vmatpush.msra.mxu0 %v1266
        %3389 = vmatmul.f32.gmra.mxu0 %v2249
        %v3390 = vpop.f32.mrf.mxu0
        %v3391 = vadd.f32 %v3371, %v3390
        %3392 = vdwg.mxu0
        %3393 = vmatpush.msra.mxu0 %v879
        %3394 = vmatpush.msra.mxu0 %v875
        %3395 = vmatpush.msra.mxu0 %v871
        %3396 = vmatpush.msra.mxu0 %v867
        %3397 = vmatpush.msra.mxu0 %v863
        %3398 = vmatpush.msra.mxu0 %v859
        %3399 = vmatpush.msra.mxu0 %v855
        %3400 = vmatpush.msra.mxu0 %v851
        %3401 = vmatpush.msra.mxu0 %v847
        %3402 = vmatpush.msra.mxu0 %v843
        %3403 = vmatpush.msra.mxu0 %v839
        %3404 = vmatpush.msra.mxu0 %v835
        %3405 = vmatpush.msra.mxu0 %v831
        %3406 = vmatpush.msra.mxu0 %v827
        %3407 = vmatpush.msra.mxu0 %v823
        %3408 = vmatpush.msra.mxu0 %v819
        %3409 = vmatmul.f32.gmra.mxu0 %v2242
        %v3410 = vpop.f32.mrf.mxu0
        %v3411 = vadd.f32 0.0, %v3410
        %3412 = vdwg.mxu0
        %3413 = vmatpush.msra.mxu0 %v943
        %3414 = vmatpush.msra.mxu0 %v939
        %3415 = vmatpush.msra.mxu0 %v935
        %3416 = vmatpush.msra.mxu0 %v931
        %3417 = vmatpush.msra.mxu0 %v927
        %3418 = vmatpush.msra.mxu0 %v923
        %3419 = vmatpush.msra.mxu0 %v919
        %3420 = vmatpush.msra.mxu0 %v915
        %3421 = vmatpush.msra.mxu0 %v911
        %3422 = vmatpush.msra.mxu0 %v907
        %3423 = vmatpush.msra.mxu0 %v903
        %3424 = vmatpush.msra.mxu0 %v899
        %3425 = vmatpush.msra.mxu0 %v895
        %3426 = vmatpush.msra.mxu0 %v891
        %3427 = vmatpush.msra.mxu0 %v887
        %3428 = vmatpush.msra.mxu0 %v883
        %3429 = vmatmul.f32.gmra.mxu0 %v2243
        %v3430 = vpop.f32.mrf.mxu0
        %v3431 = vadd.f32 %v3411, %v3430
        %3432 = vdwg.mxu0
        %3433 = vmatpush.msra.mxu0 %v1007
        %3434 = vmatpush.msra.mxu0 %v1003
        %3435 = vmatpush.msra.mxu0 %v999
        %3436 = vmatpush.msra.mxu0 %v995
        %3437 = vmatpush.msra.mxu0 %v991
        %3438 = vmatpush.msra.mxu0 %v987
        %3439 = vmatpush.msra.mxu0 %v983
        %3440 = vmatpush.msra.mxu0 %v979
        %3441 = vmatpush.msra.mxu0 %v975
        %3442 = vmatpush.msra.mxu0 %v971
        %3443 = vmatpush.msra.mxu0 %v967
        %3444 = vmatpush.msra.mxu0 %v963
        %3445 = vmatpush.msra.mxu0 %v959
        %3446 = vmatpush.msra.mxu0 %v955
        %3447 = vmatpush.msra.mxu0 %v951
        %3448 = vmatpush.msra.mxu0 %v947
        %3449 = vmatmul.f32.gmra.mxu0 %v2244
        %v3450 = vpop.f32.mrf.mxu0
        %v3451 = vadd.f32 %v3431, %v3450
        %3452 = vdwg.mxu0
        %3453 = vmatpush.msra.mxu0 %v1071
        %3454 = vmatpush.msra.mxu0 %v1067
        %3455 = vmatpush.msra.mxu0 %v1063
        %3456 = vmatpush.msra.mxu0 %v1059
        %3457 = vmatpush.msra.mxu0 %v1055
        %3458 = vmatpush.msra.mxu0 %v1051
        %3459 = vmatpush.msra.mxu0 %v1047
        %3460 = vmatpush.msra.mxu0 %v1043
        %3461 = vmatpush.msra.mxu0 %v1039
        %3462 = vmatpush.msra.mxu0 %v1035
        %3463 = vmatpush.msra.mxu0 %v1031
        %3464 = vmatpush.msra.mxu0 %v1027
        %3465 = vmatpush.msra.mxu0 %v1023
        %3466 = vmatpush.msra.mxu0 %v1019
        %3467 = vmatpush.msra.mxu0 %v1015
        %3468 = vmatpush.msra.mxu0 %v1011
        %3469 = vmatmul.f32.gmra.mxu0 %v2245
        %v3470 = vpop.f32.mrf.mxu0
        %v3471 = vadd.f32 %v3451, %v3470
        %3472 = vdwg.mxu0
        %3473 = vmatpush.msra.mxu0 %v1135
        %3474 = vmatpush.msra.mxu0 %v1131
        %3475 = vmatpush.msra.mxu0 %v1127
        %3476 = vmatpush.msra.mxu0 %v1123
        %3477 = vmatpush.msra.mxu0 %v1119
        %3478 = vmatpush.msra.mxu0 %v1115
        %3479 = vmatpush.msra.mxu0 %v1111
        %3480 = vmatpush.msra.mxu0 %v1107
        %3481 = vmatpush.msra.mxu0 %v1103
        %3482 = vmatpush.msra.mxu0 %v1099
        %3483 = vmatpush.msra.mxu0 %v1095
        %3484 = vmatpush.msra.mxu0 %v1091
        %3485 = vmatpush.msra.mxu0 %v1087
        %3486 = vmatpush.msra.mxu0 %v1083
        %3487 = vmatpush.msra.mxu0 %v1079
        %3488 = vmatpush.msra.mxu0 %v1075
        %3489 = vmatmul.f32.gmra.mxu0 %v2246
        %v3490 = vpop.f32.mrf.mxu0
        %v3491 = vadd.f32 %v3471, %v3490
        %3492 = vdwg.mxu0
        %3493 = vmatpush.msra.mxu0 %v1199
        %3494 = vmatpush.msra.mxu0 %v1195
        %3495 = vmatpush.msra.mxu0 %v1191
        %3496 = vmatpush.msra.mxu0 %v1187
        %3497 = vmatpush.msra.mxu0 %v1183
        %3498 = vmatpush.msra.mxu0 %v1179
        %3499 = vmatpush.msra.mxu0 %v1175
        %3500 = vmatpush.msra.mxu0 %v1171
        %3501 = vmatpush.msra.mxu0 %v1167
        %3502 = vmatpush.msra.mxu0 %v1163
        %3503 = vmatpush.msra.mxu0 %v1159
        %3504 = vmatpush.msra.mxu0 %v1155
        %3505 = vmatpush.msra.mxu0 %v1151
        %3506 = vmatpush.msra.mxu0 %v1147
        %3507 = vmatpush.msra.mxu0 %v1143
        %3508 = vmatpush.msra.mxu0 %v1139
        %3509 = vmatmul.f32.gmra.mxu0 %v2247
        %v3510 = vpop.f32.mrf.mxu0
        %v3511 = vadd.f32 %v3491, %v3510
        %3512 = vdwg.mxu0
        %3513 = vmatpush.msra.mxu0 %v1263
        %3514 = vmatpush.msra.mxu0 %v1259
        %3515 = vmatpush.msra.mxu0 %v1255
        %3516 = vmatpush.msra.mxu0 %v1251
        %3517 = vmatpush.msra.mxu0 %v1247
        %3518 = vmatpush.msra.mxu0 %v1243
        %3519 = vmatpush.msra.mxu0 %v1239
        %3520 = vmatpush.msra.mxu0 %v1235
        %3521 = vmatpush.msra.mxu0 %v1231
        %3522 = vmatpush.msra.mxu0 %v1227
        %3523 = vmatpush.msra.mxu0 %v1223
        %3524 = vmatpush.msra.mxu0 %v1219
        %3525 = vmatpush.msra.mxu0 %v1215
        %3526 = vmatpush.msra.mxu0 %v1211
        %3527 = vmatpush.msra.mxu0 %v1207
        %3528 = vmatpush.msra.mxu0 %v1203
        %3529 = vmatmul.f32.gmra.mxu0 %v2248
        %v3530 = vpop.f32.mrf.mxu0
        %v3531 = vadd.f32 %v3511, %v3530
        %3532 = vdwg.mxu0
        %3533 = vmatpush.msra.mxu0 %v1327
        %3534 = vmatpush.msra.mxu0 %v1323
        %3535 = vmatpush.msra.mxu0 %v1319
        %3536 = vmatpush.msra.mxu0 %v1315
        %3537 = vmatpush.msra.mxu0 %v1311
        %3538 = vmatpush.msra.mxu0 %v1307
        %3539 = vmatpush.msra.mxu0 %v1303
        %3540 = vmatpush.msra.mxu0 %v1299
        %3541 = vmatpush.msra.mxu0 %v1295
        %3542 = vmatpush.msra.mxu0 %v1291
        %3543 = vmatpush.msra.mxu0 %v1287
        %3544 = vmatpush.msra.mxu0 %v1283
        %3545 = vmatpush.msra.mxu0 %v1279
        %3546 = vmatpush.msra.mxu0 %v1275
        %3547 = vmatpush.msra.mxu0 %v1271
        %3548 = vmatpush.msra.mxu0 %v1267
        %3549 = vmatmul.f32.gmra.mxu0 %v2249
        %v3550 = vpop.f32.mrf.mxu0
        %v3551 = vadd.f32 %v3531, %v3550
        %3552 = vdwg.mxu0
        %v3553 = vsel %vm1355, %v3071, 0.0
        %v3554 = vsel %vm1355, %v3231, 0.0
        %v3555 = vadd.f32 %v3553, %v3554
        %v3556 = vsel %vm1355, %v3391, 0.0
        %v3557 = vadd.f32 %v3555, %v3556
        %v3558 = vsel %vm1355, %v3551, 0.0
        %v3559 = vadd.f32 %v3557, %v3558
        %3560 = vadd.xlane.f32.xlu0 %v3559
        %v3561 = vpop.xlane.xlu0 %3560
        %v3562 = vmul.f32 %v3561, 0.001953125
        %v3563 = vmul.f32 %v3071, %v3071
        %v3564 = vmul.f32 %v3231, %v3231
        %v3565 = vmul.f32 %v3391, %v3391
        %v3566 = vmul.f32 %v3551, %v3551
        %v3567 = vsel %vm1355, %v3563, 0.0
        %v3568 = vsel %vm1355, %v3564, 0.0
        %v3569 = vadd.f32 %v3567, %v3568
        %v3570 = vsel %vm1355, %v3565, 0.0
        %v3571 = vadd.f32 %v3569, %v3570
        %v3572 = vsel %vm1355, %v3566, 0.0
        %v3573 = vadd.f32 %v3571, %v3572
        %3574 = vadd.xlane.f32.xlu0 %v3573
        %v3575 = vpop.xlane.xlu0 %3574
        %v3576 = vmul.f32 %v3575, 0.001953125
        %v3577 = vmul.f32 %v3562, %v3562
        %v3578 = vsub.f32 %v3576, %v3577
        %v3579 = vadd.f32 %v3578, 1e-05
        %v3580 = vrsqrt.pop %v3579
        %v3581 = vmul.f32 %v3580, %v3579
        %v3582 = vmul.f32 %v3581, %v3580
        %v3583 = vmul.f32 0.5, %v3582
        %v3584 = vsub.f32 1.5, %v3583
        %v3585 = vmul.f32 %v3580, %v3584
        %vm3586 = vweird.f32 %v3579
        %vm3587 = vweird.f32 %v3580
        %vm3588 = vmor %vm3586, %vm3587
        %v3589 = vsel %vm3588, %v3580, %v3585
        %v3590 = vmul.f32 %v3589, %v814
        %v3591 = vsub.f32 %v3071, %v3562
        %v3592 = vsub.f32 %v3231, %v3562
        %v3593 = vsub.f32 %v3391, %v3562
        %v3594 = vsub.f32 %v3551, %v3562
        %3596 = vset.pattern.permute.xlu0 0
        %3597 = vperm.xlu0 %3596, %v3590
        %v3598 = vpop.permute.xlu0 %3597
        %v3600 = vmul.f32 %v3591, %v3598
        %v3601 = vmul.f32 %v3592, %v3598
        %v3602 = vmul.f32 %v3593, %v3598
        %v3603 = vmul.f32 %v3594, %v3598
        %3605 = vset.pattern.permute.xlu0 0
        %3606 = vperm.xlu0 %3605, %v815
        %v3607 = vpop.permute.xlu0 %3606
        %v3609 = vadd.f32 %v3600, %v3607
        %v3610 = vadd.f32 %v3601, %v3607
        %v3611 = vadd.f32 %v3602, %v3607
        %v3612 = vadd.f32 %v3603, %v3607
        %vm3613 = vcmp.ge.f32.partialorder %v3609, 0.0
        %vm3614 = vcmp.ge.f32.partialorder %v3610, 0.0
        %vm3615 = vcmp.ge.f32.partialorder %v3611, 0.0
        %vm3616 = vcmp.ge.f32.partialorder %v3612, 0.0
        %v3617 = vmul.f32 %v3609, 0.2
        %v3618 = vmul.f32 %v3610, 0.2
        %v3619 = vmul.f32 %v3611, 0.2
        %v3620 = vmul.f32 %v3612, 0.2
        %v3621 = vsel %vm3613, %v3609, %v3617
        %v3622 = vsel %vm3614, %v3610, %v3618
        %v3623 = vsel %vm3615, %v3611, %v3619
        %v3624 = vsel %vm3616, %v3612, %v3620
        %3625 = vrot.lane.b32.xlu0 %v3621, 1
        %v3626 = vpop.permute.xlu0 %3625
        %3627 = vrot.lane.b32.xlu0 %v3622, 1
        %v3628 = vpop.permute.xlu0 %3627
        %3629 = vrot.lane.b32.xlu0 %v3623, 1
        %v3630 = vpop.permute.xlu0 %3629
        %3631 = vrot.lane.b32.xlu0 %v3624, 1
        %v3632 = vpop.permute.xlu0 %3631
        %v3633 = vsel %vm1545, %v3630, %v3632
        %v3634 = vsel %vm1545, %v3628, %v3630
        %v3635 = vsel %vm1545, %v3626, %v3628
        %v3636 = vsel %vm1545, %v3632, %v3626
        %v3637 = vsel %vm1562, %v3636, 0.0
        %v3638 = vsel %vm1563, %v3635, 0.0
        %v3639 = vsel %vm1564, %v3634, 0.0
        %v3640 = vsel %vm1565, %v3633, 0.0
        %vm3641 = vcmp.lt.s32.totalorder %v1486, 511
        %vm3642 = vcmp.lt.s32.totalorder %v1487, 511
        %vm3643 = vcmp.lt.s32.totalorder %v1488, 511
        %vm3644 = vcmp.lt.s32.totalorder %v1489, 511
        %3645 = vrot.lane.b32.xlu0 %v3621, 127
        %v3646 = vpop.permute.xlu0 %3645
        %3647 = vrot.lane.b32.xlu0 %v3622, 127
        %v3648 = vpop.permute.xlu0 %3647
        %3649 = vrot.lane.b32.xlu0 %v3623, 127
        %v3650 = vpop.permute.xlu0 %3649
        %3651 = vrot.lane.b32.xlu0 %v3624, 127
        %v3652 = vpop.permute.xlu0 %3651
        %v3653 = vsel %vm1625, %v3650, %v3652
        %v3654 = vsel %vm1625, %v3648, %v3650
        %v3655 = vsel %vm1625, %v3646, %v3648
        %v3656 = vsel %vm1625, %v3652, %v3646
        %v3657 = vsel %vm3641, 1, 0
        %v3658 = vsel %vm3642, 1, 0
        %v3659 = vsel %vm3643, 1, 0
        %v3660 = vsel %vm3644, 1, 0
        %vm3661 = vcmp.eq.s32.totalorder %v3657, 1
        %vm3662 = vcmp.eq.s32.totalorder %v3658, 1
        %vm3663 = vcmp.eq.s32.totalorder %v3659, 1
        %vm3664 = vcmp.eq.s32.totalorder %v3660, 1
        %v3665 = vsel %vm3661, %v3655, 0.0
        %v3666 = vsel %vm3662, %v3654, 0.0
        %v3667 = vsel %vm3663, %v3653, 0.0
        %v3668 = vsel %vm3664, %v3656, 0.0
        %3670 = vrot.lane.b32.xlu0 %v812, 125
        %v3671 = vpop.permute.xlu0 %3670
        %v3672 = vsel %vm1676, %v3671, 0
        %v3675 = vsel %vm1355, %v3621, 0
        %v3678 = vsel %vm1355, %v3622, 0
        %v3681 = vsel %vm1355, %v3623, 0
        %v3684 = vsel %vm1355, %v3624, 0
        %3686 = vmatpush.msra.mxu0 0.0
        %3687 = vmatpush.msra.mxu0 0.0
        %3688 = vmatpush.msra.mxu0 0.0
        %3689 = vmatpush.msra.mxu0 0.0
        %3690 = vmatpush.msra.mxu0 0.0
        %3691 = vmatpush.msra.mxu0 0.0
        %3692 = vmatpush.msra.mxu0 0.0
        %3693 = vmatpush.msra.mxu0 0.0
        %3694 = vmatpush.msra.mxu0 0.0
        %3695 = vmatpush.msra.mxu0 0.0
        %3696 = vmatpush.msra.mxu0 0.0
        %3697 = vmatpush.msra.mxu0 0.0
        %3698 = vmatpush.msra.mxu0 0.0
        %3699 = vmatpush.msra.mxu0 0.0
        %3700 = vmatpush.msra.mxu0 0.0
        %3701 = vmatpush.msra.mxu0 %v3675
        %3702 = vmatmul.f32.gmra.mxu0 %v3672
        %v3703 = vpop.f32.mrf.mxu0
        %v3704 = vadd.f32 0.0, %v3703
        %3705 = vdwg.mxu0
        %3706 = vmatpush.msra.mxu0 0.0
        %3707 = vmatpush.msra.mxu0 0.0
        %3708 = vmatpush.msra.mxu0 0.0
        %3709 = vmatpush.msra.mxu0 0.0
        %3710 = vmatpush.msra.mxu0 0.0
        %3711 = vmatpush.msra.mxu0 0.0
        %3712 = vmatpush.msra.mxu0 0.0
        %3713 = vmatpush.msra.mxu0 0.0
        %3714 = vmatpush.msra.mxu0 0.0
        %3715 = vmatpush.msra.mxu0 0.0
        %3716 = vmatpush.msra.mxu0 0.0
        %3717 = vmatpush.msra.mxu0 0.0
        %3718 = vmatpush.msra.mxu0 0.0
        %3719 = vmatpush.msra.mxu0 0.0
        %3720 = vmatpush.msra.mxu0 0.0
        %3721 = vmatpush.msra.mxu0 %v3678
        %3722 = vmatmul.f32.gmra.mxu0 %v3672
        %v3723 = vpop.f32.mrf.mxu0
        %v3724 = vadd.f32 0.0, %v3723
        %3725 = vdwg.mxu0
        %3726 = vmatpush.msra.mxu0 0.0
        %3727 = vmatpush.msra.mxu0 0.0
        %3728 = vmatpush.msra.mxu0 0.0
        %3729 = vmatpush.msra.mxu0 0.0
        %3730 = vmatpush.msra.mxu0 0.0
        %3731 = vmatpush.msra.mxu0 0.0
        %3732 = vmatpush.msra.mxu0 0.0
        %3733 = vmatpush.msra.mxu0 0.0
        %3734 = vmatpush.msra.mxu0 0.0
        %3735 = vmatpush.msra.mxu0 0.0
        %3736 = vmatpush.msra.mxu0 0.0
        %3737 = vmatpush.msra.mxu0 0.0
        %3738 = vmatpush.msra.mxu0 0.0
        %3739 = vmatpush.msra.mxu0 0.0
        %3740 = vmatpush.msra.mxu0 0.0
        %3741 = vmatpush.msra.mxu0 %v3681
        %3742 = vmatmul.f32.gmra.mxu0 %v3672
        %v3743 = vpop.f32.mrf.mxu0
        %v3744 = vadd.f32 0.0, %v3743
        %3745 = vdwg.mxu0
        %3746 = vmatpush.msra.mxu0 0.0
        %3747 = vmatpush.msra.mxu0 0.0
        %3748 = vmatpush.msra.mxu0 0.0
        %3749 = vmatpush.msra.mxu0 0.0
        %3750 = vmatpush.msra.mxu0 0.0
        %3751 = vmatpush.msra.mxu0 0.0
        %3752 = vmatpush.msra.mxu0 0.0
        %3753 = vmatpush.msra.mxu0 0.0
        %3754 = vmatpush.msra.mxu0 0.0
        %3755 = vmatpush.msra.mxu0 0.0
        %3756 = vmatpush.msra.mxu0 0.0
        %3757 = vmatpush.msra.mxu0 0.0
        %3758 = vmatpush.msra.mxu0 0.0
        %3759 = vmatpush.msra.mxu0 0.0
        %3760 = vmatpush.msra.mxu0 0.0
        %3761 = vmatpush.msra.mxu0 %v3684
        %3762 = vmatmul.f32.gmra.mxu0 %v3672
        %v3763 = vpop.f32.mrf.mxu0
        %v3764 = vadd.f32 0.0, %v3763
        %3765 = vdwg.mxu0
        %v3766 = vsel %vm1676, %v812, 0
        %v3769 = vsel %vm1355, %v3637, 0
        %v3772 = vsel %vm1355, %v3638, 0
        %v3775 = vsel %vm1355, %v3639, 0
        %v3778 = vsel %vm1355, %v3640, 0
        %3780 = vmatpush.msra.mxu0 0.0
        %3781 = vmatpush.msra.mxu0 0.0
        %3782 = vmatpush.msra.mxu0 0.0
        %3783 = vmatpush.msra.mxu0 0.0
        %3784 = vmatpush.msra.mxu0 0.0
        %3785 = vmatpush.msra.mxu0 0.0
        %3786 = vmatpush.msra.mxu0 0.0
        %3787 = vmatpush.msra.mxu0 0.0
        %3788 = vmatpush.msra.mxu0 0.0
        %3789 = vmatpush.msra.mxu0 0.0
        %3790 = vmatpush.msra.mxu0 0.0
        %3791 = vmatpush.msra.mxu0 0.0
        %3792 = vmatpush.msra.mxu0 0.0
        %3793 = vmatpush.msra.mxu0 0.0
        %3794 = vmatpush.msra.mxu0 0.0
        %3795 = vmatpush.msra.mxu0 %v3769
        %3796 = vmatmul.f32.gmra.mxu0 %v3766
        %v3797 = vpop.f32.mrf.mxu0
        %v3798 = vadd.f32 %v3704, %v3797
        %3799 = vdwg.mxu0
        %3800 = vmatpush.msra.mxu0 0.0
        %3801 = vmatpush.msra.mxu0 0.0
        %3802 = vmatpush.msra.mxu0 0.0
        %3803 = vmatpush.msra.mxu0 0.0
        %3804 = vmatpush.msra.mxu0 0.0
        %3805 = vmatpush.msra.mxu0 0.0
        %3806 = vmatpush.msra.mxu0 0.0
        %3807 = vmatpush.msra.mxu0 0.0
        %3808 = vmatpush.msra.mxu0 0.0
        %3809 = vmatpush.msra.mxu0 0.0
        %3810 = vmatpush.msra.mxu0 0.0
        %3811 = vmatpush.msra.mxu0 0.0
        %3812 = vmatpush.msra.mxu0 0.0
        %3813 = vmatpush.msra.mxu0 0.0
        %3814 = vmatpush.msra.mxu0 0.0
        %3815 = vmatpush.msra.mxu0 %v3772
        %3816 = vmatmul.f32.gmra.mxu0 %v3766
        %v3817 = vpop.f32.mrf.mxu0
        %v3818 = vadd.f32 %v3724, %v3817
        %3819 = vdwg.mxu0
        %3820 = vmatpush.msra.mxu0 0.0
        %3821 = vmatpush.msra.mxu0 0.0
        %3822 = vmatpush.msra.mxu0 0.0
        %3823 = vmatpush.msra.mxu0 0.0
        %3824 = vmatpush.msra.mxu0 0.0
        %3825 = vmatpush.msra.mxu0 0.0
        %3826 = vmatpush.msra.mxu0 0.0
        %3827 = vmatpush.msra.mxu0 0.0
        %3828 = vmatpush.msra.mxu0 0.0
        %3829 = vmatpush.msra.mxu0 0.0
        %3830 = vmatpush.msra.mxu0 0.0
        %3831 = vmatpush.msra.mxu0 0.0
        %3832 = vmatpush.msra.mxu0 0.0
        %3833 = vmatpush.msra.mxu0 0.0
        %3834 = vmatpush.msra.mxu0 0.0
        %3835 = vmatpush.msra.mxu0 %v3775
        %3836 = vmatmul.f32.gmra.mxu0 %v3766
        %v3837 = vpop.f32.mrf.mxu0
        %v3838 = vadd.f32 %v3744, %v3837
        %3839 = vdwg.mxu0
        %3840 = vmatpush.msra.mxu0 0.0
        %3841 = vmatpush.msra.mxu0 0.0
        %3842 = vmatpush.msra.mxu0 0.0
        %3843 = vmatpush.msra.mxu0 0.0
        %3844 = vmatpush.msra.mxu0 0.0
        %3845 = vmatpush.msra.mxu0 0.0
        %3846 = vmatpush.msra.mxu0 0.0
        %3847 = vmatpush.msra.mxu0 0.0
        %3848 = vmatpush.msra.mxu0 0.0
        %3849 = vmatpush.msra.mxu0 0.0
        %3850 = vmatpush.msra.mxu0 0.0
        %3851 = vmatpush.msra.mxu0 0.0
        %3852 = vmatpush.msra.mxu0 0.0
        %3853 = vmatpush.msra.mxu0 0.0
        %3854 = vmatpush.msra.mxu0 0.0
        %3855 = vmatpush.msra.mxu0 %v3778
        %3856 = vmatmul.f32.gmra.mxu0 %v3766
        %v3857 = vpop.f32.mrf.mxu0
        %v3858 = vadd.f32 %v3764, %v3857
        %3859 = vdwg.mxu0
        %3860 = vrot.lane.b32.xlu0 %v812, 122
        %v3861 = vpop.permute.xlu0 %3860
        %v3862 = vsel %vm1676, %v3861, 0
        %v3865 = vsel %vm1355, %v3665, 0
        %v3868 = vsel %vm1355, %v3666, 0
        %v3871 = vsel %vm1355, %v3667, 0
        %v3874 = vsel %vm1355, %v3668, 0
        %3876 = vmatpush.msra.mxu0 0.0
        %3877 = vmatpush.msra.mxu0 0.0
        %3878 = vmatpush.msra.mxu0 0.0
        %3879 = vmatpush.msra.mxu0 0.0
        %3880 = vmatpush.msra.mxu0 0.0
        %3881 = vmatpush.msra.mxu0 0.0
        %3882 = vmatpush.msra.mxu0 0.0
        %3883 = vmatpush.msra.mxu0 0.0
        %3884 = vmatpush.msra.mxu0 0.0
        %3885 = vmatpush.msra.mxu0 0.0
        %3886 = vmatpush.msra.mxu0 0.0
        %3887 = vmatpush.msra.mxu0 0.0
        %3888 = vmatpush.msra.mxu0 0.0
        %3889 = vmatpush.msra.mxu0 0.0
        %3890 = vmatpush.msra.mxu0 0.0
        %3891 = vmatpush.msra.mxu0 %v3865
        %3892 = vmatmul.f32.gmra.mxu0 %v3862
        %v3893 = vpop.f32.mrf.mxu0
        %v3894 = vadd.f32 0.0, %v3893
        %3895 = vdwg.mxu0
        %3896 = vmatpush.msra.mxu0 0.0
        %3897 = vmatpush.msra.mxu0 0.0
        %3898 = vmatpush.msra.mxu0 0.0
        %3899 = vmatpush.msra.mxu0 0.0
        %3900 = vmatpush.msra.mxu0 0.0
        %3901 = vmatpush.msra.mxu0 0.0
        %3902 = vmatpush.msra.mxu0 0.0
        %3903 = vmatpush.msra.mxu0 0.0
        %3904 = vmatpush.msra.mxu0 0.0
        %3905 = vmatpush.msra.mxu0 0.0
        %3906 = vmatpush.msra.mxu0 0.0
        %3907 = vmatpush.msra.mxu0 0.0
        %3908 = vmatpush.msra.mxu0 0.0
        %3909 = vmatpush.msra.mxu0 0.0
        %3910 = vmatpush.msra.mxu0 0.0
        %3911 = vmatpush.msra.mxu0 %v3868
        %3912 = vmatmul.f32.gmra.mxu0 %v3862
        %v3913 = vpop.f32.mrf.mxu0
        %v3914 = vadd.f32 0.0, %v3913
        %3915 = vdwg.mxu0
        %3916 = vmatpush.msra.mxu0 0.0
        %3917 = vmatpush.msra.mxu0 0.0
        %3918 = vmatpush.msra.mxu0 0.0
        %3919 = vmatpush.msra.mxu0 0.0
        %3920 = vmatpush.msra.mxu0 0.0
        %3921 = vmatpush.msra.mxu0 0.0
        %3922 = vmatpush.msra.mxu0 0.0
        %3923 = vmatpush.msra.mxu0 0.0
        %3924 = vmatpush.msra.mxu0 0.0
        %3925 = vmatpush.msra.mxu0 0.0
        %3926 = vmatpush.msra.mxu0 0.0
        %3927 = vmatpush.msra.mxu0 0.0
        %3928 = vmatpush.msra.mxu0 0.0
        %3929 = vmatpush.msra.mxu0 0.0
        %3930 = vmatpush.msra.mxu0 0.0
        %3931 = vmatpush.msra.mxu0 %v3871
        %3932 = vmatmul.f32.gmra.mxu0 %v3862
        %v3933 = vpop.f32.mrf.mxu0
        %v3934 = vadd.f32 0.0, %v3933
        %3935 = vdwg.mxu0
        %3936 = vmatpush.msra.mxu0 0.0
        %3937 = vmatpush.msra.mxu0 0.0
        %3938 = vmatpush.msra.mxu0 0.0
        %3939 = vmatpush.msra.mxu0 0.0
        %3940 = vmatpush.msra.mxu0 0.0
        %3941 = vmatpush.msra.mxu0 0.0
        %3942 = vmatpush.msra.mxu0 0.0
        %3943 = vmatpush.msra.mxu0 0.0
        %3944 = vmatpush.msra.mxu0 0.0
        %3945 = vmatpush.msra.mxu0 0.0
        %3946 = vmatpush.msra.mxu0 0.0
        %3947 = vmatpush.msra.mxu0 0.0
        %3948 = vmatpush.msra.mxu0 0.0
        %3949 = vmatpush.msra.mxu0 0.0
        %3950 = vmatpush.msra.mxu0 0.0
        %3951 = vmatpush.msra.mxu0 %v3874
        %3952 = vmatmul.f32.gmra.mxu0 %v3862
        %v3953 = vpop.f32.mrf.mxu0
        %v3954 = vadd.f32 0.0, %v3953
        %3955 = vdwg.mxu0
        %v3956 = vadd.f32 %v3798, %v3894
        %v3957 = vadd.f32 %v3818, %v3914
        %v3958 = vadd.f32 %v3838, %v3934
        %v3959 = vadd.f32 %v3858, %v3954
        %3961 = vset.pattern.permute.xlu0 0
        %3962 = vperm.xlu0 %3961, %v813
        %v3963 = vpop.permute.xlu0 %3962
        %v3965 = vadd.f32 %v3956, %v3963
        %v3966 = vadd.f32 %v3957, %v3963
        %v3967 = vadd.f32 %v3958, %v3963
        %v3968 = vadd.f32 %v3959, %v3963
        %v3970 = vsel %vm1676, %v807, 0
        %v3973 = vsel %vm1355, %v2431, 0
        %v3976 = vsel %vm1355, %v2591, 0
        %v3979 = vsel %vm1355, %v2751, 0
        %v3982 = vsel %vm1355, %v2911, 0
        %3984 = vmatpush.msra.mxu0 0.0
        %3985 = vmatpush.msra.mxu0 0.0
        %3986 = vmatpush.msra.mxu0 0.0
        %3987 = vmatpush.msra.mxu0 0.0
        %3988 = vmatpush.msra.mxu0 0.0
        %3989 = vmatpush.msra.mxu0 0.0
        %3990 = vmatpush.msra.mxu0 0.0
        %3991 = vmatpush.msra.mxu0 0.0
        %3992 = vmatpush.msra.mxu0 0.0
        %3993 = vmatpush.msra.mxu0 0.0
        %3994 = vmatpush.msra.mxu0 0.0
        %3995 = vmatpush.msra.mxu0 0.0
        %3996 = vmatpush.msra.mxu0 0.0
        %3997 = vmatpush.msra.mxu0 0.0
        %3998 = vmatpush.msra.mxu0 0.0
        %3999 = vmatpush.msra.mxu0 %v3973
        %4000 = vmatmul.f32.gmra.mxu0 %v3970
        %v4001 = vpop.f32.mrf.mxu0
        %v4002 = vadd.f32 %v3965, %v4001
        %4003 = vdwg.mxu0
        %4004 = vmatpush.msra.mxu0 0.0
        %4005 = vmatpush.msra.mxu0 0.0
        %4006 = vmatpush.msra.mxu0 0.0
        %4007 = vmatpush.msra.mxu0 0.0
        %4008 = vmatpush.msra.mxu0 0.0
        %4009 = vmatpush.msra.mxu0 0.0
        %4010 = vmatpush.msra.mxu0 0.0
        %4011 = vmatpush.msra.mxu0 0.0
        %4012 = vmatpush.msra.mxu0 0.0
        %4013 = vmatpush.msra.mxu0 0.0
        %4014 = vmatpush.msra.mxu0 0.0
        %4015 = vmatpush.msra.mxu0 0.0
        %4016 = vmatpush.msra.mxu0 0.0
        %4017 = vmatpush.msra.mxu0 0.0
        %4018 = vmatpush.msra.mxu0 0.0
        %4019 = vmatpush.msra.mxu0 %v3976
        %4020 = vmatmul.f32.gmra.mxu0 %v3970
        %v4021 = vpop.f32.mrf.mxu0
        %v4022 = vadd.f32 %v3966, %v4021
        %4023 = vdwg.mxu0
        %4024 = vmatpush.msra.mxu0 0.0
        %4025 = vmatpush.msra.mxu0 0.0
        %4026 = vmatpush.msra.mxu0 0.0
        %4027 = vmatpush.msra.mxu0 0.0
        %4028 = vmatpush.msra.mxu0 0.0
        %4029 = vmatpush.msra.mxu0 0.0
        %4030 = vmatpush.msra.mxu0 0.0
        %4031 = vmatpush.msra.mxu0 0.0
        %4032 = vmatpush.msra.mxu0 0.0
        %4033 = vmatpush.msra.mxu0 0.0
        %4034 = vmatpush.msra.mxu0 0.0
        %4035 = vmatpush.msra.mxu0 0.0
        %4036 = vmatpush.msra.mxu0 0.0
        %4037 = vmatpush.msra.mxu0 0.0
        %4038 = vmatpush.msra.mxu0 0.0
        %4039 = vmatpush.msra.mxu0 %v3979
        %4040 = vmatmul.f32.gmra.mxu0 %v3970
        %v4041 = vpop.f32.mrf.mxu0
        %v4042 = vadd.f32 %v3967, %v4041
        %4043 = vdwg.mxu0
        %4044 = vmatpush.msra.mxu0 0.0
        %4045 = vmatpush.msra.mxu0 0.0
        %4046 = vmatpush.msra.mxu0 0.0
        %4047 = vmatpush.msra.mxu0 0.0
        %4048 = vmatpush.msra.mxu0 0.0
        %4049 = vmatpush.msra.mxu0 0.0
        %4050 = vmatpush.msra.mxu0 0.0
        %4051 = vmatpush.msra.mxu0 0.0
        %4052 = vmatpush.msra.mxu0 0.0
        %4053 = vmatpush.msra.mxu0 0.0
        %4054 = vmatpush.msra.mxu0 0.0
        %4055 = vmatpush.msra.mxu0 0.0
        %4056 = vmatpush.msra.mxu0 0.0
        %4057 = vmatpush.msra.mxu0 0.0
        %4058 = vmatpush.msra.mxu0 0.0
        %4059 = vmatpush.msra.mxu0 %v3982
        %4060 = vmatmul.f32.gmra.mxu0 %v3970
        %v4061 = vpop.f32.mrf.mxu0
        %v4062 = vadd.f32 %v3968, %v4061
        %4063 = vdwg.mxu0
        %v4064 = vmul.f32 %v4002, 0.70710677
        %v4065 = vmul.f32 %v4022, 0.70710677
        %v4066 = vmul.f32 %v4042, 0.70710677
        %v4067 = vmul.f32 %v4062, 0.70710677
        %v4068 = vld [vmem:[#allocation7] sm:$0xff]
        %v4069 = vld [vmem:[%s12] sm:$0xff]
        %v4070 = vld [vmem:[%s13] sm:$0xff]
        %v4071 = vld [vmem:[%s14] sm:$0xff]
        %v4072 = vld [vmem:[#allocation9] sm:$0xff]
        %v4073 = vld [vmem:[%s16] sm:$0xff]
        %v4074 = vld [vmem:[%s17] sm:$0xff]
        %v4075 = vld [vmem:[%s18] sm:$0xff]
        %v4076 = vld [vmem:[#allocation2] sm:$0xff]
        %v4077 = vld [vmem:[#allocation2 + $0x8] sm:$0xff]
        %v4078 = vld [vmem:[#allocation2 + $0x20] sm:$0xff]
        %v4079 = vld [vmem:[#allocation2 + $0x28] sm:$0xff]
        %v4080 = vld [vmem:[#allocation2 + $0x40] sm:$0xff]
        %v4081 = vld [vmem:[#allocation2 + $0x48] sm:$0xff]
        %v4082 = vld [vmem:[#allocation2 + $0x60] sm:$0xff]
        %v4083 = vld [vmem:[#allocation2 + $0x68] sm:$0xff]
        %v4084 = vld [vmem:[#allocation2 + $0x80] sm:$0xff]
        %v4085 = vld [vmem:[#allocation2 + $0x88] sm:$0xff]
        %v4086 = vld [vmem:[#allocation2 + $0xa0] sm:$0xff]
        %v4087 = vld [vmem:[#allocation2 + $0xa8] sm:$0xff]
        %v4088 = vld [vmem:[#allocation2 + $0xc0] sm:$0xff]
        %v4089 = vld [vmem:[#allocation2 + $0xc8] sm:$0xff]
        %v4090 = vld [vmem:[#allocation2 + $0xe0] sm:$0xff]
        %v4091 = vld [vmem:[#allocation2 + $0xe8] sm:$0xff]
        %v4092 = vld [vmem:[#allocation2 + $0x100] sm:$0xff]
        %v4093 = vld [vmem:[#allocation2 + $0x108] sm:$0xff]
        %v4094 = vld [vmem:[#allocation2 + $0x120] sm:$0xff]
        %v4095 = vld [vmem:[#allocation2 + $0x128] sm:$0xff]
        %v4096 = vld [vmem:[#allocation2 + $0x140] sm:$0xff]
        %v4097 = vld [vmem:[#allocation2 + $0x148] sm:$0xff]
        %v4098 = vld [vmem:[#allocation2 + $0x160] sm:$0xff]
        %v4099 = vld [vmem:[#allocation2 + $0x168] sm:$0xff]
        %v4100 = vld [vmem:[#allocation2 + $0x180] sm:$0xff]
        %v4101 = vld [vmem:[#allocation2 + $0x188] sm:$0xff]
        %v4102 = vld [vmem:[#allocation2 + $0x1a0] sm:$0xff]
        %v4103 = vld [vmem:[#allocation2 + $0x1a8] sm:$0xff]
        %v4104 = vld [vmem:[#allocation2 + $0x1c0] sm:$0xff]
        %v4105 = vld [vmem:[#allocation2 + $0x1c8] sm:$0xff]
        %v4106 = vld [vmem:[#allocation2 + $0x1e0] sm:$0xff]
        %v4107 = vld [vmem:[#allocation2 + $0x1e8] sm:$0xff]
        %v4108 = vld [vmem:[#allocation2 + $0x200] sm:$0xff]
        %v4109 = vld [vmem:[#allocation2 + $0x208] sm:$0xff]
        %v4110 = vld [vmem:[#allocation2 + $0x220] sm:$0xff]
        %v4111 = vld [vmem:[#allocation2 + $0x228] sm:$0xff]
        %v4112 = vld [vmem:[#allocation2 + $0x240] sm:$0xff]
        %v4113 = vld [vmem:[#allocation2 + $0x248] sm:$0xff]
        %v4114 = vld [vmem:[#allocation2 + $0x260] sm:$0xff]
        %v4115 = vld [vmem:[#allocation2 + $0x268] sm:$0xff]
        %v4116 = vld [vmem:[#allocation2 + $0x280] sm:$0xff]
        %v4117 = vld [vmem:[#allocation2 + $0x288] sm:$0xff]
        %v4118 = vld [vmem:[#allocation2 + $0x2a0] sm:$0xff]
        %v4119 = vld [vmem:[#allocation2 + $0x2a8] sm:$0xff]
        %v4120 = vld [vmem:[#allocation2 + $0x2c0] sm:$0xff]
        %v4121 = vld [vmem:[#allocation2 + $0x2c8] sm:$0xff]
        %v4122 = vld [vmem:[#allocation2 + $0x2e0] sm:$0xff]
        %v4123 = vld [vmem:[#allocation2 + $0x2e8] sm:$0xff]
        %v4124 = vld [vmem:[#allocation2 + $0x300] sm:$0xff]
        %v4125 = vld [vmem:[#allocation2 + $0x308] sm:$0xff]
        %v4126 = vld [vmem:[#allocation2 + $0x320] sm:$0xff]
        %v4127 = vld [vmem:[#allocation2 + $0x328] sm:$0xff]
        %v4128 = vld [vmem:[#allocation2 + $0x340] sm:$0xff]
        %v4129 = vld [vmem:[#allocation2 + $0x348] sm:$0xff]
        %v4130 = vld [vmem:[#allocation2 + $0x360] sm:$0xff]
        %v4131 = vld [vmem:[#allocation2 + $0x368] sm:$0xff]
        %v4132 = vld [vmem:[#allocation2 + $0x380] sm:$0xff]
        %v4133 = vld [vmem:[#allocation2 + $0x388] sm:$0xff]
        %v4134 = vld [vmem:[#allocation2 + $0x3a0] sm:$0xff]
        %v4135 = vld [vmem:[#allocation2 + $0x3a8] sm:$0xff]
        %v4136 = vld [vmem:[#allocation2 + $0x3c0] sm:$0xff]
        %v4137 = vld [vmem:[#allocation2 + $0x3c8] sm:$0xff]
        %v4138 = vld [vmem:[#allocation2 + $0x3e0] sm:$0xff]
        %v4139 = vld [vmem:[#allocation2 + $0x3e8] sm:$0xff]
        %v4140 = vld [vmem:[#allocation2 + $0x400] sm:$0xff]
        %v4141 = vld [vmem:[#allocation2 + $0x408] sm:$0xff]
        %v4142 = vld [vmem:[#allocation2 + $0x420] sm:$0xff]
        %v4143 = vld [vmem:[#allocation2 + $0x428] sm:$0xff]
        %v4144 = vld [vmem:[#allocation2 + $0x440] sm:$0xff]
        %v4145 = vld [vmem:[#allocation2 + $0x448] sm:$0xff]
        %v4146 = vld [vmem:[#allocation2 + $0x460] sm:$0xff]
        %v4147 = vld [vmem:[#allocation2 + $0x468] sm:$0xff]
        %v4148 = vld [vmem:[#allocation2 + $0x480] sm:$0xff]
        %v4149 = vld [vmem:[#allocation2 + $0x488] sm:$0xff]
        %v4150 = vld [vmem:[#allocation2 + $0x4a0] sm:$0xff]
        %v4151 = vld [vmem:[#allocation2 + $0x4a8] sm:$0xff]
        %v4152 = vld [vmem:[#allocation2 + $0x4c0] sm:$0xff]
        %v4153 = vld [vmem:[#allocation2 + $0x4c8] sm:$0xff]
        %v4154 = vld [vmem:[#allocation2 + $0x4e0] sm:$0xff]
        %v4155 = vld [vmem:[#allocation2 + $0x4e8] sm:$0xff]
        %v4156 = vld [vmem:[#allocation2 + $0x500] sm:$0xff]
        %v4157 = vld [vmem:[#allocation2 + $0x508] sm:$0xff]
        %v4158 = vld [vmem:[#allocation2 + $0x520] sm:$0xff]
        %v4159 = vld [vmem:[#allocation2 + $0x528] sm:$0xff]
        %v4160 = vld [vmem:[#allocation2 + $0x540] sm:$0xff]
        %v4161 = vld [vmem:[#allocation2 + $0x548] sm:$0xff]
        %v4162 = vld [vmem:[#allocation2 + $0x560] sm:$0xff]
        %v4163 = vld [vmem:[#allocation2 + $0x568] sm:$0xff]
        %v4164 = vld [vmem:[#allocation2 + $0x580] sm:$0xff]
        %v4165 = vld [vmem:[#allocation2 + $0x588] sm:$0xff]
        %v4166 = vld [vmem:[#allocation2 + $0x5a0] sm:$0xff]
        %v4167 = vld [vmem:[#allocation2 + $0x5a8] sm:$0xff]
        %v4168 = vld [vmem:[#allocation2 + $0x5c0] sm:$0xff]
        %v4169 = vld [vmem:[#allocation2 + $0x5c8] sm:$0xff]
        %v4170 = vld [vmem:[#allocation2 + $0x5e0] sm:$0xff]
        %v4171 = vld [vmem:[#allocation2 + $0x5e8] sm:$0xff]
        %v4172 = vld [vmem:[#allocation2 + $0x600] sm:$0xff]
        %v4173 = vld [vmem:[#allocation2 + $0x608] sm:$0xff]
        %v4174 = vld [vmem:[#allocation2 + $0x620] sm:$0xff]
        %v4175 = vld [vmem:[#allocation2 + $0x628] sm:$0xff]
        %v4176 = vld [vmem:[#allocation2 + $0x640] sm:$0xff]
        %v4177 = vld [vmem:[#allocation2 + $0x648] sm:$0xff]
        %v4178 = vld [vmem:[#allocation2 + $0x660] sm:$0xff]
        %v4179 = vld [vmem:[#allocation2 + $0x668] sm:$0xff]
        %v4180 = vld [vmem:[#allocation2 + $0x680] sm:$0xff]
        %v4181 = vld [vmem:[#allocation2 + $0x688] sm:$0xff]
        %v4182 = vld [vmem:[#allocation2 + $0x6a0] sm:$0xff]
        %v4183 = vld [vmem:[#allocation2 + $0x6a8] sm:$0xff]
        %v4184 = vld [vmem:[#allocation2 + $0x6c0] sm:$0xff]
        %v4185 = vld [vmem:[#allocation2 + $0x6c8] sm:$0xff]
        %v4186 = vld [vmem:[#allocation2 + $0x6e0] sm:$0xff]
        %v4187 = vld [vmem:[#allocation2 + $0x6e8] sm:$0xff]
        %v4188 = vld [vmem:[#allocation2 + $0x700] sm:$0xff]
        %v4189 = vld [vmem:[#allocation2 + $0x708] sm:$0xff]
        %v4190 = vld [vmem:[#allocation2 + $0x720] sm:$0xff]
        %v4191 = vld [vmem:[#allocation2 + $0x728] sm:$0xff]
        %v4192 = vld [vmem:[#allocation2 + $0x740] sm:$0xff]
        %v4193 = vld [vmem:[#allocation2 + $0x748] sm:$0xff]
        %v4194 = vld [vmem:[#allocation2 + $0x760] sm:$0xff]
        %v4195 = vld [vmem:[#allocation2 + $0x768] sm:$0xff]
        %v4196 = vld [vmem:[#allocation2 + $0x780] sm:$0xff]
        %v4197 = vld [vmem:[#allocation2 + $0x788] sm:$0xff]
        %v4198 = vld [vmem:[#allocation2 + $0x7a0] sm:$0xff]
        %v4199 = vld [vmem:[#allocation2 + $0x7a8] sm:$0xff]
        %v4200 = vld [vmem:[#allocation2 + $0x7c0] sm:$0xff]
        %v4201 = vld [vmem:[#allocation2 + $0x7c8] sm:$0xff]
        %v4202 = vld [vmem:[#allocation2 + $0x7e0] sm:$0xff]
        %v4203 = vld [vmem:[#allocation2 + $0x7e8] sm:$0xff]
        %v4204 = vadd.f32 %v4064, %v4065
        %v4205 = vadd.f32 %v4204, %v4066
        %v4206 = vadd.f32 %v4205, %v4067
        %4207 = vadd.xlane.f32.xlu0 %v4206
        %v4208 = vpop.xlane.xlu0 %4207
        %v4209 = vmul.f32 %v4208, 0.001953125
        %v4210 = vmul.f32 %v4064, %v4064
        %v4211 = vmul.f32 %v4065, %v4065
        %v4212 = vmul.f32 %v4066, %v4066
        %v4213 = vmul.f32 %v4067, %v4067
        %v4214 = vadd.f32 %v4210, %v4211
        %v4215 = vadd.f32 %v4214, %v4212
        %v4216 = vadd.f32 %v4215, %v4213
        %4217 = vadd.xlane.f32.xlu0 %v4216
        %v4218 = vpop.xlane.xlu0 %4217
        %v4219 = vmul.f32 %v4218, 0.001953125
        %v4220 = vmul.f32 %v4209, %v4209
        %v4221 = vsub.f32 %v4219, %v4220
        %v4222 = vadd.f32 %v4221, 1e-05
        %v4223 = vrsqrt.pop %v4222
        %v4224 = vmul.f32 %v4223, %v4222
        %v4225 = vmul.f32 %v4224, %v4223
        %v4226 = vmul.f32 0.5, %v4225
        %v4227 = vsub.f32 1.5, %v4226
        %v4228 = vmul.f32 %v4223, %v4227
        %vm4229 = vweird.f32 %v4222
        %vm4230 = vweird.f32 %v4223
        %vm4231 = vmor %vm4229, %vm4230
        %v4232 = vsel %vm4231, %v4223, %v4228
        %v4233 = vmul.f32 %v4232, %v4070
        %v4234 = vsub.f32 %v4064, %v4209
        %v4235 = vsub.f32 %v4065, %v4209
        %v4236 = vsub.f32 %v4066, %v4209
        %v4237 = vsub.f32 %v4067, %v4209
        %4239 = vset.pattern.permute.xlu0 0
        %4240 = vperm.xlu0 %4239, %v4233
        %v4241 = vpop.permute.xlu0 %4240
        %v4243 = vmul.f32 %v4234, %v4241
        %v4244 = vmul.f32 %v4235, %v4241
        %v4245 = vmul.f32 %v4236, %v4241
        %v4246 = vmul.f32 %v4237, %v4241
        %4248 = vset.pattern.permute.xlu0 0
        %4249 = vperm.xlu0 %4248, %v4071
        %v4250 = vpop.permute.xlu0 %4249
        %v4252 = vadd.f32 %v4243, %v4250
        %v4253 = vadd.f32 %v4244, %v4250
        %v4254 = vadd.f32 %v4245, %v4250
        %v4255 = vadd.f32 %v4246, %v4250
        %vm4256 = vcmp.ge.f32.partialorder %v4252, 0.0
        %vm4257 = vcmp.ge.f32.partialorder %v4253, 0.0
        %vm4258 = vcmp.ge.f32.partialorder %v4254, 0.0
        %vm4259 = vcmp.ge.f32.partialorder %v4255, 0.0
        %v4260 = vmul.f32 %v4252, 0.2
        %v4261 = vmul.f32 %v4253, 0.2
        %v4262 = vmul.f32 %v4254, 0.2
        %v4263 = vmul.f32 %v4255, 0.2
        %v4264 = vsel %vm4256, %v4252, %v4260
        %v4265 = vsel %vm4257, %v4253, %v4261
        %v4266 = vsel %vm4258, %v4254, %v4262
        %v4267 = vsel %vm4259, %v4255, %v4263
        %4268 = vrot.lane.b32.xlu0 %v4264, 1
        %v4269 = vpop.permute.xlu0 %4268
        %4270 = vrot.lane.b32.xlu0 %v4265, 1
        %v4271 = vpop.permute.xlu0 %4270
        %4272 = vrot.lane.b32.xlu0 %v4266, 1
        %v4273 = vpop.permute.xlu0 %4272
        %4274 = vrot.lane.b32.xlu0 %v4267, 1
        %v4275 = vpop.permute.xlu0 %4274
        %v4276 = vsel %vm1545, %v4273, %v4275
        %v4277 = vsel %vm1545, %v4271, %v4273
        %v4278 = vsel %vm1545, %v4269, %v4271
        %v4279 = vsel %vm1545, %v4275, %v4269
        %v4280 = vsel %vm1562, %v4279, 0.0
        %v4281 = vsel %vm1563, %v4278, 0.0
        %v4282 = vsel %vm1564, %v4277, 0.0
        %v4283 = vsel %vm1565, %v4276, 0.0
        %4284 = vrot.lane.b32.xlu0 %v4264, 127
        %v4285 = vpop.permute.xlu0 %4284
        %4286 = vrot.lane.b32.xlu0 %v4265, 127
        %v4287 = vpop.permute.xlu0 %4286
        %4288 = vrot.lane.b32.xlu0 %v4266, 127
        %v4289 = vpop.permute.xlu0 %4288
        %4290 = vrot.lane.b32.xlu0 %v4267, 127
        %v4291 = vpop.permute.xlu0 %4290
        %v4292 = vsel %vm1625, %v4289, %v4291
        %v4293 = vsel %vm1625, %v4287, %v4289
        %v4294 = vsel %vm1625, %v4285, %v4287
        %v4295 = vsel %vm1625, %v4291, %v4285
        %v4296 = vsel %vm3661, %v4294, 0.0
        %v4297 = vsel %vm3662, %v4293, 0.0
        %v4298 = vsel %vm3663, %v4292, 0.0
        %v4299 = vsel %vm3664, %v4295, 0.0
        %4301 = vset.pattern.permute.xlu0 0
        %4302 = vperm.xlu0 %4301, %v4069
        %v4303 = vpop.permute.xlu0 %4302
        %vm4305 = vcmask 195584
        %v4307 = vsel %vm4305, %v4068, 0
        %4309 = vmatpush.msra.mxu0 0.0
        %4310 = vmatpush.msra.mxu0 0.0
        %4311 = vmatpush.msra.mxu0 0.0
        %4312 = vmatpush.msra.mxu0 0.0
        %4313 = vmatpush.msra.mxu0 0.0
        %4314 = vmatpush.msra.mxu0 0.0
        %4315 = vmatpush.msra.mxu0 0.0
        %4316 = vmatpush.msra.mxu0 0.0
        %4317 = vmatpush.msra.mxu0 0.0
        %4318 = vmatpush.msra.mxu0 0.0
        %4319 = vmatpush.msra.mxu0 0.0
        %4320 = vmatpush.msra.mxu0 0.0
        %4321 = vmatpush.msra.mxu0 0.0
        %4322 = vmatpush.msra.mxu0 %v4296
        %4323 = vmatpush.msra.mxu0 %v4264
        %4324 = vmatpush.msra.mxu0 %v4280
        %4325 = vmatmul.f32.gmra.mxu0 %v4307
        %v4326 = vpop.f32.mrf.mxu0
        %v4327 = vadd.f32 %v4303, %v4326
        %4328 = vdwg.mxu0
        %4329 = vmatpush.msra.mxu0 0.0
        %4330 = vmatpush.msra.mxu0 0.0
        %4331 = vmatpush.msra.mxu0 0.0
        %4332 = vmatpush.msra.mxu0 0.0
        %4333 = vmatpush.msra.mxu0 0.0
        %4334 = vmatpush.msra.mxu0 0.0
        %4335 = vmatpush.msra.mxu0 0.0
        %4336 = vmatpush.msra.mxu0 0.0
        %4337 = vmatpush.msra.mxu0 0.0
        %4338 = vmatpush.msra.mxu0 0.0
        %4339 = vmatpush.msra.mxu0 0.0
        %4340 = vmatpush.msra.mxu0 0.0
        %4341 = vmatpush.msra.mxu0 0.0
        %4342 = vmatpush.msra.mxu0 %v4297
        %4343 = vmatpush.msra.mxu0 %v4265
        %4344 = vmatpush.msra.mxu0 %v4281
        %4345 = vmatmul.f32.gmra.mxu0 %v4307
        %v4346 = vpop.f32.mrf.mxu0
        %v4347 = vadd.f32 %v4303, %v4346
        %4348 = vdwg.mxu0
        %4349 = vmatpush.msra.mxu0 0.0
        %4350 = vmatpush.msra.mxu0 0.0
        %4351 = vmatpush.msra.mxu0 0.0
        %4352 = vmatpush.msra.mxu0 0.0
        %4353 = vmatpush.msra.mxu0 0.0
        %4354 = vmatpush.msra.mxu0 0.0
        %4355 = vmatpush.msra.mxu0 0.0
        %4356 = vmatpush.msra.mxu0 0.0
        %4357 = vmatpush.msra.mxu0 0.0
        %4358 = vmatpush.msra.mxu0 0.0
        %4359 = vmatpush.msra.mxu0 0.0
        %4360 = vmatpush.msra.mxu0 0.0
        %4361 = vmatpush.msra.mxu0 0.0
        %4362 = vmatpush.msra.mxu0 %v4298
        %4363 = vmatpush.msra.mxu0 %v4266
        %4364 = vmatpush.msra.mxu0 %v4282
        %4365 = vmatmul.f32.gmra.mxu0 %v4307
        %v4366 = vpop.f32.mrf.mxu0
        %v4367 = vadd.f32 %v4303, %v4366
        %4368 = vdwg.mxu0
        %4369 = vmatpush.msra.mxu0 0.0
        %4370 = vmatpush.msra.mxu0 0.0
        %4371 = vmatpush.msra.mxu0 0.0
        %4372 = vmatpush.msra.mxu0 0.0
        %4373 = vmatpush.msra.mxu0 0.0
        %4374 = vmatpush.msra.mxu0 0.0
        %4375 = vmatpush.msra.mxu0 0.0
        %4376 = vmatpush.msra.mxu0 0.0
        %4377 = vmatpush.msra.mxu0 0.0
        %4378 = vmatpush.msra.mxu0 0.0
        %4379 = vmatpush.msra.mxu0 0.0
        %4380 = vmatpush.msra.mxu0 0.0
        %4381 = vmatpush.msra.mxu0 0.0
        %4382 = vmatpush.msra.mxu0 %v4299
        %4383 = vmatpush.msra.mxu0 %v4267
        %4384 = vmatpush.msra.mxu0 %v4283
        %4385 = vmatmul.f32.gmra.mxu0 %v4307
        %v4386 = vpop.f32.mrf.mxu0
        %v4387 = vadd.f32 %v4303, %v4386
        %4388 = vdwg.mxu0
        %4389 = vmatpush.msra.mxu0 %v4106
        %4390 = vmatpush.msra.mxu0 %v4104
        %4391 = vmatpush.msra.mxu0 %v4102
        %4392 = vmatpush.msra.mxu0 %v4100
        %4393 = vmatpush.msra.mxu0 %v4098
        %4394 = vmatpush.msra.mxu0 %v4096
        %4395 = vmatpush.msra.mxu0 %v4094
        %4396 = vmatpush.msra.mxu0 %v4092
        %4397 = vmatpush.msra.mxu0 %v4090
        %4398 = vmatpush.msra.mxu0 %v4088
        %4399 = vmatpush.msra.mxu0 %v4086
        %4400 = vmatpush.msra.mxu0 %v4084
        %4401 = vmatpush.msra.mxu0 %v4082
        %4402 = vmatpush.msra.mxu0 %v4080
        %4403 = vmatpush.msra.mxu0 %v4078
        %4404 = vmatpush.msra.mxu0 %v4076
        %4405 = vmatmul.f32.gmra.mxu0 %v4064
        %v4406 = vpop.f32.mrf.mxu0
        %v4407 = vadd.f32 0.0, %v4406
        %4408 = vmatmul.f32.gmra.mxu0 %v4327
        %v4409 = vpop.f32.mrf.mxu0
        %v4410 = vadd.f32 0.0, %v4409
        %4411 = vdwg.mxu0
        %4412 = vmatpush.msra.mxu0 %v4138
        %4413 = vmatpush.msra.mxu0 %v4136
        %4414 = vmatpush.msra.mxu0 %v4134
        %4415 = vmatpush.msra.mxu0 %v4132
        %4416 = vmatpush.msra.mxu0 %v4130
        %4417 = vmatpush.msra.mxu0 %v4128
        %4418 = vmatpush.msra.mxu0 %v4126
        %4419 = vmatpush.msra.mxu0 %v4124
        %4420 = vmatpush.msra.mxu0 %v4122
        %4421 = vmatpush.msra.mxu0 %v4120
        %4422 = vmatpush.msra.mxu0 %v4118
        %4423 = vmatpush.msra.mxu0 %v4116
        %4424 = vmatpush.msra.mxu0 %v4114
        %4425 = vmatpush.msra.mxu0 %v4112
        %4426 = vmatpush.msra.mxu0 %v4110
        %4427 = vmatpush.msra.mxu0 %v4108
        %4428 = vmatmul.f32.gmra.mxu0 %v4065
        %v4429 = vpop.f32.mrf.mxu0
        %v4430 = vadd.f32 %v4407, %v4429
        %4431 = vmatmul.f32.gmra.mxu0 %v4347
        %v4432 = vpop.f32.mrf.mxu0
        %v4433 = vadd.f32 %v4410, %v4432
        %4434 = vdwg.mxu0
        %4435 = vmatpush.msra.mxu0 %v4170
        %4436 = vmatpush.msra.mxu0 %v4168
        %4437 = vmatpush.msra.mxu0 %v4166
        %4438 = vmatpush.msra.mxu0 %v4164
        %4439 = vmatpush.msra.mxu0 %v4162
        %4440 = vmatpush.msra.mxu0 %v4160
        %4441 = vmatpush.msra.mxu0 %v4158
        %4442 = vmatpush.msra.mxu0 %v4156
        %4443 = vmatpush.msra.mxu0 %v4154
        %4444 = vmatpush.msra.mxu0 %v4152
        %4445 = vmatpush.msra.mxu0 %v4150
        %4446 = vmatpush.msra.mxu0 %v4148
        %4447 = vmatpush.msra.mxu0 %v4146
        %4448 = vmatpush.msra.mxu0 %v4144
        %4449 = vmatpush.msra.mxu0 %v4142
        %4450 = vmatpush.msra.mxu0 %v4140
        %4451 = vmatmul.f32.gmra.mxu0 %v4066
        %v4452 = vpop.f32.mrf.mxu0
        %v4453 = vadd.f32 %v4430, %v4452
        %4454 = vmatmul.f32.gmra.mxu0 %v4367
        %v4455 = vpop.f32.mrf.mxu0
        %v4456 = vadd.f32 %v4433, %v4455
        %4457 = vdwg.mxu0
        %4458 = vmatpush.msra.mxu0 %v4202
        %4459 = vmatpush.msra.mxu0 %v4200
        %4460 = vmatpush.msra.mxu0 %v4198
        %4461 = vmatpush.msra.mxu0 %v4196
        %4462 = vmatpush.msra.mxu0 %v4194
        %4463 = vmatpush.msra.mxu0 %v4192
        %4464 = vmatpush.msra.mxu0 %v4190
        %4465 = vmatpush.msra.mxu0 %v4188
        %4466 = vmatpush.msra.mxu0 %v4186
        %4467 = vmatpush.msra.mxu0 %v4184
        %4468 = vmatpush.msra.mxu0 %v4182
        %4469 = vmatpush.msra.mxu0 %v4180
        %4470 = vmatpush.msra.mxu0 %v4178
        %4471 = vmatpush.msra.mxu0 %v4176
        %4472 = vmatpush.msra.mxu0 %v4174
        %4473 = vmatpush.msra.mxu0 %v4172
        %4474 = vmatmul.f32.gmra.mxu0 %v4067
        %v4475 = vpop.f32.mrf.mxu0
        %v4476 = vadd.f32 %v4453, %v4475
        %4477 = vmatmul.f32.gmra.mxu0 %v4387
        %v4478 = vpop.f32.mrf.mxu0
        %v4479 = vadd.f32 %v4456, %v4478
        %4480 = vdwg.mxu0
        %4481 = vmatpush.msra.mxu0 %v4107
        %4482 = vmatpush.msra.mxu0 %v4105
        %4483 = vmatpush.msra.mxu0 %v4103
        %4484 = vmatpush.msra.mxu0 %v4101
        %4485 = vmatpush.msra.mxu0 %v4099
        %4486 = vmatpush.msra.mxu0 %v4097
        %4487 = vmatpush.msra.mxu0 %v4095
        %4488 = vmatpush.msra.mxu0 %v4093
        %4489 = vmatpush.msra.mxu0 %v4091
        %4490 = vmatpush.msra.mxu0 %v4089
        %4491 = vmatpush.msra.mxu0 %v4087
        %4492 = vmatpush.msra.mxu0 %v4085
        %4493 = vmatpush.msra.mxu0 %v4083
        %4494 = vmatpush.msra.mxu0 %v4081
        %4495 = vmatpush.msra.mxu0 %v4079
        %4496 = vmatpush.msra.mxu0 %v4077
        %4497 = vmatmul.f32.gmra.mxu0 %v4064
        %v4498 = vpop.f32.mrf.mxu0
        %v4499 = vadd.f32 0.0, %v4498
        %4500 = vmatmul.f32.gmra.mxu0 %v4327
        %v4501 = vpop.f32.mrf.mxu0
        %v4502 = vadd.f32 0.0, %v4501
        %4503 = vdwg.mxu0
        %4504 = vmatpush.msra.mxu0 %v4139
        %4505 = vmatpush.msra.mxu0 %v4137
        %4506 = vmatpush.msra.mxu0 %v4135
        %4507 = vmatpush.msra.mxu0 %v4133
        %4508 = vmatpush.msra.mxu0 %v4131
        %4509 = vmatpush.msra.mxu0 %v4129
        %4510 = vmatpush.msra.mxu0 %v4127
        %4511 = vmatpush.msra.mxu0 %v4125
        %4512 = vmatpush.msra.mxu0 %v4123
        %4513 = vmatpush.msra.mxu0 %v4121
        %4514 = vmatpush.msra.mxu0 %v4119
        %4515 = vmatpush.msra.mxu0 %v4117
        %4516 = vmatpush.msra.mxu0 %v4115
        %4517 = vmatpush.msra.mxu0 %v4113
        %4518 = vmatpush.msra.mxu0 %v4111
        %4519 = vmatpush.msra.mxu0 %v4109
        %4520 = vmatmul.f32.gmra.mxu0 %v4065
        %v4521 = vpop.f32.mrf.mxu0
        %v4522 = vadd.f32 %v4499, %v4521
        %4523 = vmatmul.f32.gmra.mxu0 %v4347
        %v4524 = vpop.f32.mrf.mxu0
        %v4525 = vadd.f32 %v4502, %v4524
        %4526 = vdwg.mxu0
        %4527 = vmatpush.msra.mxu0 %v4171
        %4528 = vmatpush.msra.mxu0 %v4169
        %4529 = vmatpush.msra.mxu0 %v4167
        %4530 = vmatpush.msra.mxu0 %v4165
        %4531 = vmatpush.msra.mxu0 %v4163
        %4532 = vmatpush.msra.mxu0 %v4161
        %4533 = vmatpush.msra.mxu0 %v4159
        %4534 = vmatpush.msra.mxu0 %v4157
        %4535 = vmatpush.msra.mxu0 %v4155
        %4536 = vmatpush.msra.mxu0 %v4153
        %4537 = vmatpush.msra.mxu0 %v4151
        %4538 = vmatpush.msra.mxu0 %v4149
        %4539 = vmatpush.msra.mxu0 %v4147
        %4540 = vmatpush.msra.mxu0 %v4145
        %4541 = vmatpush.msra.mxu0 %v4143
        %4542 = vmatpush.msra.mxu0 %v4141
        %4543 = vmatmul.f32.gmra.mxu0 %v4066
        %v4544 = vpop.f32.mrf.mxu0
        %v4545 = vadd.f32 %v4522, %v4544
        %4546 = vmatmul.f32.gmra.mxu0 %v4367
        %v4547 = vpop.f32.mrf.mxu0
        %v4548 = vadd.f32 %v4525, %v4547
        %4549 = vdwg.mxu0
        %4550 = vmatpush.msra.mxu0 %v4203
        %4551 = vmatpush.msra.mxu0 %v4201
        %4552 = vmatpush.msra.mxu0 %v4199
        %4553 = vmatpush.msra.mxu0 %v4197
        %4554 = vmatpush.msra.mxu0 %v4195
        %4555 = vmatpush.msra.mxu0 %v4193
        %4556 = vmatpush.msra.mxu0 %v4191
        %4557 = vmatpush.msra.mxu0 %v4189
        %4558 = vmatpush.msra.mxu0 %v4187
        %4559 = vmatpush.msra.mxu0 %v4185
        %4560 = vmatpush.msra.mxu0 %v4183
        %4561 = vmatpush.msra.mxu0 %v4181
        %4562 = vmatpush.msra.mxu0 %v4179
        %4563 = vmatpush.msra.mxu0 %v4177
        %4564 = vmatpush.msra.mxu0 %v4175
        %4565 = vmatpush.msra.mxu0 %v4173
        %4566 = vmatmul.f32.gmra.mxu0 %v4067
        %v4567 = vpop.f32.mrf.mxu0
        %v4568 = vadd.f32 %v4545, %v4567
        %4569 = vmatmul.f32.gmra.mxu0 %v4387
        %v4570 = vpop.f32.mrf.mxu0
        %v4571 = vadd.f32 %v4548, %v4570
        %4572 = vdwg.mxu0
        %v4573 = vadd.f32 %v4479, %v4571
        %4574 = vadd.xlane.f32.xlu0 %v4573
        %v4575 = vpop.xlane.xlu0 %4574
        %v4576 = vmul.f32 %v4575, 0.00390625
        %v4577 = vmul.f32 %v4479, %v4479
        %v4578 = vmul.f32 %v4571, %v4571
        %v4579 = vadd.f32 %v4577, %v4578
        %4580 = vadd.xlane.f32.xlu0 %v4579
        %v4581 = vpop.xlane.xlu0 %4580
        %v4582 = vmul.f32 %v4581, 0.00390625
        %v4583 = vmul.f32 %v4576, %v4576
        %v4584 = vsub.f32 %v4582, %v4583
        %v4585 = vadd.f32 %v4584, 1e-05
        %v4586 = vrsqrt.pop %v4585
        %v4587 = vmul.f32 %v4586, %v4585
        %v4588 = vmul.f32 %v4587, %v4586
        %v4589 = vmul.f32 0.5, %v4588
        %v4590 = vsub.f32 1.5, %v4589
        %v4591 = vmul.f32 %v4586, %v4590
        %vm4592 = vweird.f32 %v4585
        %vm4593 = vweird.f32 %v4586
        %vm4594 = vmor %vm4592, %vm4593
        %v4595 = vsel %vm4594, %v4586, %v4591
        %v4596 = vmul.f32 %v4595, %v4074
        %v4597 = vsub.f32 %v4479, %v4576
        %v4598 = vsub.f32 %v4571, %v4576
        %4600 = vset.pattern.permute.xlu0 0
        %4601 = vperm.xlu0 %4600, %v4596
        %v4602 = vpop.permute.xlu0 %4601
        %v4604 = vmul.f32 %v4597, %v4602
        %v4605 = vmul.f32 %v4598, %v4602
        %4607 = vset.pattern.permute.xlu0 0
        %4608 = vperm.xlu0 %4607, %v4075
        %v4609 = vpop.permute.xlu0 %4608
        %v4611 = vadd.f32 %v4604, %v4609
        %v4612 = vadd.f32 %v4605, %v4609
        %vm4613 = vcmp.ge.f32.partialorder %v4611, 0.0
        %vm4614 = vcmp.ge.f32.partialorder %v4612, 0.0
        %v4615 = vmul.f32 %v4611, 0.2
        %v4616 = vmul.f32 %v4612, 0.2
        %v4617 = vsel %vm4613, %v4611, %v4615
        %v4618 = vsel %vm4614, %v4612, %v4616
        %4619 = vrot.lane.b32.xlu0 %v4617, 1
        %v4620 = vpop.permute.xlu0 %4619
        %4621 = vrot.lane.b32.xlu0 %v4618, 1
        %v4622 = vpop.permute.xlu0 %4621
        %v4623 = vsel %vm1545, %v4620, %v4622
        %v4624 = vsel %vm1545, %v4622, %v4620
        %v4625 = vsel %vm1562, %v4624, 0.0
        %v4626 = vsel %vm1563, %v4623, 0.0
        %vm4627 = vcmp.lt.s32.totalorder %v1486, 255
        %vm4628 = vcmp.lt.s32.totalorder %v1487, 255
        %4629 = vrot.lane.b32.xlu0 %v4617, 127
        %v4630 = vpop.permute.xlu0 %4629
        %4631 = vrot.lane.b32.xlu0 %v4618, 127
        %v4632 = vpop.permute.xlu0 %4631
        %v4633 = vsel %vm1625, %v4630, %v4632
        %v4634 = vsel %vm1625, %v4632, %v4630
        %v4635 = vsel %vm4627, 1, 0
        %v4636 = vsel %vm4628, 1, 0
        %vm4637 = vcmp.eq.s32.totalorder %v4635, 1
        %vm4638 = vcmp.eq.s32.totalorder %v4636, 1
        %v4639 = vsel %vm4637, %v4633, 0.0
        %v4640 = vsel %vm4638, %v4634, 0.0
        %4642 = vset.pattern.permute.xlu0 0
        %4643 = vperm.xlu0 %4642, %v4073
        %v4644 = vpop.permute.xlu0 %4643
        %v4647 = vsel %vm4305, %v4072, 0
        %4649 = vmatpush.msra.mxu0 0.0
        %4650 = vmatpush.msra.mxu0 0.0
        %4651 = vmatpush.msra.mxu0 0.0
        %4652 = vmatpush.msra.mxu0 0.0
        %4653 = vmatpush.msra.mxu0 0.0
        %4654 = vmatpush.msra.mxu0 0.0
        %4655 = vmatpush.msra.mxu0 0.0
        %4656 = vmatpush.msra.mxu0 0.0
        %4657 = vmatpush.msra.mxu0 0.0
        %4658 = vmatpush.msra.mxu0 0.0
        %4659 = vmatpush.msra.mxu0 0.0
        %4660 = vmatpush.msra.mxu0 0.0
        %4661 = vmatpush.msra.mxu0 0.0
        %4662 = vmatpush.msra.mxu0 %v4639
        %4663 = vmatpush.msra.mxu0 %v4617
        %4664 = vmatpush.msra.mxu0 %v4625
        %4665 = vmatmul.f32.gmra.mxu0 %v4647
        %v4666 = vpop.f32.mrf.mxu0
        %v4667 = vadd.f32 %v4644, %v4666
        %4668 = vdwg.mxu0
        %4669 = vmatpush.msra.mxu0 0.0
        %4670 = vmatpush.msra.mxu0 0.0
        %4671 = vmatpush.msra.mxu0 0.0
        %4672 = vmatpush.msra.mxu0 0.0
        %4673 = vmatpush.msra.mxu0 0.0
        %4674 = vmatpush.msra.mxu0 0.0
        %4675 = vmatpush.msra.mxu0 0.0
        %4676 = vmatpush.msra.mxu0 0.0
        %4677 = vmatpush.msra.mxu0 0.0
        %4678 = vmatpush.msra.mxu0 0.0
        %4679 = vmatpush.msra.mxu0 0.0
        %4680 = vmatpush.msra.mxu0 0.0
        %4681 = vmatpush.msra.mxu0 0.0
        %4682 = vmatpush.msra.mxu0 %v4640
        %4683 = vmatpush.msra.mxu0 %v4618
        %4684 = vmatpush.msra.mxu0 %v4626
        %4685 = vmatmul.f32.gmra.mxu0 %v4647
        %v4686 = vpop.f32.mrf.mxu0
        %v4687 = vadd.f32 %v4644, %v4686
        %4688 = vdwg.mxu0
        %v4689 = vadd.f32 %v4476, %v4667
        %v4690 = vadd.f32 %v4568, %v4687
        %v4691 = vmul.f32 %v4689, 0.70710677
        %v4692 = vmul.f32 %v4690, 0.70710677
        %s4693 = scalar_lea.vmem [#allocation7], 8
        %v4694 = vld [vmem:[%s4693] sm:$0xff]
        %s4695 = scalar_lea.vmem %s12, 8
        %v4696 = vld [vmem:[%s4695] sm:$0xff]
        %s4697 = scalar_lea.vmem %s13, 8
        %v4698 = vld [vmem:[%s4697] sm:$0xff]
        %s4699 = scalar_lea.vmem %s14, 8
        %v4700 = vld [vmem:[%s4699] sm:$0xff]
        %s4701 = scalar_lea.vmem [#allocation9], 8
        %v4702 = vld [vmem:[%s4701] sm:$0xff]
        %s4703 = scalar_lea.vmem %s16, 8
        %v4704 = vld [vmem:[%s4703] sm:$0xff]
        %s4705 = scalar_lea.vmem %s17, 8
        %v4706 = vld [vmem:[%s4705] sm:$0xff]
        %s4707 = scalar_lea.vmem %s18, 8
        %v4708 = vld [vmem:[%s4707] sm:$0xff]
        %v4709 = vld [vmem:[#allocation2] sm:$0xff]
        %v4710 = vld [vmem:[#allocation2 + $0x20] sm:$0xff]
        %v4711 = vld [vmem:[#allocation2 + $0x40] sm:$0xff]
        %v4712 = vld [vmem:[#allocation2 + $0x60] sm:$0xff]
        %v4713 = vld [vmem:[#allocation2 + $0x80] sm:$0xff]
        %v4714 = vld [vmem:[#allocation2 + $0xa0] sm:$0xff]
        %v4715 = vld [vmem:[#allocation2 + $0xc0] sm:$0xff]
        %v4716 = vld [vmem:[#allocation2 + $0xe0] sm:$0xff]
        %v4717 = vld [vmem:[#allocation2 + $0x100] sm:$0xff]
        %v4718 = vld [vmem:[#allocation2 + $0x120] sm:$0xff]
        %v4719 = vld [vmem:[#allocation2 + $0x140] sm:$0xff]
        %v4720 = vld [vmem:[#allocation2 + $0x160] sm:$0xff]
        %v4721 = vld [vmem:[#allocation2 + $0x180] sm:$0xff]
        %v4722 = vld [vmem:[#allocation2 + $0x1a0] sm:$0xff]
        %v4723 = vld [vmem:[#allocation2 + $0x1c0] sm:$0xff]
        %v4724 = vld [vmem:[#allocation2 + $0x1e0] sm:$0xff]
        %v4725 = vld [vmem:[#allocation2 + $0x200] sm:$0xff]
        %v4726 = vld [vmem:[#allocation2 + $0x220] sm:$0xff]
        %v4727 = vld [vmem:[#allocation2 + $0x240] sm:$0xff]
        %v4728 = vld [vmem:[#allocation2 + $0x260] sm:$0xff]
        %v4729 = vld [vmem:[#allocation2 + $0x280] sm:$0xff]
        %v4730 = vld [vmem:[#allocation2 + $0x2a0] sm:$0xff]
        %v4731 = vld [vmem:[#allocation2 + $0x2c0] sm:$0xff]
        %v4732 = vld [vmem:[#allocation2 + $0x2e0] sm:$0xff]
        %v4733 = vld [vmem:[#allocation2 + $0x300] sm:$0xff]
        %v4734 = vld [vmem:[#allocation2 + $0x320] sm:$0xff]
        %v4735 = vld [vmem:[#allocation2 + $0x340] sm:$0xff]
        %v4736 = vld [vmem:[#allocation2 + $0x360] sm:$0xff]
        %v4737 = vld [vmem:[#allocation2 + $0x380] sm:$0xff]
        %v4738 = vld [vmem:[#allocation2 + $0x3a0] sm:$0xff]
        %v4739 = vld [vmem:[#allocation2 + $0x3c0] sm:$0xff]
        %v4740 = vld [vmem:[#allocation2 + $0x3e0] sm:$0xff]
        %v4741 = vadd.f32 %v4691, %v4692
        %4742 = vadd.xlane.f32.xlu0 %v4741
        %v4743 = vpop.xlane.xlu0 %4742
        %v4744 = vmul.f32 %v4743, 0.00390625
        %v4745 = vmul.f32 %v4691, %v4691
        %v4746 = vmul.f32 %v4692, %v4692
        %v4747 = vadd.f32 %v4745, %v4746
        %4748 = vadd.xlane.f32.xlu0 %v4747
        %v4749 = vpop.xlane.xlu0 %4748
        %v4750 = vmul.f32 %v4749, 0.00390625
        %v4751 = vmul.f32 %v4744, %v4744
        %v4752 = vsub.f32 %v4750, %v4751
        %v4753 = vadd.f32 %v4752, 1e-05
        %v4754 = vrsqrt.pop %v4753
        %v4755 = vmul.f32 %v4754, %v4753
        %v4756 = vmul.f32 %v4755, %v4754
        %v4757 = vmul.f32 0.5, %v4756
        %v4758 = vsub.f32 1.5, %v4757
        %v4759 = vmul.f32 %v4754, %v4758
        %vm4760 = vweird.f32 %v4753
        %vm4761 = vweird.f32 %v4754
        %vm4762 = vmor %vm4760, %vm4761
        %v4763 = vsel %vm4762, %v4754, %v4759
        %v4764 = vmul.f32 %v4763, %v4698
        %v4765 = vsub.f32 %v4691, %v4744
        %v4766 = vsub.f32 %v4692, %v4744
        %4768 = vset.pattern.permute.xlu0 0
        %4769 = vperm.xlu0 %4768, %v4764
        %v4770 = vpop.permute.xlu0 %4769
        %v4772 = vmul.f32 %v4765, %v4770
        %v4773 = vmul.f32 %v4766, %v4770
        %4775 = vset.pattern.permute.xlu0 0
        %4776 = vperm.xlu0 %4775, %v4700
        %v4777 = vpop.permute.xlu0 %4776
        %v4779 = vadd.f32 %v4772, %v4777
        %v4780 = vadd.f32 %v4773, %v4777
        %vm4781 = vcmp.ge.f32.partialorder %v4779, 0.0
        %vm4782 = vcmp.ge.f32.partialorder %v4780, 0.0
        %v4783 = vmul.f32 %v4779, 0.2
        %v4784 = vmul.f32 %v4780, 0.2
        %v4785 = vsel %vm4781, %v4779, %v4783
        %v4786 = vsel %vm4782, %v4780, %v4784
        %4787 = vrot.lane.b32.xlu0 %v4785, 1
        %v4788 = vpop.permute.xlu0 %4787
        %4789 = vrot.lane.b32.xlu0 %v4786, 1
        %v4790 = vpop.permute.xlu0 %4789
        %v4791 = vsel %vm1545, %v4788, %v4790
        %v4792 = vsel %vm1545, %v4790, %v4788
        %v4793 = vsel %vm1562, %v4792, 0.0
        %v4794 = vsel %vm1563, %v4791, 0.0
        %4795 = vrot.lane.b32.xlu0 %v4785, 127
        %v4796 = vpop.permute.xlu0 %4795
        %4797 = vrot.lane.b32.xlu0 %v4786, 127
        %v4798 = vpop.permute.xlu0 %4797
        %v4799 = vsel %vm1625, %v4796, %v4798
        %v4800 = vsel %vm1625, %v4798, %v4796
        %v4801 = vsel %vm4637, %v4799, 0.0
        %v4802 = vsel %vm4638, %v4800, 0.0
        %4804 = vset.pattern.permute.xlu0 0
        %4805 = vperm.xlu0 %4804, %v4696
        %v4806 = vpop.permute.xlu0 %4805
        %v4809 = vsel %vm4305, %v4694, 0
        %4811 = vmatpush.msra.mxu0 0.0
        %4812 = vmatpush.msra.mxu0 0.0
        %4813 = vmatpush.msra.mxu0 0.0
        %4814 = vmatpush.msra.mxu0 0.0
        %4815 = vmatpush.msra.mxu0 0.0
        %4816 = vmatpush.msra.mxu0 0.0
        %4817 = vmatpush.msra.mxu0 0.0
        %4818 = vmatpush.msra.mxu0 0.0
        %4819 = vmatpush.msra.mxu0 0.0
        %4820 = vmatpush.msra.mxu0 0.0
        %4821 = vmatpush.msra.mxu0 0.0
        %4822 = vmatpush.msra.mxu0 0.0
        %4823 = vmatpush.msra.mxu0 0.0
        %4824 = vmatpush.msra.mxu0 %v4801
        %4825 = vmatpush.msra.mxu0 %v4785
        %4826 = vmatpush.msra.mxu0 %v4793
        %4827 = vmatmul.f32.gmra.mxu0 %v4809
        %v4828 = vpop.f32.mrf.mxu0
        %v4829 = vadd.f32 %v4806, %v4828
        %4830 = vdwg.mxu0
        %4831 = vmatpush.msra.mxu0 0.0
        %4832 = vmatpush.msra.mxu0 0.0
        %4833 = vmatpush.msra.mxu0 0.0
        %4834 = vmatpush.msra.mxu0 0.0
        %4835 = vmatpush.msra.mxu0 0.0
        %4836 = vmatpush.msra.mxu0 0.0
        %4837 = vmatpush.msra.mxu0 0.0
        %4838 = vmatpush.msra.mxu0 0.0
        %4839 = vmatpush.msra.mxu0 0.0
        %4840 = vmatpush.msra.mxu0 0.0
        %4841 = vmatpush.msra.mxu0 0.0
        %4842 = vmatpush.msra.mxu0 0.0
        %4843 = vmatpush.msra.mxu0 0.0
        %4844 = vmatpush.msra.mxu0 %v4802
        %4845 = vmatpush.msra.mxu0 %v4786
        %4846 = vmatpush.msra.mxu0 %v4794
        %4847 = vmatmul.f32.gmra.mxu0 %v4809
        %v4848 = vpop.f32.mrf.mxu0
        %v4849 = vadd.f32 %v4806, %v4848
        %4850 = vdwg.mxu0
        %4851 = vmatpush.msra.mxu0 %v4724
        %4852 = vmatpush.msra.mxu0 %v4723
        %4853 = vmatpush.msra.mxu0 %v4722
        %4854 = vmatpush.msra.mxu0 %v4721
        %4855 = vmatpush.msra.mxu0 %v4720
        %4856 = vmatpush.msra.mxu0 %v4719
        %4857 = vmatpush.msra.mxu0 %v4718
        %4858 = vmatpush.msra.mxu0 %v4717
        %4859 = vmatpush.msra.mxu0 %v4716
        %4860 = vmatpush.msra.mxu0 %v4715
        %4861 = vmatpush.msra.mxu0 %v4714
        %4862 = vmatpush.msra.mxu0 %v4713
        %4863 = vmatpush.msra.mxu0 %v4712
        %4864 = vmatpush.msra.mxu0 %v4711
        %4865 = vmatpush.msra.mxu0 %v4710
        %4866 = vmatpush.msra.mxu0 %v4709
        %4867 = vmatmul.f32.gmra.mxu0 %v4691
        %v4868 = vpop.f32.mrf.mxu0
        %v4869 = vadd.f32 0.0, %v4868
        %4870 = vmatmul.f32.gmra.mxu0 %v4829
        %v4871 = vpop.f32.mrf.mxu0
        %v4872 = vadd.f32 0.0, %v4871
        %4873 = vdwg.mxu0
        %4874 = vmatpush.msra.mxu0 %v4740
        %4875 = vmatpush.msra.mxu0 %v4739
        %4876 = vmatpush.msra.mxu0 %v4738
        %4877 = vmatpush.msra.mxu0 %v4737
        %4878 = vmatpush.msra.mxu0 %v4736
        %4879 = vmatpush.msra.mxu0 %v4735
        %4880 = vmatpush.msra.mxu0 %v4734
        %4881 = vmatpush.msra.mxu0 %v4733
        %4882 = vmatpush.msra.mxu0 %v4732
        %4883 = vmatpush.msra.mxu0 %v4731
        %4884 = vmatpush.msra.mxu0 %v4730
        %4885 = vmatpush.msra.mxu0 %v4729
        %4886 = vmatpush.msra.mxu0 %v4728
        %4887 = vmatpush.msra.mxu0 %v4727
        %4888 = vmatpush.msra.mxu0 %v4726
        %4889 = vmatpush.msra.mxu0 %v4725
        %4890 = vmatmul.f32.gmra.mxu0 %v4692
        %v4891 = vpop.f32.mrf.mxu0
        %v4892 = vadd.f32 %v4869, %v4891
        %4893 = vmatmul.f32.gmra.mxu0 %v4849
        %v4894 = vpop.f32.mrf.mxu0
        %v4895 = vadd.f32 %v4872, %v4894
        %4896 = vdwg.mxu0
        %4897 = vadd.xlane.f32.xlu0 %v4895
        %v4898 = vpop.xlane.xlu0 %4897
        %v4899 = vmul.f32 %v4898, 0.0078125
        %v4900 = vmul.f32 %v4895, %v4895
        %4901 = vadd.xlane.f32.xlu0 %v4900
        %v4902 = vpop.xlane.xlu0 %4901
        %v4903 = vmul.f32 %v4902, 0.0078125
        %v4904 = vmul.f32 %v4899, %v4899
        %v4905 = vsub.f32 %v4903, %v4904
        %v4906 = vadd.f32 %v4905, 1e-05
        %v4907 = vrsqrt.pop %v4906
        %v4908 = vmul.f32 %v4907, %v4906
        %v4909 = vmul.f32 %v4908, %v4907
        %v4910 = vmul.f32 0.5, %v4909
        %v4911 = vsub.f32 1.5, %v4910
        %v4912 = vmul.f32 %v4907, %v4911
        %vm4913 = vweird.f32 %v4906
        %vm4914 = vweird.f32 %v4907
        %vm4915 = vmor %vm4913, %vm4914
        %v4916 = vsel %vm4915, %v4907, %v4912
        %v4917 = vmul.f32 %v4916, %v4706
        %v4918 = vsub.f32 %v4895, %v4899
        %4920 = vset.pattern.permute.xlu0 0
        %4921 = vperm.xlu0 %4920, %v4917
        %v4922 = vpop.permute.xlu0 %4921
        %v4924 = vmul.f32 %v4918, %v4922
        %4926 = vset.pattern.permute.xlu0 0
        %4927 = vperm.xlu0 %4926, %v4708
        %v4928 = vpop.permute.xlu0 %4927
        %v4930 = vadd.f32 %v4924, %v4928
        %vm4931 = vcmp.ge.f32.partialorder %v4930, 0.0
        %v4932 = vmul.f32 %v4930, 0.2
        %v4933 = vsel %vm4931, %v4930, %v4932
        %4934 = vrot.lane.b32.xlu0 %v4933, 1
        %v4935 = vpop.permute.xlu0 %4934
        %v4936 = vsel %vm1562, %v4935, 0.0
        %4937 = vrot.lane.b32.xlu0 %v4933, 127
        %v4938 = vpop.permute.xlu0 %4937
        %v4939 = vsel %vm1625, 1, 0
        %vm4940 = vcmp.eq.s32.totalorder %v4939, 1
        %v4941 = vsel %vm4940, %v4938, 0.0
        %4943 = vset.pattern.permute.xlu0 0
        %4944 = vperm.xlu0 %4943, %v4704
        %v4945 = vpop.permute.xlu0 %4944
        %v4948 = vsel %vm4305, %v4702, 0
        %4950 = vmatpush.msra.mxu0 0.0
        %4951 = vmatpush.msra.mxu0 0.0
        %4952 = vmatpush.msra.mxu0 0.0
        %4953 = vmatpush.msra.mxu0 0.0
        %4954 = vmatpush.msra.mxu0 0.0
        %4955 = vmatpush.msra.mxu0 0.0
        %4956 = vmatpush.msra.mxu0 0.0
        %4957 = vmatpush.msra.mxu0 0.0
        %4958 = vmatpush.msra.mxu0 0.0
        %4959 = vmatpush.msra.mxu0 0.0
        %4960 = vmatpush.msra.mxu0 0.0
        %4961 = vmatpush.msra.mxu0 0.0
        %4962 = vmatpush.msra.mxu0 0.0
        %4963 = vmatpush.msra.mxu0 %v4941
        %4964 = vmatpush.msra.mxu0 %v4933
        %4965 = vmatpush.msra.mxu0 %v4936
        %4966 = vmatmul.f32.gmra.mxu0 %v4948
        %v4967 = vpop.f32.mrf.mxu0
        %v4968 = vadd.f32 %v4945, %v4967
        %4969 = vdwg.mxu0
        %v4970 = vadd.f32 %v4892, %v4968
        %v4971 = vmul.f32 %v4970, 0.70710677
        %s4972 = scalar_lea.vmem [#allocation7], 16
        %v4973 = vld [vmem:[%s4972] sm:$0xff]
        %s4974 = scalar_lea.vmem %s12, 16
        %v4975 = vld [vmem:[%s4974] sm:$0xff]
        %s4976 = scalar_lea.vmem %s13, 16
        %v4977 = vld [vmem:[%s4976] sm:$0xff]
        %s4978 = scalar_lea.vmem %s14, 16
        %v4979 = vld [vmem:[%s4978] sm:$0xff]
        %s4980 = scalar_lea.vmem [#allocation9], 16
        %v4981 = vld [vmem:[%s4980] sm:$0xff]
        %s4982 = scalar_lea.vmem %s16, 16
        %v4983 = vld [vmem:[%s4982] sm:$0xff]
        %s4984 = scalar_lea.vmem %s17, 16
        %v4985 = vld [vmem:[%s4984] sm:$0xff]
        %s4986 = scalar_lea.vmem %s18, 16
        %v4987 = vld [vmem:[%s4986] sm:$0xff]
        %v4988 = vld [vmem:[#allocation2] sm:$0xff]
        %v4989 = vld [vmem:[#allocation2 + $0x20] sm:$0xff]
        %v4990 = vld [vmem:[#allocation2 + $0x40] sm:$0xff]
        %v4991 = vld [vmem:[#allocation2 + $0x60] sm:$0xff]
        %v4992 = vld [vmem:[#allocation2 + $0x80] sm:$0xff]
        %v4993 = vld [vmem:[#allocation2 + $0xa0] sm:$0xff]
        %v4994 = vld [vmem:[#allocation2 + $0xc0] sm:$0xff]
        %v4995 = vld [vmem:[#allocation2 + $0xe0] sm:$0xff]
        %v4996 = vld [vmem:[#allocation2 + $0x100] sm:$0xff]
        %v4997 = vld [vmem:[#allocation2 + $0x120] sm:$0xff]
        %v4998 = vld [vmem:[#allocation2 + $0x140] sm:$0xff]
        %v4999 = vld [vmem:[#allocation2 + $0x160] sm:$0xff]
        %v5000 = vld [vmem:[#allocation2 + $0x180] sm:$0xff]
        %v5001 = vld [vmem:[#allocation2 + $0x1a0] sm:$0xff]
        %v5002 = vld [vmem:[#allocation2 + $0x1c0] sm:$0xff]
        %v5003 = vld [vmem:[#allocation2 + $0x1e0] sm:$0xff]
        %5004 = vadd.xlane.f32.xlu0 %v4971
        %v5005 = vpop.xlane.xlu0 %5004
        %v5006 = vmul.f32 %v5005, 0.0078125
        %v5007 = vmul.f32 %v4971, %v4971
        %5008 = vadd.xlane.f32.xlu0 %v5007
        %v5009 = vpop.xlane.xlu0 %5008
        %v5010 = vmul.f32 %v5009, 0.0078125
        %v5011 = vmul.f32 %v5006, %v5006
        %v5012 = vsub.f32 %v5010, %v5011
        %v5013 = vadd.f32 %v5012, 1e-05
        %v5014 = vrsqrt.pop %v5013
        %v5015 = vmul.f32 %v5014, %v5013
        %v5016 = vmul.f32 %v5015, %v5014
        %v5017 = vmul.f32 0.5, %v5016
        %v5018 = vsub.f32 1.5, %v5017
        %v5019 = vmul.f32 %v5014, %v5018
        %vm5020 = vweird.f32 %v5013
        %vm5021 = vweird.f32 %v5014
        %vm5022 = vmor %vm5020, %vm5021
        %v5023 = vsel %vm5022, %v5014, %v5019
        %v5024 = vmul.f32 %v5023, %v4977
        %v5025 = vsub.f32 %v4971, %v5006
        %5027 = vset.pattern.permute.xlu0 0
        %5028 = vperm.xlu0 %5027, %v5024
        %v5029 = vpop.permute.xlu0 %5028
        %v5031 = vmul.f32 %v5025, %v5029
        %5033 = vset.pattern.permute.xlu0 0
        %5034 = vperm.xlu0 %5033, %v4979
        %v5035 = vpop.permute.xlu0 %5034
        %v5037 = vadd.f32 %v5031, %v5035
        %vm5038 = vcmp.ge.f32.partialorder %v5037, 0.0
        %v5039 = vmul.f32 %v5037, 0.2
        %v5040 = vsel %vm5038, %v5037, %v5039
        %5041 = vrot.lane.b32.xlu0 %v5040, 1
        %v5042 = vpop.permute.xlu0 %5041
        %v5043 = vsel %vm1562, %v5042, 0.0
        %5044 = vrot.lane.b32.xlu0 %v5040, 127
        %v5045 = vpop.permute.xlu0 %5044
        %v5046 = vsel %vm4940, %v5045, 0.0
        %5048 = vset.pattern.permute.xlu0 0
        %5049 = vperm.xlu0 %5048, %v4975
        %v5050 = vpop.permute.xlu0 %5049
        %v5053 = vsel %vm4305, %v4973, 0
        %5055 = vmatpush.msra.mxu0 0.0
        %5056 = vmatpush.msra.mxu0 0.0
        %5057 = vmatpush.msra.mxu0 0.0
        %5058 = vmatpush.msra.mxu0 0.0
        %5059 = vmatpush.msra.mxu0 0.0
        %5060 = vmatpush.msra.mxu0 0.0
        %5061 = vmatpush.msra.mxu0 0.0
        %5062 = vmatpush.msra.mxu0 0.0
        %5063 = vmatpush.msra.mxu0 0.0
        %5064 = vmatpush.msra.mxu0 0.0
        %5065 = vmatpush.msra.mxu0 0.0
        %5066 = vmatpush.msra.mxu0 0.0
        %5067 = vmatpush.msra.mxu0 0.0
        %5068 = vmatpush.msra.mxu0 %v5046
        %5069 = vmatpush.msra.mxu0 %v5040
        %5070 = vmatpush.msra.mxu0 %v5043
        %5071 = vmatmul.f32.gmra.mxu0 %v5053
        %v5072 = vpop.f32.mrf.mxu0
        %v5073 = vadd.f32 %v5050, %v5072
        %5074 = vdwg.mxu0
        %5075 = vmatpush.msra.mxu0 %v5003
        %5076 = vmatpush.msra.mxu0 %v5002
        %5077 = vmatpush.msra.mxu0 %v5001
        %5078 = vmatpush.msra.mxu0 %v5000
        %5079 = vmatpush.msra.mxu0 %v4999
        %5080 = vmatpush.msra.mxu0 %v4998
        %5081 = vmatpush.msra.mxu0 %v4997
        %5082 = vmatpush.msra.mxu0 %v4996
        %5083 = vmatpush.msra.mxu0 %v4995
        %5084 = vmatpush.msra.mxu0 %v4994
        %5085 = vmatpush.msra.mxu0 %v4993
        %5086 = vmatpush.msra.mxu0 %v4992
        %5087 = vmatpush.msra.mxu0 %v4991
        %5088 = vmatpush.msra.mxu0 %v4990
        %5089 = vmatpush.msra.mxu0 %v4989
        %5090 = vmatpush.msra.mxu0 %v4988
        %5091 = vmatmul.f32.gmra.mxu0 %v4971
        %v5092 = vpop.f32.mrf.mxu0
        %v5093 = vadd.f32 0.0, %v5092
        %5094 = vmatmul.f32.gmra.mxu0 %v5073
        %v5095 = vpop.f32.mrf.mxu0
        %v5096 = vadd.f32 0.0, %v5095
        %5097 = vdwg.mxu0
        %vm5098 = vcmask 523264
        %v5099 = vsel %vm5098, %v5096, 0.0
        %5100 = vadd.xlane.f32.xlu0 %v5099
        %v5101 = vpop.xlane.xlu0 %5100
        %v5102 = vmul.f32 %v5101, 0.015625
        %v5103 = vmul.f32 %v5096, %v5096
        %v5104 = vsel %vm5098, %v5103, 0.0
        %5105 = vadd.xlane.f32.xlu0 %v5104
        %v5106 = vpop.xlane.xlu0 %5105
        %v5107 = vmul.f32 %v5106, 0.015625
        %v5108 = vmul.f32 %v5102, %v5102
        %v5109 = vsub.f32 %v5107, %v5108
        %v5110 = vadd.f32 %v5109, 1e-05
        %v5111 = vrsqrt.pop %v5110
        %v5112 = vmul.f32 %v5111, %v5110
        %v5113 = vmul.f32 %v5112, %v5111
        %v5114 = vmul.f32 0.5, %v5113
        %v5115 = vsub.f32 1.5, %v5114
        %v5116 = vmul.f32 %v5111, %v5115
        %vm5117 = vweird.f32 %v5110
        %vm5118 = vweird.f32 %v5111
        %vm5119 = vmor %vm5117, %vm5118
        %v5120 = vsel %vm5119, %v5111, %v5116
        %v5121 = vmul.f32 %v5120, %v4985
        %v5122 = vsub.f32 %v5096, %v5102
        %5124 = vset.pattern.permute.xlu0 0
        %5125 = vperm.xlu0 %5124, %v5121
        %v5126 = vpop.permute.xlu0 %5125
        %v5128 = vmul.f32 %v5122, %v5126
        %5130 = vset.pattern.permute.xlu0 0
        %5131 = vperm.xlu0 %5130, %v4987
        %v5132 = vpop.permute.xlu0 %5131
        %v5134 = vadd.f32 %v5128, %v5132
        %vm5135 = vcmp.ge.f32.partialorder %v5134, 0.0
        %v5136 = vmul.f32 %v5134, 0.2
        %v5137 = vsel %vm5135, %v5134, %v5136
        %vm5138 = vcmask 1048064
        %5139 = vrot.lane.b32.xlu0 %v5137, 64
        %v5140 = vpop.permute.xlu0 %5139
        %v5141 = vsel %vm5138, %v5140, %v5137
        %5142 = vrot.lane.b32.xlu0 %v5141, 64
        %v5143 = vpop.permute.xlu0 %5142
        %v5144 = vsel %vm5138, %v5143, %v5137
        %5146 = vrot.lane.b32.xlu0 %v5144, 65
        %v5147 = vpop.permute.xlu0 %5146
        %v5149 = vsel %vm1562, %v5147, 0.0
        %vm5150 = vcmp.lt.s32.totalorder %v1486, 63
        %v5151 = vsel %vm5150, 1, 0
        %vm5152 = vcmp.eq.s32.totalorder %v5151, 1
        %5153 = vrot.lane.b32.xlu0 %v5144, 127
        %v5154 = vpop.permute.xlu0 %5153
        %v5156 = vsel %vm5152, %v5154, 0.0
        %5158 = vset.pattern.permute.xlu0 0
        %5159 = vperm.xlu0 %5158, %v4983
        %v5160 = vpop.permute.xlu0 %5159
        %v5163 = vsel %vm4305, %v4981, 0
        %5165 = vmatpush.msra.mxu0 0.0
        %5166 = vmatpush.msra.mxu0 0.0
        %5167 = vmatpush.msra.mxu0 0.0
        %5168 = vmatpush.msra.mxu0 0.0
        %5169 = vmatpush.msra.mxu0 0.0
        %5170 = vmatpush.msra.mxu0 0.0
        %5171 = vmatpush.msra.mxu0 0.0
        %5172 = vmatpush.msra.mxu0 0.0
        %5173 = vmatpush.msra.mxu0 0.0
        %5174 = vmatpush.msra.mxu0 0.0
        %5175 = vmatpush.msra.mxu0 0.0
        %5176 = vmatpush.msra.mxu0 0.0
        %5177 = vmatpush.msra.mxu0 0.0
        %5178 = vmatpush.msra.mxu0 %v5156
        %5179 = vmatpush.msra.mxu0 %v5137
        %5180 = vmatpush.msra.mxu0 %v5149
        %5181 = vmatmul.f32.gmra.mxu0 %v5163
        %v5182 = vpop.f32.mrf.mxu0
        %v5183 = vadd.f32 %v5160, %v5182
        %5184 = vdwg.mxu0
        %v5185 = vadd.f32 %v5093, %v5183
        %v5186 = vmul.f32 %v5185, 0.70710677
        %s5187 = scalar_lea.vmem [#allocation7], 24
        %v5188 = vld [vmem:[%s5187] sm:$0xff]
        %s5189 = scalar_lea.vmem %s12, 24
        %v5190 = vld [vmem:[%s5189] sm:$0xff]
        %s5191 = scalar_lea.vmem %s13, 24
        %v5192 = vld [vmem:[%s5191] sm:$0xff]
        %s5193 = scalar_lea.vmem %s14, 24
        %v5194 = vld [vmem:[%s5193] sm:$0xff]
        %s5195 = scalar_lea.vmem [#allocation9], 24
        %v5196 = vld [vmem:[%s5195] sm:$0xff]
        %s5197 = scalar_lea.vmem %s16, 24
        %v5198 = vld [vmem:[%s5197] sm:$0xff]
        %s5199 = scalar_lea.vmem %s17, 24
        %v5200 = vld [vmem:[%s5199] sm:$0xff]
        %s5201 = scalar_lea.vmem %s18, 24
        %v5202 = vld [vmem:[%s5201] sm:$0xff]
        %v5203 = vld [vmem:[#allocation2] sm:$0xff]
        %v5204 = vld [vmem:[#allocation2 + $0x20] sm:$0xff]
        %v5205 = vld [vmem:[#allocation2 + $0x40] sm:$0xff]
        %v5206 = vld [vmem:[#allocation2 + $0x60] sm:$0xff]
        %v5207 = vld [vmem:[#allocation2 + $0x80] sm:$0xff]
        %v5208 = vld [vmem:[#allocation2 + $0xa0] sm:$0xff]
        %v5209 = vld [vmem:[#allocation2 + $0xc0] sm:$0xff]
        %v5210 = vld [vmem:[#allocation2 + $0xe0] sm:$0xff]
        %v5211 = vsel %vm5098, %v5186, 0.0
        %5212 = vadd.xlane.f32.xlu0 %v5211
        %v5213 = vpop.xlane.xlu0 %5212
        %v5214 = vmul.f32 %v5213, 0.015625
        %v5215 = vmul.f32 %v5186, %v5186
        %v5216 = vsel %vm5098, %v5215, 0.0
        %5217 = vadd.xlane.f32.xlu0 %v5216
        %v5218 = vpop.xlane.xlu0 %5217
        %v5219 = vmul.f32 %v5218, 0.015625
        %v5220 = vmul.f32 %v5214, %v5214
        %v5221 = vsub.f32 %v5219, %v5220
        %v5222 = vadd.f32 %v5221, 1e-05
        %v5223 = vrsqrt.pop %v5222
        %v5224 = vmul.f32 %v5223, %v5222
        %v5225 = vmul.f32 %v5224, %v5223
        %v5226 = vmul.f32 0.5, %v5225
        %v5227 = vsub.f32 1.5, %v5226
        %v5228 = vmul.f32 %v5223, %v5227
        %vm5229 = vweird.f32 %v5222
        %vm5230 = vweird.f32 %v5223
        %vm5231 = vmor %vm5229, %vm5230
        %v5232 = vsel %vm5231, %v5223, %v5228
        %v5233 = vmul.f32 %v5232, %v5192
        %v5234 = vsub.f32 %v5186, %v5214
        %5236 = vset.pattern.permute.xlu0 0
        %5237 = vperm.xlu0 %5236, %v5233
        %v5238 = vpop.permute.xlu0 %5237
        %v5240 = vmul.f32 %v5234, %v5238
        %5242 = vset.pattern.permute.xlu0 0
        %5243 = vperm.xlu0 %5242, %v5194
        %v5244 = vpop.permute.xlu0 %5243
        %v5246 = vadd.f32 %v5240, %v5244
        %vm5247 = vcmp.ge.f32.partialorder %v5246, 0.0
        %v5248 = vmul.f32 %v5246, 0.2
        %v5249 = vsel %vm5247, %v5246, %v5248
        %5250 = vrot.lane.b32.xlu0 %v5249, 64
        %v5251 = vpop.permute.xlu0 %5250
        %v5252 = vsel %vm5138, %v5251, %v5249
        %5253 = vrot.lane.b32.xlu0 %v5252, 64
        %v5254 = vpop.permute.xlu0 %5253
        %v5255 = vsel %vm5138, %v5254, %v5249
        %5257 = vrot.lane.b32.xlu0 %v5255, 65
        %v5258 = vpop.permute.xlu0 %5257
        %v5260 = vsel %vm1562, %v5258, 0.0
        %5261 = vrot.lane.b32.xlu0 %v5255, 127
        %v5262 = vpop.permute.xlu0 %5261
        %v5264 = vsel %vm5152, %v5262, 0.0
        %5266 = vset.pattern.permute.xlu0 0
        %5267 = vperm.xlu0 %5266, %v5190
        %v5268 = vpop.permute.xlu0 %5267
        %v5271 = vsel %vm4305, %v5188, 0
        %5273 = vmatpush.msra.mxu0 0.0
        %5274 = vmatpush.msra.mxu0 0.0
        %5275 = vmatpush.msra.mxu0 0.0
        %5276 = vmatpush.msra.mxu0 0.0
        %5277 = vmatpush.msra.mxu0 0.0
        %5278 = vmatpush.msra.mxu0 0.0
        %5279 = vmatpush.msra.mxu0 0.0
        %5280 = vmatpush.msra.mxu0 0.0
        %5281 = vmatpush.msra.mxu0 0.0
        %5282 = vmatpush.msra.mxu0 0.0
        %5283 = vmatpush.msra.mxu0 0.0
        %5284 = vmatpush.msra.mxu0 0.0
        %5285 = vmatpush.msra.mxu0 0.0
        %5286 = vmatpush.msra.mxu0 %v5264
        %5287 = vmatpush.msra.mxu0 %v5249
        %5288 = vmatpush.msra.mxu0 %v5260
        %5289 = vmatmul.f32.gmra.mxu0 %v5271
        %v5290 = vpop.f32.mrf.mxu0
        %v5291 = vadd.f32 %v5268, %v5290
        %5292 = vdwg.mxu0
        %v5294 = vsel %vm5098, %v5186, 0
        %v5297 = vsel %vm5098, %v5291, 0
        %5299 = vmatpush.msra.mxu0 0.0
        %5300 = vmatpush.msra.mxu0 0.0
        %5301 = vmatpush.msra.mxu0 0.0
        %5302 = vmatpush.msra.mxu0 0.0
        %5303 = vmatpush.msra.mxu0 0.0
        %5304 = vmatpush.msra.mxu0 0.0
        %5305 = vmatpush.msra.mxu0 0.0
        %5306 = vmatpush.msra.mxu0 0.0
        %5307 = vmatpush.msra.mxu0 %v5210
        %5308 = vmatpush.msra.mxu0 %v5209
        %5309 = vmatpush.msra.mxu0 %v5208
        %5310 = vmatpush.msra.mxu0 %v5207
        %5311 = vmatpush.msra.mxu0 %v5206
        %5312 = vmatpush.msra.mxu0 %v5205
        %5313 = vmatpush.msra.mxu0 %v5204
        %5314 = vmatpush.msra.mxu0 %v5203
        %5315 = vmatmul.f32.gmra.mxu0 %v5294
        %v5316 = vpop.f32.mrf.mxu0
        %v5317 = vadd.f32 0.0, %v5316
        %5318 = vmatmul.f32.gmra.mxu0 %v5297
        %v5319 = vpop.f32.mrf.mxu0
        %v5320 = vadd.f32 0.0, %v5319
        %5321 = vdwg.mxu0
        %vm5322 = vcmask 261120
        %v5323 = vsel %vm5322, %v5320, 0.0
        %5324 = vadd.xlane.f32.xlu0 %v5323
        %v5325 = vpop.xlane.xlu0 %5324
        %v5326 = vmul.f32 %v5325, 0.03125
        %v5327 = vmul.f32 %v5320, %v5320
        %v5328 = vsel %vm5322, %v5327, 0.0
        %5329 = vadd.xlane.f32.xlu0 %v5328
        %v5330 = vpop.xlane.xlu0 %5329
        %v5331 = vmul.f32 %v5330, 0.03125
        %v5332 = vmul.f32 %v5326, %v5326
        %v5333 = vsub.f32 %v5331, %v5332
        %v5334 = vadd.f32 %v5333, 1e-05
        %v5335 = vrsqrt.pop %v5334
        %v5336 = vmul.f32 %v5335, %v5334
        %v5337 = vmul.f32 %v5336, %v5335
        %v5338 = vmul.f32 0.5, %v5337
        %v5339 = vsub.f32 1.5, %v5338
        %v5340 = vmul.f32 %v5335, %v5339
        %vm5341 = vweird.f32 %v5334
        %vm5342 = vweird.f32 %v5335
        %vm5343 = vmor %vm5341, %vm5342
        %v5344 = vsel %vm5343, %v5335, %v5340
        %v5345 = vmul.f32 %v5344, %v5200
        %v5346 = vsub.f32 %v5320, %v5326
        %5348 = vset.pattern.permute.xlu0 0
        %5349 = vperm.xlu0 %5348, %v5345
        %v5350 = vpop.permute.xlu0 %5349
        %v5352 = vmul.f32 %v5346, %v5350
        %5354 = vset.pattern.permute.xlu0 0
        %5355 = vperm.xlu0 %5354, %v5202
        %v5356 = vpop.permute.xlu0 %5355
        %v5358 = vadd.f32 %v5352, %v5356
        %vm5359 = vcmp.ge.f32.partialorder %v5358, 0.0
        %v5360 = vmul.f32 %v5358, 0.2
        %v5361 = vsel %vm5359, %v5358, %v5360
        %vm5362 = vcmask 1047808
        %5363 = vrot.lane.b32.xlu0 %v5361, 32
        %v5364 = vpop.permute.xlu0 %5363
        %v5365 = vsel %vm5362, %v5364, %v5361
        %5366 = vrot.lane.b32.xlu0 %v5365, 32
        %v5367 = vpop.permute.xlu0 %5366
        %v5368 = vsel %vm5362, %v5367, %v5361
        %5370 = vrot.lane.b32.xlu0 %v5368, 97
        %v5371 = vpop.permute.xlu0 %5370
        %v5373 = vsel %vm1562, %v5371, 0.0
        %vm5374 = vcmp.lt.s32.totalorder %v1486, 31
        %v5375 = vsel %vm5374, 1, 0
        %vm5376 = vcmp.eq.s32.totalorder %v5375, 1
        %5377 = vrot.lane.b32.xlu0 %v5368, 127
        %v5378 = vpop.permute.xlu0 %5377
        %v5380 = vsel %vm5376, %v5378, 0.0
        %5382 = vset.pattern.permute.xlu0 0
        %5383 = vperm.xlu0 %5382, %v5198
        %v5384 = vpop.permute.xlu0 %5383
        %v5387 = vsel %vm4305, %v5196, 0
        %5389 = vmatpush.msra.mxu0 0.0
        %5390 = vmatpush.msra.mxu0 0.0
        %5391 = vmatpush.msra.mxu0 0.0
        %5392 = vmatpush.msra.mxu0 0.0
        %5393 = vmatpush.msra.mxu0 0.0
        %5394 = vmatpush.msra.mxu0 0.0
        %5395 = vmatpush.msra.mxu0 0.0
        %5396 = vmatpush.msra.mxu0 0.0
        %5397 = vmatpush.msra.mxu0 0.0
        %5398 = vmatpush.msra.mxu0 0.0
        %5399 = vmatpush.msra.mxu0 0.0
        %5400 = vmatpush.msra.mxu0 0.0
        %5401 = vmatpush.msra.mxu0 0.0
        %5402 = vmatpush.msra.mxu0 %v5380
        %5403 = vmatpush.msra.mxu0 %v5361
        %5404 = vmatpush.msra.mxu0 %v5373
        %5405 = vmatmul.f32.gmra.mxu0 %v5387
        %v5406 = vpop.f32.mrf.mxu0
        %v5407 = vadd.f32 %v5384, %v5406
        %5408 = vdwg.mxu0
        %v5409 = vadd.f32 %v5317, %v5407
        %v5410 = vmul.f32 %v5409, 0.70710677
        %s5411 = scalar_lea.vmem [#allocation7], 32
        %v5412 = vld [vmem:[%s5411] sm:$0xff]
        %s5413 = scalar_lea.vmem %s12, 32
        %v5414 = vld [vmem:[%s5413] sm:$0xff]
        %s5415 = scalar_lea.vmem %s13, 32
        %v5416 = vld [vmem:[%s5415] sm:$0xff]
        %s5417 = scalar_lea.vmem %s14, 32
        %v5418 = vld [vmem:[%s5417] sm:$0xff]
        %s5419 = scalar_lea.vmem [#allocation9], 32
        %v5420 = vld [vmem:[%s5419] sm:$0xff]
        %s5421 = scalar_lea.vmem %s16, 32
        %v5422 = vld [vmem:[%s5421] sm:$0xff]
        %s5423 = scalar_lea.vmem %s17, 32
        %v5424 = vld [vmem:[%s5423] sm:$0xff]
        %s5425 = scalar_lea.vmem %s18, 32
        %v5426 = vld [vmem:[%s5425] sm:$0xff]
        %v5427 = vld [vmem:[#allocation2] sm:$0xff]
        %v5428 = vld [vmem:[#allocation2 + $0x20] sm:$0xff]
        %v5429 = vld [vmem:[#allocation2 + $0x40] sm:$0xff]
        %v5430 = vld [vmem:[#allocation2 + $0x60] sm:$0xff]
        %v5431 = vsel %vm5322, %v5410, 0.0
        %5432 = vadd.xlane.f32.xlu0 %v5431
        %v5433 = vpop.xlane.xlu0 %5432
        %v5434 = vmul.f32 %v5433, 0.03125
        %v5435 = vmul.f32 %v5410, %v5410
        %v5436 = vsel %vm5322, %v5435, 0.0
        %5437 = vadd.xlane.f32.xlu0 %v5436
        %v5438 = vpop.xlane.xlu0 %5437
        %v5439 = vmul.f32 %v5438, 0.03125
        %v5440 = vmul.f32 %v5434, %v5434
        %v5441 = vsub.f32 %v5439, %v5440
        %v5442 = vadd.f32 %v5441, 1e-05
        %v5443 = vrsqrt.pop %v5442
        %v5444 = vmul.f32 %v5443, %v5442
        %v5445 = vmul.f32 %v5444, %v5443
        %v5446 = vmul.f32 0.5, %v5445
        %v5447 = vsub.f32 1.5, %v5446
        %v5448 = vmul.f32 %v5443, %v5447
        %vm5449 = vweird.f32 %v5442
        %vm5450 = vweird.f32 %v5443
        %vm5451 = vmor %vm5449, %vm5450
        %v5452 = vsel %vm5451, %v5443, %v5448
        %v5453 = vmul.f32 %v5452, %v5416
        %v5454 = vsub.f32 %v5410, %v5434
        %5456 = vset.pattern.permute.xlu0 0
        %5457 = vperm.xlu0 %5456, %v5453
        %v5458 = vpop.permute.xlu0 %5457
        %v5460 = vmul.f32 %v5454, %v5458
        %5462 = vset.pattern.permute.xlu0 0
        %5463 = vperm.xlu0 %5462, %v5418
        %v5464 = vpop.permute.xlu0 %5463
        %v5466 = vadd.f32 %v5460, %v5464
        %vm5467 = vcmp.ge.f32.partialorder %v5466, 0.0
        %v5468 = vmul.f32 %v5466, 0.2
        %v5469 = vsel %vm5467, %v5466, %v5468
        %5470 = vrot.lane.b32.xlu0 %v5469, 32
        %v5471 = vpop.permute.xlu0 %5470
        %v5472 = vsel %vm5362, %v5471, %v5469
        %5473 = vrot.lane.b32.xlu0 %v5472, 32
        %v5474 = vpop.permute.xlu0 %5473
        %v5475 = vsel %vm5362, %v5474, %v5469
        %5477 = vrot.lane.b32.xlu0 %v5475, 97
        %v5478 = vpop.permute.xlu0 %5477
        %v5480 = vsel %vm1562, %v5478, 0.0
        %5481 = vrot.lane.b32.xlu0 %v5475, 127
        %v5482 = vpop.permute.xlu0 %5481
        %v5484 = vsel %vm5376, %v5482, 0.0
        %5486 = vset.pattern.permute.xlu0 0
        %5487 = vperm.xlu0 %5486, %v5414
        %v5488 = vpop.permute.xlu0 %5487
        %v5491 = vsel %vm4305, %v5412, 0
        %5493 = vmatpush.msra.mxu0 0.0
        %5494 = vmatpush.msra.mxu0 0.0
        %5495 = vmatpush.msra.mxu0 0.0
        %5496 = vmatpush.msra.mxu0 0.0
        %5497 = vmatpush.msra.mxu0 0.0
        %5498 = vmatpush.msra.mxu0 0.0
        %5499 = vmatpush.msra.mxu0 0.0
        %5500 = vmatpush.msra.mxu0 0.0
        %5501 = vmatpush.msra.mxu0 0.0
        %5502 = vmatpush.msra.mxu0 0.0
        %5503 = vmatpush.msra.mxu0 0.0
        %5504 = vmatpush.msra.mxu0 0.0
        %5505 = vmatpush.msra.mxu0 0.0
        %5506 = vmatpush.msra.mxu0 %v5484
        %5507 = vmatpush.msra.mxu0 %v5469
        %5508 = vmatpush.msra.mxu0 %v5480
        %5509 = vmatmul.f32.gmra.mxu0 %v5491
        %v5510 = vpop.f32.mrf.mxu0
        %v5511 = vadd.f32 %v5488, %v5510
        %5512 = vdwg.mxu0
        %v5514 = vsel %vm5322, %v5410, 0
        %v5517 = vsel %vm5322, %v5511, 0
        %5519 = vmatpush.msra.mxu0 0.0
        %5520 = vmatpush.msra.mxu0 0.0
        %5521 = vmatpush.msra.mxu0 0.0
        %5522 = vmatpush.msra.mxu0 0.0
        %5523 = vmatpush.msra.mxu0 0.0
        %5524 = vmatpush.msra.mxu0 0.0
        %5525 = vmatpush.msra.mxu0 0.0
        %5526 = vmatpush.msra.mxu0 0.0
        %5527 = vmatpush.msra.mxu0 0.0
        %5528 = vmatpush.msra.mxu0 0.0
        %5529 = vmatpush.msra.mxu0 0.0
        %5530 = vmatpush.msra.mxu0 0.0
        %5531 = vmatpush.msra.mxu0 %v5430
        %5532 = vmatpush.msra.mxu0 %v5429
        %5533 = vmatpush.msra.mxu0 %v5428
        %5534 = vmatpush.msra.mxu0 %v5427
        %5535 = vmatmul.f32.gmra.mxu0 %v5514
        %v5536 = vpop.f32.mrf.mxu0
        %v5537 = vadd.f32 0.0, %v5536
        %5538 = vmatmul.f32.gmra.mxu0 %v5517
        %v5539 = vpop.f32.mrf.mxu0
        %v5540 = vadd.f32 0.0, %v5539
        %5541 = vdwg.mxu0
        %vm5542 = vcmask 130048
        %v5543 = vsel %vm5542, %v5540, 0.0
        %5544 = vadd.xlane.f32.xlu0 %v5543
        %v5545 = vpop.xlane.xlu0 %5544
        %v5546 = vmul.f32 %v5545, 0.0625
        %v5547 = vmul.f32 %v5540, %v5540
        %v5548 = vsel %vm5542, %v5547, 0.0
        %5549 = vadd.xlane.f32.xlu0 %v5548
        %v5550 = vpop.xlane.xlu0 %5549
        %v5551 = vmul.f32 %v5550, 0.0625
        %v5552 = vmul.f32 %v5546, %v5546
        %v5553 = vsub.f32 %v5551, %v5552
        %v5554 = vadd.f32 %v5553, 1e-05
        %v5555 = vrsqrt.pop %v5554
        %v5556 = vmul.f32 %v5555, %v5554
        %v5557 = vmul.f32 %v5556, %v5555
        %v5558 = vmul.f32 0.5, %v5557
        %v5559 = vsub.f32 1.5, %v5558
        %v5560 = vmul.f32 %v5555, %v5559
        %vm5561 = vweird.f32 %v5554
        %vm5562 = vweird.f32 %v5555
        %vm5563 = vmor %vm5561, %vm5562
        %v5564 = vsel %vm5563, %v5555, %v5560
        %v5565 = vmul.f32 %v5564, %v5424
        %v5566 = vsub.f32 %v5540, %v5546
        %5568 = vset.pattern.permute.xlu0 0
        %5569 = vperm.xlu0 %5568, %v5565
        %v5570 = vpop.permute.xlu0 %5569
        %v5572 = vmul.f32 %v5566, %v5570
        %5574 = vset.pattern.permute.xlu0 0
        %5575 = vperm.xlu0 %5574, %v5426
        %v5576 = vpop.permute.xlu0 %5575
        %v5578 = vadd.f32 %v5572, %v5576
        %vm5579 = vcmp.ge.f32.partialorder %v5578, 0.0
        %v5580 = vmul.f32 %v5578, 0.2
        %v5581 = vsel %vm5579, %v5578, %v5580
        %vm5582 = vcmask 1047680
        %5583 = vrot.lane.b32.xlu0 %v5581, 16
        %v5584 = vpop.permute.xlu0 %5583
        %v5585 = vsel %vm5582, %v5584, %v5581
        %5586 = vrot.lane.b32.xlu0 %v5585, 16
        %v5587 = vpop.permute.xlu0 %5586
        %v5588 = vsel %vm5582, %v5587, %v5581
        %5590 = vrot.lane.b32.xlu0 %v5588, 113
        %v5591 = vpop.permute.xlu0 %5590
        %v5593 = vsel %vm1562, %v5591, 0.0
        %vm5594 = vcmp.lt.s32.totalorder %v1486, 15
        %v5595 = vsel %vm5594, 1, 0
        %vm5596 = vcmp.eq.s32.totalorder %v5595, 1
        %5597 = vrot.lane.b32.xlu0 %v5588, 127
        %v5598 = vpop.permute.xlu0 %5597
        %v5600 = vsel %vm5596, %v5598, 0.0
        %5602 = vset.pattern.permute.xlu0 0
        %5603 = vperm.xlu0 %5602, %v5422
        %v5604 = vpop.permute.xlu0 %5603
        %v5607 = vsel %vm4305, %v5420, 0
        %5609 = vmatpush.msra.mxu0 0.0
        %5610 = vmatpush.msra.mxu0 0.0
        %5611 = vmatpush.msra.mxu0 0.0
        %5612 = vmatpush.msra.mxu0 0.0
        %5613 = vmatpush.msra.mxu0 0.0
        %5614 = vmatpush.msra.mxu0 0.0
        %5615 = vmatpush.msra.mxu0 0.0
        %5616 = vmatpush.msra.mxu0 0.0
        %5617 = vmatpush.msra.mxu0 0.0
        %5618 = vmatpush.msra.mxu0 0.0
        %5619 = vmatpush.msra.mxu0 0.0
        %5620 = vmatpush.msra.mxu0 0.0
        %5621 = vmatpush.msra.mxu0 0.0
        %5622 = vmatpush.msra.mxu0 %v5600
        %5623 = vmatpush.msra.mxu0 %v5581
        %5624 = vmatpush.msra.mxu0 %v5593
        %5625 = vmatmul.f32.gmra.mxu0 %v5607
        %v5626 = vpop.f32.mrf.mxu0
        %v5627 = vadd.f32 %v5604, %v5626
        %5628 = vdwg.mxu0
        %v5629 = vadd.f32 %v5537, %v5627
        %v5630 = vmul.f32 %v5629, 0.70710677
        %s5631 = scalar_lea.vmem [#allocation7], 40
        %v5632 = vld [vmem:[%s5631] sm:$0xff]
        %s5633 = scalar_lea.vmem %s12, 40
        %v5634 = vld [vmem:[%s5633] sm:$0xff]
        %s5635 = scalar_lea.vmem %s13, 40
        %v5636 = vld [vmem:[%s5635] sm:$0xff]
        %s5637 = scalar_lea.vmem %s14, 40
        %v5638 = vld [vmem:[%s5637] sm:$0xff]
        %s5639 = scalar_lea.vmem [#allocation9], 40
        %v5640 = vld [vmem:[%s5639] sm:$0xff]
        %s5641 = scalar_lea.vmem %s16, 40
        %v5642 = vld [vmem:[%s5641] sm:$0xff]
        %s5643 = scalar_lea.vmem %s17, 40
        %v5644 = vld [vmem:[%s5643] sm:$0xff]
        %s5645 = scalar_lea.vmem %s18, 40
        %v5646 = vld [vmem:[%s5645] sm:$0xff]
        %v5647 = vld [vmem:[#allocation2] sm:$0xff]
        %v5648 = vld [vmem:[#allocation2 + $0x20] sm:$0xff]
        %v5649 = vsel %vm5542, %v5630, 0.0
        %5650 = vadd.xlane.f32.xlu0 %v5649
        %v5651 = vpop.xlane.xlu0 %5650
        %v5652 = vmul.f32 %v5651, 0.0625
        %v5653 = vmul.f32 %v5630, %v5630
        %v5654 = vsel %vm5542, %v5653, 0.0
        %5655 = vadd.xlane.f32.xlu0 %v5654
        %v5656 = vpop.xlane.xlu0 %5655
        %v5657 = vmul.f32 %v5656, 0.0625
        %v5658 = vmul.f32 %v5652, %v5652
        %v5659 = vsub.f32 %v5657, %v5658
        %v5660 = vadd.f32 %v5659, 1e-05
        %v5661 = vrsqrt.pop %v5660
        %v5662 = vmul.f32 %v5661, %v5660
        %v5663 = vmul.f32 %v5662, %v5661
        %v5664 = vmul.f32 0.5, %v5663
        %v5665 = vsub.f32 1.5, %v5664
        %v5666 = vmul.f32 %v5661, %v5665
        %vm5667 = vweird.f32 %v5660
        %vm5668 = vweird.f32 %v5661
        %vm5669 = vmor %vm5667, %vm5668
        %v5670 = vsel %vm5669, %v5661, %v5666
        %v5671 = vmul.f32 %v5670, %v5636
        %v5672 = vsub.f32 %v5630, %v5652
        %5674 = vset.pattern.permute.xlu0 0
        %5675 = vperm.xlu0 %5674, %v5671
        %v5676 = vpop.permute.xlu0 %5675
        %v5678 = vmul.f32 %v5672, %v5676
        %5680 = vset.pattern.permute.xlu0 0
        %5681 = vperm.xlu0 %5680, %v5638
        %v5682 = vpop.permute.xlu0 %5681
        %v5684 = vadd.f32 %v5678, %v5682
        %vm5685 = vcmp.ge.f32.partialorder %v5684, 0.0
        %v5686 = vmul.f32 %v5684, 0.2
        %v5687 = vsel %vm5685, %v5684, %v5686
        %5688 = vrot.lane.b32.xlu0 %v5687, 16
        %v5689 = vpop.permute.xlu0 %5688
        %v5690 = vsel %vm5582, %v5689, %v5687
        %5691 = vrot.lane.b32.xlu0 %v5690, 16
        %v5692 = vpop.permute.xlu0 %5691
        %v5693 = vsel %vm5582, %v5692, %v5687
        %5695 = vrot.lane.b32.xlu0 %v5693, 113
        %v5696 = vpop.permute.xlu0 %5695
        %v5698 = vsel %vm1562, %v5696, 0.0
        %5699 = vrot.lane.b32.xlu0 %v5693, 127
        %v5700 = vpop.permute.xlu0 %5699
        %v5702 = vsel %vm5596, %v5700, 0.0
        %5704 = vset.pattern.permute.xlu0 0
        %5705 = vperm.xlu0 %5704, %v5634
        %v5706 = vpop.permute.xlu0 %5705
        %v5709 = vsel %vm4305, %v5632, 0
        %5711 = vmatpush.msra.mxu0 0.0
        %5712 = vmatpush.msra.mxu0 0.0
        %5713 = vmatpush.msra.mxu0 0.0
        %5714 = vmatpush.msra.mxu0 0.0
        %5715 = vmatpush.msra.mxu0 0.0
        %5716 = vmatpush.msra.mxu0 0.0
        %5717 = vmatpush.msra.mxu0 0.0
        %5718 = vmatpush.msra.mxu0 0.0
        %5719 = vmatpush.msra.mxu0 0.0
        %5720 = vmatpush.msra.mxu0 0.0
        %5721 = vmatpush.msra.mxu0 0.0
        %5722 = vmatpush.msra.mxu0 0.0
        %5723 = vmatpush.msra.mxu0 0.0
        %5724 = vmatpush.msra.mxu0 %v5702
        %5725 = vmatpush.msra.mxu0 %v5687
        %5726 = vmatpush.msra.mxu0 %v5698
        %5727 = vmatmul.f32.gmra.mxu0 %v5709
        %v5728 = vpop.f32.mrf.mxu0
        %v5729 = vadd.f32 %v5706, %v5728
        %5730 = vdwg.mxu0
        %v5732 = vsel %vm5542, %v5630, 0
        %v5735 = vsel %vm5542, %v5729, 0
        %5737 = vmatpush.msra.mxu0 0.0
        %5738 = vmatpush.msra.mxu0 0.0
        %5739 = vmatpush.msra.mxu0 0.0
        %5740 = vmatpush.msra.mxu0 0.0
        %5741 = vmatpush.msra.mxu0 0.0
        %5742 = vmatpush.msra.mxu0 0.0
        %5743 = vmatpush.msra.mxu0 0.0
        %5744 = vmatpush.msra.mxu0 0.0
        %5745 = vmatpush.msra.mxu0 0.0
        %5746 = vmatpush.msra.mxu0 0.0
        %5747 = vmatpush.msra.mxu0 0.0
        %5748 = vmatpush.msra.mxu0 0.0
        %5749 = vmatpush.msra.mxu0 0.0
        %5750 = vmatpush.msra.mxu0 0.0
        %5751 = vmatpush.msra.mxu0 %v5648
        %5752 = vmatpush.msra.mxu0 %v5647
        %5753 = vmatmul.f32.gmra.mxu0 %v5732
        %v5754 = vpop.f32.mrf.mxu0
        %v5755 = vadd.f32 0.0, %v5754
        %5756 = vmatmul.f32.gmra.mxu0 %v5735
        %v5757 = vpop.f32.mrf.mxu0
        %v5758 = vadd.f32 0.0, %v5757
        %5759 = vdwg.mxu0
        %vm5760 = vcmask 64512
        %v5761 = vsel %vm5760, %v5758, 0.0
        %5762 = vadd.xlane.f32.xlu0 %v5761
        %v5763 = vpop.xlane.xlu0 %5762
        %v5764 = vmul.f32 %v5763, 0.125
        %v5765 = vmul.f32 %v5758, %v5758
        %v5766 = vsel %vm5760, %v5765, 0.0
        %5767 = vadd.xlane.f32.xlu0 %v5766
        %v5768 = vpop.xlane.xlu0 %5767
        %v5769 = vmul.f32 %v5768, 0.125
        %v5770 = vmul.f32 %v5764, %v5764
        %v5771 = vsub.f32 %v5769, %v5770
        %v5772 = vadd.f32 %v5771, 1e-05
        %v5773 = vrsqrt.pop %v5772
        %v5774 = vmul.f32 %v5773, %v5772
        %v5775 = vmul.f32 %v5774, %v5773
        %v5776 = vmul.f32 0.5, %v5775
        %v5777 = vsub.f32 1.5, %v5776
        %v5778 = vmul.f32 %v5773, %v5777
        %vm5779 = vweird.f32 %v5772
        %vm5780 = vweird.f32 %v5773
        %vm5781 = vmor %vm5779, %vm5780
        %v5782 = vsel %vm5781, %v5773, %v5778
        %v5783 = vmul.f32 %v5782, %v5644
        %v5784 = vsub.f32 %v5758, %v5764
        %5786 = vset.pattern.permute.xlu0 0
        %5787 = vperm.xlu0 %5786, %v5783
        %v5788 = vpop.permute.xlu0 %5787
        %v5790 = vmul.f32 %v5784, %v5788
        %5792 = vset.pattern.permute.xlu0 0
        %5793 = vperm.xlu0 %5792, %v5646
        %v5794 = vpop.permute.xlu0 %5793
        %v5796 = vadd.f32 %v5790, %v5794
        %vm5797 = vcmp.ge.f32.partialorder %v5796, 0.0
        %v5798 = vmul.f32 %v5796, 0.2
        %v5799 = vsel %vm5797, %v5796, %v5798
        %vm5800 = vcmask 1047616
        %5801 = vrot.lane.b32.xlu0 %v5799, 8
        %v5802 = vpop.permute.xlu0 %5801
        %v5803 = vsel %vm5800, %v5802, %v5799
        %5804 = vrot.lane.b32.xlu0 %v5803, 8
        %v5805 = vpop.permute.xlu0 %5804
        %v5806 = vsel %vm5800, %v5805, %v5799
        %5808 = vrot.lane.b32.xlu0 %v5806, 121
        %v5809 = vpop.permute.xlu0 %5808
        %v5811 = vsel %vm1562, %v5809, 0.0
        %vm5812 = vcmp.lt.s32.totalorder %v1486, 7
        %v5813 = vsel %vm5812, 1, 0
        %vm5814 = vcmp.eq.s32.totalorder %v5813, 1
        %5815 = vrot.lane.b32.xlu0 %v5806, 127
        %v5816 = vpop.permute.xlu0 %5815
        %v5818 = vsel %vm5814, %v5816, 0.0
        %5820 = vset.pattern.permute.xlu0 0
        %5821 = vperm.xlu0 %5820, %v5642
        %v5822 = vpop.permute.xlu0 %5821
        %v5825 = vsel %vm4305, %v5640, 0
        %5827 = vmatpush.msra.mxu0 0.0
        %5828 = vmatpush.msra.mxu0 0.0
        %5829 = vmatpush.msra.mxu0 0.0
        %5830 = vmatpush.msra.mxu0 0.0
        %5831 = vmatpush.msra.mxu0 0.0
        %5832 = vmatpush.msra.mxu0 0.0
        %5833 = vmatpush.msra.mxu0 0.0
        %5834 = vmatpush.msra.mxu0 0.0
        %5835 = vmatpush.msra.mxu0 0.0
        %5836 = vmatpush.msra.mxu0 0.0
        %5837 = vmatpush.msra.mxu0 0.0
        %5838 = vmatpush.msra.mxu0 0.0
        %5839 = vmatpush.msra.mxu0 0.0
        %5840 = vmatpush.msra.mxu0 %v5818
        %5841 = vmatpush.msra.mxu0 %v5799
        %5842 = vmatpush.msra.mxu0 %v5811
        %5843 = vmatmul.f32.gmra.mxu0 %v5825
        %v5844 = vpop.f32.mrf.mxu0
        %v5845 = vadd.f32 %v5822, %v5844
        %5846 = vdwg.mxu0
        %v5847 = vadd.f32 %v5755, %v5845
        %v5848 = vmul.f32 %v5847, 0.70710677
        %s5849 = scalar_lea.vmem [#allocation7], 48
        %v5850 = vld [vmem:[%s5849] sm:$0xff]
        %s5851 = scalar_lea.vmem %s12, 48
        %v5852 = vld [vmem:[%s5851] sm:$0xff]
        %s5853 = scalar_lea.vmem %s13, 48
        %v5854 = vld [vmem:[%s5853] sm:$0xff]
        %s5855 = scalar_lea.vmem %s14, 48
        %v5856 = vld [vmem:[%s5855] sm:$0xff]
        %s5857 = scalar_lea.vmem [#allocation9], 48
        %v5858 = vld [vmem:[%s5857] sm:$0xff]
        %s5859 = scalar_lea.vmem %s16, 48
        %v5860 = vld [vmem:[%s5859] sm:$0xff]
        %s5861 = scalar_lea.vmem %s17, 48
        %v5862 = vld [vmem:[%s5861] sm:$0xff]
        %s5863 = scalar_lea.vmem %s18, 48
        %v5864 = vld [vmem:[%s5863] sm:$0xff]
        %v5865 = vld [vmem:[#allocation2] sm:$0xff]
        %v5866 = vsel %vm5760, %v5848, 0.0
        %5867 = vadd.xlane.f32.xlu0 %v5866
        %v5868 = vpop.xlane.xlu0 %5867
        %v5869 = vmul.f32 %v5868, 0.125
        %v5870 = vmul.f32 %v5848, %v5848
        %v5871 = vsel %vm5760, %v5870, 0.0
        %5872 = vadd.xlane.f32.xlu0 %v5871
        %v5873 = vpop.xlane.xlu0 %5872
        %v5874 = vmul.f32 %v5873, 0.125
        %v5875 = vmul.f32 %v5869, %v5869
        %v5876 = vsub.f32 %v5874, %v5875
        %v5877 = vadd.f32 %v5876, 1e-05
        %v5878 = vrsqrt.pop %v5877
        %v5879 = vmul.f32 %v5878, %v5877
        %v5880 = vmul.f32 %v5879, %v5878
        %v5881 = vmul.f32 0.5, %v5880
        %v5882 = vsub.f32 1.5, %v5881
        %v5883 = vmul.f32 %v5878, %v5882
        %vm5884 = vweird.f32 %v5877
        %vm5885 = vweird.f32 %v5878
        %vm5886 = vmor %vm5884, %vm5885
        %v5887 = vsel %vm5886, %v5878, %v5883
        %v5888 = vmul.f32 %v5887, %v5854
        %v5889 = vsub.f32 %v5848, %v5869
        %5891 = vset.pattern.permute.xlu0 0
        %5892 = vperm.xlu0 %5891, %v5888
        %v5893 = vpop.permute.xlu0 %5892
        %v5895 = vmul.f32 %v5889, %v5893
        %5897 = vset.pattern.permute.xlu0 0
        %5898 = vperm.xlu0 %5897, %v5856
        %v5899 = vpop.permute.xlu0 %5898
        %v5901 = vadd.f32 %v5895, %v5899
        %vm5902 = vcmp.ge.f32.partialorder %v5901, 0.0
        %v5903 = vmul.f32 %v5901, 0.2
        %v5904 = vsel %vm5902, %v5901, %v5903
        %5905 = vrot.lane.b32.xlu0 %v5904, 8
        %v5906 = vpop.permute.xlu0 %5905
        %v5907 = vsel %vm5800, %v5906, %v5904
        %5908 = vrot.lane.b32.xlu0 %v5907, 8
        %v5909 = vpop.permute.xlu0 %5908
        %v5910 = vsel %vm5800, %v5909, %v5904
        %5912 = vrot.lane.b32.xlu0 %v5910, 121
        %v5913 = vpop.permute.xlu0 %5912
        %v5915 = vsel %vm1562, %v5913, 0.0
        %5916 = vrot.lane.b32.xlu0 %v5910, 127
        %v5917 = vpop.permute.xlu0 %5916
        %v5919 = vsel %vm5814, %v5917, 0.0
        %5921 = vset.pattern.permute.xlu0 0
        %5922 = vperm.xlu0 %5921, %v5852
        %v5923 = vpop.permute.xlu0 %5922
        %v5926 = vsel %vm4305, %v5850, 0
        %5928 = vmatpush.msra.mxu0 0.0
        %5929 = vmatpush.msra.mxu0 0.0
        %5930 = vmatpush.msra.mxu0 0.0
        %5931 = vmatpush.msra.mxu0 0.0
        %5932 = vmatpush.msra.mxu0 0.0
        %5933 = vmatpush.msra.mxu0 0.0
        %5934 = vmatpush.msra.mxu0 0.0
        %5935 = vmatpush.msra.mxu0 0.0
        %5936 = vmatpush.msra.mxu0 0.0
        %5937 = vmatpush.msra.mxu0 0.0
        %5938 = vmatpush.msra.mxu0 0.0
        %5939 = vmatpush.msra.mxu0 0.0
        %5940 = vmatpush.msra.mxu0 0.0
        %5941 = vmatpush.msra.mxu0 %v5919
        %5942 = vmatpush.msra.mxu0 %v5904
        %5943 = vmatpush.msra.mxu0 %v5915
        %5944 = vmatmul.f32.gmra.mxu0 %v5926
        %v5945 = vpop.f32.mrf.mxu0
        %v5946 = vadd.f32 %v5923, %v5945
        %5947 = vdwg.mxu0
        %v5949 = vsel %vm5760, %v5848, 0
        %v5952 = vsel %vm5760, %v5946, 0
        %5954 = vmatpush.msra.mxu0 0.0
        %5955 = vmatpush.msra.mxu0 0.0
        %5956 = vmatpush.msra.mxu0 0.0
        %5957 = vmatpush.msra.mxu0 0.0
        %5958 = vmatpush.msra.mxu0 0.0
        %5959 = vmatpush.msra.mxu0 0.0
        %5960 = vmatpush.msra.mxu0 0.0
        %5961 = vmatpush.msra.mxu0 0.0
        %5962 = vmatpush.msra.mxu0 0.0
        %5963 = vmatpush.msra.mxu0 0.0
        %5964 = vmatpush.msra.mxu0 0.0
        %5965 = vmatpush.msra.mxu0 0.0
        %5966 = vmatpush.msra.mxu0 0.0
        %5967 = vmatpush.msra.mxu0 0.0
        %5968 = vmatpush.msra.mxu0 0.0
        %5969 = vmatpush.msra.mxu0 %v5865
        %5970 = vmatmul.f32.gmra.mxu0 %v5949
        %v5971 = vpop.f32.mrf.mxu0
        %v5972 = vadd.f32 0.0, %v5971
        %5973 = vmatmul.f32.gmra.mxu0 %v5952
        %v5974 = vpop.f32.mrf.mxu0
        %v5975 = vadd.f32 0.0, %v5974
        %5976 = vdwg.mxu0
        %vm5977 = vcmask 31744
        %v5978 = vsel %vm5977, %v5975, 0.0
        %5979 = vadd.xlane.f32.xlu0 %v5978
        %v5980 = vpop.xlane.xlu0 %5979
        %v5981 = vmul.f32 %v5980, 0.25
        %v5982 = vmul.f32 %v5975, %v5975
        %v5983 = vsel %vm5977, %v5982, 0.0
        %5984 = vadd.xlane.f32.xlu0 %v5983
        %v5985 = vpop.xlane.xlu0 %5984
        %v5986 = vmul.f32 %v5985, 0.25
        %v5987 = vmul.f32 %v5981, %v5981
        %v5988 = vsub.f32 %v5986, %v5987
        %v5989 = vadd.f32 %v5988, 1e-05
        %v5990 = vrsqrt.pop %v5989
        %v5991 = vmul.f32 %v5990, %v5989
        %v5992 = vmul.f32 %v5991, %v5990
        %v5993 = vmul.f32 0.5, %v5992
        %v5994 = vsub.f32 1.5, %v5993
        %v5995 = vmul.f32 %v5990, %v5994
        %vm5996 = vweird.f32 %v5989
        %vm5997 = vweird.f32 %v5990
        %vm5998 = vmor %vm5996, %vm5997
        %v5999 = vsel %vm5998, %v5990, %v5995
        %v6000 = vmul.f32 %v5999, %v5862
        %v6001 = vsub.f32 %v5975, %v5981
        %6003 = vset.pattern.permute.xlu0 0
        %6004 = vperm.xlu0 %6003, %v6000
        %v6005 = vpop.permute.xlu0 %6004
        %v6007 = vmul.f32 %v6001, %v6005
        %6009 = vset.pattern.permute.xlu0 0
        %6010 = vperm.xlu0 %6009, %v5864
        %v6011 = vpop.permute.xlu0 %6010
        %v6013 = vadd.f32 %v6007, %v6011
        %vm6014 = vcmp.ge.f32.partialorder %v6013, 0.0
        %v6015 = vmul.f32 %v6013, 0.2
        %v6016 = vsel %vm6014, %v6013, %v6015
        %vm6017 = vcmask 1047584
        %6018 = vrot.lane.b32.xlu0 %v6016, 4
        %v6019 = vpop.permute.xlu0 %6018
        %v6020 = vsel %vm6017, %v6019, %v6016
        %6021 = vrot.lane.b32.xlu0 %v6020, 4
        %v6022 = vpop.permute.xlu0 %6021
        %v6023 = vsel %vm6017, %v6022, %v6016
        %6025 = vrot.lane.b32.xlu0 %v6023, 125
        %v6026 = vpop.permute.xlu0 %6025
        %v6028 = vsel %vm1562, %v6026, 0.0
        %vm6029 = vcmp.lt.s32.totalorder %v1486, 3
        %v6030 = vsel %vm6029, 1, 0
        %vm6031 = vcmp.eq.s32.totalorder %v6030, 1
        %6032 = vrot.lane.b32.xlu0 %v6023, 127
        %v6033 = vpop.permute.xlu0 %6032
        %v6035 = vsel %vm6031, %v6033, 0.0
        %6037 = vset.pattern.permute.xlu0 0
        %6038 = vperm.xlu0 %6037, %v5860
        %v6039 = vpop.permute.xlu0 %6038
        %v6042 = vsel %vm4305, %v5858, 0
        %6044 = vmatpush.msra.mxu0 0.0
        %6045 = vmatpush.msra.mxu0 0.0
        %6046 = vmatpush.msra.mxu0 0.0
        %6047 = vmatpush.msra.mxu0 0.0
        %6048 = vmatpush.msra.mxu0 0.0
        %6049 = vmatpush.msra.mxu0 0.0
        %6050 = vmatpush.msra.mxu0 0.0
        %6051 = vmatpush.msra.mxu0 0.0
        %6052 = vmatpush.msra.mxu0 0.0
        %6053 = vmatpush.msra.mxu0 0.0
        %6054 = vmatpush.msra.mxu0 0.0
        %6055 = vmatpush.msra.mxu0 0.0
        %6056 = vmatpush.msra.mxu0 0.0
        %6057 = vmatpush.msra.mxu0 %v6035
        %6058 = vmatpush.msra.mxu0 %v6016
        %6059 = vmatpush.msra.mxu0 %v6028
        %6060 = vmatmul.f32.gmra.mxu0 %v6042
        %v6061 = vpop.f32.mrf.mxu0
        %v6062 = vadd.f32 %v6039, %v6061
        %6063 = vdwg.mxu0
        %v6064 = vadd.f32 %v5972, %v6062
        %v6065 = vmul.f32 %v6064, 0.70710677
        %s6066 = scalar_lea.vmem [#allocation7], 56
        %v6067 = vld [vmem:[%s6066] sm:$0xff]
        %s6068 = scalar_lea.vmem %s12, 56
        %v6069 = vld [vmem:[%s6068] sm:$0xff]
        %s6070 = scalar_lea.vmem %s13, 56
        %v6071 = vld [vmem:[%s6070] sm:$0xff]
        %s6072 = scalar_lea.vmem %s14, 56
        %v6073 = vld [vmem:[%s6072] sm:$0xff]
        %s6074 = scalar_lea.vmem [#allocation9], 56
        %v6075 = vld [vmem:[%s6074] sm:$0xff]
        %s6076 = scalar_lea.vmem %s16, 56
        %v6077 = vld [vmem:[%s6076] sm:$0xff]
        %s6078 = scalar_lea.vmem %s17, 56
        %v6079 = vld [vmem:[%s6078] sm:$0xff]
        %s6080 = scalar_lea.vmem %s18, 56
        %v6081 = vld [vmem:[%s6080] sm:$0xff]
        %v6082 = vld [vmem:[#allocation2] sm:$0xf]
        %v6083 = vsel %vm5977, %v6065, 0.0
        %6084 = vadd.xlane.f32.xlu0 %v6083
        %v6085 = vpop.xlane.xlu0 %6084
        %v6086 = vmul.f32 %v6085, 0.25
        %v6087 = vmul.f32 %v6065, %v6065
        %v6088 = vsel %vm5977, %v6087, 0.0
        %6089 = vadd.xlane.f32.xlu0 %v6088
        %v6090 = vpop.xlane.xlu0 %6089
        %v6091 = vmul.f32 %v6090, 0.25
        %v6092 = vmul.f32 %v6086, %v6086
        %v6093 = vsub.f32 %v6091, %v6092
        %v6094 = vadd.f32 %v6093, 1e-05
        %v6095 = vrsqrt.pop %v6094
        %v6096 = vmul.f32 %v6095, %v6094
        %v6097 = vmul.f32 %v6096, %v6095
        %v6098 = vmul.f32 0.5, %v6097
        %v6099 = vsub.f32 1.5, %v6098
        %v6100 = vmul.f32 %v6095, %v6099
        %vm6101 = vweird.f32 %v6094
        %vm6102 = vweird.f32 %v6095
        %vm6103 = vmor %vm6101, %vm6102
        %v6104 = vsel %vm6103, %v6095, %v6100
        %v6105 = vmul.f32 %v6104, %v6071
        %v6106 = vsub.f32 %v6065, %v6086
        %6108 = vset.pattern.permute.xlu0 0
        %6109 = vperm.xlu0 %6108, %v6105
        %v6110 = vpop.permute.xlu0 %6109
        %v6112 = vmul.f32 %v6106, %v6110
        %6114 = vset.pattern.permute.xlu0 0
        %6115 = vperm.xlu0 %6114, %v6073
        %v6116 = vpop.permute.xlu0 %6115
        %v6118 = vadd.f32 %v6112, %v6116
        %vm6119 = vcmp.ge.f32.partialorder %v6118, 0.0
        %v6120 = vmul.f32 %v6118, 0.2
        %v6121 = vsel %vm6119, %v6118, %v6120
        %6122 = vrot.lane.b32.xlu0 %v6121, 4
        %v6123 = vpop.permute.xlu0 %6122
        %v6124 = vsel %vm6017, %v6123, %v6121
        %6125 = vrot.lane.b32.xlu0 %v6124, 4
        %v6126 = vpop.permute.xlu0 %6125
        %v6127 = vsel %vm6017, %v6126, %v6121
        %6129 = vrot.lane.b32.xlu0 %v6127, 125
        %v6130 = vpop.permute.xlu0 %6129
        %v6132 = vsel %vm1562, %v6130, 0.0
        %6133 = vrot.lane.b32.xlu0 %v6127, 127
        %v6134 = vpop.permute.xlu0 %6133
        %v6136 = vsel %vm6031, %v6134, 0.0
        %6138 = vset.pattern.permute.xlu0 0
        %6139 = vperm.xlu0 %6138, %v6069
        %v6140 = vpop.permute.xlu0 %6139
        %v6143 = vsel %vm4305, %v6067, 0
        %6145 = vmatpush.msra.mxu0 0.0
        %6146 = vmatpush.msra.mxu0 0.0
        %6147 = vmatpush.msra.mxu0 0.0
        %6148 = vmatpush.msra.mxu0 0.0
        %6149 = vmatpush.msra.mxu0 0.0
        %6150 = vmatpush.msra.mxu0 0.0
        %6151 = vmatpush.msra.mxu0 0.0
        %6152 = vmatpush.msra.mxu0 0.0
        %6153 = vmatpush.msra.mxu0 0.0
        %6154 = vmatpush.msra.mxu0 0.0
        %6155 = vmatpush.msra.mxu0 0.0
        %6156 = vmatpush.msra.mxu0 0.0
        %6157 = vmatpush.msra.mxu0 0.0
        %6158 = vmatpush.msra.mxu0 %v6136
        %6159 = vmatpush.msra.mxu0 %v6121
        %6160 = vmatpush.msra.mxu0 %v6132
        %6161 = vmatmul.f32.gmra.mxu0 %v6143
        %v6162 = vpop.f32.mrf.mxu0
        %v6163 = vadd.f32 %v6140, %v6162
        %6164 = vdwg.mxu0
        %v6166 = vsel %vm5977, %v6065, 0
        %v6169 = vsel %vm5977, %v6163, 0
        %vm6171 = vcmask 1043456
        %v6173 = vsel %vm6171, %v6082, 0
        %6175 = vmatpush.msra.mxu0 0.0
        %6176 = vmatpush.msra.mxu0 0.0
        %6177 = vmatpush.msra.mxu0 0.0
        %6178 = vmatpush.msra.mxu0 0.0
        %6179 = vmatpush.msra.mxu0 0.0
        %6180 = vmatpush.msra.mxu0 0.0
        %6181 = vmatpush.msra.mxu0 0.0
        %6182 = vmatpush.msra.mxu0 0.0
        %6183 = vmatpush.msra.mxu0 0.0
        %6184 = vmatpush.msra.mxu0 0.0
        %6185 = vmatpush.msra.mxu0 0.0
        %6186 = vmatpush.msra.mxu0 0.0
        %6187 = vmatpush.msra.mxu0 0.0
        %6188 = vmatpush.msra.mxu0 0.0
        %6189 = vmatpush.msra.mxu0 0.0
        %6190 = vmatpush.msra.mxu0 %v6173
        %6191 = vmatmul.f32.gmra.mxu0 %v6166
        %v6192 = vpop.f32.mrf.mxu0
        %v6193 = vadd.f32 0.0, %v6192
        %6194 = vmatmul.f32.gmra.mxu0 %v6169
        %v6195 = vpop.f32.mrf.mxu0
        %v6196 = vadd.f32 0.0, %v6195
        %6197 = vdwg.mxu0
        %vm6198 = vcmask 15360
        %v6199 = vsel %vm6198, %v6196, 0.0
        %6200 = vadd.xlane.f32.xlu0 %v6199
        %v6201 = vpop.xlane.xlu0 %6200
        %v6202 = vmul.f32 %v6201, 0.5
        %v6203 = vmul.f32 %v6196, %v6196
        %v6204 = vsel %vm6198, %v6203, 0.0
        %6205 = vadd.xlane.f32.xlu0 %v6204
        %v6206 = vpop.xlane.xlu0 %6205
        %v6207 = vmul.f32 %v6206, 0.5
        %v6208 = vmul.f32 %v6202, %v6202
        %v6209 = vsub.f32 %v6207, %v6208
        %v6210 = vadd.f32 %v6209, 1e-05
        %v6211 = vrsqrt.pop %v6210
        %v6212 = vmul.f32 %v6211, %v6210
        %v6213 = vmul.f32 %v6212, %v6211
        %v6214 = vmul.f32 0.5, %v6213
        %v6215 = vsub.f32 1.5, %v6214
        %v6216 = vmul.f32 %v6211, %v6215
        %vm6217 = vweird.f32 %v6210
        %vm6218 = vweird.f32 %v6211
        %vm6219 = vmor %vm6217, %vm6218
        %v6220 = vsel %vm6219, %v6211, %v6216
        %v6221 = vmul.f32 %v6220, %v6079
        %v6222 = vsub.f32 %v6196, %v6202
        %6224 = vset.pattern.permute.xlu0 0
        %6225 = vperm.xlu0 %6224, %v6221
        %v6226 = vpop.permute.xlu0 %6225
        %v6228 = vmul.f32 %v6222, %v6226
        %6230 = vset.pattern.permute.xlu0 0
        %6231 = vperm.xlu0 %6230, %v6081
        %v6232 = vpop.permute.xlu0 %6231
        %v6234 = vadd.f32 %v6228, %v6232
        %vm6235 = vcmp.ge.f32.partialorder %v6234, 0.0
        %v6236 = vmul.f32 %v6234, 0.2
        %v6237 = vsel %vm6235, %v6234, %v6236
        %vm6238 = vcmask 1047568
        %6239 = vrot.lane.b32.xlu0 %v6237, 2
        %v6240 = vpop.permute.xlu0 %6239
        %v6241 = vsel %vm6238, %v6240, %v6237
        %6242 = vrot.lane.b32.xlu0 %v6241, 2
        %v6243 = vpop.permute.xlu0 %6242
        %v6244 = vsel %vm6238, %v6243, %v6237
        %6246 = vrot.lane.b32.xlu0 %v6244, 127
        %v6247 = vpop.permute.xlu0 %6246
        %v6249 = vsel %vm1562, %v6247, 0.0
        %v6250 = vsel %vm1545, 1, 0
        %vm6251 = vcmp.eq.s32.totalorder %v6250, 1
        %v6252 = vsel %vm6251, %v6247, 0.0
        %6254 = vset.pattern.permute.xlu0 0
        %6255 = vperm.xlu0 %6254, %v6077
        %v6256 = vpop.permute.xlu0 %6255
        %v6259 = vsel %vm4305, %v6075, 0
        %6261 = vmatpush.msra.mxu0 0.0
        %6262 = vmatpush.msra.mxu0 0.0
        %6263 = vmatpush.msra.mxu0 0.0
        %6264 = vmatpush.msra.mxu0 0.0
        %6265 = vmatpush.msra.mxu0 0.0
        %6266 = vmatpush.msra.mxu0 0.0
        %6267 = vmatpush.msra.mxu0 0.0
        %6268 = vmatpush.msra.mxu0 0.0
        %6269 = vmatpush.msra.mxu0 0.0
        %6270 = vmatpush.msra.mxu0 0.0
        %6271 = vmatpush.msra.mxu0 0.0
        %6272 = vmatpush.msra.mxu0 0.0
        %6273 = vmatpush.msra.mxu0 0.0
        %6274 = vmatpush.msra.mxu0 %v6252
        %6275 = vmatpush.msra.mxu0 %v6237
        %6276 = vmatpush.msra.mxu0 %v6249
        %6277 = vmatmul.f32.gmra.mxu0 %v6259
        %v6278 = vpop.f32.mrf.mxu0
        %v6279 = vadd.f32 %v6256, %v6278
        %6280 = vdwg.mxu0
        %v6281 = vadd.f32 %v6193, %v6279
        %v6282 = vmul.f32 %v6281, 0.70710677
        %v6283 = vld [vmem:[%s20] sm:$0xff]
        %v6284 = vld [vmem:[%s20 + $0x8] sm:$0xff]
        %v6285 = vld [vmem:[%s19] sm:$0xff]
        %v6286 = vld [vmem:[%s19 + $0x8] sm:$0xff]
        %v6288 = vsel %vm5760, %v6285, 0
        %v6291 = vsel %vm5760, %v6286, 0
        %6293 = vmatpush.msra.mxu0 0.0
        %6294 = vmatpush.msra.mxu0 0.0
        %6295 = vmatpush.msra.mxu0 0.0
        %6296 = vmatpush.msra.mxu0 0.0
        %6297 = vmatpush.msra.mxu0 0.0
        %6298 = vmatpush.msra.mxu0 0.0
        %6299 = vmatpush.msra.mxu0 0.0
        %6300 = vmatpush.msra.mxu0 0.0
        %6301 = vmatpush.msra.mxu0 0.0
        %6302 = vmatpush.msra.mxu0 0.0
        %6303 = vmatpush.msra.mxu0 0.0
        %6304 = vmatpush.msra.mxu0 0.0
        %6305 = vmatpush.msra.mxu0 0.0
        %6306 = vmatpush.msra.mxu0 0.0
        %6307 = vmatpush.msra.mxu0 0.0
        %6308 = vmatpush.msra.mxu0 %v6282
        %6309 = vmatmul.f32.gmra.mxu0 %v6288
        %v6310 = vpop.f32.mrf.mxu0
        %v6311 = vadd.f32 0.0, %v6310
        %6312 = vmatmul.f32.gmra.mxu0 %v6291
        %v6313 = vpop.f32.mrf.mxu0
        %v6314 = vadd.f32 0.0, %v6313
        %6315 = vdwg.mxu0
        %v6316 = vadd.f32 %v6283, %v6311
        %v6317 = vadd.f32 %v6284, %v6314
        %s6318 = scalar_lea.vmem %s19, 16
        %v6319 = vld [vmem:[%s6318] sm:$0xff]
        %v6320 = vld [vmem:[%s6318 + $0x8] sm:$0xff]
        %6322 = vrot.lane.b32.xlu0 %v6282, 127
        %v6323 = vpop.permute.xlu0 %6322
        %v6326 = vsel %vm5760, %v6319, 0
        %v6329 = vsel %vm5760, %v6320, 0
        %6331 = vmatpush.msra.mxu0 0.0
        %6332 = vmatpush.msra.mxu0 0.0
        %6333 = vmatpush.msra.mxu0 0.0
        %6334 = vmatpush.msra.mxu0 0.0
        %6335 = vmatpush.msra.mxu0 0.0
        %6336 = vmatpush.msra.mxu0 0.0
        %6337 = vmatpush.msra.mxu0 0.0
        %6338 = vmatpush.msra.mxu0 0.0
        %6339 = vmatpush.msra.mxu0 0.0
        %6340 = vmatpush.msra.mxu0 0.0
        %6341 = vmatpush.msra.mxu0 0.0
        %6342 = vmatpush.msra.mxu0 0.0
        %6343 = vmatpush.msra.mxu0 0.0
        %6344 = vmatpush.msra.mxu0 0.0
        %6345 = vmatpush.msra.mxu0 0.0
        %6346 = vmatpush.msra.mxu0 %v6323
        %6347 = vmatmul.f32.gmra.mxu0 %v6326
        %v6348 = vpop.f32.mrf.mxu0
        %v6349 = vadd.f32 0.0, %v6348
        %6350 = vmatmul.f32.gmra.mxu0 %v6329
        %v6351 = vpop.f32.mrf.mxu0
        %v6352 = vadd.f32 0.0, %v6351
        %6353 = vdwg.mxu0
        %v6354 = vadd.f32 %v6316, %v6349
        %v6355 = vadd.f32 %v6317, %v6352
        %vm6356 = vcmp.ge.f32.partialorder %v6354, 0.0
        %vm6357 = vcmp.ge.f32.partialorder %v6355, 0.0
        %v6358 = vmul.f32 %v6354, 0.2
        %v6359 = vmul.f32 %v6355, 0.2
        %v6360 = vsel %vm6356, %v6354, %v6358
        %v6361 = vsel %vm6357, %v6355, %v6359
        %v6362 = vld [vmem:[#allocation10] sm:$0x3]
        %v6363 = vld [vmem:[%s22] sm:$0x3]
        %v6365 = vsel %vm5542, %v6362, 0
        %6367 = vmatpush.msra.mxu0 0.0
        %6368 = vmatpush.msra.mxu0 0.0
        %6369 = vmatpush.msra.mxu0 0.0
        %6370 = vmatpush.msra.mxu0 0.0
        %6371 = vmatpush.msra.mxu0 0.0
        %6372 = vmatpush.msra.mxu0 0.0
        %6373 = vmatpush.msra.mxu0 0.0
        %6374 = vmatpush.msra.mxu0 0.0
        %6375 = vmatpush.msra.mxu0 0.0
        %6376 = vmatpush.msra.mxu0 0.0
        %6377 = vmatpush.msra.mxu0 0.0
        %6378 = vmatpush.msra.mxu0 0.0
        %6379 = vmatpush.msra.mxu0 0.0
        %6380 = vmatpush.msra.mxu0 0.0
        %6381 = vmatpush.msra.mxu0 %v6361
        %6382 = vmatpush.msra.mxu0 %v6360
        %6383 = vmatmul.f32.gmra.mxu0 %v6365
        %v6384 = vpop.f32.mrf.mxu0
        %v6385 = vadd.f32 %v6363, %v6384
        %6386 = vdwg.mxu0
        %vm6387 = vcmask 1024
        %6388 = vst.msk [vmem:[%s802] sm:$0x3] %vm6387, %v6385
        %p6389 = scmp.lt.s32.totalorder %s38, 1
        %s6390 = scalar_select %p6389, %s38, 1
        %s6391 = smul.addr %s6390, 2
        %s6392 = scalar_lea.vmem %s23, %s6391
        // Predicated region
        $region137: #{model_forward.1} parent=111 // pred_check
          %p6393 = pneg %p544
        $region138: #{model_forward.1} parent=111 // pred_check_branch
          %6395 = sbr.rel (%p6393) target = $region140
        $region139: #{model_forward.1} parent=111 // pred_region
          _
        $region140: #{model_forward.1} parent=111 // pred_fallthru
          _
      $region112: #{model_forward.1} parent=5 // pred_fallthru
        _
      %p6396 = scmp.le.s32.totalorder 2, %s33
      // Predicated region
      $region141: #{model_forward.1} parent=5 // pred_check
        %p6397 = pneg %p6396
      $region142: #{model_forward.1} parent=5 // pred_check_branch
        %6399 = sbr.rel (%p6397) target = $region144
      $region143: #{model_forward.1} parent=5 // pred_region
        %s6400 = ssub.s32 %s33, 2
        // Predicated region
        $region145: #{model_forward.1} parent=143 // pred_check
          %p6401 = pneg %p550
        $region146: #{model_forward.1} parent=143 // pred_check_branch
          %6403 = sbr.rel (%p6401) target = $region148
        $region147: #{model_forward.1} parent=143 // pred_region
          %p6404 = scmp.lt.s32.totalorder %s39, 1
          %s6405 = scalar_select %p6404, %s39, 1
          %s6406 = smul.addr %s6405, 2
          %s6407 = scalar_lea.vmem %s23, %s6406
        $region148: #{model_forward.1} parent=143 // pred_fallthru
          _
      $region144: #{model_forward.1} parent=5 // pred_fallthru
        _
    $region6: #{model_forward.1} parent=1 // loop_footer
      %s37 = sadd.s32 1, %s33
    $region7: #{model_forward.1} parent=1 // loop_footer_branch
      %32 = sbr.rel target = $region3
    $region8: #{model_forward.1} parent=1 // loop_exit
      _
    %6408 = vsyncpa [#allocation3], 1
    %s6409 = scalar_lea.sflag [#allocation3], 1
    %6410 = vsyncpa %s6409, 1
    %6411 = vsyncpa [#allocation5], 1
    %6412 = vsyncpa [#allocation8], 1
    %6413 = vsyncpa [#allocation11], 1

</llo_original>
